<compile_context>
chip_gen: v7x
topology: tpu7x:2x2x1
jax: 0.10.0
libtpu: 0.0.40
codegen_flags: <defaults>
</compile_context>

<pallas_src>
import functools

import numpy as np
import jax
import jax.numpy as jnp
from jax.experimental import pallas as pl
from jax.experimental.pallas import tpu as pltpu


_CONV_CHANNELS = [(1, 8), (8, 8), (8, 16), (16, 16),
                  (16, 16), (16, 16), (16, 8), (8, 1)]


# ------------------------- constant-matrix helpers ---------------------------

def _valid_taps(Hc, Wc):
    """5x5 'same' taps (ky, kx) that are valid for at least one output pixel."""
    return [(ky, kx) for ky in range(5) for kx in range(5)
            if abs(ky - 2) < Hc and abs(kx - 2) < Wc]


def _border_mask(Hc, Wc, taps, Bt):
    """(T, Bt*Hc*Wc) 0/1 mask; row t is 1 where tap (ky-2, kx-2) stays inside
    the image ('same' zero padding), tiled across the Bt lane-batched images."""
    S = Hc * Wc
    m = np.zeros((len(taps), Bt * S), np.float32)
    for t, (ky, kx) in enumerate(taps):
        dy, dx = ky - 2, kx - 2
        valid = np.zeros((Hc, Wc), np.float32)
        valid[max(0, -dy):min(Hc, Hc - dy), max(0, -dx):min(Wc, Wc - dx)] = 1.0
        m[t] = np.tile(valid.reshape(-1), Bt)
    return m


def _pool_selector(Hc, Wc, Bt):
    """(Bt*Hc*Wc, Bt*(Hc//2)*(Wc//2)) 0/1 block-diagonal matrix that keeps the
    even-(y, x) corner of each 2x2 window, per lane-batched image."""
    Hq, Wq = Hc // 2, Wc // 2
    d = np.zeros((Hc * Wc, Hq * Wq), np.float32)
    for yq in range(Hq):
        for xq in range(Wq):
            d[(2 * yq) * Wc + 2 * xq, yq * Wq + xq] = 1.0
    return np.kron(np.eye(Bt, dtype=np.float32), d)


# ----------------------------- fused Pallas kernel ---------------------------

def _cnn_fused_kernel(x_ref, *refs, H, W, taps_per_stage):
    """Whole CNN forward for Bt lane-batched images, fully VMEM-resident."""
    conv_w = refs[0:8]        # layer0: (8, T) f32; others: (Cout, T*Cin) bf16
    conv_b = refs[8:16]       # (Cout, 1) f32
    stage_m = refs[16:20]     # (T, Bt*S) bf16 per-stage border masks
    pool_d = refs[20:23]      # (Bt*S, Bt*S/4) f32 0/1 selectors (block-diag)
    lmask_ref, f0w_ref, f0b_ref, f1w_ref, f1b_ref = refs[23:28]
    out_ref = refs[28]        # (1, 1, Bt) f32

    def shift(v, d, S):
        # out[:, s] = v[:, s + d], zero-filled outside [0, S)
        C = v.shape[0]
        if d == 0:
            return v
        if abs(d) >= S:
            return jnp.zeros((C, S), v.dtype)
        z = jnp.zeros((C, abs(d)), v.dtype)
        if d > 0:
            return jnp.concatenate([v[:, d:], z], axis=1)
        return jnp.concatenate([z, v[:, :S + d]], axis=1)

    def conv5x5(v, w_ref, b_ref, m_ref, taps, Wc, relu):
        cin, Stot = v.shape
        cout = w_ref.shape[0]
        if cin == 1:
            # Layer 0: single input channel -> pure-f32 VPU accumulation
            # (no im2col materialisation, no bf16 rounding on the first layer).
            w = w_ref[...]                                      # (cout, T) f32
            y = jnp.zeros((cout, Stot), jnp.float32)
            for t, (ky, kx) in enumerate(taps):
                d = (ky - 2) * Wc + (kx - 2)
                p = shift(v, d, Stot) * m_ref[t:t + 1, :]       # (1, Stot) f32
                y = y + w[:, t:t + 1] * p                       # (cout, Stot)
        else:
            # im2col: mask + cast each shifted piece to bf16 BEFORE the
            # sublane concat (0/1 masks are exact in bf16; halves live bytes).
            pieces = []
            for t, (ky, kx) in enumerate(taps):
                d = (ky - 2) * Wc + (kx - 2)
                p = shift(v, d, Stot).astype(jnp.bfloat16) * m_ref[t:t + 1, :]
                pieces.append(p)                                # (cin, Stot)
            im = jnp.concatenate(pieces, axis=0)                # (T*cin, Stot)
            y = jnp.dot(w_ref[...], im,                         # bf16 MXU matmul
                        preferred_element_type=jnp.float32)     # (cout, Stot)
        y = y + b_ref[...]                                      # lane broadcast
        if relu:
            y = jnp.maximum(y, 0.0)
        return y

    def maxpool2x2(v, d_ref, Wc):
        Stot = v.shape[1]
        m1 = jnp.maximum(v, shift(v, 1, Stot))       # horizontal pair max
        m2 = jnp.maximum(m1, shift(m1, Wc, Stot))    # vertical pair max
        # keep only even-(y, x) positions via 0/1 selection matmul (exact);
        # garbage at discarded / cross-image positions multiplies by 0.
        return jnp.dot(m2, d_ref[...], preferred_element_type=jnp.float32)

    a = x_ref[0]        # (1, Bt*H*W) f32 — single input channel, lane-batched
    sizes = [(H, W), (H // 2, W // 2), (H // 4, W // 4), (H // 8, W // 8)]

    li = 0
    for g, (_, Wc) in enumerate(sizes):
        taps = taps_per_stage[g]
        a = conv5x5(a, conv_w[li], conv_b[li], stage_m[g], taps, Wc, relu=False)
        li += 1
        a = conv5x5(a, conv_w[li], conv_b[li], stage_m[g], taps, Wc, relu=True)
        li += 1
        if g < 3:
            a = maxpool2x2(a, pool_d[g], Wc)
    # Dropout(p=0.2): identity at inference (eval mode).

    h = a * lmask_ref[...]                                           # (1, Bt*F)
    z = jnp.dot(h, f0w_ref[...],                                     # block-diag
                preferred_element_type=jnp.float32) + f0b_ref[...]   # (1, Bt*32)
    z = jnp.maximum(z, 0.0)
    o = jnp.dot(z, f1w_ref[...],
                preferred_element_type=jnp.float32) + f1b_ref[...]   # (1, Bt)
    out_ref[0] = jax.nn.sigmoid(o)


# ------------------------------ model forward -------------------------------

def cnn_forward(params, x_nchw, mask_dscale):
    """Replicates CNN.forward (eval mode).  x_nchw: (B,1,H,W) float32 -> (B,)."""
    B, C0, H, W = x_nchw.shape
    assert C0 == 1 and H % 8 == 0 and W % 8 == 0
    F = (H // 8) * (W // 8)

    # Batch folding: Bt images share one grid step along the lane axis.
    # Keep >= 2 grid steps when B > 1 so v7x's two TensorCores both get work;
    # cap Bt because the kron'd pool selectors grow as Bt^2.
    num_steps = 2 if B > 1 else 1
    Bt = -(-B // num_steps)
    if Bt > 8:
        Bt = 8
        num_steps = -(-B // Bt)
    Bp = num_steps * Bt

    x = x_nchw.astype(jnp.float32).reshape(B, H * W)
    if Bp != B:
        x = jnp.concatenate([x, jnp.zeros((Bp - B, H * W), jnp.float32)], 0)
    x = x.reshape(num_steps, 1, Bt * H * W)            # lane-batched layout

    sizes = [(H, W), (H // 2, W // 2), (H // 4, W // 4), (H // 8, W // 8)]
    taps_per_stage = tuple(_valid_taps(Hc, Wc) for (Hc, Wc) in sizes)

    # Conv weights in (pruned) im2col layout: column index = t*cin + ci.
    w_mats, b_cols = [], []
    for i, (cin, cout) in enumerate(_CONV_CHANNELS):
        taps = taps_per_stage[i // 2]
        w = params[f"c{i}_w"].astype(jnp.float32)                 # (cout,cin,5,5)
        cols = [w[:, :, ky, kx] for (ky, kx) in taps]             # each (cout,cin)
        wm = jnp.concatenate(cols, axis=1)                        # (cout, T*cin)
        w_mats.append(wm if cin == 1 else wm.astype(jnp.bfloat16))
        b_cols.append(params[f"c{i}_b"].reshape(cout, 1).astype(jnp.float32))

    stage_masks = [jnp.asarray(_border_mask(Hc, Wc, taps_per_stage[g], Bt),
                               dtype=jnp.bfloat16)
                   for g, (Hc, Wc) in enumerate(sizes)]
    pool_sel = [jnp.asarray(_pool_selector(sizes[g][0], sizes[g][1], Bt))
                for g in range(3)]

    lmask = jnp.tile(mask_dscale.reshape(1, F).astype(jnp.float32), (1, Bt))
    eye = jnp.eye(Bt, dtype=jnp.float32)
    f0w = jnp.kron(eye, params["fc0_w"].astype(jnp.float32))      # (Bt*F, Bt*32)
    f0b = jnp.tile(params["fc0_b"].reshape(1, 32).astype(jnp.float32), (1, Bt))
    f1w = jnp.kron(eye, params["fc1_w"].astype(jnp.float32))      # (Bt*32, Bt)
    f1b = jnp.tile(params["fc1_b"].reshape(1, 1).astype(jnp.float32), (1, Bt))

    const_inputs = [*w_mats, *b_cols, *stage_masks, *pool_sel,
                    lmask, f0w, f0b, f1w, f1b]

    in_specs = [pl.BlockSpec((1, 1, Bt * H * W), lambda b: (b, 0, 0))]
    in_specs += [pl.BlockSpec(c.shape, lambda b: (0, 0)) for c in const_inputs]

    out = pl.pallas_call(
        functools.partial(_cnn_fused_kernel, H=H, W=W,
                          taps_per_stage=taps_per_stage),
        grid=(num_steps,),
        in_specs=in_specs,
        out_specs=pl.BlockSpec((1, 1, Bt), lambda b: (b, 0, 0)),
        out_shape=jax.ShapeDtypeStruct((num_steps, 1, Bt), jnp.float32),
        compiler_params=pltpu.CompilerParams(
            dimension_semantics=("parallel",),        # v7x: 2 TCs share steps
            vmem_limit_bytes=32 * 1024 * 1024),
    )(x, *const_inputs)
    return out.reshape(Bp)[:B]


# ---------------------------- deterministic init -----------------------------

def init_params(key, num_features):
    params = {}
    for i, (cin, cout) in enumerate(_CONV_CHANNELS):
        key, kw, kb = jax.random.split(key, 3)
        bound = 1.0 / float(np.sqrt(cin * 5 * 5))
        params[f"c{i}_w"] = jax.random.uniform(
            kw, (cout, cin, 5, 5), jnp.float32, -bound, bound)
        params[f"c{i}_b"] = jax.random.uniform(
            kb, (cout,), jnp.float32, -bound, bound)

    # Linear(num_features, 32) -> stored pre-transposed (in, out)
    key, kw, kb = jax.random.split(key, 3)
    b0 = 1.0 / float(np.sqrt(num_features))
    params["fc0_w"] = jax.random.uniform(kw, (num_features, 32), jnp.float32, -b0, b0)
    params["fc0_b"] = jax.random.uniform(kb, (32,), jnp.float32, -b0, b0)

    # Linear(32, 1)
    key, kw, kb = jax.random.split(key, 3)
    b1 = 1.0 / float(np.sqrt(32))
    params["fc1_w"] = jax.random.uniform(kw, (32, 1), jnp.float32, -b1, b1)
    params["fc1_b"] = jax.random.uniform(kb, (1,), jnp.float32, -b1, b1)
    return params


# ----------------------------------- main ------------------------------------

if __name__ == "__main__":
    B, H, W = 2, 16, 16                       # spatial_shape = (16, 16)
    num_features = (H // 8) * (W // 8)        # downscale_factor = 1/8

    key = jax.random.PRNGKey(0)
    k_param, k_x, k_mask = jax.random.split(key, 3)

    # Land mask and its nearest-neighbour 1/8 downscale (>0.5 -> int), as in __init__.
    mask = (jax.random.uniform(k_mask, (H, W)) > 0.3).astype(jnp.float32)
    mask_dscale = (mask[::8, ::8] > 0.5).astype(jnp.int32)   # (H//8, W//8)

    params = init_params(k_param, num_features)
    x = jax.random.normal(k_x, (B, 1, H, W), dtype=jnp.float32)

    out = jax.jit(cnn_forward)(params, x, mask_dscale)
    out = jax.block_until_ready(out)

    assert out.shape == (B,)
    assert bool(jnp.all(jnp.isfinite(out)))
    print("KERNEL_OK")
</pallas_src>

<mosaic_0001>
module attributes {stable_mosaic.version = 11 : i64} {
  func.func @_cnn_fused_kernel(%arg0: i32, %arg1: memref<1x1x256xf32, #tpu.memory_space<vmem>>, %arg2: memref<8x25xf32, #tpu.memory_space<vmem>>, %arg3: memref<8x200xbf16, #tpu.memory_space<vmem>>, %arg4: memref<16x200xbf16, #tpu.memory_space<vmem>>, %arg5: memref<16x400xbf16, #tpu.memory_space<vmem>>, %arg6: memref<16x400xbf16, #tpu.memory_space<vmem>>, %arg7: memref<16x400xbf16, #tpu.memory_space<vmem>>, %arg8: memref<8x144xbf16, #tpu.memory_space<vmem>>, %arg9: memref<1x72xbf16, #tpu.memory_space<vmem>>, %arg10: memref<8x1xf32, #tpu.memory_space<vmem>>, %arg11: memref<8x1xf32, #tpu.memory_space<vmem>>, %arg12: memref<16x1xf32, #tpu.memory_space<vmem>>, %arg13: memref<16x1xf32, #tpu.memory_space<vmem>>, %arg14: memref<16x1xf32, #tpu.memory_space<vmem>>, %arg15: memref<16x1xf32, #tpu.memory_space<vmem>>, %arg16: memref<8x1xf32, #tpu.memory_space<vmem>>, %arg17: memref<1x1xf32, #tpu.memory_space<vmem>>, %arg18: memref<25x256xbf16, #tpu.memory_space<vmem>>, %arg19: memref<25x64xbf16, #tpu.memory_space<vmem>>, %arg20: memref<25x16xbf16, #tpu.memory_space<vmem>>, %arg21: memref<9x4xbf16, #tpu.memory_space<vmem>>, %arg22: memref<256x64xf32, #tpu.memory_space<vmem>>, %arg23: memref<64x16xf32, #tpu.memory_space<vmem>>, %arg24: memref<16x4xf32, #tpu.memory_space<vmem>>, %arg25: memref<1x4xf32, #tpu.memory_space<vmem>>, %arg26: memref<4x32xf32, #tpu.memory_space<vmem>>, %arg27: memref<1x32xf32, #tpu.memory_space<vmem>>, %arg28: memref<32x1xf32, #tpu.memory_space<vmem>>, %arg29: memref<1x1xf32, #tpu.memory_space<vmem>>, %arg30: memref<1x1x1xf32, #tpu.memory_space<vmem>>) attributes {dimension_semantics = [#tpu.dimension_semantics<parallel>], iteration_bounds = array<i64: 2>, scalar_prefetch = 0 : i64, scratch_operands = 0 : i64, tpu.core_type = #tpu.core_type<tc>, window_params = [{transform_indices = @transform_0, window_bounds = array<i64: 1, 1, 256>}, {pipeline_mode = #tpu.pipeline_mode<synchronous>, transform_indices = @transform_1, window_bounds = array<i64: 8, 25>}, {pipeline_mode = #tpu.pipeline_mode<synchronous>, transform_indices = @transform_2, window_bounds = array<i64: 8, 200>}, {pipeline_mode = #tpu.pipeline_mode<synchronous>, transform_indices = @transform_3, window_bounds = array<i64: 16, 200>}, {pipeline_mode = #tpu.pipeline_mode<synchronous>, transform_indices = @transform_4, window_bounds = array<i64: 16, 400>}, {pipeline_mode = #tpu.pipeline_mode<synchronous>, transform_indices = @transform_5, window_bounds = array<i64: 16, 400>}, {pipeline_mode = #tpu.pipeline_mode<synchronous>, transform_indices = @transform_6, window_bounds = array<i64: 16, 400>}, {pipeline_mode = #tpu.pipeline_mode<synchronous>, transform_indices = @transform_7, window_bounds = array<i64: 8, 144>}, {pipeline_mode = #tpu.pipeline_mode<synchronous>, transform_indices = @transform_8, window_bounds = array<i64: 1, 72>}, {pipeline_mode = #tpu.pipeline_mode<synchronous>, transform_indices = @transform_9, window_bounds = array<i64: 8, 1>}, {pipeline_mode = #tpu.pipeline_mode<synchronous>, transform_indices = @transform_10, window_bounds = array<i64: 8, 1>}, {pipeline_mode = #tpu.pipeline_mode<synchronous>, transform_indices = @transform_11, window_bounds = array<i64: 16, 1>}, {pipeline_mode = #tpu.pipeline_mode<synchronous>, transform_indices = @transform_12, window_bounds = array<i64: 16, 1>}, {pipeline_mode = #tpu.pipeline_mode<synchronous>, transform_indices = @transform_13, window_bounds = array<i64: 16, 1>}, {pipeline_mode = #tpu.pipeline_mode<synchronous>, transform_indices = @transform_14, window_bounds = array<i64: 16, 1>}, {pipeline_mode = #tpu.pipeline_mode<synchronous>, transform_indices = @transform_15, window_bounds = array<i64: 8, 1>}, {pipeline_mode = #tpu.pipeline_mode<synchronous>, transform_indices = @transform_16, window_bounds = array<i64: 1, 1>}, {pipeline_mode = #tpu.pipeline_mode<synchronous>, transform_indices = @transform_17, window_bounds = array<i64: 25, 256>}, {pipeline_mode = #tpu.pipeline_mode<synchronous>, transform_indices = @transform_18, window_bounds = array<i64: 25, 64>}, {pipeline_mode = #tpu.pipeline_mode<synchronous>, transform_indices = @transform_19, window_bounds = array<i64: 25, 16>}, {pipeline_mode = #tpu.pipeline_mode<synchronous>, transform_indices = @transform_20, window_bounds = array<i64: 9, 4>}, {pipeline_mode = #tpu.pipeline_mode<synchronous>, transform_indices = @transform_21, window_bounds = array<i64: 256, 64>}, {pipeline_mode = #tpu.pipeline_mode<synchronous>, transform_indices = @transform_22, window_bounds = array<i64: 64, 16>}, {pipeline_mode = #tpu.pipeline_mode<synchronous>, transform_indices = @transform_23, window_bounds = array<i64: 16, 4>}, {pipeline_mode = #tpu.pipeline_mode<synchronous>, transform_indices = @transform_24, window_bounds = array<i64: 1, 4>}, {pipeline_mode = #tpu.pipeline_mode<synchronous>, transform_indices = @transform_25, window_bounds = array<i64: 4, 32>}, {pipeline_mode = #tpu.pipeline_mode<synchronous>, transform_indices = @transform_26, window_bounds = array<i64: 1, 32>}, {pipeline_mode = #tpu.pipeline_mode<synchronous>, transform_indices = @transform_27, window_bounds = array<i64: 32, 1>}, {pipeline_mode = #tpu.pipeline_mode<synchronous>, transform_indices = @transform_28, window_bounds = array<i64: 1, 1>}, {transform_indices = @transform_29, window_bounds = array<i64: 1, 1, 1>}]} {
    %c0 = arith.constant 0 : index
    %c0_0 = arith.constant 0 : index
    %c0_1 = arith.constant 0 : index
    %0 = vector.load %arg1[%c0, %c0_0, %c0_1] : memref<1x1x256xf32, #tpu.memory_space<vmem>>, vector<1x1x256xf32>
    %1 = vector.shape_cast %0 : vector<1x1x256xf32> to vector<1x256xf32>
    %c0_2 = arith.constant 0 : index
    %c0_3 = arith.constant 0 : index
    %2 = vector.load %arg2[%c0_2, %c0_3] : memref<8x25xf32, #tpu.memory_space<vmem>>, vector<8x25xf32>
    %cst = arith.constant 0.000000e+00 : f32
    %3 = vector.broadcast %cst : f32 to vector<8x256xf32>
    %cst_4 = arith.constant 0.000000e+00 : f32
    %4 = vector.broadcast %cst_4 : f32 to vector<1x34xf32>
    %5 = vector.extract_strided_slice %1 {offsets = [0, 0], sizes = [1, 222], strides = [1, 1]} : vector<1x256xf32> to vector<1x222xf32>
    %6 = tpu.concatenate %4, %5 in 1 : vector<1x34xf32>, vector<1x222xf32> -> vector<1x256xf32>
    %c0_5 = arith.constant 0 : index
    %c0_6 = arith.constant 0 : index
    %7 = vector.load %arg18[%c0_5, %c0_6] : memref<25x256xbf16, #tpu.memory_space<vmem>>, vector<1x256xbf16>
    %8 = arith.extf %7 : vector<1x256xbf16> to vector<1x256xf32>
    %9 = arith.mulf %6, %8 : vector<1x256xf32>
    %10 = vector.extract_strided_slice %2 {offsets = [0, 0], sizes = [8, 1], strides = [1, 1]} : vector<8x25xf32> to vector<8x1xf32>
    %11 = vector.broadcast %10 : vector<8x1xf32> to vector<8x256xf32>
    %12 = vector.broadcast %9 : vector<1x256xf32> to vector<8x256xf32>
    %13 = arith.mulf %11, %12 : vector<8x256xf32>
    %14 = arith.addf %3, %13 : vector<8x256xf32>
    %cst_7 = arith.constant 0.000000e+00 : f32
    %15 = vector.broadcast %cst_7 : f32 to vector<1x33xf32>
    %16 = vector.extract_strided_slice %1 {offsets = [0, 0], sizes = [1, 223], strides = [1, 1]} : vector<1x256xf32> to vector<1x223xf32>
    %17 = tpu.concatenate %15, %16 in 1 : vector<1x33xf32>, vector<1x223xf32> -> vector<1x256xf32>
    %c1 = arith.constant 1 : index
    %c0_8 = arith.constant 0 : index
    %18 = vector.load %arg18[%c1, %c0_8] : memref<25x256xbf16, #tpu.memory_space<vmem>>, vector<1x256xbf16>
    %19 = arith.extf %18 : vector<1x256xbf16> to vector<1x256xf32>
    %20 = arith.mulf %17, %19 : vector<1x256xf32>
    %21 = vector.extract_strided_slice %2 {offsets = [0, 1], sizes = [8, 1], strides = [1, 1]} : vector<8x25xf32> to vector<8x1xf32>
    %22 = vector.broadcast %21 : vector<8x1xf32> to vector<8x256xf32>
    %23 = vector.broadcast %20 : vector<1x256xf32> to vector<8x256xf32>
    %24 = arith.mulf %22, %23 : vector<8x256xf32>
    %25 = arith.addf %14, %24 : vector<8x256xf32>
    %cst_9 = arith.constant 0.000000e+00 : f32
    %26 = vector.broadcast %cst_9 : f32 to vector<1x32xf32>
    %27 = vector.extract_strided_slice %1 {offsets = [0, 0], sizes = [1, 224], strides = [1, 1]} : vector<1x256xf32> to vector<1x224xf32>
    %28 = tpu.concatenate %26, %27 in 1 : vector<1x32xf32>, vector<1x224xf32> -> vector<1x256xf32>
    %c2 = arith.constant 2 : index
    %c0_10 = arith.constant 0 : index
    %29 = vector.load %arg18[%c2, %c0_10] : memref<25x256xbf16, #tpu.memory_space<vmem>>, vector<1x256xbf16>
    %30 = arith.extf %29 : vector<1x256xbf16> to vector<1x256xf32>
    %31 = arith.mulf %28, %30 : vector<1x256xf32>
    %32 = vector.extract_strided_slice %2 {offsets = [0, 2], sizes = [8, 1], strides = [1, 1]} : vector<8x25xf32> to vector<8x1xf32>
    %33 = vector.broadcast %32 : vector<8x1xf32> to vector<8x256xf32>
    %34 = vector.broadcast %31 : vector<1x256xf32> to vector<8x256xf32>
    %35 = arith.mulf %33, %34 : vector<8x256xf32>
    %36 = arith.addf %25, %35 : vector<8x256xf32>
    %cst_11 = arith.constant 0.000000e+00 : f32
    %37 = vector.broadcast %cst_11 : f32 to vector<1x31xf32>
    %38 = vector.extract_strided_slice %1 {offsets = [0, 0], sizes = [1, 225], strides = [1, 1]} : vector<1x256xf32> to vector<1x225xf32>
    %39 = tpu.concatenate %37, %38 in 1 : vector<1x31xf32>, vector<1x225xf32> -> vector<1x256xf32>
    %c3 = arith.constant 3 : index
    %c0_12 = arith.constant 0 : index
    %40 = vector.load %arg18[%c3, %c0_12] : memref<25x256xbf16, #tpu.memory_space<vmem>>, vector<1x256xbf16>
    %41 = arith.extf %40 : vector<1x256xbf16> to vector<1x256xf32>
    %42 = arith.mulf %39, %41 : vector<1x256xf32>
    %43 = vector.extract_strided_slice %2 {offsets = [0, 3], sizes = [8, 1], strides = [1, 1]} : vector<8x25xf32> to vector<8x1xf32>
    %44 = vector.broadcast %43 : vector<8x1xf32> to vector<8x256xf32>
    %45 = vector.broadcast %42 : vector<1x256xf32> to vector<8x256xf32>
    %46 = arith.mulf %44, %45 : vector<8x256xf32>
    %47 = arith.addf %36, %46 : vector<8x256xf32>
    %cst_13 = arith.constant 0.000000e+00 : f32
    %48 = vector.broadcast %cst_13 : f32 to vector<1x30xf32>
    %49 = vector.extract_strided_slice %1 {offsets = [0, 0], sizes = [1, 226], strides = [1, 1]} : vector<1x256xf32> to vector<1x226xf32>
    %50 = tpu.concatenate %48, %49 in 1 : vector<1x30xf32>, vector<1x226xf32> -> vector<1x256xf32>
    %c4 = arith.constant 4 : index
    %c0_14 = arith.constant 0 : index
    %51 = vector.load %arg18[%c4, %c0_14] : memref<25x256xbf16, #tpu.memory_space<vmem>>, vector<1x256xbf16>
    %52 = arith.extf %51 : vector<1x256xbf16> to vector<1x256xf32>
    %53 = arith.mulf %50, %52 : vector<1x256xf32>
    %54 = vector.extract_strided_slice %2 {offsets = [0, 4], sizes = [8, 1], strides = [1, 1]} : vector<8x25xf32> to vector<8x1xf32>
    %55 = vector.broadcast %54 : vector<8x1xf32> to vector<8x256xf32>
    %56 = vector.broadcast %53 : vector<1x256xf32> to vector<8x256xf32>
    %57 = arith.mulf %55, %56 : vector<8x256xf32>
    %58 = arith.addf %47, %57 : vector<8x256xf32>
    %cst_15 = arith.constant 0.000000e+00 : f32
    %59 = vector.broadcast %cst_15 : f32 to vector<1x18xf32>
    %60 = vector.extract_strided_slice %1 {offsets = [0, 0], sizes = [1, 238], strides = [1, 1]} : vector<1x256xf32> to vector<1x238xf32>
    %61 = tpu.concatenate %59, %60 in 1 : vector<1x18xf32>, vector<1x238xf32> -> vector<1x256xf32>
    %c5 = arith.constant 5 : index
    %c0_16 = arith.constant 0 : index
    %62 = vector.load %arg18[%c5, %c0_16] : memref<25x256xbf16, #tpu.memory_space<vmem>>, vector<1x256xbf16>
    %63 = arith.extf %62 : vector<1x256xbf16> to vector<1x256xf32>
    %64 = arith.mulf %61, %63 : vector<1x256xf32>
    %65 = vector.extract_strided_slice %2 {offsets = [0, 5], sizes = [8, 1], strides = [1, 1]} : vector<8x25xf32> to vector<8x1xf32>
    %66 = vector.broadcast %65 : vector<8x1xf32> to vector<8x256xf32>
    %67 = vector.broadcast %64 : vector<1x256xf32> to vector<8x256xf32>
    %68 = arith.mulf %66, %67 : vector<8x256xf32>
    %69 = arith.addf %58, %68 : vector<8x256xf32>
    %cst_17 = arith.constant 0.000000e+00 : f32
    %70 = vector.broadcast %cst_17 : f32 to vector<1x17xf32>
    %71 = vector.extract_strided_slice %1 {offsets = [0, 0], sizes = [1, 239], strides = [1, 1]} : vector<1x256xf32> to vector<1x239xf32>
    %72 = tpu.concatenate %70, %71 in 1 : vector<1x17xf32>, vector<1x239xf32> -> vector<1x256xf32>
    %c6 = arith.constant 6 : index
    %c0_18 = arith.constant 0 : index
    %73 = vector.load %arg18[%c6, %c0_18] : memref<25x256xbf16, #tpu.memory_space<vmem>>, vector<1x256xbf16>
    %74 = arith.extf %73 : vector<1x256xbf16> to vector<1x256xf32>
    %75 = arith.mulf %72, %74 : vector<1x256xf32>
    %76 = vector.extract_strided_slice %2 {offsets = [0, 6], sizes = [8, 1], strides = [1, 1]} : vector<8x25xf32> to vector<8x1xf32>
    %77 = vector.broadcast %76 : vector<8x1xf32> to vector<8x256xf32>
    %78 = vector.broadcast %75 : vector<1x256xf32> to vector<8x256xf32>
    %79 = arith.mulf %77, %78 : vector<8x256xf32>
    %80 = arith.addf %69, %79 : vector<8x256xf32>
    %cst_19 = arith.constant 0.000000e+00 : f32
    %81 = vector.broadcast %cst_19 : f32 to vector<1x16xf32>
    %82 = vector.extract_strided_slice %1 {offsets = [0, 0], sizes = [1, 240], strides = [1, 1]} : vector<1x256xf32> to vector<1x240xf32>
    %83 = tpu.concatenate %81, %82 in 1 : vector<1x16xf32>, vector<1x240xf32> -> vector<1x256xf32>
    %c7 = arith.constant 7 : index
    %c0_20 = arith.constant 0 : index
    %84 = vector.load %arg18[%c7, %c0_20] : memref<25x256xbf16, #tpu.memory_space<vmem>>, vector<1x256xbf16>
    %85 = arith.extf %84 : vector<1x256xbf16> to vector<1x256xf32>
    %86 = arith.mulf %83, %85 : vector<1x256xf32>
    %87 = vector.extract_strided_slice %2 {offsets = [0, 7], sizes = [8, 1], strides = [1, 1]} : vector<8x25xf32> to vector<8x1xf32>
    %88 = vector.broadcast %87 : vector<8x1xf32> to vector<8x256xf32>
    %89 = vector.broadcast %86 : vector<1x256xf32> to vector<8x256xf32>
    %90 = arith.mulf %88, %89 : vector<8x256xf32>
    %91 = arith.addf %80, %90 : vector<8x256xf32>
    %cst_21 = arith.constant 0.000000e+00 : f32
    %92 = vector.broadcast %cst_21 : f32 to vector<1x15xf32>
    %93 = vector.extract_strided_slice %1 {offsets = [0, 0], sizes = [1, 241], strides = [1, 1]} : vector<1x256xf32> to vector<1x241xf32>
    %94 = tpu.concatenate %92, %93 in 1 : vector<1x15xf32>, vector<1x241xf32> -> vector<1x256xf32>
    %c8 = arith.constant 8 : index
    %c0_22 = arith.constant 0 : index
    %95 = vector.load %arg18[%c8, %c0_22] : memref<25x256xbf16, #tpu.memory_space<vmem>>, vector<1x256xbf16>
    %96 = arith.extf %95 : vector<1x256xbf16> to vector<1x256xf32>
    %97 = arith.mulf %94, %96 : vector<1x256xf32>
    %98 = vector.extract_strided_slice %2 {offsets = [0, 8], sizes = [8, 1], strides = [1, 1]} : vector<8x25xf32> to vector<8x1xf32>
    %99 = vector.broadcast %98 : vector<8x1xf32> to vector<8x256xf32>
    %100 = vector.broadcast %97 : vector<1x256xf32> to vector<8x256xf32>
    %101 = arith.mulf %99, %100 : vector<8x256xf32>
    %102 = arith.addf %91, %101 : vector<8x256xf32>
    %cst_23 = arith.constant 0.000000e+00 : f32
    %103 = vector.broadcast %cst_23 : f32 to vector<1x14xf32>
    %104 = vector.extract_strided_slice %1 {offsets = [0, 0], sizes = [1, 242], strides = [1, 1]} : vector<1x256xf32> to vector<1x242xf32>
    %105 = tpu.concatenate %103, %104 in 1 : vector<1x14xf32>, vector<1x242xf32> -> vector<1x256xf32>
    %c9 = arith.constant 9 : index
    %c0_24 = arith.constant 0 : index
    %106 = vector.load %arg18[%c9, %c0_24] : memref<25x256xbf16, #tpu.memory_space<vmem>>, vector<1x256xbf16>
    %107 = arith.extf %106 : vector<1x256xbf16> to vector<1x256xf32>
    %108 = arith.mulf %105, %107 : vector<1x256xf32>
    %109 = vector.extract_strided_slice %2 {offsets = [0, 9], sizes = [8, 1], strides = [1, 1]} : vector<8x25xf32> to vector<8x1xf32>
    %110 = vector.broadcast %109 : vector<8x1xf32> to vector<8x256xf32>
    %111 = vector.broadcast %108 : vector<1x256xf32> to vector<8x256xf32>
    %112 = arith.mulf %110, %111 : vector<8x256xf32>
    %113 = arith.addf %102, %112 : vector<8x256xf32>
    %cst_25 = arith.constant 0.000000e+00 : f32
    %114 = vector.broadcast %cst_25 : f32 to vector<1x2xf32>
    %115 = vector.extract_strided_slice %1 {offsets = [0, 0], sizes = [1, 254], strides = [1, 1]} : vector<1x256xf32> to vector<1x254xf32>
    %116 = tpu.concatenate %114, %115 in 1 : vector<1x2xf32>, vector<1x254xf32> -> vector<1x256xf32>
    %c10 = arith.constant 10 : index
    %c0_26 = arith.constant 0 : index
    %117 = vector.load %arg18[%c10, %c0_26] : memref<25x256xbf16, #tpu.memory_space<vmem>>, vector<1x256xbf16>
    %118 = arith.extf %117 : vector<1x256xbf16> to vector<1x256xf32>
    %119 = arith.mulf %116, %118 : vector<1x256xf32>
    %120 = vector.extract_strided_slice %2 {offsets = [0, 10], sizes = [8, 1], strides = [1, 1]} : vector<8x25xf32> to vector<8x1xf32>
    %121 = vector.broadcast %120 : vector<8x1xf32> to vector<8x256xf32>
    %122 = vector.broadcast %119 : vector<1x256xf32> to vector<8x256xf32>
    %123 = arith.mulf %121, %122 : vector<8x256xf32>
    %124 = arith.addf %113, %123 : vector<8x256xf32>
    %cst_27 = arith.constant 0.000000e+00 : f32
    %125 = vector.broadcast %cst_27 : f32 to vector<1x1xf32>
    %126 = vector.extract_strided_slice %1 {offsets = [0, 0], sizes = [1, 255], strides = [1, 1]} : vector<1x256xf32> to vector<1x255xf32>
    %127 = tpu.concatenate %125, %126 in 1 : vector<1x1xf32>, vector<1x255xf32> -> vector<1x256xf32>
    %c11 = arith.constant 11 : index
    %c0_28 = arith.constant 0 : index
    %128 = vector.load %arg18[%c11, %c0_28] : memref<25x256xbf16, #tpu.memory_space<vmem>>, vector<1x256xbf16>
    %129 = arith.extf %128 : vector<1x256xbf16> to vector<1x256xf32>
    %130 = arith.mulf %127, %129 : vector<1x256xf32>
    %131 = vector.extract_strided_slice %2 {offsets = [0, 11], sizes = [8, 1], strides = [1, 1]} : vector<8x25xf32> to vector<8x1xf32>
    %132 = vector.broadcast %131 : vector<8x1xf32> to vector<8x256xf32>
    %133 = vector.broadcast %130 : vector<1x256xf32> to vector<8x256xf32>
    %134 = arith.mulf %132, %133 : vector<8x256xf32>
    %135 = arith.addf %124, %134 : vector<8x256xf32>
    %c12 = arith.constant 12 : index
    %c0_29 = arith.constant 0 : index
    %136 = vector.load %arg18[%c12, %c0_29] : memref<25x256xbf16, #tpu.memory_space<vmem>>, vector<1x256xbf16>
    %137 = arith.extf %136 : vector<1x256xbf16> to vector<1x256xf32>
    %138 = arith.mulf %1, %137 : vector<1x256xf32>
    %139 = vector.extract_strided_slice %2 {offsets = [0, 12], sizes = [8, 1], strides = [1, 1]} : vector<8x25xf32> to vector<8x1xf32>
    %140 = vector.broadcast %139 : vector<8x1xf32> to vector<8x256xf32>
    %141 = vector.broadcast %138 : vector<1x256xf32> to vector<8x256xf32>
    %142 = arith.mulf %140, %141 : vector<8x256xf32>
    %143 = arith.addf %135, %142 : vector<8x256xf32>
    %cst_30 = arith.constant 0.000000e+00 : f32
    %144 = vector.broadcast %cst_30 : f32 to vector<1x1xf32>
    %145 = vector.extract_strided_slice %1 {offsets = [0, 1], sizes = [1, 255], strides = [1, 1]} : vector<1x256xf32> to vector<1x255xf32>
    %146 = tpu.concatenate %145, %144 in 1 : vector<1x255xf32>, vector<1x1xf32> -> vector<1x256xf32>
    %c13 = arith.constant 13 : index
    %c0_31 = arith.constant 0 : index
    %147 = vector.load %arg18[%c13, %c0_31] : memref<25x256xbf16, #tpu.memory_space<vmem>>, vector<1x256xbf16>
    %148 = arith.extf %147 : vector<1x256xbf16> to vector<1x256xf32>
    %149 = arith.mulf %146, %148 : vector<1x256xf32>
    %150 = vector.extract_strided_slice %2 {offsets = [0, 13], sizes = [8, 1], strides = [1, 1]} : vector<8x25xf32> to vector<8x1xf32>
    %151 = vector.broadcast %150 : vector<8x1xf32> to vector<8x256xf32>
    %152 = vector.broadcast %149 : vector<1x256xf32> to vector<8x256xf32>
    %153 = arith.mulf %151, %152 : vector<8x256xf32>
    %154 = arith.addf %143, %153 : vector<8x256xf32>
    %cst_32 = arith.constant 0.000000e+00 : f32
    %155 = vector.broadcast %cst_32 : f32 to vector<1x2xf32>
    %156 = vector.extract_strided_slice %1 {offsets = [0, 2], sizes = [1, 254], strides = [1, 1]} : vector<1x256xf32> to vector<1x254xf32>
    %157 = tpu.concatenate %156, %155 in 1 : vector<1x254xf32>, vector<1x2xf32> -> vector<1x256xf32>
    %c14 = arith.constant 14 : index
    %c0_33 = arith.constant 0 : index
    %158 = vector.load %arg18[%c14, %c0_33] : memref<25x256xbf16, #tpu.memory_space<vmem>>, vector<1x256xbf16>
    %159 = arith.extf %158 : vector<1x256xbf16> to vector<1x256xf32>
    %160 = arith.mulf %157, %159 : vector<1x256xf32>
    %161 = vector.extract_strided_slice %2 {offsets = [0, 14], sizes = [8, 1], strides = [1, 1]} : vector<8x25xf32> to vector<8x1xf32>
    %162 = vector.broadcast %161 : vector<8x1xf32> to vector<8x256xf32>
    %163 = vector.broadcast %160 : vector<1x256xf32> to vector<8x256xf32>
    %164 = arith.mulf %162, %163 : vector<8x256xf32>
    %165 = arith.addf %154, %164 : vector<8x256xf32>
    %cst_34 = arith.constant 0.000000e+00 : f32
    %166 = vector.broadcast %cst_34 : f32 to vector<1x14xf32>
    %167 = vector.extract_strided_slice %1 {offsets = [0, 14], sizes = [1, 242], strides = [1, 1]} : vector<1x256xf32> to vector<1x242xf32>
    %168 = tpu.concatenate %167, %166 in 1 : vector<1x242xf32>, vector<1x14xf32> -> vector<1x256xf32>
    %c15 = arith.constant 15 : index
    %c0_35 = arith.constant 0 : index
    %169 = vector.load %arg18[%c15, %c0_35] : memref<25x256xbf16, #tpu.memory_space<vmem>>, vector<1x256xbf16>
    %170 = arith.extf %169 : vector<1x256xbf16> to vector<1x256xf32>
    %171 = arith.mulf %168, %170 : vector<1x256xf32>
    %172 = vector.extract_strided_slice %2 {offsets = [0, 15], sizes = [8, 1], strides = [1, 1]} : vector<8x25xf32> to vector<8x1xf32>
    %173 = vector.broadcast %172 : vector<8x1xf32> to vector<8x256xf32>
    %174 = vector.broadcast %171 : vector<1x256xf32> to vector<8x256xf32>
    %175 = arith.mulf %173, %174 : vector<8x256xf32>
    %176 = arith.addf %165, %175 : vector<8x256xf32>
    %cst_36 = arith.constant 0.000000e+00 : f32
    %177 = vector.broadcast %cst_36 : f32 to vector<1x15xf32>
    %178 = vector.extract_strided_slice %1 {offsets = [0, 15], sizes = [1, 241], strides = [1, 1]} : vector<1x256xf32> to vector<1x241xf32>
    %179 = tpu.concatenate %178, %177 in 1 : vector<1x241xf32>, vector<1x15xf32> -> vector<1x256xf32>
    %c16 = arith.constant 16 : index
    %c0_37 = arith.constant 0 : index
    %180 = vector.load %arg18[%c16, %c0_37] : memref<25x256xbf16, #tpu.memory_space<vmem>>, vector<1x256xbf16>
    %181 = arith.extf %180 : vector<1x256xbf16> to vector<1x256xf32>
    %182 = arith.mulf %179, %181 : vector<1x256xf32>
    %183 = vector.extract_strided_slice %2 {offsets = [0, 16], sizes = [8, 1], strides = [1, 1]} : vector<8x25xf32> to vector<8x1xf32>
    %184 = vector.broadcast %183 : vector<8x1xf32> to vector<8x256xf32>
    %185 = vector.broadcast %182 : vector<1x256xf32> to vector<8x256xf32>
    %186 = arith.mulf %184, %185 : vector<8x256xf32>
    %187 = arith.addf %176, %186 : vector<8x256xf32>
    %cst_38 = arith.constant 0.000000e+00 : f32
    %188 = vector.broadcast %cst_38 : f32 to vector<1x16xf32>
    %189 = vector.extract_strided_slice %1 {offsets = [0, 16], sizes = [1, 240], strides = [1, 1]} : vector<1x256xf32> to vector<1x240xf32>
    %190 = tpu.concatenate %189, %188 in 1 : vector<1x240xf32>, vector<1x16xf32> -> vector<1x256xf32>
    %c17 = arith.constant 17 : index
    %c0_39 = arith.constant 0 : index
    %191 = vector.load %arg18[%c17, %c0_39] : memref<25x256xbf16, #tpu.memory_space<vmem>>, vector<1x256xbf16>
    %192 = arith.extf %191 : vector<1x256xbf16> to vector<1x256xf32>
    %193 = arith.mulf %190, %192 : vector<1x256xf32>
    %194 = vector.extract_strided_slice %2 {offsets = [0, 17], sizes = [8, 1], strides = [1, 1]} : vector<8x25xf32> to vector<8x1xf32>
    %195 = vector.broadcast %194 : vector<8x1xf32> to vector<8x256xf32>
    %196 = vector.broadcast %193 : vector<1x256xf32> to vector<8x256xf32>
    %197 = arith.mulf %195, %196 : vector<8x256xf32>
    %198 = arith.addf %187, %197 : vector<8x256xf32>
    %cst_40 = arith.constant 0.000000e+00 : f32
    %199 = vector.broadcast %cst_40 : f32 to vector<1x17xf32>
    %200 = vector.extract_strided_slice %1 {offsets = [0, 17], sizes = [1, 239], strides = [1, 1]} : vector<1x256xf32> to vector<1x239xf32>
    %201 = tpu.concatenate %200, %199 in 1 : vector<1x239xf32>, vector<1x17xf32> -> vector<1x256xf32>
    %c18 = arith.constant 18 : index
    %c0_41 = arith.constant 0 : index
    %202 = vector.load %arg18[%c18, %c0_41] : memref<25x256xbf16, #tpu.memory_space<vmem>>, vector<1x256xbf16>
    %203 = arith.extf %202 : vector<1x256xbf16> to vector<1x256xf32>
    %204 = arith.mulf %201, %203 : vector<1x256xf32>
    %205 = vector.extract_strided_slice %2 {offsets = [0, 18], sizes = [8, 1], strides = [1, 1]} : vector<8x25xf32> to vector<8x1xf32>
    %206 = vector.broadcast %205 : vector<8x1xf32> to vector<8x256xf32>
    %207 = vector.broadcast %204 : vector<1x256xf32> to vector<8x256xf32>
    %208 = arith.mulf %206, %207 : vector<8x256xf32>
    %209 = arith.addf %198, %208 : vector<8x256xf32>
    %cst_42 = arith.constant 0.000000e+00 : f32
    %210 = vector.broadcast %cst_42 : f32 to vector<1x18xf32>
    %211 = vector.extract_strided_slice %1 {offsets = [0, 18], sizes = [1, 238], strides = [1, 1]} : vector<1x256xf32> to vector<1x238xf32>
    %212 = tpu.concatenate %211, %210 in 1 : vector<1x238xf32>, vector<1x18xf32> -> vector<1x256xf32>
    %c19 = arith.constant 19 : index
    %c0_43 = arith.constant 0 : index
    %213 = vector.load %arg18[%c19, %c0_43] : memref<25x256xbf16, #tpu.memory_space<vmem>>, vector<1x256xbf16>
    %214 = arith.extf %213 : vector<1x256xbf16> to vector<1x256xf32>
    %215 = arith.mulf %212, %214 : vector<1x256xf32>
    %216 = vector.extract_strided_slice %2 {offsets = [0, 19], sizes = [8, 1], strides = [1, 1]} : vector<8x25xf32> to vector<8x1xf32>
    %217 = vector.broadcast %216 : vector<8x1xf32> to vector<8x256xf32>
    %218 = vector.broadcast %215 : vector<1x256xf32> to vector<8x256xf32>
    %219 = arith.mulf %217, %218 : vector<8x256xf32>
    %220 = arith.addf %209, %219 : vector<8x256xf32>
    %cst_44 = arith.constant 0.000000e+00 : f32
    %221 = vector.broadcast %cst_44 : f32 to vector<1x30xf32>
    %222 = vector.extract_strided_slice %1 {offsets = [0, 30], sizes = [1, 226], strides = [1, 1]} : vector<1x256xf32> to vector<1x226xf32>
    %223 = tpu.concatenate %222, %221 in 1 : vector<1x226xf32>, vector<1x30xf32> -> vector<1x256xf32>
    %c20 = arith.constant 20 : index
    %c0_45 = arith.constant 0 : index
    %224 = vector.load %arg18[%c20, %c0_45] : memref<25x256xbf16, #tpu.memory_space<vmem>>, vector<1x256xbf16>
    %225 = arith.extf %224 : vector<1x256xbf16> to vector<1x256xf32>
    %226 = arith.mulf %223, %225 : vector<1x256xf32>
    %227 = vector.extract_strided_slice %2 {offsets = [0, 20], sizes = [8, 1], strides = [1, 1]} : vector<8x25xf32> to vector<8x1xf32>
    %228 = vector.broadcast %227 : vector<8x1xf32> to vector<8x256xf32>
    %229 = vector.broadcast %226 : vector<1x256xf32> to vector<8x256xf32>
    %230 = arith.mulf %228, %229 : vector<8x256xf32>
    %231 = arith.addf %220, %230 : vector<8x256xf32>
    %cst_46 = arith.constant 0.000000e+00 : f32
    %232 = vector.broadcast %cst_46 : f32 to vector<1x31xf32>
    %233 = vector.extract_strided_slice %1 {offsets = [0, 31], sizes = [1, 225], strides = [1, 1]} : vector<1x256xf32> to vector<1x225xf32>
    %234 = tpu.concatenate %233, %232 in 1 : vector<1x225xf32>, vector<1x31xf32> -> vector<1x256xf32>
    %c21 = arith.constant 21 : index
    %c0_47 = arith.constant 0 : index
    %235 = vector.load %arg18[%c21, %c0_47] : memref<25x256xbf16, #tpu.memory_space<vmem>>, vector<1x256xbf16>
    %236 = arith.extf %235 : vector<1x256xbf16> to vector<1x256xf32>
    %237 = arith.mulf %234, %236 : vector<1x256xf32>
    %238 = vector.extract_strided_slice %2 {offsets = [0, 21], sizes = [8, 1], strides = [1, 1]} : vector<8x25xf32> to vector<8x1xf32>
    %239 = vector.broadcast %238 : vector<8x1xf32> to vector<8x256xf32>
    %240 = vector.broadcast %237 : vector<1x256xf32> to vector<8x256xf32>
    %241 = arith.mulf %239, %240 : vector<8x256xf32>
    %242 = arith.addf %231, %241 : vector<8x256xf32>
    %cst_48 = arith.constant 0.000000e+00 : f32
    %243 = vector.broadcast %cst_48 : f32 to vector<1x32xf32>
    %244 = vector.extract_strided_slice %1 {offsets = [0, 32], sizes = [1, 224], strides = [1, 1]} : vector<1x256xf32> to vector<1x224xf32>
    %245 = tpu.concatenate %244, %243 in 1 : vector<1x224xf32>, vector<1x32xf32> -> vector<1x256xf32>
    %c22 = arith.constant 22 : index
    %c0_49 = arith.constant 0 : index
    %246 = vector.load %arg18[%c22, %c0_49] : memref<25x256xbf16, #tpu.memory_space<vmem>>, vector<1x256xbf16>
    %247 = arith.extf %246 : vector<1x256xbf16> to vector<1x256xf32>
    %248 = arith.mulf %245, %247 : vector<1x256xf32>
    %249 = vector.extract_strided_slice %2 {offsets = [0, 22], sizes = [8, 1], strides = [1, 1]} : vector<8x25xf32> to vector<8x1xf32>
    %250 = vector.broadcast %249 : vector<8x1xf32> to vector<8x256xf32>
    %251 = vector.broadcast %248 : vector<1x256xf32> to vector<8x256xf32>
    %252 = arith.mulf %250, %251 : vector<8x256xf32>
    %253 = arith.addf %242, %252 : vector<8x256xf32>
    %cst_50 = arith.constant 0.000000e+00 : f32
    %254 = vector.broadcast %cst_50 : f32 to vector<1x33xf32>
    %255 = vector.extract_strided_slice %1 {offsets = [0, 33], sizes = [1, 223], strides = [1, 1]} : vector<1x256xf32> to vector<1x223xf32>
    %256 = tpu.concatenate %255, %254 in 1 : vector<1x223xf32>, vector<1x33xf32> -> vector<1x256xf32>
    %c23 = arith.constant 23 : index
    %c0_51 = arith.constant 0 : index
    %257 = vector.load %arg18[%c23, %c0_51] : memref<25x256xbf16, #tpu.memory_space<vmem>>, vector<1x256xbf16>
    %258 = arith.extf %257 : vector<1x256xbf16> to vector<1x256xf32>
    %259 = arith.mulf %256, %258 : vector<1x256xf32>
    %260 = vector.extract_strided_slice %2 {offsets = [0, 23], sizes = [8, 1], strides = [1, 1]} : vector<8x25xf32> to vector<8x1xf32>
    %261 = vector.broadcast %260 : vector<8x1xf32> to vector<8x256xf32>
    %262 = vector.broadcast %259 : vector<1x256xf32> to vector<8x256xf32>
    %263 = arith.mulf %261, %262 : vector<8x256xf32>
    %264 = arith.addf %253, %263 : vector<8x256xf32>
    %cst_52 = arith.constant 0.000000e+00 : f32
    %265 = vector.broadcast %cst_52 : f32 to vector<1x34xf32>
    %266 = vector.extract_strided_slice %1 {offsets = [0, 34], sizes = [1, 222], strides = [1, 1]} : vector<1x256xf32> to vector<1x222xf32>
    %267 = tpu.concatenate %266, %265 in 1 : vector<1x222xf32>, vector<1x34xf32> -> vector<1x256xf32>
    %c24 = arith.constant 24 : index
    %c0_53 = arith.constant 0 : index
    %268 = vector.load %arg18[%c24, %c0_53] : memref<25x256xbf16, #tpu.memory_space<vmem>>, vector<1x256xbf16>
    %269 = arith.extf %268 : vector<1x256xbf16> to vector<1x256xf32>
    %270 = arith.mulf %267, %269 : vector<1x256xf32>
    %271 = vector.extract_strided_slice %2 {offsets = [0, 24], sizes = [8, 1], strides = [1, 1]} : vector<8x25xf32> to vector<8x1xf32>
    %272 = vector.broadcast %271 : vector<8x1xf32> to vector<8x256xf32>
    %273 = vector.broadcast %270 : vector<1x256xf32> to vector<8x256xf32>
    %274 = arith.mulf %272, %273 : vector<8x256xf32>
    %275 = arith.addf %264, %274 : vector<8x256xf32>
    %c0_54 = arith.constant 0 : index
    %c0_55 = arith.constant 0 : index
    %276 = vector.load %arg10[%c0_54, %c0_55] : memref<8x1xf32, #tpu.memory_space<vmem>>, vector<8x1xf32>
    %277 = vector.broadcast %276 : vector<8x1xf32> to vector<8x256xf32>
    %278 = arith.addf %275, %277 : vector<8x256xf32>
    %cst_56 = arith.constant 0.000000e+00 : f32
    %279 = vector.broadcast %cst_56 : f32 to vector<8x34xf32>
    %280 = vector.extract_strided_slice %278 {offsets = [0, 0], sizes = [8, 222], strides = [1, 1]} : vector<8x256xf32> to vector<8x222xf32>
    %281 = tpu.concatenate %279, %280 in 1 : vector<8x34xf32>, vector<8x222xf32> -> vector<8x256xf32>
    %282 = arith.truncf %281 : vector<8x256xf32> to vector<8x256xbf16>
    %c0_57 = arith.constant 0 : index
    %c0_58 = arith.constant 0 : index
    %283 = vector.load %arg18[%c0_57, %c0_58] : memref<25x256xbf16, #tpu.memory_space<vmem>>, vector<1x256xbf16>
    %284 = vector.broadcast %283 : vector<1x256xbf16> to vector<8x256xbf16>
    %285 = arith.mulf %282, %284 : vector<8x256xbf16>
    %cst_59 = arith.constant 0.000000e+00 : f32
    %286 = vector.broadcast %cst_59 : f32 to vector<8x33xf32>
    %287 = vector.extract_strided_slice %278 {offsets = [0, 0], sizes = [8, 223], strides = [1, 1]} : vector<8x256xf32> to vector<8x223xf32>
    %288 = tpu.concatenate %286, %287 in 1 : vector<8x33xf32>, vector<8x223xf32> -> vector<8x256xf32>
    %289 = arith.truncf %288 : vector<8x256xf32> to vector<8x256xbf16>
    %c1_60 = arith.constant 1 : index
    %c0_61 = arith.constant 0 : index
    %290 = vector.load %arg18[%c1_60, %c0_61] : memref<25x256xbf16, #tpu.memory_space<vmem>>, vector<1x256xbf16>
    %291 = vector.broadcast %290 : vector<1x256xbf16> to vector<8x256xbf16>
    %292 = arith.mulf %289, %291 : vector<8x256xbf16>
    %cst_62 = arith.constant 0.000000e+00 : f32
    %293 = vector.broadcast %cst_62 : f32 to vector<8x32xf32>
    %294 = vector.extract_strided_slice %278 {offsets = [0, 0], sizes = [8, 224], strides = [1, 1]} : vector<8x256xf32> to vector<8x224xf32>
    %295 = tpu.concatenate %293, %294 in 1 : vector<8x32xf32>, vector<8x224xf32> -> vector<8x256xf32>
    %296 = arith.truncf %295 : vector<8x256xf32> to vector<8x256xbf16>
    %c2_63 = arith.constant 2 : index
    %c0_64 = arith.constant 0 : index
    %297 = vector.load %arg18[%c2_63, %c0_64] : memref<25x256xbf16, #tpu.memory_space<vmem>>, vector<1x256xbf16>
    %298 = vector.broadcast %297 : vector<1x256xbf16> to vector<8x256xbf16>
    %299 = arith.mulf %296, %298 : vector<8x256xbf16>
    %cst_65 = arith.constant 0.000000e+00 : f32
    %300 = vector.broadcast %cst_65 : f32 to vector<8x31xf32>
    %301 = vector.extract_strided_slice %278 {offsets = [0, 0], sizes = [8, 225], strides = [1, 1]} : vector<8x256xf32> to vector<8x225xf32>
    %302 = tpu.concatenate %300, %301 in 1 : vector<8x31xf32>, vector<8x225xf32> -> vector<8x256xf32>
    %303 = arith.truncf %302 : vector<8x256xf32> to vector<8x256xbf16>
    %c3_66 = arith.constant 3 : index
    %c0_67 = arith.constant 0 : index
    %304 = vector.load %arg18[%c3_66, %c0_67] : memref<25x256xbf16, #tpu.memory_space<vmem>>, vector<1x256xbf16>
    %305 = vector.broadcast %304 : vector<1x256xbf16> to vector<8x256xbf16>
    %306 = arith.mulf %303, %305 : vector<8x256xbf16>
    %cst_68 = arith.constant 0.000000e+00 : f32
    %307 = vector.broadcast %cst_68 : f32 to vector<8x30xf32>
    %308 = vector.extract_strided_slice %278 {offsets = [0, 0], sizes = [8, 226], strides = [1, 1]} : vector<8x256xf32> to vector<8x226xf32>
    %309 = tpu.concatenate %307, %308 in 1 : vector<8x30xf32>, vector<8x226xf32> -> vector<8x256xf32>
    %310 = arith.truncf %309 : vector<8x256xf32> to vector<8x256xbf16>
    %c4_69 = arith.constant 4 : index
    %c0_70 = arith.constant 0 : index
    %311 = vector.load %arg18[%c4_69, %c0_70] : memref<25x256xbf16, #tpu.memory_space<vmem>>, vector<1x256xbf16>
    %312 = vector.broadcast %311 : vector<1x256xbf16> to vector<8x256xbf16>
    %313 = arith.mulf %310, %312 : vector<8x256xbf16>
    %cst_71 = arith.constant 0.000000e+00 : f32
    %314 = vector.broadcast %cst_71 : f32 to vector<8x18xf32>
    %315 = vector.extract_strided_slice %278 {offsets = [0, 0], sizes = [8, 238], strides = [1, 1]} : vector<8x256xf32> to vector<8x238xf32>
    %316 = tpu.concatenate %314, %315 in 1 : vector<8x18xf32>, vector<8x238xf32> -> vector<8x256xf32>
    %317 = arith.truncf %316 : vector<8x256xf32> to vector<8x256xbf16>
    %c5_72 = arith.constant 5 : index
    %c0_73 = arith.constant 0 : index
    %318 = vector.load %arg18[%c5_72, %c0_73] : memref<25x256xbf16, #tpu.memory_space<vmem>>, vector<1x256xbf16>
    %319 = vector.broadcast %318 : vector<1x256xbf16> to vector<8x256xbf16>
    %320 = arith.mulf %317, %319 : vector<8x256xbf16>
    %cst_74 = arith.constant 0.000000e+00 : f32
    %321 = vector.broadcast %cst_74 : f32 to vector<8x17xf32>
    %322 = vector.extract_strided_slice %278 {offsets = [0, 0], sizes = [8, 239], strides = [1, 1]} : vector<8x256xf32> to vector<8x239xf32>
    %323 = tpu.concatenate %321, %322 in 1 : vector<8x17xf32>, vector<8x239xf32> -> vector<8x256xf32>
    %324 = arith.truncf %323 : vector<8x256xf32> to vector<8x256xbf16>
    %c6_75 = arith.constant 6 : index
    %c0_76 = arith.constant 0 : index
    %325 = vector.load %arg18[%c6_75, %c0_76] : memref<25x256xbf16, #tpu.memory_space<vmem>>, vector<1x256xbf16>
    %326 = vector.broadcast %325 : vector<1x256xbf16> to vector<8x256xbf16>
    %327 = arith.mulf %324, %326 : vector<8x256xbf16>
    %cst_77 = arith.constant 0.000000e+00 : f32
    %328 = vector.broadcast %cst_77 : f32 to vector<8x16xf32>
    %329 = vector.extract_strided_slice %278 {offsets = [0, 0], sizes = [8, 240], strides = [1, 1]} : vector<8x256xf32> to vector<8x240xf32>
    %330 = tpu.concatenate %328, %329 in 1 : vector<8x16xf32>, vector<8x240xf32> -> vector<8x256xf32>
    %331 = arith.truncf %330 : vector<8x256xf32> to vector<8x256xbf16>
    %c7_78 = arith.constant 7 : index
    %c0_79 = arith.constant 0 : index
    %332 = vector.load %arg18[%c7_78, %c0_79] : memref<25x256xbf16, #tpu.memory_space<vmem>>, vector<1x256xbf16>
    %333 = vector.broadcast %332 : vector<1x256xbf16> to vector<8x256xbf16>
    %334 = arith.mulf %331, %333 : vector<8x256xbf16>
    %cst_80 = arith.constant 0.000000e+00 : f32
    %335 = vector.broadcast %cst_80 : f32 to vector<8x15xf32>
    %336 = vector.extract_strided_slice %278 {offsets = [0, 0], sizes = [8, 241], strides = [1, 1]} : vector<8x256xf32> to vector<8x241xf32>
    %337 = tpu.concatenate %335, %336 in 1 : vector<8x15xf32>, vector<8x241xf32> -> vector<8x256xf32>
    %338 = arith.truncf %337 : vector<8x256xf32> to vector<8x256xbf16>
    %c8_81 = arith.constant 8 : index
    %c0_82 = arith.constant 0 : index
    %339 = vector.load %arg18[%c8_81, %c0_82] : memref<25x256xbf16, #tpu.memory_space<vmem>>, vector<1x256xbf16>
    %340 = vector.broadcast %339 : vector<1x256xbf16> to vector<8x256xbf16>
    %341 = arith.mulf %338, %340 : vector<8x256xbf16>
    %cst_83 = arith.constant 0.000000e+00 : f32
    %342 = vector.broadcast %cst_83 : f32 to vector<8x14xf32>
    %343 = vector.extract_strided_slice %278 {offsets = [0, 0], sizes = [8, 242], strides = [1, 1]} : vector<8x256xf32> to vector<8x242xf32>
    %344 = tpu.concatenate %342, %343 in 1 : vector<8x14xf32>, vector<8x242xf32> -> vector<8x256xf32>
    %345 = arith.truncf %344 : vector<8x256xf32> to vector<8x256xbf16>
    %c9_84 = arith.constant 9 : index
    %c0_85 = arith.constant 0 : index
    %346 = vector.load %arg18[%c9_84, %c0_85] : memref<25x256xbf16, #tpu.memory_space<vmem>>, vector<1x256xbf16>
    %347 = vector.broadcast %346 : vector<1x256xbf16> to vector<8x256xbf16>
    %348 = arith.mulf %345, %347 : vector<8x256xbf16>
    %cst_86 = arith.constant 0.000000e+00 : f32
    %349 = vector.broadcast %cst_86 : f32 to vector<8x2xf32>
    %350 = vector.extract_strided_slice %278 {offsets = [0, 0], sizes = [8, 254], strides = [1, 1]} : vector<8x256xf32> to vector<8x254xf32>
    %351 = tpu.concatenate %349, %350 in 1 : vector<8x2xf32>, vector<8x254xf32> -> vector<8x256xf32>
    %352 = arith.truncf %351 : vector<8x256xf32> to vector<8x256xbf16>
    %c10_87 = arith.constant 10 : index
    %c0_88 = arith.constant 0 : index
    %353 = vector.load %arg18[%c10_87, %c0_88] : memref<25x256xbf16, #tpu.memory_space<vmem>>, vector<1x256xbf16>
    %354 = vector.broadcast %353 : vector<1x256xbf16> to vector<8x256xbf16>
    %355 = arith.mulf %352, %354 : vector<8x256xbf16>
    %cst_89 = arith.constant 0.000000e+00 : f32
    %356 = vector.broadcast %cst_89 : f32 to vector<8x1xf32>
    %357 = vector.extract_strided_slice %278 {offsets = [0, 0], sizes = [8, 255], strides = [1, 1]} : vector<8x256xf32> to vector<8x255xf32>
    %358 = tpu.concatenate %356, %357 in 1 : vector<8x1xf32>, vector<8x255xf32> -> vector<8x256xf32>
    %359 = arith.truncf %358 : vector<8x256xf32> to vector<8x256xbf16>
    %c11_90 = arith.constant 11 : index
    %c0_91 = arith.constant 0 : index
    %360 = vector.load %arg18[%c11_90, %c0_91] : memref<25x256xbf16, #tpu.memory_space<vmem>>, vector<1x256xbf16>
    %361 = vector.broadcast %360 : vector<1x256xbf16> to vector<8x256xbf16>
    %362 = arith.mulf %359, %361 : vector<8x256xbf16>
    %363 = arith.truncf %278 : vector<8x256xf32> to vector<8x256xbf16>
    %c12_92 = arith.constant 12 : index
    %c0_93 = arith.constant 0 : index
    %364 = vector.load %arg18[%c12_92, %c0_93] : memref<25x256xbf16, #tpu.memory_space<vmem>>, vector<1x256xbf16>
    %365 = vector.broadcast %364 : vector<1x256xbf16> to vector<8x256xbf16>
    %366 = arith.mulf %363, %365 : vector<8x256xbf16>
    %cst_94 = arith.constant 0.000000e+00 : f32
    %367 = vector.broadcast %cst_94 : f32 to vector<8x1xf32>
    %368 = vector.extract_strided_slice %278 {offsets = [0, 1], sizes = [8, 255], strides = [1, 1]} : vector<8x256xf32> to vector<8x255xf32>
    %369 = tpu.concatenate %368, %367 in 1 : vector<8x255xf32>, vector<8x1xf32> -> vector<8x256xf32>
    %370 = arith.truncf %369 : vector<8x256xf32> to vector<8x256xbf16>
    %c13_95 = arith.constant 13 : index
    %c0_96 = arith.constant 0 : index
    %371 = vector.load %arg18[%c13_95, %c0_96] : memref<25x256xbf16, #tpu.memory_space<vmem>>, vector<1x256xbf16>
    %372 = vector.broadcast %371 : vector<1x256xbf16> to vector<8x256xbf16>
    %373 = arith.mulf %370, %372 : vector<8x256xbf16>
    %cst_97 = arith.constant 0.000000e+00 : f32
    %374 = vector.broadcast %cst_97 : f32 to vector<8x2xf32>
    %375 = vector.extract_strided_slice %278 {offsets = [0, 2], sizes = [8, 254], strides = [1, 1]} : vector<8x256xf32> to vector<8x254xf32>
    %376 = tpu.concatenate %375, %374 in 1 : vector<8x254xf32>, vector<8x2xf32> -> vector<8x256xf32>
    %377 = arith.truncf %376 : vector<8x256xf32> to vector<8x256xbf16>
    %c14_98 = arith.constant 14 : index
    %c0_99 = arith.constant 0 : index
    %378 = vector.load %arg18[%c14_98, %c0_99] : memref<25x256xbf16, #tpu.memory_space<vmem>>, vector<1x256xbf16>
    %379 = vector.broadcast %378 : vector<1x256xbf16> to vector<8x256xbf16>
    %380 = arith.mulf %377, %379 : vector<8x256xbf16>
    %cst_100 = arith.constant 0.000000e+00 : f32
    %381 = vector.broadcast %cst_100 : f32 to vector<8x14xf32>
    %382 = vector.extract_strided_slice %278 {offsets = [0, 14], sizes = [8, 242], strides = [1, 1]} : vector<8x256xf32> to vector<8x242xf32>
    %383 = tpu.concatenate %382, %381 in 1 : vector<8x242xf32>, vector<8x14xf32> -> vector<8x256xf32>
    %384 = arith.truncf %383 : vector<8x256xf32> to vector<8x256xbf16>
    %c15_101 = arith.constant 15 : index
    %c0_102 = arith.constant 0 : index
    %385 = vector.load %arg18[%c15_101, %c0_102] : memref<25x256xbf16, #tpu.memory_space<vmem>>, vector<1x256xbf16>
    %386 = vector.broadcast %385 : vector<1x256xbf16> to vector<8x256xbf16>
    %387 = arith.mulf %384, %386 : vector<8x256xbf16>
    %cst_103 = arith.constant 0.000000e+00 : f32
    %388 = vector.broadcast %cst_103 : f32 to vector<8x15xf32>
    %389 = vector.extract_strided_slice %278 {offsets = [0, 15], sizes = [8, 241], strides = [1, 1]} : vector<8x256xf32> to vector<8x241xf32>
    %390 = tpu.concatenate %389, %388 in 1 : vector<8x241xf32>, vector<8x15xf32> -> vector<8x256xf32>
    %391 = arith.truncf %390 : vector<8x256xf32> to vector<8x256xbf16>
    %c16_104 = arith.constant 16 : index
    %c0_105 = arith.constant 0 : index
    %392 = vector.load %arg18[%c16_104, %c0_105] : memref<25x256xbf16, #tpu.memory_space<vmem>>, vector<1x256xbf16>
    %393 = vector.broadcast %392 : vector<1x256xbf16> to vector<8x256xbf16>
    %394 = arith.mulf %391, %393 : vector<8x256xbf16>
    %cst_106 = arith.constant 0.000000e+00 : f32
    %395 = vector.broadcast %cst_106 : f32 to vector<8x16xf32>
    %396 = vector.extract_strided_slice %278 {offsets = [0, 16], sizes = [8, 240], strides = [1, 1]} : vector<8x256xf32> to vector<8x240xf32>
    %397 = tpu.concatenate %396, %395 in 1 : vector<8x240xf32>, vector<8x16xf32> -> vector<8x256xf32>
    %398 = arith.truncf %397 : vector<8x256xf32> to vector<8x256xbf16>
    %c17_107 = arith.constant 17 : index
    %c0_108 = arith.constant 0 : index
    %399 = vector.load %arg18[%c17_107, %c0_108] : memref<25x256xbf16, #tpu.memory_space<vmem>>, vector<1x256xbf16>
    %400 = vector.broadcast %399 : vector<1x256xbf16> to vector<8x256xbf16>
    %401 = arith.mulf %398, %400 : vector<8x256xbf16>
    %cst_109 = arith.constant 0.000000e+00 : f32
    %402 = vector.broadcast %cst_109 : f32 to vector<8x17xf32>
    %403 = vector.extract_strided_slice %278 {offsets = [0, 17], sizes = [8, 239], strides = [1, 1]} : vector<8x256xf32> to vector<8x239xf32>
    %404 = tpu.concatenate %403, %402 in 1 : vector<8x239xf32>, vector<8x17xf32> -> vector<8x256xf32>
    %405 = arith.truncf %404 : vector<8x256xf32> to vector<8x256xbf16>
    %c18_110 = arith.constant 18 : index
    %c0_111 = arith.constant 0 : index
    %406 = vector.load %arg18[%c18_110, %c0_111] : memref<25x256xbf16, #tpu.memory_space<vmem>>, vector<1x256xbf16>
    %407 = vector.broadcast %406 : vector<1x256xbf16> to vector<8x256xbf16>
    %408 = arith.mulf %405, %407 : vector<8x256xbf16>
    %cst_112 = arith.constant 0.000000e+00 : f32
    %409 = vector.broadcast %cst_112 : f32 to vector<8x18xf32>
    %410 = vector.extract_strided_slice %278 {offsets = [0, 18], sizes = [8, 238], strides = [1, 1]} : vector<8x256xf32> to vector<8x238xf32>
    %411 = tpu.concatenate %410, %409 in 1 : vector<8x238xf32>, vector<8x18xf32> -> vector<8x256xf32>
    %412 = arith.truncf %411 : vector<8x256xf32> to vector<8x256xbf16>
    %c19_113 = arith.constant 19 : index
    %c0_114 = arith.constant 0 : index
    %413 = vector.load %arg18[%c19_113, %c0_114] : memref<25x256xbf16, #tpu.memory_space<vmem>>, vector<1x256xbf16>
    %414 = vector.broadcast %413 : vector<1x256xbf16> to vector<8x256xbf16>
    %415 = arith.mulf %412, %414 : vector<8x256xbf16>
    %cst_115 = arith.constant 0.000000e+00 : f32
    %416 = vector.broadcast %cst_115 : f32 to vector<8x30xf32>
    %417 = vector.extract_strided_slice %278 {offsets = [0, 30], sizes = [8, 226], strides = [1, 1]} : vector<8x256xf32> to vector<8x226xf32>
    %418 = tpu.concatenate %417, %416 in 1 : vector<8x226xf32>, vector<8x30xf32> -> vector<8x256xf32>
    %419 = arith.truncf %418 : vector<8x256xf32> to vector<8x256xbf16>
    %c20_116 = arith.constant 20 : index
    %c0_117 = arith.constant 0 : index
    %420 = vector.load %arg18[%c20_116, %c0_117] : memref<25x256xbf16, #tpu.memory_space<vmem>>, vector<1x256xbf16>
    %421 = vector.broadcast %420 : vector<1x256xbf16> to vector<8x256xbf16>
    %422 = arith.mulf %419, %421 : vector<8x256xbf16>
    %cst_118 = arith.constant 0.000000e+00 : f32
    %423 = vector.broadcast %cst_118 : f32 to vector<8x31xf32>
    %424 = vector.extract_strided_slice %278 {offsets = [0, 31], sizes = [8, 225], strides = [1, 1]} : vector<8x256xf32> to vector<8x225xf32>
    %425 = tpu.concatenate %424, %423 in 1 : vector<8x225xf32>, vector<8x31xf32> -> vector<8x256xf32>
    %426 = arith.truncf %425 : vector<8x256xf32> to vector<8x256xbf16>
    %c21_119 = arith.constant 21 : index
    %c0_120 = arith.constant 0 : index
    %427 = vector.load %arg18[%c21_119, %c0_120] : memref<25x256xbf16, #tpu.memory_space<vmem>>, vector<1x256xbf16>
    %428 = vector.broadcast %427 : vector<1x256xbf16> to vector<8x256xbf16>
    %429 = arith.mulf %426, %428 : vector<8x256xbf16>
    %cst_121 = arith.constant 0.000000e+00 : f32
    %430 = vector.broadcast %cst_121 : f32 to vector<8x32xf32>
    %431 = vector.extract_strided_slice %278 {offsets = [0, 32], sizes = [8, 224], strides = [1, 1]} : vector<8x256xf32> to vector<8x224xf32>
    %432 = tpu.concatenate %431, %430 in 1 : vector<8x224xf32>, vector<8x32xf32> -> vector<8x256xf32>
    %433 = arith.truncf %432 : vector<8x256xf32> to vector<8x256xbf16>
    %c22_122 = arith.constant 22 : index
    %c0_123 = arith.constant 0 : index
    %434 = vector.load %arg18[%c22_122, %c0_123] : memref<25x256xbf16, #tpu.memory_space<vmem>>, vector<1x256xbf16>
    %435 = vector.broadcast %434 : vector<1x256xbf16> to vector<8x256xbf16>
    %436 = arith.mulf %433, %435 : vector<8x256xbf16>
    %cst_124 = arith.constant 0.000000e+00 : f32
    %437 = vector.broadcast %cst_124 : f32 to vector<8x33xf32>
    %438 = vector.extract_strided_slice %278 {offsets = [0, 33], sizes = [8, 223], strides = [1, 1]} : vector<8x256xf32> to vector<8x223xf32>
    %439 = tpu.concatenate %438, %437 in 1 : vector<8x223xf32>, vector<8x33xf32> -> vector<8x256xf32>
    %440 = arith.truncf %439 : vector<8x256xf32> to vector<8x256xbf16>
    %c23_125 = arith.constant 23 : index
    %c0_126 = arith.constant 0 : index
    %441 = vector.load %arg18[%c23_125, %c0_126] : memref<25x256xbf16, #tpu.memory_space<vmem>>, vector<1x256xbf16>
    %442 = vector.broadcast %441 : vector<1x256xbf16> to vector<8x256xbf16>
    %443 = arith.mulf %440, %442 : vector<8x256xbf16>
    %cst_127 = arith.constant 0.000000e+00 : f32
    %444 = vector.broadcast %cst_127 : f32 to vector<8x34xf32>
    %445 = vector.extract_strided_slice %278 {offsets = [0, 34], sizes = [8, 222], strides = [1, 1]} : vector<8x256xf32> to vector<8x222xf32>
    %446 = tpu.concatenate %445, %444 in 1 : vector<8x222xf32>, vector<8x34xf32> -> vector<8x256xf32>
    %447 = arith.truncf %446 : vector<8x256xf32> to vector<8x256xbf16>
    %c24_128 = arith.constant 24 : index
    %c0_129 = arith.constant 0 : index
    %448 = vector.load %arg18[%c24_128, %c0_129] : memref<25x256xbf16, #tpu.memory_space<vmem>>, vector<1x256xbf16>
    %449 = vector.broadcast %448 : vector<1x256xbf16> to vector<8x256xbf16>
    %450 = arith.mulf %447, %449 : vector<8x256xbf16>
    %451 = tpu.concatenate %285, %292, %299, %306, %313, %320, %327, %334, %341, %348, %355, %362, %366, %373, %380, %387 in 0 : vector<8x256xbf16>, vector<8x256xbf16>, vector<8x256xbf16>, vector<8x256xbf16>, vector<8x256xbf16>, vector<8x256xbf16>, vector<8x256xbf16>, vector<8x256xbf16>, vector<8x256xbf16>, vector<8x256xbf16>, vector<8x256xbf16>, vector<8x256xbf16>, vector<8x256xbf16>, vector<8x256xbf16>, vector<8x256xbf16>, vector<8x256xbf16> -> vector<128x256xbf16>
    %452 = tpu.concatenate %394, %401, %408, %415, %422, %429, %436, %443, %450 in 0 : vector<8x256xbf16>, vector<8x256xbf16>, vector<8x256xbf16>, vector<8x256xbf16>, vector<8x256xbf16>, vector<8x256xbf16>, vector<8x256xbf16>, vector<8x256xbf16>, vector<8x256xbf16> -> vector<72x256xbf16>
    %453 = tpu.concatenate %451, %452 in 0 : vector<128x256xbf16>, vector<72x256xbf16> -> vector<200x256xbf16>
    %c0_130 = arith.constant 0 : index
    %c0_131 = arith.constant 0 : index
    %454 = vector.load %arg3[%c0_130, %c0_131] : memref<8x200xbf16, #tpu.memory_space<vmem>>, vector<8x200xbf16>
    %cst_132 = arith.constant dense<0.000000e+00> : vector<8x256xf32>
    %455 = tpu.matmul %454, %453, %cst_132 {dimension_numbers = #tpu.dot_dimension_numbers<[1], [0], [0], [1], [0, 0, 1, 1], [], []>} : vector<8x200xbf16>, vector<200x256xbf16>, vector<8x256xf32> -> vector<8x256xf32>
    %c0_133 = arith.constant 0 : index
    %c0_134 = arith.constant 0 : index
    %456 = vector.load %arg11[%c0_133, %c0_134] : memref<8x1xf32, #tpu.memory_space<vmem>>, vector<8x1xf32>
    %457 = vector.broadcast %456 : vector<8x1xf32> to vector<8x256xf32>
    %458 = arith.addf %455, %457 : vector<8x256xf32>
    %cst_135 = arith.constant 0.000000e+00 : f32
    %459 = vector.broadcast %cst_135 : f32 to vector<8x256xf32>
    %460 = arith.maximumf %458, %459 : vector<8x256xf32>
    %cst_136 = arith.constant 0.000000e+00 : f32
    %461 = vector.broadcast %cst_136 : f32 to vector<8x1xf32>
    %462 = vector.extract_strided_slice %460 {offsets = [0, 1], sizes = [8, 255], strides = [1, 1]} : vector<8x256xf32> to vector<8x255xf32>
    %463 = tpu.concatenate %462, %461 in 1 : vector<8x255xf32>, vector<8x1xf32> -> vector<8x256xf32>
    %464 = arith.maximumf %460, %463 : vector<8x256xf32>
    %cst_137 = arith.constant 0.000000e+00 : f32
    %465 = vector.broadcast %cst_137 : f32 to vector<8x16xf32>
    %466 = vector.extract_strided_slice %464 {offsets = [0, 16], sizes = [8, 240], strides = [1, 1]} : vector<8x256xf32> to vector<8x240xf32>
    %467 = tpu.concatenate %466, %465 in 1 : vector<8x240xf32>, vector<8x16xf32> -> vector<8x256xf32>
    %468 = arith.maximumf %464, %467 : vector<8x256xf32>
    %c0_138 = arith.constant 0 : index
    %c0_139 = arith.constant 0 : index
    %469 = vector.load %arg22[%c0_138, %c0_139] : memref<256x64xf32, #tpu.memory_space<vmem>>, vector<256x64xf32>
    %cst_140 = arith.constant dense<0.000000e+00> : vector<8x64xf32>
    %470 = tpu.matmul %468, %469, %cst_140 {dimension_numbers = #tpu.dot_dimension_numbers<[1], [0], [0], [1], [0, 0, 1, 1], [], []>} : vector<8x256xf32>, vector<256x64xf32>, vector<8x64xf32> -> vector<8x64xf32>
    %cst_141 = arith.constant 0.000000e+00 : f32
    %471 = vector.broadcast %cst_141 : f32 to vector<8x18xf32>
    %472 = vector.extract_strided_slice %470 {offsets = [0, 0], sizes = [8, 46], strides = [1, 1]} : vector<8x64xf32> to vector<8x46xf32>
    %473 = tpu.concatenate %471, %472 in 1 : vector<8x18xf32>, vector<8x46xf32> -> vector<8x64xf32>
    %474 = arith.truncf %473 : vector<8x64xf32> to vector<8x64xbf16>
    %c0_142 = arith.constant 0 : index
    %c0_143 = arith.constant 0 : index
    %475 = vector.load %arg19[%c0_142, %c0_143] : memref<25x64xbf16, #tpu.memory_space<vmem>>, vector<1x64xbf16>
    %476 = vector.broadcast %475 : vector<1x64xbf16> to vector<8x64xbf16>
    %477 = arith.mulf %474, %476 : vector<8x64xbf16>
    %cst_144 = arith.constant 0.000000e+00 : f32
    %478 = vector.broadcast %cst_144 : f32 to vector<8x17xf32>
    %479 = vector.extract_strided_slice %470 {offsets = [0, 0], sizes = [8, 47], strides = [1, 1]} : vector<8x64xf32> to vector<8x47xf32>
    %480 = tpu.concatenate %478, %479 in 1 : vector<8x17xf32>, vector<8x47xf32> -> vector<8x64xf32>
    %481 = arith.truncf %480 : vector<8x64xf32> to vector<8x64xbf16>
    %c1_145 = arith.constant 1 : index
    %c0_146 = arith.constant 0 : index
    %482 = vector.load %arg19[%c1_145, %c0_146] : memref<25x64xbf16, #tpu.memory_space<vmem>>, vector<1x64xbf16>
    %483 = vector.broadcast %482 : vector<1x64xbf16> to vector<8x64xbf16>
    %484 = arith.mulf %481, %483 : vector<8x64xbf16>
    %cst_147 = arith.constant 0.000000e+00 : f32
    %485 = vector.broadcast %cst_147 : f32 to vector<8x16xf32>
    %486 = vector.extract_strided_slice %470 {offsets = [0, 0], sizes = [8, 48], strides = [1, 1]} : vector<8x64xf32> to vector<8x48xf32>
    %487 = tpu.concatenate %485, %486 in 1 : vector<8x16xf32>, vector<8x48xf32> -> vector<8x64xf32>
    %488 = arith.truncf %487 : vector<8x64xf32> to vector<8x64xbf16>
    %c2_148 = arith.constant 2 : index
    %c0_149 = arith.constant 0 : index
    %489 = vector.load %arg19[%c2_148, %c0_149] : memref<25x64xbf16, #tpu.memory_space<vmem>>, vector<1x64xbf16>
    %490 = vector.broadcast %489 : vector<1x64xbf16> to vector<8x64xbf16>
    %491 = arith.mulf %488, %490 : vector<8x64xbf16>
    %cst_150 = arith.constant 0.000000e+00 : f32
    %492 = vector.broadcast %cst_150 : f32 to vector<8x15xf32>
    %493 = vector.extract_strided_slice %470 {offsets = [0, 0], sizes = [8, 49], strides = [1, 1]} : vector<8x64xf32> to vector<8x49xf32>
    %494 = tpu.concatenate %492, %493 in 1 : vector<8x15xf32>, vector<8x49xf32> -> vector<8x64xf32>
    %495 = arith.truncf %494 : vector<8x64xf32> to vector<8x64xbf16>
    %c3_151 = arith.constant 3 : index
    %c0_152 = arith.constant 0 : index
    %496 = vector.load %arg19[%c3_151, %c0_152] : memref<25x64xbf16, #tpu.memory_space<vmem>>, vector<1x64xbf16>
    %497 = vector.broadcast %496 : vector<1x64xbf16> to vector<8x64xbf16>
    %498 = arith.mulf %495, %497 : vector<8x64xbf16>
    %cst_153 = arith.constant 0.000000e+00 : f32
    %499 = vector.broadcast %cst_153 : f32 to vector<8x14xf32>
    %500 = vector.extract_strided_slice %470 {offsets = [0, 0], sizes = [8, 50], strides = [1, 1]} : vector<8x64xf32> to vector<8x50xf32>
    %501 = tpu.concatenate %499, %500 in 1 : vector<8x14xf32>, vector<8x50xf32> -> vector<8x64xf32>
    %502 = arith.truncf %501 : vector<8x64xf32> to vector<8x64xbf16>
    %c4_154 = arith.constant 4 : index
    %c0_155 = arith.constant 0 : index
    %503 = vector.load %arg19[%c4_154, %c0_155] : memref<25x64xbf16, #tpu.memory_space<vmem>>, vector<1x64xbf16>
    %504 = vector.broadcast %503 : vector<1x64xbf16> to vector<8x64xbf16>
    %505 = arith.mulf %502, %504 : vector<8x64xbf16>
    %cst_156 = arith.constant 0.000000e+00 : f32
    %506 = vector.broadcast %cst_156 : f32 to vector<8x10xf32>
    %507 = vector.extract_strided_slice %470 {offsets = [0, 0], sizes = [8, 54], strides = [1, 1]} : vector<8x64xf32> to vector<8x54xf32>
    %508 = tpu.concatenate %506, %507 in 1 : vector<8x10xf32>, vector<8x54xf32> -> vector<8x64xf32>
    %509 = arith.truncf %508 : vector<8x64xf32> to vector<8x64xbf16>
    %c5_157 = arith.constant 5 : index
    %c0_158 = arith.constant 0 : index
    %510 = vector.load %arg19[%c5_157, %c0_158] : memref<25x64xbf16, #tpu.memory_space<vmem>>, vector<1x64xbf16>
    %511 = vector.broadcast %510 : vector<1x64xbf16> to vector<8x64xbf16>
    %512 = arith.mulf %509, %511 : vector<8x64xbf16>
    %cst_159 = arith.constant 0.000000e+00 : f32
    %513 = vector.broadcast %cst_159 : f32 to vector<8x9xf32>
    %514 = vector.extract_strided_slice %470 {offsets = [0, 0], sizes = [8, 55], strides = [1, 1]} : vector<8x64xf32> to vector<8x55xf32>
    %515 = tpu.concatenate %513, %514 in 1 : vector<8x9xf32>, vector<8x55xf32> -> vector<8x64xf32>
    %516 = arith.truncf %515 : vector<8x64xf32> to vector<8x64xbf16>
    %c6_160 = arith.constant 6 : index
    %c0_161 = arith.constant 0 : index
    %517 = vector.load %arg19[%c6_160, %c0_161] : memref<25x64xbf16, #tpu.memory_space<vmem>>, vector<1x64xbf16>
    %518 = vector.broadcast %517 : vector<1x64xbf16> to vector<8x64xbf16>
    %519 = arith.mulf %516, %518 : vector<8x64xbf16>
    %cst_162 = arith.constant 0.000000e+00 : f32
    %520 = vector.broadcast %cst_162 : f32 to vector<8x8xf32>
    %521 = vector.extract_strided_slice %470 {offsets = [0, 0], sizes = [8, 56], strides = [1, 1]} : vector<8x64xf32> to vector<8x56xf32>
    %522 = tpu.concatenate %520, %521 in 1 : vector<8x8xf32>, vector<8x56xf32> -> vector<8x64xf32>
    %523 = arith.truncf %522 : vector<8x64xf32> to vector<8x64xbf16>
    %c7_163 = arith.constant 7 : index
    %c0_164 = arith.constant 0 : index
    %524 = vector.load %arg19[%c7_163, %c0_164] : memref<25x64xbf16, #tpu.memory_space<vmem>>, vector<1x64xbf16>
    %525 = vector.broadcast %524 : vector<1x64xbf16> to vector<8x64xbf16>
    %526 = arith.mulf %523, %525 : vector<8x64xbf16>
    %cst_165 = arith.constant 0.000000e+00 : f32
    %527 = vector.broadcast %cst_165 : f32 to vector<8x7xf32>
    %528 = vector.extract_strided_slice %470 {offsets = [0, 0], sizes = [8, 57], strides = [1, 1]} : vector<8x64xf32> to vector<8x57xf32>
    %529 = tpu.concatenate %527, %528 in 1 : vector<8x7xf32>, vector<8x57xf32> -> vector<8x64xf32>
    %530 = arith.truncf %529 : vector<8x64xf32> to vector<8x64xbf16>
    %c8_166 = arith.constant 8 : index
    %c0_167 = arith.constant 0 : index
    %531 = vector.load %arg19[%c8_166, %c0_167] : memref<25x64xbf16, #tpu.memory_space<vmem>>, vector<1x64xbf16>
    %532 = vector.broadcast %531 : vector<1x64xbf16> to vector<8x64xbf16>
    %533 = arith.mulf %530, %532 : vector<8x64xbf16>
    %cst_168 = arith.constant 0.000000e+00 : f32
    %534 = vector.broadcast %cst_168 : f32 to vector<8x6xf32>
    %535 = vector.extract_strided_slice %470 {offsets = [0, 0], sizes = [8, 58], strides = [1, 1]} : vector<8x64xf32> to vector<8x58xf32>
    %536 = tpu.concatenate %534, %535 in 1 : vector<8x6xf32>, vector<8x58xf32> -> vector<8x64xf32>
    %537 = arith.truncf %536 : vector<8x64xf32> to vector<8x64xbf16>
    %c9_169 = arith.constant 9 : index
    %c0_170 = arith.constant 0 : index
    %538 = vector.load %arg19[%c9_169, %c0_170] : memref<25x64xbf16, #tpu.memory_space<vmem>>, vector<1x64xbf16>
    %539 = vector.broadcast %538 : vector<1x64xbf16> to vector<8x64xbf16>
    %540 = arith.mulf %537, %539 : vector<8x64xbf16>
    %cst_171 = arith.constant 0.000000e+00 : f32
    %541 = vector.broadcast %cst_171 : f32 to vector<8x2xf32>
    %542 = vector.extract_strided_slice %470 {offsets = [0, 0], sizes = [8, 62], strides = [1, 1]} : vector<8x64xf32> to vector<8x62xf32>
    %543 = tpu.concatenate %541, %542 in 1 : vector<8x2xf32>, vector<8x62xf32> -> vector<8x64xf32>
    %544 = arith.truncf %543 : vector<8x64xf32> to vector<8x64xbf16>
    %c10_172 = arith.constant 10 : index
    %c0_173 = arith.constant 0 : index
    %545 = vector.load %arg19[%c10_172, %c0_173] : memref<25x64xbf16, #tpu.memory_space<vmem>>, vector<1x64xbf16>
    %546 = vector.broadcast %545 : vector<1x64xbf16> to vector<8x64xbf16>
    %547 = arith.mulf %544, %546 : vector<8x64xbf16>
    %cst_174 = arith.constant 0.000000e+00 : f32
    %548 = vector.broadcast %cst_174 : f32 to vector<8x1xf32>
    %549 = vector.extract_strided_slice %470 {offsets = [0, 0], sizes = [8, 63], strides = [1, 1]} : vector<8x64xf32> to vector<8x63xf32>
    %550 = tpu.concatenate %548, %549 in 1 : vector<8x1xf32>, vector<8x63xf32> -> vector<8x64xf32>
    %551 = arith.truncf %550 : vector<8x64xf32> to vector<8x64xbf16>
    %c11_175 = arith.constant 11 : index
    %c0_176 = arith.constant 0 : index
    %552 = vector.load %arg19[%c11_175, %c0_176] : memref<25x64xbf16, #tpu.memory_space<vmem>>, vector<1x64xbf16>
    %553 = vector.broadcast %552 : vector<1x64xbf16> to vector<8x64xbf16>
    %554 = arith.mulf %551, %553 : vector<8x64xbf16>
    %555 = arith.truncf %470 : vector<8x64xf32> to vector<8x64xbf16>
    %c12_177 = arith.constant 12 : index
    %c0_178 = arith.constant 0 : index
    %556 = vector.load %arg19[%c12_177, %c0_178] : memref<25x64xbf16, #tpu.memory_space<vmem>>, vector<1x64xbf16>
    %557 = vector.broadcast %556 : vector<1x64xbf16> to vector<8x64xbf16>
    %558 = arith.mulf %555, %557 : vector<8x64xbf16>
    %cst_179 = arith.constant 0.000000e+00 : f32
    %559 = vector.broadcast %cst_179 : f32 to vector<8x1xf32>
    %560 = vector.extract_strided_slice %470 {offsets = [0, 1], sizes = [8, 63], strides = [1, 1]} : vector<8x64xf32> to vector<8x63xf32>
    %561 = tpu.concatenate %560, %559 in 1 : vector<8x63xf32>, vector<8x1xf32> -> vector<8x64xf32>
    %562 = arith.truncf %561 : vector<8x64xf32> to vector<8x64xbf16>
    %c13_180 = arith.constant 13 : index
    %c0_181 = arith.constant 0 : index
    %563 = vector.load %arg19[%c13_180, %c0_181] : memref<25x64xbf16, #tpu.memory_space<vmem>>, vector<1x64xbf16>
    %564 = vector.broadcast %563 : vector<1x64xbf16> to vector<8x64xbf16>
    %565 = arith.mulf %562, %564 : vector<8x64xbf16>
    %cst_182 = arith.constant 0.000000e+00 : f32
    %566 = vector.broadcast %cst_182 : f32 to vector<8x2xf32>
    %567 = vector.extract_strided_slice %470 {offsets = [0, 2], sizes = [8, 62], strides = [1, 1]} : vector<8x64xf32> to vector<8x62xf32>
    %568 = tpu.concatenate %567, %566 in 1 : vector<8x62xf32>, vector<8x2xf32> -> vector<8x64xf32>
    %569 = arith.truncf %568 : vector<8x64xf32> to vector<8x64xbf16>
    %c14_183 = arith.constant 14 : index
    %c0_184 = arith.constant 0 : index
    %570 = vector.load %arg19[%c14_183, %c0_184] : memref<25x64xbf16, #tpu.memory_space<vmem>>, vector<1x64xbf16>
    %571 = vector.broadcast %570 : vector<1x64xbf16> to vector<8x64xbf16>
    %572 = arith.mulf %569, %571 : vector<8x64xbf16>
    %cst_185 = arith.constant 0.000000e+00 : f32
    %573 = vector.broadcast %cst_185 : f32 to vector<8x6xf32>
    %574 = vector.extract_strided_slice %470 {offsets = [0, 6], sizes = [8, 58], strides = [1, 1]} : vector<8x64xf32> to vector<8x58xf32>
    %575 = tpu.concatenate %574, %573 in 1 : vector<8x58xf32>, vector<8x6xf32> -> vector<8x64xf32>
    %576 = arith.truncf %575 : vector<8x64xf32> to vector<8x64xbf16>
    %c15_186 = arith.constant 15 : index
    %c0_187 = arith.constant 0 : index
    %577 = vector.load %arg19[%c15_186, %c0_187] : memref<25x64xbf16, #tpu.memory_space<vmem>>, vector<1x64xbf16>
    %578 = vector.broadcast %577 : vector<1x64xbf16> to vector<8x64xbf16>
    %579 = arith.mulf %576, %578 : vector<8x64xbf16>
    %cst_188 = arith.constant 0.000000e+00 : f32
    %580 = vector.broadcast %cst_188 : f32 to vector<8x7xf32>
    %581 = vector.extract_strided_slice %470 {offsets = [0, 7], sizes = [8, 57], strides = [1, 1]} : vector<8x64xf32> to vector<8x57xf32>
    %582 = tpu.concatenate %581, %580 in 1 : vector<8x57xf32>, vector<8x7xf32> -> vector<8x64xf32>
    %583 = arith.truncf %582 : vector<8x64xf32> to vector<8x64xbf16>
    %c16_189 = arith.constant 16 : index
    %c0_190 = arith.constant 0 : index
    %584 = vector.load %arg19[%c16_189, %c0_190] : memref<25x64xbf16, #tpu.memory_space<vmem>>, vector<1x64xbf16>
    %585 = vector.broadcast %584 : vector<1x64xbf16> to vector<8x64xbf16>
    %586 = arith.mulf %583, %585 : vector<8x64xbf16>
    %cst_191 = arith.constant 0.000000e+00 : f32
    %587 = vector.broadcast %cst_191 : f32 to vector<8x8xf32>
    %588 = vector.extract_strided_slice %470 {offsets = [0, 8], sizes = [8, 56], strides = [1, 1]} : vector<8x64xf32> to vector<8x56xf32>
    %589 = tpu.concatenate %588, %587 in 1 : vector<8x56xf32>, vector<8x8xf32> -> vector<8x64xf32>
    %590 = arith.truncf %589 : vector<8x64xf32> to vector<8x64xbf16>
    %c17_192 = arith.constant 17 : index
    %c0_193 = arith.constant 0 : index
    %591 = vector.load %arg19[%c17_192, %c0_193] : memref<25x64xbf16, #tpu.memory_space<vmem>>, vector<1x64xbf16>
    %592 = vector.broadcast %591 : vector<1x64xbf16> to vector<8x64xbf16>
    %593 = arith.mulf %590, %592 : vector<8x64xbf16>
    %cst_194 = arith.constant 0.000000e+00 : f32
    %594 = vector.broadcast %cst_194 : f32 to vector<8x9xf32>
    %595 = vector.extract_strided_slice %470 {offsets = [0, 9], sizes = [8, 55], strides = [1, 1]} : vector<8x64xf32> to vector<8x55xf32>
    %596 = tpu.concatenate %595, %594 in 1 : vector<8x55xf32>, vector<8x9xf32> -> vector<8x64xf32>
    %597 = arith.truncf %596 : vector<8x64xf32> to vector<8x64xbf16>
    %c18_195 = arith.constant 18 : index
    %c0_196 = arith.constant 0 : index
    %598 = vector.load %arg19[%c18_195, %c0_196] : memref<25x64xbf16, #tpu.memory_space<vmem>>, vector<1x64xbf16>
    %599 = vector.broadcast %598 : vector<1x64xbf16> to vector<8x64xbf16>
    %600 = arith.mulf %597, %599 : vector<8x64xbf16>
    %cst_197 = arith.constant 0.000000e+00 : f32
    %601 = vector.broadcast %cst_197 : f32 to vector<8x10xf32>
    %602 = vector.extract_strided_slice %470 {offsets = [0, 10], sizes = [8, 54], strides = [1, 1]} : vector<8x64xf32> to vector<8x54xf32>
    %603 = tpu.concatenate %602, %601 in 1 : vector<8x54xf32>, vector<8x10xf32> -> vector<8x64xf32>
    %604 = arith.truncf %603 : vector<8x64xf32> to vector<8x64xbf16>
    %c19_198 = arith.constant 19 : index
    %c0_199 = arith.constant 0 : index
    %605 = vector.load %arg19[%c19_198, %c0_199] : memref<25x64xbf16, #tpu.memory_space<vmem>>, vector<1x64xbf16>
    %606 = vector.broadcast %605 : vector<1x64xbf16> to vector<8x64xbf16>
    %607 = arith.mulf %604, %606 : vector<8x64xbf16>
    %cst_200 = arith.constant 0.000000e+00 : f32
    %608 = vector.broadcast %cst_200 : f32 to vector<8x14xf32>
    %609 = vector.extract_strided_slice %470 {offsets = [0, 14], sizes = [8, 50], strides = [1, 1]} : vector<8x64xf32> to vector<8x50xf32>
    %610 = tpu.concatenate %609, %608 in 1 : vector<8x50xf32>, vector<8x14xf32> -> vector<8x64xf32>
    %611 = arith.truncf %610 : vector<8x64xf32> to vector<8x64xbf16>
    %c20_201 = arith.constant 20 : index
    %c0_202 = arith.constant 0 : index
    %612 = vector.load %arg19[%c20_201, %c0_202] : memref<25x64xbf16, #tpu.memory_space<vmem>>, vector<1x64xbf16>
    %613 = vector.broadcast %612 : vector<1x64xbf16> to vector<8x64xbf16>
    %614 = arith.mulf %611, %613 : vector<8x64xbf16>
    %cst_203 = arith.constant 0.000000e+00 : f32
    %615 = vector.broadcast %cst_203 : f32 to vector<8x15xf32>
    %616 = vector.extract_strided_slice %470 {offsets = [0, 15], sizes = [8, 49], strides = [1, 1]} : vector<8x64xf32> to vector<8x49xf32>
    %617 = tpu.concatenate %616, %615 in 1 : vector<8x49xf32>, vector<8x15xf32> -> vector<8x64xf32>
    %618 = arith.truncf %617 : vector<8x64xf32> to vector<8x64xbf16>
    %c21_204 = arith.constant 21 : index
    %c0_205 = arith.constant 0 : index
    %619 = vector.load %arg19[%c21_204, %c0_205] : memref<25x64xbf16, #tpu.memory_space<vmem>>, vector<1x64xbf16>
    %620 = vector.broadcast %619 : vector<1x64xbf16> to vector<8x64xbf16>
    %621 = arith.mulf %618, %620 : vector<8x64xbf16>
    %cst_206 = arith.constant 0.000000e+00 : f32
    %622 = vector.broadcast %cst_206 : f32 to vector<8x16xf32>
    %623 = vector.extract_strided_slice %470 {offsets = [0, 16], sizes = [8, 48], strides = [1, 1]} : vector<8x64xf32> to vector<8x48xf32>
    %624 = tpu.concatenate %623, %622 in 1 : vector<8x48xf32>, vector<8x16xf32> -> vector<8x64xf32>
    %625 = arith.truncf %624 : vector<8x64xf32> to vector<8x64xbf16>
    %c22_207 = arith.constant 22 : index
    %c0_208 = arith.constant 0 : index
    %626 = vector.load %arg19[%c22_207, %c0_208] : memref<25x64xbf16, #tpu.memory_space<vmem>>, vector<1x64xbf16>
    %627 = vector.broadcast %626 : vector<1x64xbf16> to vector<8x64xbf16>
    %628 = arith.mulf %625, %627 : vector<8x64xbf16>
    %cst_209 = arith.constant 0.000000e+00 : f32
    %629 = vector.broadcast %cst_209 : f32 to vector<8x17xf32>
    %630 = vector.extract_strided_slice %470 {offsets = [0, 17], sizes = [8, 47], strides = [1, 1]} : vector<8x64xf32> to vector<8x47xf32>
    %631 = tpu.concatenate %630, %629 in 1 : vector<8x47xf32>, vector<8x17xf32> -> vector<8x64xf32>
    %632 = arith.truncf %631 : vector<8x64xf32> to vector<8x64xbf16>
    %c23_210 = arith.constant 23 : index
    %c0_211 = arith.constant 0 : index
    %633 = vector.load %arg19[%c23_210, %c0_211] : memref<25x64xbf16, #tpu.memory_space<vmem>>, vector<1x64xbf16>
    %634 = vector.broadcast %633 : vector<1x64xbf16> to vector<8x64xbf16>
    %635 = arith.mulf %632, %634 : vector<8x64xbf16>
    %cst_212 = arith.constant 0.000000e+00 : f32
    %636 = vector.broadcast %cst_212 : f32 to vector<8x18xf32>
    %637 = vector.extract_strided_slice %470 {offsets = [0, 18], sizes = [8, 46], strides = [1, 1]} : vector<8x64xf32> to vector<8x46xf32>
    %638 = tpu.concatenate %637, %636 in 1 : vector<8x46xf32>, vector<8x18xf32> -> vector<8x64xf32>
    %639 = arith.truncf %638 : vector<8x64xf32> to vector<8x64xbf16>
    %c24_213 = arith.constant 24 : index
    %c0_214 = arith.constant 0 : index
    %640 = vector.load %arg19[%c24_213, %c0_214] : memref<25x64xbf16, #tpu.memory_space<vmem>>, vector<1x64xbf16>
    %641 = vector.broadcast %640 : vector<1x64xbf16> to vector<8x64xbf16>
    %642 = arith.mulf %639, %641 : vector<8x64xbf16>
    %643 = tpu.concatenate %477, %484, %491, %498, %505, %512, %519, %526, %533, %540, %547, %554, %558, %565, %572, %579 in 0 : vector<8x64xbf16>, vector<8x64xbf16>, vector<8x64xbf16>, vector<8x64xbf16>, vector<8x64xbf16>, vector<8x64xbf16>, vector<8x64xbf16>, vector<8x64xbf16>, vector<8x64xbf16>, vector<8x64xbf16>, vector<8x64xbf16>, vector<8x64xbf16>, vector<8x64xbf16>, vector<8x64xbf16>, vector<8x64xbf16>, vector<8x64xbf16> -> vector<128x64xbf16>
    %644 = tpu.concatenate %586, %593, %600, %607, %614, %621, %628, %635, %642 in 0 : vector<8x64xbf16>, vector<8x64xbf16>, vector<8x64xbf16>, vector<8x64xbf16>, vector<8x64xbf16>, vector<8x64xbf16>, vector<8x64xbf16>, vector<8x64xbf16>, vector<8x64xbf16> -> vector<72x64xbf16>
    %645 = tpu.concatenate %643, %644 in 0 : vector<128x64xbf16>, vector<72x64xbf16> -> vector<200x64xbf16>
    %c0_215 = arith.constant 0 : index
    %c0_216 = arith.constant 0 : index
    %646 = vector.load %arg4[%c0_215, %c0_216] : memref<16x200xbf16, #tpu.memory_space<vmem>>, vector<16x200xbf16>
    %cst_217 = arith.constant dense<0.000000e+00> : vector<16x64xf32>
    %647 = tpu.matmul %646, %645, %cst_217 {dimension_numbers = #tpu.dot_dimension_numbers<[1], [0], [0], [1], [0, 0, 1, 1], [], []>} : vector<16x200xbf16>, vector<200x64xbf16>, vector<16x64xf32> -> vector<16x64xf32>
    %c0_218 = arith.constant 0 : index
    %c0_219 = arith.constant 0 : index
    %648 = vector.load %arg12[%c0_218, %c0_219] : memref<16x1xf32, #tpu.memory_space<vmem>>, vector<16x1xf32>
    %649 = vector.broadcast %648 : vector<16x1xf32> to vector<16x64xf32>
    %650 = arith.addf %647, %649 : vector<16x64xf32>
    %cst_220 = arith.constant 0.000000e+00 : f32
    %651 = vector.broadcast %cst_220 : f32 to vector<16x18xf32>
    %652 = vector.extract_strided_slice %650 {offsets = [0, 0], sizes = [16, 46], strides = [1, 1]} : vector<16x64xf32> to vector<16x46xf32>
    %653 = tpu.concatenate %651, %652 in 1 : vector<16x18xf32>, vector<16x46xf32> -> vector<16x64xf32>
    %654 = arith.truncf %653 : vector<16x64xf32> to vector<16x64xbf16>
    %c0_221 = arith.constant 0 : index
    %c0_222 = arith.constant 0 : index
    %655 = vector.load %arg19[%c0_221, %c0_222] : memref<25x64xbf16, #tpu.memory_space<vmem>>, vector<1x64xbf16>
    %656 = vector.broadcast %655 : vector<1x64xbf16> to vector<16x64xbf16>
    %657 = arith.mulf %654, %656 : vector<16x64xbf16>
    %cst_223 = arith.constant 0.000000e+00 : f32
    %658 = vector.broadcast %cst_223 : f32 to vector<16x17xf32>
    %659 = vector.extract_strided_slice %650 {offsets = [0, 0], sizes = [16, 47], strides = [1, 1]} : vector<16x64xf32> to vector<16x47xf32>
    %660 = tpu.concatenate %658, %659 in 1 : vector<16x17xf32>, vector<16x47xf32> -> vector<16x64xf32>
    %661 = arith.truncf %660 : vector<16x64xf32> to vector<16x64xbf16>
    %c1_224 = arith.constant 1 : index
    %c0_225 = arith.constant 0 : index
    %662 = vector.load %arg19[%c1_224, %c0_225] : memref<25x64xbf16, #tpu.memory_space<vmem>>, vector<1x64xbf16>
    %663 = vector.broadcast %662 : vector<1x64xbf16> to vector<16x64xbf16>
    %664 = arith.mulf %661, %663 : vector<16x64xbf16>
    %cst_226 = arith.constant 0.000000e+00 : f32
    %665 = vector.broadcast %cst_226 : f32 to vector<16x16xf32>
    %666 = vector.extract_strided_slice %650 {offsets = [0, 0], sizes = [16, 48], strides = [1, 1]} : vector<16x64xf32> to vector<16x48xf32>
    %667 = tpu.concatenate %665, %666 in 1 : vector<16x16xf32>, vector<16x48xf32> -> vector<16x64xf32>
    %668 = arith.truncf %667 : vector<16x64xf32> to vector<16x64xbf16>
    %c2_227 = arith.constant 2 : index
    %c0_228 = arith.constant 0 : index
    %669 = vector.load %arg19[%c2_227, %c0_228] : memref<25x64xbf16, #tpu.memory_space<vmem>>, vector<1x64xbf16>
    %670 = vector.broadcast %669 : vector<1x64xbf16> to vector<16x64xbf16>
    %671 = arith.mulf %668, %670 : vector<16x64xbf16>
    %cst_229 = arith.constant 0.000000e+00 : f32
    %672 = vector.broadcast %cst_229 : f32 to vector<16x15xf32>
    %673 = vector.extract_strided_slice %650 {offsets = [0, 0], sizes = [16, 49], strides = [1, 1]} : vector<16x64xf32> to vector<16x49xf32>
    %674 = tpu.concatenate %672, %673 in 1 : vector<16x15xf32>, vector<16x49xf32> -> vector<16x64xf32>
    %675 = arith.truncf %674 : vector<16x64xf32> to vector<16x64xbf16>
    %c3_230 = arith.constant 3 : index
    %c0_231 = arith.constant 0 : index
    %676 = vector.load %arg19[%c3_230, %c0_231] : memref<25x64xbf16, #tpu.memory_space<vmem>>, vector<1x64xbf16>
    %677 = vector.broadcast %676 : vector<1x64xbf16> to vector<16x64xbf16>
    %678 = arith.mulf %675, %677 : vector<16x64xbf16>
    %cst_232 = arith.constant 0.000000e+00 : f32
    %679 = vector.broadcast %cst_232 : f32 to vector<16x14xf32>
    %680 = vector.extract_strided_slice %650 {offsets = [0, 0], sizes = [16, 50], strides = [1, 1]} : vector<16x64xf32> to vector<16x50xf32>
    %681 = tpu.concatenate %679, %680 in 1 : vector<16x14xf32>, vector<16x50xf32> -> vector<16x64xf32>
    %682 = arith.truncf %681 : vector<16x64xf32> to vector<16x64xbf16>
    %c4_233 = arith.constant 4 : index
    %c0_234 = arith.constant 0 : index
    %683 = vector.load %arg19[%c4_233, %c0_234] : memref<25x64xbf16, #tpu.memory_space<vmem>>, vector<1x64xbf16>
    %684 = vector.broadcast %683 : vector<1x64xbf16> to vector<16x64xbf16>
    %685 = arith.mulf %682, %684 : vector<16x64xbf16>
    %cst_235 = arith.constant 0.000000e+00 : f32
    %686 = vector.broadcast %cst_235 : f32 to vector<16x10xf32>
    %687 = vector.extract_strided_slice %650 {offsets = [0, 0], sizes = [16, 54], strides = [1, 1]} : vector<16x64xf32> to vector<16x54xf32>
    %688 = tpu.concatenate %686, %687 in 1 : vector<16x10xf32>, vector<16x54xf32> -> vector<16x64xf32>
    %689 = arith.truncf %688 : vector<16x64xf32> to vector<16x64xbf16>
    %c5_236 = arith.constant 5 : index
    %c0_237 = arith.constant 0 : index
    %690 = vector.load %arg19[%c5_236, %c0_237] : memref<25x64xbf16, #tpu.memory_space<vmem>>, vector<1x64xbf16>
    %691 = vector.broadcast %690 : vector<1x64xbf16> to vector<16x64xbf16>
    %692 = arith.mulf %689, %691 : vector<16x64xbf16>
    %cst_238 = arith.constant 0.000000e+00 : f32
    %693 = vector.broadcast %cst_238 : f32 to vector<16x9xf32>
    %694 = vector.extract_strided_slice %650 {offsets = [0, 0], sizes = [16, 55], strides = [1, 1]} : vector<16x64xf32> to vector<16x55xf32>
    %695 = tpu.concatenate %693, %694 in 1 : vector<16x9xf32>, vector<16x55xf32> -> vector<16x64xf32>
    %696 = arith.truncf %695 : vector<16x64xf32> to vector<16x64xbf16>
    %c6_239 = arith.constant 6 : index
    %c0_240 = arith.constant 0 : index
    %697 = vector.load %arg19[%c6_239, %c0_240] : memref<25x64xbf16, #tpu.memory_space<vmem>>, vector<1x64xbf16>
    %698 = vector.broadcast %697 : vector<1x64xbf16> to vector<16x64xbf16>
    %699 = arith.mulf %696, %698 : vector<16x64xbf16>
    %cst_241 = arith.constant 0.000000e+00 : f32
    %700 = vector.broadcast %cst_241 : f32 to vector<16x8xf32>
    %701 = vector.extract_strided_slice %650 {offsets = [0, 0], sizes = [16, 56], strides = [1, 1]} : vector<16x64xf32> to vector<16x56xf32>
    %702 = tpu.concatenate %700, %701 in 1 : vector<16x8xf32>, vector<16x56xf32> -> vector<16x64xf32>
    %703 = arith.truncf %702 : vector<16x64xf32> to vector<16x64xbf16>
    %c7_242 = arith.constant 7 : index
    %c0_243 = arith.constant 0 : index
    %704 = vector.load %arg19[%c7_242, %c0_243] : memref<25x64xbf16, #tpu.memory_space<vmem>>, vector<1x64xbf16>
    %705 = vector.broadcast %704 : vector<1x64xbf16> to vector<16x64xbf16>
    %706 = arith.mulf %703, %705 : vector<16x64xbf16>
    %cst_244 = arith.constant 0.000000e+00 : f32
    %707 = vector.broadcast %cst_244 : f32 to vector<16x7xf32>
    %708 = vector.extract_strided_slice %650 {offsets = [0, 0], sizes = [16, 57], strides = [1, 1]} : vector<16x64xf32> to vector<16x57xf32>
    %709 = tpu.concatenate %707, %708 in 1 : vector<16x7xf32>, vector<16x57xf32> -> vector<16x64xf32>
    %710 = arith.truncf %709 : vector<16x64xf32> to vector<16x64xbf16>
    %c8_245 = arith.constant 8 : index
    %c0_246 = arith.constant 0 : index
    %711 = vector.load %arg19[%c8_245, %c0_246] : memref<25x64xbf16, #tpu.memory_space<vmem>>, vector<1x64xbf16>
    %712 = vector.broadcast %711 : vector<1x64xbf16> to vector<16x64xbf16>
    %713 = arith.mulf %710, %712 : vector<16x64xbf16>
    %cst_247 = arith.constant 0.000000e+00 : f32
    %714 = vector.broadcast %cst_247 : f32 to vector<16x6xf32>
    %715 = vector.extract_strided_slice %650 {offsets = [0, 0], sizes = [16, 58], strides = [1, 1]} : vector<16x64xf32> to vector<16x58xf32>
    %716 = tpu.concatenate %714, %715 in 1 : vector<16x6xf32>, vector<16x58xf32> -> vector<16x64xf32>
    %717 = arith.truncf %716 : vector<16x64xf32> to vector<16x64xbf16>
    %c9_248 = arith.constant 9 : index
    %c0_249 = arith.constant 0 : index
    %718 = vector.load %arg19[%c9_248, %c0_249] : memref<25x64xbf16, #tpu.memory_space<vmem>>, vector<1x64xbf16>
    %719 = vector.broadcast %718 : vector<1x64xbf16> to vector<16x64xbf16>
    %720 = arith.mulf %717, %719 : vector<16x64xbf16>
    %cst_250 = arith.constant 0.000000e+00 : f32
    %721 = vector.broadcast %cst_250 : f32 to vector<16x2xf32>
    %722 = vector.extract_strided_slice %650 {offsets = [0, 0], sizes = [16, 62], strides = [1, 1]} : vector<16x64xf32> to vector<16x62xf32>
    %723 = tpu.concatenate %721, %722 in 1 : vector<16x2xf32>, vector<16x62xf32> -> vector<16x64xf32>
    %724 = arith.truncf %723 : vector<16x64xf32> to vector<16x64xbf16>
    %c10_251 = arith.constant 10 : index
    %c0_252 = arith.constant 0 : index
    %725 = vector.load %arg19[%c10_251, %c0_252] : memref<25x64xbf16, #tpu.memory_space<vmem>>, vector<1x64xbf16>
    %726 = vector.broadcast %725 : vector<1x64xbf16> to vector<16x64xbf16>
    %727 = arith.mulf %724, %726 : vector<16x64xbf16>
    %cst_253 = arith.constant 0.000000e+00 : f32
    %728 = vector.broadcast %cst_253 : f32 to vector<16x1xf32>
    %729 = vector.extract_strided_slice %650 {offsets = [0, 0], sizes = [16, 63], strides = [1, 1]} : vector<16x64xf32> to vector<16x63xf32>
    %730 = tpu.concatenate %728, %729 in 1 : vector<16x1xf32>, vector<16x63xf32> -> vector<16x64xf32>
    %731 = arith.truncf %730 : vector<16x64xf32> to vector<16x64xbf16>
    %c11_254 = arith.constant 11 : index
    %c0_255 = arith.constant 0 : index
    %732 = vector.load %arg19[%c11_254, %c0_255] : memref<25x64xbf16, #tpu.memory_space<vmem>>, vector<1x64xbf16>
    %733 = vector.broadcast %732 : vector<1x64xbf16> to vector<16x64xbf16>
    %734 = arith.mulf %731, %733 : vector<16x64xbf16>
    %735 = arith.truncf %650 : vector<16x64xf32> to vector<16x64xbf16>
    %c12_256 = arith.constant 12 : index
    %c0_257 = arith.constant 0 : index
    %736 = vector.load %arg19[%c12_256, %c0_257] : memref<25x64xbf16, #tpu.memory_space<vmem>>, vector<1x64xbf16>
    %737 = vector.broadcast %736 : vector<1x64xbf16> to vector<16x64xbf16>
    %738 = arith.mulf %735, %737 : vector<16x64xbf16>
    %cst_258 = arith.constant 0.000000e+00 : f32
    %739 = vector.broadcast %cst_258 : f32 to vector<16x1xf32>
    %740 = vector.extract_strided_slice %650 {offsets = [0, 1], sizes = [16, 63], strides = [1, 1]} : vector<16x64xf32> to vector<16x63xf32>
    %741 = tpu.concatenate %740, %739 in 1 : vector<16x63xf32>, vector<16x1xf32> -> vector<16x64xf32>
    %742 = arith.truncf %741 : vector<16x64xf32> to vector<16x64xbf16>
    %c13_259 = arith.constant 13 : index
    %c0_260 = arith.constant 0 : index
    %743 = vector.load %arg19[%c13_259, %c0_260] : memref<25x64xbf16, #tpu.memory_space<vmem>>, vector<1x64xbf16>
    %744 = vector.broadcast %743 : vector<1x64xbf16> to vector<16x64xbf16>
    %745 = arith.mulf %742, %744 : vector<16x64xbf16>
    %cst_261 = arith.constant 0.000000e+00 : f32
    %746 = vector.broadcast %cst_261 : f32 to vector<16x2xf32>
    %747 = vector.extract_strided_slice %650 {offsets = [0, 2], sizes = [16, 62], strides = [1, 1]} : vector<16x64xf32> to vector<16x62xf32>
    %748 = tpu.concatenate %747, %746 in 1 : vector<16x62xf32>, vector<16x2xf32> -> vector<16x64xf32>
    %749 = arith.truncf %748 : vector<16x64xf32> to vector<16x64xbf16>
    %c14_262 = arith.constant 14 : index
    %c0_263 = arith.constant 0 : index
    %750 = vector.load %arg19[%c14_262, %c0_263] : memref<25x64xbf16, #tpu.memory_space<vmem>>, vector<1x64xbf16>
    %751 = vector.broadcast %750 : vector<1x64xbf16> to vector<16x64xbf16>
    %752 = arith.mulf %749, %751 : vector<16x64xbf16>
    %cst_264 = arith.constant 0.000000e+00 : f32
    %753 = vector.broadcast %cst_264 : f32 to vector<16x6xf32>
    %754 = vector.extract_strided_slice %650 {offsets = [0, 6], sizes = [16, 58], strides = [1, 1]} : vector<16x64xf32> to vector<16x58xf32>
    %755 = tpu.concatenate %754, %753 in 1 : vector<16x58xf32>, vector<16x6xf32> -> vector<16x64xf32>
    %756 = arith.truncf %755 : vector<16x64xf32> to vector<16x64xbf16>
    %c15_265 = arith.constant 15 : index
    %c0_266 = arith.constant 0 : index
    %757 = vector.load %arg19[%c15_265, %c0_266] : memref<25x64xbf16, #tpu.memory_space<vmem>>, vector<1x64xbf16>
    %758 = vector.broadcast %757 : vector<1x64xbf16> to vector<16x64xbf16>
    %759 = arith.mulf %756, %758 : vector<16x64xbf16>
    %cst_267 = arith.constant 0.000000e+00 : f32
    %760 = vector.broadcast %cst_267 : f32 to vector<16x7xf32>
    %761 = vector.extract_strided_slice %650 {offsets = [0, 7], sizes = [16, 57], strides = [1, 1]} : vector<16x64xf32> to vector<16x57xf32>
    %762 = tpu.concatenate %761, %760 in 1 : vector<16x57xf32>, vector<16x7xf32> -> vector<16x64xf32>
    %763 = arith.truncf %762 : vector<16x64xf32> to vector<16x64xbf16>
    %c16_268 = arith.constant 16 : index
    %c0_269 = arith.constant 0 : index
    %764 = vector.load %arg19[%c16_268, %c0_269] : memref<25x64xbf16, #tpu.memory_space<vmem>>, vector<1x64xbf16>
    %765 = vector.broadcast %764 : vector<1x64xbf16> to vector<16x64xbf16>
    %766 = arith.mulf %763, %765 : vector<16x64xbf16>
    %cst_270 = arith.constant 0.000000e+00 : f32
    %767 = vector.broadcast %cst_270 : f32 to vector<16x8xf32>
    %768 = vector.extract_strided_slice %650 {offsets = [0, 8], sizes = [16, 56], strides = [1, 1]} : vector<16x64xf32> to vector<16x56xf32>
    %769 = tpu.concatenate %768, %767 in 1 : vector<16x56xf32>, vector<16x8xf32> -> vector<16x64xf32>
    %770 = arith.truncf %769 : vector<16x64xf32> to vector<16x64xbf16>
    %c17_271 = arith.constant 17 : index
    %c0_272 = arith.constant 0 : index
    %771 = vector.load %arg19[%c17_271, %c0_272] : memref<25x64xbf16, #tpu.memory_space<vmem>>, vector<1x64xbf16>
    %772 = vector.broadcast %771 : vector<1x64xbf16> to vector<16x64xbf16>
    %773 = arith.mulf %770, %772 : vector<16x64xbf16>
    %cst_273 = arith.constant 0.000000e+00 : f32
    %774 = vector.broadcast %cst_273 : f32 to vector<16x9xf32>
    %775 = vector.extract_strided_slice %650 {offsets = [0, 9], sizes = [16, 55], strides = [1, 1]} : vector<16x64xf32> to vector<16x55xf32>
    %776 = tpu.concatenate %775, %774 in 1 : vector<16x55xf32>, vector<16x9xf32> -> vector<16x64xf32>
    %777 = arith.truncf %776 : vector<16x64xf32> to vector<16x64xbf16>
    %c18_274 = arith.constant 18 : index
    %c0_275 = arith.constant 0 : index
    %778 = vector.load %arg19[%c18_274, %c0_275] : memref<25x64xbf16, #tpu.memory_space<vmem>>, vector<1x64xbf16>
    %779 = vector.broadcast %778 : vector<1x64xbf16> to vector<16x64xbf16>
    %780 = arith.mulf %777, %779 : vector<16x64xbf16>
    %cst_276 = arith.constant 0.000000e+00 : f32
    %781 = vector.broadcast %cst_276 : f32 to vector<16x10xf32>
    %782 = vector.extract_strided_slice %650 {offsets = [0, 10], sizes = [16, 54], strides = [1, 1]} : vector<16x64xf32> to vector<16x54xf32>
    %783 = tpu.concatenate %782, %781 in 1 : vector<16x54xf32>, vector<16x10xf32> -> vector<16x64xf32>
    %784 = arith.truncf %783 : vector<16x64xf32> to vector<16x64xbf16>
    %c19_277 = arith.constant 19 : index
    %c0_278 = arith.constant 0 : index
    %785 = vector.load %arg19[%c19_277, %c0_278] : memref<25x64xbf16, #tpu.memory_space<vmem>>, vector<1x64xbf16>
    %786 = vector.broadcast %785 : vector<1x64xbf16> to vector<16x64xbf16>
    %787 = arith.mulf %784, %786 : vector<16x64xbf16>
    %cst_279 = arith.constant 0.000000e+00 : f32
    %788 = vector.broadcast %cst_279 : f32 to vector<16x14xf32>
    %789 = vector.extract_strided_slice %650 {offsets = [0, 14], sizes = [16, 50], strides = [1, 1]} : vector<16x64xf32> to vector<16x50xf32>
    %790 = tpu.concatenate %789, %788 in 1 : vector<16x50xf32>, vector<16x14xf32> -> vector<16x64xf32>
    %791 = arith.truncf %790 : vector<16x64xf32> to vector<16x64xbf16>
    %c20_280 = arith.constant 20 : index
    %c0_281 = arith.constant 0 : index
    %792 = vector.load %arg19[%c20_280, %c0_281] : memref<25x64xbf16, #tpu.memory_space<vmem>>, vector<1x64xbf16>
    %793 = vector.broadcast %792 : vector<1x64xbf16> to vector<16x64xbf16>
    %794 = arith.mulf %791, %793 : vector<16x64xbf16>
    %cst_282 = arith.constant 0.000000e+00 : f32
    %795 = vector.broadcast %cst_282 : f32 to vector<16x15xf32>
    %796 = vector.extract_strided_slice %650 {offsets = [0, 15], sizes = [16, 49], strides = [1, 1]} : vector<16x64xf32> to vector<16x49xf32>
    %797 = tpu.concatenate %796, %795 in 1 : vector<16x49xf32>, vector<16x15xf32> -> vector<16x64xf32>
    %798 = arith.truncf %797 : vector<16x64xf32> to vector<16x64xbf16>
    %c21_283 = arith.constant 21 : index
    %c0_284 = arith.constant 0 : index
    %799 = vector.load %arg19[%c21_283, %c0_284] : memref<25x64xbf16, #tpu.memory_space<vmem>>, vector<1x64xbf16>
    %800 = vector.broadcast %799 : vector<1x64xbf16> to vector<16x64xbf16>
    %801 = arith.mulf %798, %800 : vector<16x64xbf16>
    %cst_285 = arith.constant 0.000000e+00 : f32
    %802 = vector.broadcast %cst_285 : f32 to vector<16x16xf32>
    %803 = vector.extract_strided_slice %650 {offsets = [0, 16], sizes = [16, 48], strides = [1, 1]} : vector<16x64xf32> to vector<16x48xf32>
    %804 = tpu.concatenate %803, %802 in 1 : vector<16x48xf32>, vector<16x16xf32> -> vector<16x64xf32>
    %805 = arith.truncf %804 : vector<16x64xf32> to vector<16x64xbf16>
    %c22_286 = arith.constant 22 : index
    %c0_287 = arith.constant 0 : index
    %806 = vector.load %arg19[%c22_286, %c0_287] : memref<25x64xbf16, #tpu.memory_space<vmem>>, vector<1x64xbf16>
    %807 = vector.broadcast %806 : vector<1x64xbf16> to vector<16x64xbf16>
    %808 = arith.mulf %805, %807 : vector<16x64xbf16>
    %cst_288 = arith.constant 0.000000e+00 : f32
    %809 = vector.broadcast %cst_288 : f32 to vector<16x17xf32>
    %810 = vector.extract_strided_slice %650 {offsets = [0, 17], sizes = [16, 47], strides = [1, 1]} : vector<16x64xf32> to vector<16x47xf32>
    %811 = tpu.concatenate %810, %809 in 1 : vector<16x47xf32>, vector<16x17xf32> -> vector<16x64xf32>
    %812 = arith.truncf %811 : vector<16x64xf32> to vector<16x64xbf16>
    %c23_289 = arith.constant 23 : index
    %c0_290 = arith.constant 0 : index
    %813 = vector.load %arg19[%c23_289, %c0_290] : memref<25x64xbf16, #tpu.memory_space<vmem>>, vector<1x64xbf16>
    %814 = vector.broadcast %813 : vector<1x64xbf16> to vector<16x64xbf16>
    %815 = arith.mulf %812, %814 : vector<16x64xbf16>
    %cst_291 = arith.constant 0.000000e+00 : f32
    %816 = vector.broadcast %cst_291 : f32 to vector<16x18xf32>
    %817 = vector.extract_strided_slice %650 {offsets = [0, 18], sizes = [16, 46], strides = [1, 1]} : vector<16x64xf32> to vector<16x46xf32>
    %818 = tpu.concatenate %817, %816 in 1 : vector<16x46xf32>, vector<16x18xf32> -> vector<16x64xf32>
    %819 = arith.truncf %818 : vector<16x64xf32> to vector<16x64xbf16>
    %c24_292 = arith.constant 24 : index
    %c0_293 = arith.constant 0 : index
    %820 = vector.load %arg19[%c24_292, %c0_293] : memref<25x64xbf16, #tpu.memory_space<vmem>>, vector<1x64xbf16>
    %821 = vector.broadcast %820 : vector<1x64xbf16> to vector<16x64xbf16>
    %822 = arith.mulf %819, %821 : vector<16x64xbf16>
    %823 = tpu.concatenate %657, %664, %671, %678, %685, %692, %699, %706, %713, %720, %727, %734, %738, %745, %752, %759 in 0 : vector<16x64xbf16>, vector<16x64xbf16>, vector<16x64xbf16>, vector<16x64xbf16>, vector<16x64xbf16>, vector<16x64xbf16>, vector<16x64xbf16>, vector<16x64xbf16>, vector<16x64xbf16>, vector<16x64xbf16>, vector<16x64xbf16>, vector<16x64xbf16>, vector<16x64xbf16>, vector<16x64xbf16>, vector<16x64xbf16>, vector<16x64xbf16> -> vector<256x64xbf16>
    %824 = tpu.concatenate %766, %773, %780, %787, %794, %801, %808, %815, %822 in 0 : vector<16x64xbf16>, vector<16x64xbf16>, vector<16x64xbf16>, vector<16x64xbf16>, vector<16x64xbf16>, vector<16x64xbf16>, vector<16x64xbf16>, vector<16x64xbf16>, vector<16x64xbf16> -> vector<144x64xbf16>
    %825 = tpu.concatenate %823, %824 in 0 : vector<256x64xbf16>, vector<144x64xbf16> -> vector<400x64xbf16>
    %c0_294 = arith.constant 0 : index
    %c0_295 = arith.constant 0 : index
    %826 = vector.load %arg5[%c0_294, %c0_295] : memref<16x400xbf16, #tpu.memory_space<vmem>>, vector<16x400xbf16>
    %cst_296 = arith.constant dense<0.000000e+00> : vector<16x64xf32>
    %827 = tpu.matmul %826, %825, %cst_296 {dimension_numbers = #tpu.dot_dimension_numbers<[1], [0], [0], [1], [0, 0, 1, 1], [], []>} : vector<16x400xbf16>, vector<400x64xbf16>, vector<16x64xf32> -> vector<16x64xf32>
    %c0_297 = arith.constant 0 : index
    %c0_298 = arith.constant 0 : index
    %828 = vector.load %arg13[%c0_297, %c0_298] : memref<16x1xf32, #tpu.memory_space<vmem>>, vector<16x1xf32>
    %829 = vector.broadcast %828 : vector<16x1xf32> to vector<16x64xf32>
    %830 = arith.addf %827, %829 : vector<16x64xf32>
    %cst_299 = arith.constant 0.000000e+00 : f32
    %831 = vector.broadcast %cst_299 : f32 to vector<16x64xf32>
    %832 = arith.maximumf %830, %831 : vector<16x64xf32>
    %cst_300 = arith.constant 0.000000e+00 : f32
    %833 = vector.broadcast %cst_300 : f32 to vector<16x1xf32>
    %834 = vector.extract_strided_slice %832 {offsets = [0, 1], sizes = [16, 63], strides = [1, 1]} : vector<16x64xf32> to vector<16x63xf32>
    %835 = tpu.concatenate %834, %833 in 1 : vector<16x63xf32>, vector<16x1xf32> -> vector<16x64xf32>
    %836 = arith.maximumf %832, %835 : vector<16x64xf32>
    %cst_301 = arith.constant 0.000000e+00 : f32
    %837 = vector.broadcast %cst_301 : f32 to vector<16x8xf32>
    %838 = vector.extract_strided_slice %836 {offsets = [0, 8], sizes = [16, 56], strides = [1, 1]} : vector<16x64xf32> to vector<16x56xf32>
    %839 = tpu.concatenate %838, %837 in 1 : vector<16x56xf32>, vector<16x8xf32> -> vector<16x64xf32>
    %840 = arith.maximumf %836, %839 : vector<16x64xf32>
    %c0_302 = arith.constant 0 : index
    %c0_303 = arith.constant 0 : index
    %841 = vector.load %arg23[%c0_302, %c0_303] : memref<64x16xf32, #tpu.memory_space<vmem>>, vector<64x16xf32>
    %cst_304 = arith.constant dense<0.000000e+00> : vector<16x16xf32>
    %842 = tpu.matmul %840, %841, %cst_304 {dimension_numbers = #tpu.dot_dimension_numbers<[1], [0], [0], [1], [0, 0, 1, 1], [], []>} : vector<16x64xf32>, vector<64x16xf32>, vector<16x16xf32> -> vector<16x16xf32>
    %cst_305 = arith.constant 0.000000e+00 : f32
    %843 = vector.broadcast %cst_305 : f32 to vector<16x10xf32>
    %844 = vector.extract_strided_slice %842 {offsets = [0, 0], sizes = [16, 6], strides = [1, 1]} : vector<16x16xf32> to vector<16x6xf32>
    %845 = tpu.concatenate %843, %844 in 1 : vector<16x10xf32>, vector<16x6xf32> -> vector<16x16xf32>
    %846 = arith.truncf %845 : vector<16x16xf32> to vector<16x16xbf16>
    %c0_306 = arith.constant 0 : index
    %c0_307 = arith.constant 0 : index
    %847 = vector.load %arg20[%c0_306, %c0_307] : memref<25x16xbf16, #tpu.memory_space<vmem>>, vector<1x16xbf16>
    %848 = vector.broadcast %847 : vector<1x16xbf16> to vector<16x16xbf16>
    %849 = arith.mulf %846, %848 : vector<16x16xbf16>
    %cst_308 = arith.constant 0.000000e+00 : f32
    %850 = vector.broadcast %cst_308 : f32 to vector<16x9xf32>
    %851 = vector.extract_strided_slice %842 {offsets = [0, 0], sizes = [16, 7], strides = [1, 1]} : vector<16x16xf32> to vector<16x7xf32>
    %852 = tpu.concatenate %850, %851 in 1 : vector<16x9xf32>, vector<16x7xf32> -> vector<16x16xf32>
    %853 = arith.truncf %852 : vector<16x16xf32> to vector<16x16xbf16>
    %c1_309 = arith.constant 1 : index
    %c0_310 = arith.constant 0 : index
    %854 = vector.load %arg20[%c1_309, %c0_310] : memref<25x16xbf16, #tpu.memory_space<vmem>>, vector<1x16xbf16>
    %855 = vector.broadcast %854 : vector<1x16xbf16> to vector<16x16xbf16>
    %856 = arith.mulf %853, %855 : vector<16x16xbf16>
    %cst_311 = arith.constant 0.000000e+00 : f32
    %857 = vector.broadcast %cst_311 : f32 to vector<16x8xf32>
    %858 = vector.extract_strided_slice %842 {offsets = [0, 0], sizes = [16, 8], strides = [1, 1]} : vector<16x16xf32> to vector<16x8xf32>
    %859 = tpu.concatenate %857, %858 in 1 : vector<16x8xf32>, vector<16x8xf32> -> vector<16x16xf32>
    %860 = arith.truncf %859 : vector<16x16xf32> to vector<16x16xbf16>
    %c2_312 = arith.constant 2 : index
    %c0_313 = arith.constant 0 : index
    %861 = vector.load %arg20[%c2_312, %c0_313] : memref<25x16xbf16, #tpu.memory_space<vmem>>, vector<1x16xbf16>
    %862 = vector.broadcast %861 : vector<1x16xbf16> to vector<16x16xbf16>
    %863 = arith.mulf %860, %862 : vector<16x16xbf16>
    %cst_314 = arith.constant 0.000000e+00 : f32
    %864 = vector.broadcast %cst_314 : f32 to vector<16x7xf32>
    %865 = vector.extract_strided_slice %842 {offsets = [0, 0], sizes = [16, 9], strides = [1, 1]} : vector<16x16xf32> to vector<16x9xf32>
    %866 = tpu.concatenate %864, %865 in 1 : vector<16x7xf32>, vector<16x9xf32> -> vector<16x16xf32>
    %867 = arith.truncf %866 : vector<16x16xf32> to vector<16x16xbf16>
    %c3_315 = arith.constant 3 : index
    %c0_316 = arith.constant 0 : index
    %868 = vector.load %arg20[%c3_315, %c0_316] : memref<25x16xbf16, #tpu.memory_space<vmem>>, vector<1x16xbf16>
    %869 = vector.broadcast %868 : vector<1x16xbf16> to vector<16x16xbf16>
    %870 = arith.mulf %867, %869 : vector<16x16xbf16>
    %cst_317 = arith.constant 0.000000e+00 : f32
    %871 = vector.broadcast %cst_317 : f32 to vector<16x6xf32>
    %872 = vector.extract_strided_slice %842 {offsets = [0, 0], sizes = [16, 10], strides = [1, 1]} : vector<16x16xf32> to vector<16x10xf32>
    %873 = tpu.concatenate %871, %872 in 1 : vector<16x6xf32>, vector<16x10xf32> -> vector<16x16xf32>
    %874 = arith.truncf %873 : vector<16x16xf32> to vector<16x16xbf16>
    %c4_318 = arith.constant 4 : index
    %c0_319 = arith.constant 0 : index
    %875 = vector.load %arg20[%c4_318, %c0_319] : memref<25x16xbf16, #tpu.memory_space<vmem>>, vector<1x16xbf16>
    %876 = vector.broadcast %875 : vector<1x16xbf16> to vector<16x16xbf16>
    %877 = arith.mulf %874, %876 : vector<16x16xbf16>
    %cst_320 = arith.constant 0.000000e+00 : f32
    %878 = vector.broadcast %cst_320 : f32 to vector<16x6xf32>
    %879 = vector.extract_strided_slice %842 {offsets = [0, 0], sizes = [16, 10], strides = [1, 1]} : vector<16x16xf32> to vector<16x10xf32>
    %880 = tpu.concatenate %878, %879 in 1 : vector<16x6xf32>, vector<16x10xf32> -> vector<16x16xf32>
    %881 = arith.truncf %880 : vector<16x16xf32> to vector<16x16xbf16>
    %c5_321 = arith.constant 5 : index
    %c0_322 = arith.constant 0 : index
    %882 = vector.load %arg20[%c5_321, %c0_322] : memref<25x16xbf16, #tpu.memory_space<vmem>>, vector<1x16xbf16>
    %883 = vector.broadcast %882 : vector<1x16xbf16> to vector<16x16xbf16>
    %884 = arith.mulf %881, %883 : vector<16x16xbf16>
    %cst_323 = arith.constant 0.000000e+00 : f32
    %885 = vector.broadcast %cst_323 : f32 to vector<16x5xf32>
    %886 = vector.extract_strided_slice %842 {offsets = [0, 0], sizes = [16, 11], strides = [1, 1]} : vector<16x16xf32> to vector<16x11xf32>
    %887 = tpu.concatenate %885, %886 in 1 : vector<16x5xf32>, vector<16x11xf32> -> vector<16x16xf32>
    %888 = arith.truncf %887 : vector<16x16xf32> to vector<16x16xbf16>
    %c6_324 = arith.constant 6 : index
    %c0_325 = arith.constant 0 : index
    %889 = vector.load %arg20[%c6_324, %c0_325] : memref<25x16xbf16, #tpu.memory_space<vmem>>, vector<1x16xbf16>
    %890 = vector.broadcast %889 : vector<1x16xbf16> to vector<16x16xbf16>
    %891 = arith.mulf %888, %890 : vector<16x16xbf16>
    %cst_326 = arith.constant 0.000000e+00 : f32
    %892 = vector.broadcast %cst_326 : f32 to vector<16x4xf32>
    %893 = vector.extract_strided_slice %842 {offsets = [0, 0], sizes = [16, 12], strides = [1, 1]} : vector<16x16xf32> to vector<16x12xf32>
    %894 = tpu.concatenate %892, %893 in 1 : vector<16x4xf32>, vector<16x12xf32> -> vector<16x16xf32>
    %895 = arith.truncf %894 : vector<16x16xf32> to vector<16x16xbf16>
    %c7_327 = arith.constant 7 : index
    %c0_328 = arith.constant 0 : index
    %896 = vector.load %arg20[%c7_327, %c0_328] : memref<25x16xbf16, #tpu.memory_space<vmem>>, vector<1x16xbf16>
    %897 = vector.broadcast %896 : vector<1x16xbf16> to vector<16x16xbf16>
    %898 = arith.mulf %895, %897 : vector<16x16xbf16>
    %cst_329 = arith.constant 0.000000e+00 : f32
    %899 = vector.broadcast %cst_329 : f32 to vector<16x3xf32>
    %900 = vector.extract_strided_slice %842 {offsets = [0, 0], sizes = [16, 13], strides = [1, 1]} : vector<16x16xf32> to vector<16x13xf32>
    %901 = tpu.concatenate %899, %900 in 1 : vector<16x3xf32>, vector<16x13xf32> -> vector<16x16xf32>
    %902 = arith.truncf %901 : vector<16x16xf32> to vector<16x16xbf16>
    %c8_330 = arith.constant 8 : index
    %c0_331 = arith.constant 0 : index
    %903 = vector.load %arg20[%c8_330, %c0_331] : memref<25x16xbf16, #tpu.memory_space<vmem>>, vector<1x16xbf16>
    %904 = vector.broadcast %903 : vector<1x16xbf16> to vector<16x16xbf16>
    %905 = arith.mulf %902, %904 : vector<16x16xbf16>
    %cst_332 = arith.constant 0.000000e+00 : f32
    %906 = vector.broadcast %cst_332 : f32 to vector<16x2xf32>
    %907 = vector.extract_strided_slice %842 {offsets = [0, 0], sizes = [16, 14], strides = [1, 1]} : vector<16x16xf32> to vector<16x14xf32>
    %908 = tpu.concatenate %906, %907 in 1 : vector<16x2xf32>, vector<16x14xf32> -> vector<16x16xf32>
    %909 = arith.truncf %908 : vector<16x16xf32> to vector<16x16xbf16>
    %c9_333 = arith.constant 9 : index
    %c0_334 = arith.constant 0 : index
    %910 = vector.load %arg20[%c9_333, %c0_334] : memref<25x16xbf16, #tpu.memory_space<vmem>>, vector<1x16xbf16>
    %911 = vector.broadcast %910 : vector<1x16xbf16> to vector<16x16xbf16>
    %912 = arith.mulf %909, %911 : vector<16x16xbf16>
    %cst_335 = arith.constant 0.000000e+00 : f32
    %913 = vector.broadcast %cst_335 : f32 to vector<16x2xf32>
    %914 = vector.extract_strided_slice %842 {offsets = [0, 0], sizes = [16, 14], strides = [1, 1]} : vector<16x16xf32> to vector<16x14xf32>
    %915 = tpu.concatenate %913, %914 in 1 : vector<16x2xf32>, vector<16x14xf32> -> vector<16x16xf32>
    %916 = arith.truncf %915 : vector<16x16xf32> to vector<16x16xbf16>
    %c10_336 = arith.constant 10 : index
    %c0_337 = arith.constant 0 : index
    %917 = vector.load %arg20[%c10_336, %c0_337] : memref<25x16xbf16, #tpu.memory_space<vmem>>, vector<1x16xbf16>
    %918 = vector.broadcast %917 : vector<1x16xbf16> to vector<16x16xbf16>
    %919 = arith.mulf %916, %918 : vector<16x16xbf16>
    %cst_338 = arith.constant 0.000000e+00 : f32
    %920 = vector.broadcast %cst_338 : f32 to vector<16x1xf32>
    %921 = vector.extract_strided_slice %842 {offsets = [0, 0], sizes = [16, 15], strides = [1, 1]} : vector<16x16xf32> to vector<16x15xf32>
    %922 = tpu.concatenate %920, %921 in 1 : vector<16x1xf32>, vector<16x15xf32> -> vector<16x16xf32>
    %923 = arith.truncf %922 : vector<16x16xf32> to vector<16x16xbf16>
    %c11_339 = arith.constant 11 : index
    %c0_340 = arith.constant 0 : index
    %924 = vector.load %arg20[%c11_339, %c0_340] : memref<25x16xbf16, #tpu.memory_space<vmem>>, vector<1x16xbf16>
    %925 = vector.broadcast %924 : vector<1x16xbf16> to vector<16x16xbf16>
    %926 = arith.mulf %923, %925 : vector<16x16xbf16>
    %927 = arith.truncf %842 : vector<16x16xf32> to vector<16x16xbf16>
    %c12_341 = arith.constant 12 : index
    %c0_342 = arith.constant 0 : index
    %928 = vector.load %arg20[%c12_341, %c0_342] : memref<25x16xbf16, #tpu.memory_space<vmem>>, vector<1x16xbf16>
    %929 = vector.broadcast %928 : vector<1x16xbf16> to vector<16x16xbf16>
    %930 = arith.mulf %927, %929 : vector<16x16xbf16>
    %cst_343 = arith.constant 0.000000e+00 : f32
    %931 = vector.broadcast %cst_343 : f32 to vector<16x1xf32>
    %932 = vector.extract_strided_slice %842 {offsets = [0, 1], sizes = [16, 15], strides = [1, 1]} : vector<16x16xf32> to vector<16x15xf32>
    %933 = tpu.concatenate %932, %931 in 1 : vector<16x15xf32>, vector<16x1xf32> -> vector<16x16xf32>
    %934 = arith.truncf %933 : vector<16x16xf32> to vector<16x16xbf16>
    %c13_344 = arith.constant 13 : index
    %c0_345 = arith.constant 0 : index
    %935 = vector.load %arg20[%c13_344, %c0_345] : memref<25x16xbf16, #tpu.memory_space<vmem>>, vector<1x16xbf16>
    %936 = vector.broadcast %935 : vector<1x16xbf16> to vector<16x16xbf16>
    %937 = arith.mulf %934, %936 : vector<16x16xbf16>
    %cst_346 = arith.constant 0.000000e+00 : f32
    %938 = vector.broadcast %cst_346 : f32 to vector<16x2xf32>
    %939 = vector.extract_strided_slice %842 {offsets = [0, 2], sizes = [16, 14], strides = [1, 1]} : vector<16x16xf32> to vector<16x14xf32>
    %940 = tpu.concatenate %939, %938 in 1 : vector<16x14xf32>, vector<16x2xf32> -> vector<16x16xf32>
    %941 = arith.truncf %940 : vector<16x16xf32> to vector<16x16xbf16>
    %c14_347 = arith.constant 14 : index
    %c0_348 = arith.constant 0 : index
    %942 = vector.load %arg20[%c14_347, %c0_348] : memref<25x16xbf16, #tpu.memory_space<vmem>>, vector<1x16xbf16>
    %943 = vector.broadcast %942 : vector<1x16xbf16> to vector<16x16xbf16>
    %944 = arith.mulf %941, %943 : vector<16x16xbf16>
    %cst_349 = arith.constant 0.000000e+00 : f32
    %945 = vector.broadcast %cst_349 : f32 to vector<16x2xf32>
    %946 = vector.extract_strided_slice %842 {offsets = [0, 2], sizes = [16, 14], strides = [1, 1]} : vector<16x16xf32> to vector<16x14xf32>
    %947 = tpu.concatenate %946, %945 in 1 : vector<16x14xf32>, vector<16x2xf32> -> vector<16x16xf32>
    %948 = arith.truncf %947 : vector<16x16xf32> to vector<16x16xbf16>
    %c15_350 = arith.constant 15 : index
    %c0_351 = arith.constant 0 : index
    %949 = vector.load %arg20[%c15_350, %c0_351] : memref<25x16xbf16, #tpu.memory_space<vmem>>, vector<1x16xbf16>
    %950 = vector.broadcast %949 : vector<1x16xbf16> to vector<16x16xbf16>
    %951 = arith.mulf %948, %950 : vector<16x16xbf16>
    %cst_352 = arith.constant 0.000000e+00 : f32
    %952 = vector.broadcast %cst_352 : f32 to vector<16x3xf32>
    %953 = vector.extract_strided_slice %842 {offsets = [0, 3], sizes = [16, 13], strides = [1, 1]} : vector<16x16xf32> to vector<16x13xf32>
    %954 = tpu.concatenate %953, %952 in 1 : vector<16x13xf32>, vector<16x3xf32> -> vector<16x16xf32>
    %955 = arith.truncf %954 : vector<16x16xf32> to vector<16x16xbf16>
    %c16_353 = arith.constant 16 : index
    %c0_354 = arith.constant 0 : index
    %956 = vector.load %arg20[%c16_353, %c0_354] : memref<25x16xbf16, #tpu.memory_space<vmem>>, vector<1x16xbf16>
    %957 = vector.broadcast %956 : vector<1x16xbf16> to vector<16x16xbf16>
    %958 = arith.mulf %955, %957 : vector<16x16xbf16>
    %cst_355 = arith.constant 0.000000e+00 : f32
    %959 = vector.broadcast %cst_355 : f32 to vector<16x4xf32>
    %960 = vector.extract_strided_slice %842 {offsets = [0, 4], sizes = [16, 12], strides = [1, 1]} : vector<16x16xf32> to vector<16x12xf32>
    %961 = tpu.concatenate %960, %959 in 1 : vector<16x12xf32>, vector<16x4xf32> -> vector<16x16xf32>
    %962 = arith.truncf %961 : vector<16x16xf32> to vector<16x16xbf16>
    %c17_356 = arith.constant 17 : index
    %c0_357 = arith.constant 0 : index
    %963 = vector.load %arg20[%c17_356, %c0_357] : memref<25x16xbf16, #tpu.memory_space<vmem>>, vector<1x16xbf16>
    %964 = vector.broadcast %963 : vector<1x16xbf16> to vector<16x16xbf16>
    %965 = arith.mulf %962, %964 : vector<16x16xbf16>
    %cst_358 = arith.constant 0.000000e+00 : f32
    %966 = vector.broadcast %cst_358 : f32 to vector<16x5xf32>
    %967 = vector.extract_strided_slice %842 {offsets = [0, 5], sizes = [16, 11], strides = [1, 1]} : vector<16x16xf32> to vector<16x11xf32>
    %968 = tpu.concatenate %967, %966 in 1 : vector<16x11xf32>, vector<16x5xf32> -> vector<16x16xf32>
    %969 = arith.truncf %968 : vector<16x16xf32> to vector<16x16xbf16>
    %c18_359 = arith.constant 18 : index
    %c0_360 = arith.constant 0 : index
    %970 = vector.load %arg20[%c18_359, %c0_360] : memref<25x16xbf16, #tpu.memory_space<vmem>>, vector<1x16xbf16>
    %971 = vector.broadcast %970 : vector<1x16xbf16> to vector<16x16xbf16>
    %972 = arith.mulf %969, %971 : vector<16x16xbf16>
    %cst_361 = arith.constant 0.000000e+00 : f32
    %973 = vector.broadcast %cst_361 : f32 to vector<16x6xf32>
    %974 = vector.extract_strided_slice %842 {offsets = [0, 6], sizes = [16, 10], strides = [1, 1]} : vector<16x16xf32> to vector<16x10xf32>
    %975 = tpu.concatenate %974, %973 in 1 : vector<16x10xf32>, vector<16x6xf32> -> vector<16x16xf32>
    %976 = arith.truncf %975 : vector<16x16xf32> to vector<16x16xbf16>
    %c19_362 = arith.constant 19 : index
    %c0_363 = arith.constant 0 : index
    %977 = vector.load %arg20[%c19_362, %c0_363] : memref<25x16xbf16, #tpu.memory_space<vmem>>, vector<1x16xbf16>
    %978 = vector.broadcast %977 : vector<1x16xbf16> to vector<16x16xbf16>
    %979 = arith.mulf %976, %978 : vector<16x16xbf16>
    %cst_364 = arith.constant 0.000000e+00 : f32
    %980 = vector.broadcast %cst_364 : f32 to vector<16x6xf32>
    %981 = vector.extract_strided_slice %842 {offsets = [0, 6], sizes = [16, 10], strides = [1, 1]} : vector<16x16xf32> to vector<16x10xf32>
    %982 = tpu.concatenate %981, %980 in 1 : vector<16x10xf32>, vector<16x6xf32> -> vector<16x16xf32>
    %983 = arith.truncf %982 : vector<16x16xf32> to vector<16x16xbf16>
    %c20_365 = arith.constant 20 : index
    %c0_366 = arith.constant 0 : index
    %984 = vector.load %arg20[%c20_365, %c0_366] : memref<25x16xbf16, #tpu.memory_space<vmem>>, vector<1x16xbf16>
    %985 = vector.broadcast %984 : vector<1x16xbf16> to vector<16x16xbf16>
    %986 = arith.mulf %983, %985 : vector<16x16xbf16>
    %cst_367 = arith.constant 0.000000e+00 : f32
    %987 = vector.broadcast %cst_367 : f32 to vector<16x7xf32>
    %988 = vector.extract_strided_slice %842 {offsets = [0, 7], sizes = [16, 9], strides = [1, 1]} : vector<16x16xf32> to vector<16x9xf32>
    %989 = tpu.concatenate %988, %987 in 1 : vector<16x9xf32>, vector<16x7xf32> -> vector<16x16xf32>
    %990 = arith.truncf %989 : vector<16x16xf32> to vector<16x16xbf16>
    %c21_368 = arith.constant 21 : index
    %c0_369 = arith.constant 0 : index
    %991 = vector.load %arg20[%c21_368, %c0_369] : memref<25x16xbf16, #tpu.memory_space<vmem>>, vector<1x16xbf16>
    %992 = vector.broadcast %991 : vector<1x16xbf16> to vector<16x16xbf16>
    %993 = arith.mulf %990, %992 : vector<16x16xbf16>
    %cst_370 = arith.constant 0.000000e+00 : f32
    %994 = vector.broadcast %cst_370 : f32 to vector<16x8xf32>
    %995 = vector.extract_strided_slice %842 {offsets = [0, 8], sizes = [16, 8], strides = [1, 1]} : vector<16x16xf32> to vector<16x8xf32>
    %996 = tpu.concatenate %995, %994 in 1 : vector<16x8xf32>, vector<16x8xf32> -> vector<16x16xf32>
    %997 = arith.truncf %996 : vector<16x16xf32> to vector<16x16xbf16>
    %c22_371 = arith.constant 22 : index
    %c0_372 = arith.constant 0 : index
    %998 = vector.load %arg20[%c22_371, %c0_372] : memref<25x16xbf16, #tpu.memory_space<vmem>>, vector<1x16xbf16>
    %999 = vector.broadcast %998 : vector<1x16xbf16> to vector<16x16xbf16>
    %1000 = arith.mulf %997, %999 : vector<16x16xbf16>
    %cst_373 = arith.constant 0.000000e+00 : f32
    %1001 = vector.broadcast %cst_373 : f32 to vector<16x9xf32>
    %1002 = vector.extract_strided_slice %842 {offsets = [0, 9], sizes = [16, 7], strides = [1, 1]} : vector<16x16xf32> to vector<16x7xf32>
    %1003 = tpu.concatenate %1002, %1001 in 1 : vector<16x7xf32>, vector<16x9xf32> -> vector<16x16xf32>
    %1004 = arith.truncf %1003 : vector<16x16xf32> to vector<16x16xbf16>
    %c23_374 = arith.constant 23 : index
    %c0_375 = arith.constant 0 : index
    %1005 = vector.load %arg20[%c23_374, %c0_375] : memref<25x16xbf16, #tpu.memory_space<vmem>>, vector<1x16xbf16>
    %1006 = vector.broadcast %1005 : vector<1x16xbf16> to vector<16x16xbf16>
    %1007 = arith.mulf %1004, %1006 : vector<16x16xbf16>
    %cst_376 = arith.constant 0.000000e+00 : f32
    %1008 = vector.broadcast %cst_376 : f32 to vector<16x10xf32>
    %1009 = vector.extract_strided_slice %842 {offsets = [0, 10], sizes = [16, 6], strides = [1, 1]} : vector<16x16xf32> to vector<16x6xf32>
    %1010 = tpu.concatenate %1009, %1008 in 1 : vector<16x6xf32>, vector<16x10xf32> -> vector<16x16xf32>
    %1011 = arith.truncf %1010 : vector<16x16xf32> to vector<16x16xbf16>
    %c24_377 = arith.constant 24 : index
    %c0_378 = arith.constant 0 : index
    %1012 = vector.load %arg20[%c24_377, %c0_378] : memref<25x16xbf16, #tpu.memory_space<vmem>>, vector<1x16xbf16>
    %1013 = vector.broadcast %1012 : vector<1x16xbf16> to vector<16x16xbf16>
    %1014 = arith.mulf %1011, %1013 : vector<16x16xbf16>
    %1015 = tpu.concatenate %849, %856, %863, %870, %877, %884, %891, %898, %905, %912, %919, %926, %930, %937, %944, %951 in 0 : vector<16x16xbf16>, vector<16x16xbf16>, vector<16x16xbf16>, vector<16x16xbf16>, vector<16x16xbf16>, vector<16x16xbf16>, vector<16x16xbf16>, vector<16x16xbf16>, vector<16x16xbf16>, vector<16x16xbf16>, vector<16x16xbf16>, vector<16x16xbf16>, vector<16x16xbf16>, vector<16x16xbf16>, vector<16x16xbf16>, vector<16x16xbf16> -> vector<256x16xbf16>
    %1016 = tpu.concatenate %958, %965, %972, %979, %986, %993, %1000, %1007, %1014 in 0 : vector<16x16xbf16>, vector<16x16xbf16>, vector<16x16xbf16>, vector<16x16xbf16>, vector<16x16xbf16>, vector<16x16xbf16>, vector<16x16xbf16>, vector<16x16xbf16>, vector<16x16xbf16> -> vector<144x16xbf16>
    %1017 = tpu.concatenate %1015, %1016 in 0 : vector<256x16xbf16>, vector<144x16xbf16> -> vector<400x16xbf16>
    %c0_379 = arith.constant 0 : index
    %c0_380 = arith.constant 0 : index
    %1018 = vector.load %arg6[%c0_379, %c0_380] : memref<16x400xbf16, #tpu.memory_space<vmem>>, vector<16x400xbf16>
    %cst_381 = arith.constant dense<0.000000e+00> : vector<16x16xf32>
    %1019 = tpu.matmul %1018, %1017, %cst_381 {dimension_numbers = #tpu.dot_dimension_numbers<[1], [0], [0], [1], [0, 0, 1, 1], [], []>} : vector<16x400xbf16>, vector<400x16xbf16>, vector<16x16xf32> -> vector<16x16xf32>
    %c0_382 = arith.constant 0 : index
    %c0_383 = arith.constant 0 : index
    %1020 = vector.load %arg14[%c0_382, %c0_383] : memref<16x1xf32, #tpu.memory_space<vmem>>, vector<16x1xf32>
    %1021 = vector.broadcast %1020 : vector<16x1xf32> to vector<16x16xf32>
    %1022 = arith.addf %1019, %1021 : vector<16x16xf32>
    %cst_384 = arith.constant 0.000000e+00 : f32
    %1023 = vector.broadcast %cst_384 : f32 to vector<16x10xf32>
    %1024 = vector.extract_strided_slice %1022 {offsets = [0, 0], sizes = [16, 6], strides = [1, 1]} : vector<16x16xf32> to vector<16x6xf32>
    %1025 = tpu.concatenate %1023, %1024 in 1 : vector<16x10xf32>, vector<16x6xf32> -> vector<16x16xf32>
    %1026 = arith.truncf %1025 : vector<16x16xf32> to vector<16x16xbf16>
    %c0_385 = arith.constant 0 : index
    %c0_386 = arith.constant 0 : index
    %1027 = vector.load %arg20[%c0_385, %c0_386] : memref<25x16xbf16, #tpu.memory_space<vmem>>, vector<1x16xbf16>
    %1028 = vector.broadcast %1027 : vector<1x16xbf16> to vector<16x16xbf16>
    %1029 = arith.mulf %1026, %1028 : vector<16x16xbf16>
    %cst_387 = arith.constant 0.000000e+00 : f32
    %1030 = vector.broadcast %cst_387 : f32 to vector<16x9xf32>
    %1031 = vector.extract_strided_slice %1022 {offsets = [0, 0], sizes = [16, 7], strides = [1, 1]} : vector<16x16xf32> to vector<16x7xf32>
    %1032 = tpu.concatenate %1030, %1031 in 1 : vector<16x9xf32>, vector<16x7xf32> -> vector<16x16xf32>
    %1033 = arith.truncf %1032 : vector<16x16xf32> to vector<16x16xbf16>
    %c1_388 = arith.constant 1 : index
    %c0_389 = arith.constant 0 : index
    %1034 = vector.load %arg20[%c1_388, %c0_389] : memref<25x16xbf16, #tpu.memory_space<vmem>>, vector<1x16xbf16>
    %1035 = vector.broadcast %1034 : vector<1x16xbf16> to vector<16x16xbf16>
    %1036 = arith.mulf %1033, %1035 : vector<16x16xbf16>
    %cst_390 = arith.constant 0.000000e+00 : f32
    %1037 = vector.broadcast %cst_390 : f32 to vector<16x8xf32>
    %1038 = vector.extract_strided_slice %1022 {offsets = [0, 0], sizes = [16, 8], strides = [1, 1]} : vector<16x16xf32> to vector<16x8xf32>
    %1039 = tpu.concatenate %1037, %1038 in 1 : vector<16x8xf32>, vector<16x8xf32> -> vector<16x16xf32>
    %1040 = arith.truncf %1039 : vector<16x16xf32> to vector<16x16xbf16>
    %c2_391 = arith.constant 2 : index
    %c0_392 = arith.constant 0 : index
    %1041 = vector.load %arg20[%c2_391, %c0_392] : memref<25x16xbf16, #tpu.memory_space<vmem>>, vector<1x16xbf16>
    %1042 = vector.broadcast %1041 : vector<1x16xbf16> to vector<16x16xbf16>
    %1043 = arith.mulf %1040, %1042 : vector<16x16xbf16>
    %cst_393 = arith.constant 0.000000e+00 : f32
    %1044 = vector.broadcast %cst_393 : f32 to vector<16x7xf32>
    %1045 = vector.extract_strided_slice %1022 {offsets = [0, 0], sizes = [16, 9], strides = [1, 1]} : vector<16x16xf32> to vector<16x9xf32>
    %1046 = tpu.concatenate %1044, %1045 in 1 : vector<16x7xf32>, vector<16x9xf32> -> vector<16x16xf32>
    %1047 = arith.truncf %1046 : vector<16x16xf32> to vector<16x16xbf16>
    %c3_394 = arith.constant 3 : index
    %c0_395 = arith.constant 0 : index
    %1048 = vector.load %arg20[%c3_394, %c0_395] : memref<25x16xbf16, #tpu.memory_space<vmem>>, vector<1x16xbf16>
    %1049 = vector.broadcast %1048 : vector<1x16xbf16> to vector<16x16xbf16>
    %1050 = arith.mulf %1047, %1049 : vector<16x16xbf16>
    %cst_396 = arith.constant 0.000000e+00 : f32
    %1051 = vector.broadcast %cst_396 : f32 to vector<16x6xf32>
    %1052 = vector.extract_strided_slice %1022 {offsets = [0, 0], sizes = [16, 10], strides = [1, 1]} : vector<16x16xf32> to vector<16x10xf32>
    %1053 = tpu.concatenate %1051, %1052 in 1 : vector<16x6xf32>, vector<16x10xf32> -> vector<16x16xf32>
    %1054 = arith.truncf %1053 : vector<16x16xf32> to vector<16x16xbf16>
    %c4_397 = arith.constant 4 : index
    %c0_398 = arith.constant 0 : index
    %1055 = vector.load %arg20[%c4_397, %c0_398] : memref<25x16xbf16, #tpu.memory_space<vmem>>, vector<1x16xbf16>
    %1056 = vector.broadcast %1055 : vector<1x16xbf16> to vector<16x16xbf16>
    %1057 = arith.mulf %1054, %1056 : vector<16x16xbf16>
    %cst_399 = arith.constant 0.000000e+00 : f32
    %1058 = vector.broadcast %cst_399 : f32 to vector<16x6xf32>
    %1059 = vector.extract_strided_slice %1022 {offsets = [0, 0], sizes = [16, 10], strides = [1, 1]} : vector<16x16xf32> to vector<16x10xf32>
    %1060 = tpu.concatenate %1058, %1059 in 1 : vector<16x6xf32>, vector<16x10xf32> -> vector<16x16xf32>
    %1061 = arith.truncf %1060 : vector<16x16xf32> to vector<16x16xbf16>
    %c5_400 = arith.constant 5 : index
    %c0_401 = arith.constant 0 : index
    %1062 = vector.load %arg20[%c5_400, %c0_401] : memref<25x16xbf16, #tpu.memory_space<vmem>>, vector<1x16xbf16>
    %1063 = vector.broadcast %1062 : vector<1x16xbf16> to vector<16x16xbf16>
    %1064 = arith.mulf %1061, %1063 : vector<16x16xbf16>
    %cst_402 = arith.constant 0.000000e+00 : f32
    %1065 = vector.broadcast %cst_402 : f32 to vector<16x5xf32>
    %1066 = vector.extract_strided_slice %1022 {offsets = [0, 0], sizes = [16, 11], strides = [1, 1]} : vector<16x16xf32> to vector<16x11xf32>
    %1067 = tpu.concatenate %1065, %1066 in 1 : vector<16x5xf32>, vector<16x11xf32> -> vector<16x16xf32>
    %1068 = arith.truncf %1067 : vector<16x16xf32> to vector<16x16xbf16>
    %c6_403 = arith.constant 6 : index
    %c0_404 = arith.constant 0 : index
    %1069 = vector.load %arg20[%c6_403, %c0_404] : memref<25x16xbf16, #tpu.memory_space<vmem>>, vector<1x16xbf16>
    %1070 = vector.broadcast %1069 : vector<1x16xbf16> to vector<16x16xbf16>
    %1071 = arith.mulf %1068, %1070 : vector<16x16xbf16>
    %cst_405 = arith.constant 0.000000e+00 : f32
    %1072 = vector.broadcast %cst_405 : f32 to vector<16x4xf32>
    %1073 = vector.extract_strided_slice %1022 {offsets = [0, 0], sizes = [16, 12], strides = [1, 1]} : vector<16x16xf32> to vector<16x12xf32>
    %1074 = tpu.concatenate %1072, %1073 in 1 : vector<16x4xf32>, vector<16x12xf32> -> vector<16x16xf32>
    %1075 = arith.truncf %1074 : vector<16x16xf32> to vector<16x16xbf16>
    %c7_406 = arith.constant 7 : index
    %c0_407 = arith.constant 0 : index
    %1076 = vector.load %arg20[%c7_406, %c0_407] : memref<25x16xbf16, #tpu.memory_space<vmem>>, vector<1x16xbf16>
    %1077 = vector.broadcast %1076 : vector<1x16xbf16> to vector<16x16xbf16>
    %1078 = arith.mulf %1075, %1077 : vector<16x16xbf16>
    %cst_408 = arith.constant 0.000000e+00 : f32
    %1079 = vector.broadcast %cst_408 : f32 to vector<16x3xf32>
    %1080 = vector.extract_strided_slice %1022 {offsets = [0, 0], sizes = [16, 13], strides = [1, 1]} : vector<16x16xf32> to vector<16x13xf32>
    %1081 = tpu.concatenate %1079, %1080 in 1 : vector<16x3xf32>, vector<16x13xf32> -> vector<16x16xf32>
    %1082 = arith.truncf %1081 : vector<16x16xf32> to vector<16x16xbf16>
    %c8_409 = arith.constant 8 : index
    %c0_410 = arith.constant 0 : index
    %1083 = vector.load %arg20[%c8_409, %c0_410] : memref<25x16xbf16, #tpu.memory_space<vmem>>, vector<1x16xbf16>
    %1084 = vector.broadcast %1083 : vector<1x16xbf16> to vector<16x16xbf16>
    %1085 = arith.mulf %1082, %1084 : vector<16x16xbf16>
    %cst_411 = arith.constant 0.000000e+00 : f32
    %1086 = vector.broadcast %cst_411 : f32 to vector<16x2xf32>
    %1087 = vector.extract_strided_slice %1022 {offsets = [0, 0], sizes = [16, 14], strides = [1, 1]} : vector<16x16xf32> to vector<16x14xf32>
    %1088 = tpu.concatenate %1086, %1087 in 1 : vector<16x2xf32>, vector<16x14xf32> -> vector<16x16xf32>
    %1089 = arith.truncf %1088 : vector<16x16xf32> to vector<16x16xbf16>
    %c9_412 = arith.constant 9 : index
    %c0_413 = arith.constant 0 : index
    %1090 = vector.load %arg20[%c9_412, %c0_413] : memref<25x16xbf16, #tpu.memory_space<vmem>>, vector<1x16xbf16>
    %1091 = vector.broadcast %1090 : vector<1x16xbf16> to vector<16x16xbf16>
    %1092 = arith.mulf %1089, %1091 : vector<16x16xbf16>
    %cst_414 = arith.constant 0.000000e+00 : f32
    %1093 = vector.broadcast %cst_414 : f32 to vector<16x2xf32>
    %1094 = vector.extract_strided_slice %1022 {offsets = [0, 0], sizes = [16, 14], strides = [1, 1]} : vector<16x16xf32> to vector<16x14xf32>
    %1095 = tpu.concatenate %1093, %1094 in 1 : vector<16x2xf32>, vector<16x14xf32> -> vector<16x16xf32>
    %1096 = arith.truncf %1095 : vector<16x16xf32> to vector<16x16xbf16>
    %c10_415 = arith.constant 10 : index
    %c0_416 = arith.constant 0 : index
    %1097 = vector.load %arg20[%c10_415, %c0_416] : memref<25x16xbf16, #tpu.memory_space<vmem>>, vector<1x16xbf16>
    %1098 = vector.broadcast %1097 : vector<1x16xbf16> to vector<16x16xbf16>
    %1099 = arith.mulf %1096, %1098 : vector<16x16xbf16>
    %cst_417 = arith.constant 0.000000e+00 : f32
    %1100 = vector.broadcast %cst_417 : f32 to vector<16x1xf32>
    %1101 = vector.extract_strided_slice %1022 {offsets = [0, 0], sizes = [16, 15], strides = [1, 1]} : vector<16x16xf32> to vector<16x15xf32>
    %1102 = tpu.concatenate %1100, %1101 in 1 : vector<16x1xf32>, vector<16x15xf32> -> vector<16x16xf32>
    %1103 = arith.truncf %1102 : vector<16x16xf32> to vector<16x16xbf16>
    %c11_418 = arith.constant 11 : index
    %c0_419 = arith.constant 0 : index
    %1104 = vector.load %arg20[%c11_418, %c0_419] : memref<25x16xbf16, #tpu.memory_space<vmem>>, vector<1x16xbf16>
    %1105 = vector.broadcast %1104 : vector<1x16xbf16> to vector<16x16xbf16>
    %1106 = arith.mulf %1103, %1105 : vector<16x16xbf16>
    %1107 = arith.truncf %1022 : vector<16x16xf32> to vector<16x16xbf16>
    %c12_420 = arith.constant 12 : index
    %c0_421 = arith.constant 0 : index
    %1108 = vector.load %arg20[%c12_420, %c0_421] : memref<25x16xbf16, #tpu.memory_space<vmem>>, vector<1x16xbf16>
    %1109 = vector.broadcast %1108 : vector<1x16xbf16> to vector<16x16xbf16>
    %1110 = arith.mulf %1107, %1109 : vector<16x16xbf16>
    %cst_422 = arith.constant 0.000000e+00 : f32
    %1111 = vector.broadcast %cst_422 : f32 to vector<16x1xf32>
    %1112 = vector.extract_strided_slice %1022 {offsets = [0, 1], sizes = [16, 15], strides = [1, 1]} : vector<16x16xf32> to vector<16x15xf32>
    %1113 = tpu.concatenate %1112, %1111 in 1 : vector<16x15xf32>, vector<16x1xf32> -> vector<16x16xf32>
    %1114 = arith.truncf %1113 : vector<16x16xf32> to vector<16x16xbf16>
    %c13_423 = arith.constant 13 : index
    %c0_424 = arith.constant 0 : index
    %1115 = vector.load %arg20[%c13_423, %c0_424] : memref<25x16xbf16, #tpu.memory_space<vmem>>, vector<1x16xbf16>
    %1116 = vector.broadcast %1115 : vector<1x16xbf16> to vector<16x16xbf16>
    %1117 = arith.mulf %1114, %1116 : vector<16x16xbf16>
    %cst_425 = arith.constant 0.000000e+00 : f32
    %1118 = vector.broadcast %cst_425 : f32 to vector<16x2xf32>
    %1119 = vector.extract_strided_slice %1022 {offsets = [0, 2], sizes = [16, 14], strides = [1, 1]} : vector<16x16xf32> to vector<16x14xf32>
    %1120 = tpu.concatenate %1119, %1118 in 1 : vector<16x14xf32>, vector<16x2xf32> -> vector<16x16xf32>
    %1121 = arith.truncf %1120 : vector<16x16xf32> to vector<16x16xbf16>
    %c14_426 = arith.constant 14 : index
    %c0_427 = arith.constant 0 : index
    %1122 = vector.load %arg20[%c14_426, %c0_427] : memref<25x16xbf16, #tpu.memory_space<vmem>>, vector<1x16xbf16>
    %1123 = vector.broadcast %1122 : vector<1x16xbf16> to vector<16x16xbf16>
    %1124 = arith.mulf %1121, %1123 : vector<16x16xbf16>
    %cst_428 = arith.constant 0.000000e+00 : f32
    %1125 = vector.broadcast %cst_428 : f32 to vector<16x2xf32>
    %1126 = vector.extract_strided_slice %1022 {offsets = [0, 2], sizes = [16, 14], strides = [1, 1]} : vector<16x16xf32> to vector<16x14xf32>
    %1127 = tpu.concatenate %1126, %1125 in 1 : vector<16x14xf32>, vector<16x2xf32> -> vector<16x16xf32>
    %1128 = arith.truncf %1127 : vector<16x16xf32> to vector<16x16xbf16>
    %c15_429 = arith.constant 15 : index
    %c0_430 = arith.constant 0 : index
    %1129 = vector.load %arg20[%c15_429, %c0_430] : memref<25x16xbf16, #tpu.memory_space<vmem>>, vector<1x16xbf16>
    %1130 = vector.broadcast %1129 : vector<1x16xbf16> to vector<16x16xbf16>
    %1131 = arith.mulf %1128, %1130 : vector<16x16xbf16>
    %cst_431 = arith.constant 0.000000e+00 : f32
    %1132 = vector.broadcast %cst_431 : f32 to vector<16x3xf32>
    %1133 = vector.extract_strided_slice %1022 {offsets = [0, 3], sizes = [16, 13], strides = [1, 1]} : vector<16x16xf32> to vector<16x13xf32>
    %1134 = tpu.concatenate %1133, %1132 in 1 : vector<16x13xf32>, vector<16x3xf32> -> vector<16x16xf32>
    %1135 = arith.truncf %1134 : vector<16x16xf32> to vector<16x16xbf16>
    %c16_432 = arith.constant 16 : index
    %c0_433 = arith.constant 0 : index
    %1136 = vector.load %arg20[%c16_432, %c0_433] : memref<25x16xbf16, #tpu.memory_space<vmem>>, vector<1x16xbf16>
    %1137 = vector.broadcast %1136 : vector<1x16xbf16> to vector<16x16xbf16>
    %1138 = arith.mulf %1135, %1137 : vector<16x16xbf16>
    %cst_434 = arith.constant 0.000000e+00 : f32
    %1139 = vector.broadcast %cst_434 : f32 to vector<16x4xf32>
    %1140 = vector.extract_strided_slice %1022 {offsets = [0, 4], sizes = [16, 12], strides = [1, 1]} : vector<16x16xf32> to vector<16x12xf32>
    %1141 = tpu.concatenate %1140, %1139 in 1 : vector<16x12xf32>, vector<16x4xf32> -> vector<16x16xf32>
    %1142 = arith.truncf %1141 : vector<16x16xf32> to vector<16x16xbf16>
    %c17_435 = arith.constant 17 : index
    %c0_436 = arith.constant 0 : index
    %1143 = vector.load %arg20[%c17_435, %c0_436] : memref<25x16xbf16, #tpu.memory_space<vmem>>, vector<1x16xbf16>
    %1144 = vector.broadcast %1143 : vector<1x16xbf16> to vector<16x16xbf16>
    %1145 = arith.mulf %1142, %1144 : vector<16x16xbf16>
    %cst_437 = arith.constant 0.000000e+00 : f32
    %1146 = vector.broadcast %cst_437 : f32 to vector<16x5xf32>
    %1147 = vector.extract_strided_slice %1022 {offsets = [0, 5], sizes = [16, 11], strides = [1, 1]} : vector<16x16xf32> to vector<16x11xf32>
    %1148 = tpu.concatenate %1147, %1146 in 1 : vector<16x11xf32>, vector<16x5xf32> -> vector<16x16xf32>
    %1149 = arith.truncf %1148 : vector<16x16xf32> to vector<16x16xbf16>
    %c18_438 = arith.constant 18 : index
    %c0_439 = arith.constant 0 : index
    %1150 = vector.load %arg20[%c18_438, %c0_439] : memref<25x16xbf16, #tpu.memory_space<vmem>>, vector<1x16xbf16>
    %1151 = vector.broadcast %1150 : vector<1x16xbf16> to vector<16x16xbf16>
    %1152 = arith.mulf %1149, %1151 : vector<16x16xbf16>
    %cst_440 = arith.constant 0.000000e+00 : f32
    %1153 = vector.broadcast %cst_440 : f32 to vector<16x6xf32>
    %1154 = vector.extract_strided_slice %1022 {offsets = [0, 6], sizes = [16, 10], strides = [1, 1]} : vector<16x16xf32> to vector<16x10xf32>
    %1155 = tpu.concatenate %1154, %1153 in 1 : vector<16x10xf32>, vector<16x6xf32> -> vector<16x16xf32>
    %1156 = arith.truncf %1155 : vector<16x16xf32> to vector<16x16xbf16>
    %c19_441 = arith.constant 19 : index
    %c0_442 = arith.constant 0 : index
    %1157 = vector.load %arg20[%c19_441, %c0_442] : memref<25x16xbf16, #tpu.memory_space<vmem>>, vector<1x16xbf16>
    %1158 = vector.broadcast %1157 : vector<1x16xbf16> to vector<16x16xbf16>
    %1159 = arith.mulf %1156, %1158 : vector<16x16xbf16>
    %cst_443 = arith.constant 0.000000e+00 : f32
    %1160 = vector.broadcast %cst_443 : f32 to vector<16x6xf32>
    %1161 = vector.extract_strided_slice %1022 {offsets = [0, 6], sizes = [16, 10], strides = [1, 1]} : vector<16x16xf32> to vector<16x10xf32>
    %1162 = tpu.concatenate %1161, %1160 in 1 : vector<16x10xf32>, vector<16x6xf32> -> vector<16x16xf32>
    %1163 = arith.truncf %1162 : vector<16x16xf32> to vector<16x16xbf16>
    %c20_444 = arith.constant 20 : index
    %c0_445 = arith.constant 0 : index
    %1164 = vector.load %arg20[%c20_444, %c0_445] : memref<25x16xbf16, #tpu.memory_space<vmem>>, vector<1x16xbf16>
    %1165 = vector.broadcast %1164 : vector<1x16xbf16> to vector<16x16xbf16>
    %1166 = arith.mulf %1163, %1165 : vector<16x16xbf16>
    %cst_446 = arith.constant 0.000000e+00 : f32
    %1167 = vector.broadcast %cst_446 : f32 to vector<16x7xf32>
    %1168 = vector.extract_strided_slice %1022 {offsets = [0, 7], sizes = [16, 9], strides = [1, 1]} : vector<16x16xf32> to vector<16x9xf32>
    %1169 = tpu.concatenate %1168, %1167 in 1 : vector<16x9xf32>, vector<16x7xf32> -> vector<16x16xf32>
    %1170 = arith.truncf %1169 : vector<16x16xf32> to vector<16x16xbf16>
    %c21_447 = arith.constant 21 : index
    %c0_448 = arith.constant 0 : index
    %1171 = vector.load %arg20[%c21_447, %c0_448] : memref<25x16xbf16, #tpu.memory_space<vmem>>, vector<1x16xbf16>
    %1172 = vector.broadcast %1171 : vector<1x16xbf16> to vector<16x16xbf16>
    %1173 = arith.mulf %1170, %1172 : vector<16x16xbf16>
    %cst_449 = arith.constant 0.000000e+00 : f32
    %1174 = vector.broadcast %cst_449 : f32 to vector<16x8xf32>
    %1175 = vector.extract_strided_slice %1022 {offsets = [0, 8], sizes = [16, 8], strides = [1, 1]} : vector<16x16xf32> to vector<16x8xf32>
    %1176 = tpu.concatenate %1175, %1174 in 1 : vector<16x8xf32>, vector<16x8xf32> -> vector<16x16xf32>
    %1177 = arith.truncf %1176 : vector<16x16xf32> to vector<16x16xbf16>
    %c22_450 = arith.constant 22 : index
    %c0_451 = arith.constant 0 : index
    %1178 = vector.load %arg20[%c22_450, %c0_451] : memref<25x16xbf16, #tpu.memory_space<vmem>>, vector<1x16xbf16>
    %1179 = vector.broadcast %1178 : vector<1x16xbf16> to vector<16x16xbf16>
    %1180 = arith.mulf %1177, %1179 : vector<16x16xbf16>
    %cst_452 = arith.constant 0.000000e+00 : f32
    %1181 = vector.broadcast %cst_452 : f32 to vector<16x9xf32>
    %1182 = vector.extract_strided_slice %1022 {offsets = [0, 9], sizes = [16, 7], strides = [1, 1]} : vector<16x16xf32> to vector<16x7xf32>
    %1183 = tpu.concatenate %1182, %1181 in 1 : vector<16x7xf32>, vector<16x9xf32> -> vector<16x16xf32>
    %1184 = arith.truncf %1183 : vector<16x16xf32> to vector<16x16xbf16>
    %c23_453 = arith.constant 23 : index
    %c0_454 = arith.constant 0 : index
    %1185 = vector.load %arg20[%c23_453, %c0_454] : memref<25x16xbf16, #tpu.memory_space<vmem>>, vector<1x16xbf16>
    %1186 = vector.broadcast %1185 : vector<1x16xbf16> to vector<16x16xbf16>
    %1187 = arith.mulf %1184, %1186 : vector<16x16xbf16>
    %cst_455 = arith.constant 0.000000e+00 : f32
    %1188 = vector.broadcast %cst_455 : f32 to vector<16x10xf32>
    %1189 = vector.extract_strided_slice %1022 {offsets = [0, 10], sizes = [16, 6], strides = [1, 1]} : vector<16x16xf32> to vector<16x6xf32>
    %1190 = tpu.concatenate %1189, %1188 in 1 : vector<16x6xf32>, vector<16x10xf32> -> vector<16x16xf32>
    %1191 = arith.truncf %1190 : vector<16x16xf32> to vector<16x16xbf16>
    %c24_456 = arith.constant 24 : index
    %c0_457 = arith.constant 0 : index
    %1192 = vector.load %arg20[%c24_456, %c0_457] : memref<25x16xbf16, #tpu.memory_space<vmem>>, vector<1x16xbf16>
    %1193 = vector.broadcast %1192 : vector<1x16xbf16> to vector<16x16xbf16>
    %1194 = arith.mulf %1191, %1193 : vector<16x16xbf16>
    %1195 = tpu.concatenate %1029, %1036, %1043, %1050, %1057, %1064, %1071, %1078, %1085, %1092, %1099, %1106, %1110, %1117, %1124, %1131 in 0 : vector<16x16xbf16>, vector<16x16xbf16>, vector<16x16xbf16>, vector<16x16xbf16>, vector<16x16xbf16>, vector<16x16xbf16>, vector<16x16xbf16>, vector<16x16xbf16>, vector<16x16xbf16>, vector<16x16xbf16>, vector<16x16xbf16>, vector<16x16xbf16>, vector<16x16xbf16>, vector<16x16xbf16>, vector<16x16xbf16>, vector<16x16xbf16> -> vector<256x16xbf16>
    %1196 = tpu.concatenate %1138, %1145, %1152, %1159, %1166, %1173, %1180, %1187, %1194 in 0 : vector<16x16xbf16>, vector<16x16xbf16>, vector<16x16xbf16>, vector<16x16xbf16>, vector<16x16xbf16>, vector<16x16xbf16>, vector<16x16xbf16>, vector<16x16xbf16>, vector<16x16xbf16> -> vector<144x16xbf16>
    %1197 = tpu.concatenate %1195, %1196 in 0 : vector<256x16xbf16>, vector<144x16xbf16> -> vector<400x16xbf16>
    %c0_458 = arith.constant 0 : index
    %c0_459 = arith.constant 0 : index
    %1198 = vector.load %arg7[%c0_458, %c0_459] : memref<16x400xbf16, #tpu.memory_space<vmem>>, vector<16x400xbf16>
    %cst_460 = arith.constant dense<0.000000e+00> : vector<16x16xf32>
    %1199 = tpu.matmul %1198, %1197, %cst_460 {dimension_numbers = #tpu.dot_dimension_numbers<[1], [0], [0], [1], [0, 0, 1, 1], [], []>} : vector<16x400xbf16>, vector<400x16xbf16>, vector<16x16xf32> -> vector<16x16xf32>
    %c0_461 = arith.constant 0 : index
    %c0_462 = arith.constant 0 : index
    %1200 = vector.load %arg15[%c0_461, %c0_462] : memref<16x1xf32, #tpu.memory_space<vmem>>, vector<16x1xf32>
    %1201 = vector.broadcast %1200 : vector<16x1xf32> to vector<16x16xf32>
    %1202 = arith.addf %1199, %1201 : vector<16x16xf32>
    %cst_463 = arith.constant 0.000000e+00 : f32
    %1203 = vector.broadcast %cst_463 : f32 to vector<16x16xf32>
    %1204 = arith.maximumf %1202, %1203 : vector<16x16xf32>
    %cst_464 = arith.constant 0.000000e+00 : f32
    %1205 = vector.broadcast %cst_464 : f32 to vector<16x1xf32>
    %1206 = vector.extract_strided_slice %1204 {offsets = [0, 1], sizes = [16, 15], strides = [1, 1]} : vector<16x16xf32> to vector<16x15xf32>
    %1207 = tpu.concatenate %1206, %1205 in 1 : vector<16x15xf32>, vector<16x1xf32> -> vector<16x16xf32>
    %1208 = arith.maximumf %1204, %1207 : vector<16x16xf32>
    %cst_465 = arith.constant 0.000000e+00 : f32
    %1209 = vector.broadcast %cst_465 : f32 to vector<16x4xf32>
    %1210 = vector.extract_strided_slice %1208 {offsets = [0, 4], sizes = [16, 12], strides = [1, 1]} : vector<16x16xf32> to vector<16x12xf32>
    %1211 = tpu.concatenate %1210, %1209 in 1 : vector<16x12xf32>, vector<16x4xf32> -> vector<16x16xf32>
    %1212 = arith.maximumf %1208, %1211 : vector<16x16xf32>
    %c0_466 = arith.constant 0 : index
    %c0_467 = arith.constant 0 : index
    %1213 = vector.load %arg24[%c0_466, %c0_467] : memref<16x4xf32, #tpu.memory_space<vmem>>, vector<16x4xf32>
    %cst_468 = arith.constant dense<0.000000e+00> : vector<16x4xf32>
    %1214 = tpu.matmul %1212, %1213, %cst_468 {dimension_numbers = #tpu.dot_dimension_numbers<[1], [0], [0], [1], [0, 0, 1, 1], [], []>} : vector<16x16xf32>, vector<16x4xf32>, vector<16x4xf32> -> vector<16x4xf32>
    %cst_469 = arith.constant 0.000000e+00 : f32
    %1215 = vector.broadcast %cst_469 : f32 to vector<16x3xf32>
    %1216 = vector.extract_strided_slice %1214 {offsets = [0, 0], sizes = [16, 1], strides = [1, 1]} : vector<16x4xf32> to vector<16x1xf32>
    %1217 = tpu.concatenate %1215, %1216 in 1 : vector<16x3xf32>, vector<16x1xf32> -> vector<16x4xf32>
    %1218 = arith.truncf %1217 : vector<16x4xf32> to vector<16x4xbf16>
    %c0_470 = arith.constant 0 : index
    %c0_471 = arith.constant 0 : index
    %1219 = vector.load %arg21[%c0_470, %c0_471] : memref<9x4xbf16, #tpu.memory_space<vmem>>, vector<1x4xbf16>
    %1220 = vector.broadcast %1219 : vector<1x4xbf16> to vector<16x4xbf16>
    %1221 = arith.mulf %1218, %1220 : vector<16x4xbf16>
    %cst_472 = arith.constant 0.000000e+00 : f32
    %1222 = vector.broadcast %cst_472 : f32 to vector<16x2xf32>
    %1223 = vector.extract_strided_slice %1214 {offsets = [0, 0], sizes = [16, 2], strides = [1, 1]} : vector<16x4xf32> to vector<16x2xf32>
    %1224 = tpu.concatenate %1222, %1223 in 1 : vector<16x2xf32>, vector<16x2xf32> -> vector<16x4xf32>
    %1225 = arith.truncf %1224 : vector<16x4xf32> to vector<16x4xbf16>
    %c1_473 = arith.constant 1 : index
    %c0_474 = arith.constant 0 : index
    %1226 = vector.load %arg21[%c1_473, %c0_474] : memref<9x4xbf16, #tpu.memory_space<vmem>>, vector<1x4xbf16>
    %1227 = vector.broadcast %1226 : vector<1x4xbf16> to vector<16x4xbf16>
    %1228 = arith.mulf %1225, %1227 : vector<16x4xbf16>
    %cst_475 = arith.constant 0.000000e+00 : f32
    %1229 = vector.broadcast %cst_475 : f32 to vector<16x1xf32>
    %1230 = vector.extract_strided_slice %1214 {offsets = [0, 0], sizes = [16, 3], strides = [1, 1]} : vector<16x4xf32> to vector<16x3xf32>
    %1231 = tpu.concatenate %1229, %1230 in 1 : vector<16x1xf32>, vector<16x3xf32> -> vector<16x4xf32>
    %1232 = arith.truncf %1231 : vector<16x4xf32> to vector<16x4xbf16>
    %c2_476 = arith.constant 2 : index
    %c0_477 = arith.constant 0 : index
    %1233 = vector.load %arg21[%c2_476, %c0_477] : memref<9x4xbf16, #tpu.memory_space<vmem>>, vector<1x4xbf16>
    %1234 = vector.broadcast %1233 : vector<1x4xbf16> to vector<16x4xbf16>
    %1235 = arith.mulf %1232, %1234 : vector<16x4xbf16>
    %cst_478 = arith.constant 0.000000e+00 : f32
    %1236 = vector.broadcast %cst_478 : f32 to vector<16x1xf32>
    %1237 = vector.extract_strided_slice %1214 {offsets = [0, 0], sizes = [16, 3], strides = [1, 1]} : vector<16x4xf32> to vector<16x3xf32>
    %1238 = tpu.concatenate %1236, %1237 in 1 : vector<16x1xf32>, vector<16x3xf32> -> vector<16x4xf32>
    %1239 = arith.truncf %1238 : vector<16x4xf32> to vector<16x4xbf16>
    %c3_479 = arith.constant 3 : index
    %c0_480 = arith.constant 0 : index
    %1240 = vector.load %arg21[%c3_479, %c0_480] : memref<9x4xbf16, #tpu.memory_space<vmem>>, vector<1x4xbf16>
    %1241 = vector.broadcast %1240 : vector<1x4xbf16> to vector<16x4xbf16>
    %1242 = arith.mulf %1239, %1241 : vector<16x4xbf16>
    %1243 = arith.truncf %1214 : vector<16x4xf32> to vector<16x4xbf16>
    %c4_481 = arith.constant 4 : index
    %c0_482 = arith.constant 0 : index
    %1244 = vector.load %arg21[%c4_481, %c0_482] : memref<9x4xbf16, #tpu.memory_space<vmem>>, vector<1x4xbf16>
    %1245 = vector.broadcast %1244 : vector<1x4xbf16> to vector<16x4xbf16>
    %1246 = arith.mulf %1243, %1245 : vector<16x4xbf16>
    %cst_483 = arith.constant 0.000000e+00 : f32
    %1247 = vector.broadcast %cst_483 : f32 to vector<16x1xf32>
    %1248 = vector.extract_strided_slice %1214 {offsets = [0, 1], sizes = [16, 3], strides = [1, 1]} : vector<16x4xf32> to vector<16x3xf32>
    %1249 = tpu.concatenate %1248, %1247 in 1 : vector<16x3xf32>, vector<16x1xf32> -> vector<16x4xf32>
    %1250 = arith.truncf %1249 : vector<16x4xf32> to vector<16x4xbf16>
    %c5_484 = arith.constant 5 : index
    %c0_485 = arith.constant 0 : index
    %1251 = vector.load %arg21[%c5_484, %c0_485] : memref<9x4xbf16, #tpu.memory_space<vmem>>, vector<1x4xbf16>
    %1252 = vector.broadcast %1251 : vector<1x4xbf16> to vector<16x4xbf16>
    %1253 = arith.mulf %1250, %1252 : vector<16x4xbf16>
    %cst_486 = arith.constant 0.000000e+00 : f32
    %1254 = vector.broadcast %cst_486 : f32 to vector<16x1xf32>
    %1255 = vector.extract_strided_slice %1214 {offsets = [0, 1], sizes = [16, 3], strides = [1, 1]} : vector<16x4xf32> to vector<16x3xf32>
    %1256 = tpu.concatenate %1255, %1254 in 1 : vector<16x3xf32>, vector<16x1xf32> -> vector<16x4xf32>
    %1257 = arith.truncf %1256 : vector<16x4xf32> to vector<16x4xbf16>
    %c6_487 = arith.constant 6 : index
    %c0_488 = arith.constant 0 : index
    %1258 = vector.load %arg21[%c6_487, %c0_488] : memref<9x4xbf16, #tpu.memory_space<vmem>>, vector<1x4xbf16>
    %1259 = vector.broadcast %1258 : vector<1x4xbf16> to vector<16x4xbf16>
    %1260 = arith.mulf %1257, %1259 : vector<16x4xbf16>
    %cst_489 = arith.constant 0.000000e+00 : f32
    %1261 = vector.broadcast %cst_489 : f32 to vector<16x2xf32>
    %1262 = vector.extract_strided_slice %1214 {offsets = [0, 2], sizes = [16, 2], strides = [1, 1]} : vector<16x4xf32> to vector<16x2xf32>
    %1263 = tpu.concatenate %1262, %1261 in 1 : vector<16x2xf32>, vector<16x2xf32> -> vector<16x4xf32>
    %1264 = arith.truncf %1263 : vector<16x4xf32> to vector<16x4xbf16>
    %c7_490 = arith.constant 7 : index
    %c0_491 = arith.constant 0 : index
    %1265 = vector.load %arg21[%c7_490, %c0_491] : memref<9x4xbf16, #tpu.memory_space<vmem>>, vector<1x4xbf16>
    %1266 = vector.broadcast %1265 : vector<1x4xbf16> to vector<16x4xbf16>
    %1267 = arith.mulf %1264, %1266 : vector<16x4xbf16>
    %cst_492 = arith.constant 0.000000e+00 : f32
    %1268 = vector.broadcast %cst_492 : f32 to vector<16x3xf32>
    %1269 = vector.extract_strided_slice %1214 {offsets = [0, 3], sizes = [16, 1], strides = [1, 1]} : vector<16x4xf32> to vector<16x1xf32>
    %1270 = tpu.concatenate %1269, %1268 in 1 : vector<16x1xf32>, vector<16x3xf32> -> vector<16x4xf32>
    %1271 = arith.truncf %1270 : vector<16x4xf32> to vector<16x4xbf16>
    %c8_493 = arith.constant 8 : index
    %c0_494 = arith.constant 0 : index
    %1272 = vector.load %arg21[%c8_493, %c0_494] : memref<9x4xbf16, #tpu.memory_space<vmem>>, vector<1x4xbf16>
    %1273 = vector.broadcast %1272 : vector<1x4xbf16> to vector<16x4xbf16>
    %1274 = arith.mulf %1271, %1273 : vector<16x4xbf16>
    %1275 = tpu.concatenate %1221, %1228, %1235, %1242, %1246, %1253, %1260, %1267, %1274 in 0 : vector<16x4xbf16>, vector<16x4xbf16>, vector<16x4xbf16>, vector<16x4xbf16>, vector<16x4xbf16>, vector<16x4xbf16>, vector<16x4xbf16>, vector<16x4xbf16>, vector<16x4xbf16> -> vector<144x4xbf16>
    %c0_495 = arith.constant 0 : index
    %c0_496 = arith.constant 0 : index
    %1276 = vector.load %arg8[%c0_495, %c0_496] : memref<8x144xbf16, #tpu.memory_space<vmem>>, vector<8x144xbf16>
    %cst_497 = arith.constant dense<0.000000e+00> : vector<8x4xf32>
    %1277 = tpu.matmul %1276, %1275, %cst_497 {dimension_numbers = #tpu.dot_dimension_numbers<[1], [0], [0], [1], [0, 0, 1, 1], [], []>} : vector<8x144xbf16>, vector<144x4xbf16>, vector<8x4xf32> -> vector<8x4xf32>
    %c0_498 = arith.constant 0 : index
    %c0_499 = arith.constant 0 : index
    %1278 = vector.load %arg16[%c0_498, %c0_499] : memref<8x1xf32, #tpu.memory_space<vmem>>, vector<8x1xf32>
    %1279 = vector.broadcast %1278 : vector<8x1xf32> to vector<8x4xf32>
    %1280 = arith.addf %1277, %1279 : vector<8x4xf32>
    %cst_500 = arith.constant 0.000000e+00 : f32
    %1281 = vector.broadcast %cst_500 : f32 to vector<8x3xf32>
    %1282 = vector.extract_strided_slice %1280 {offsets = [0, 0], sizes = [8, 1], strides = [1, 1]} : vector<8x4xf32> to vector<8x1xf32>
    %1283 = tpu.concatenate %1281, %1282 in 1 : vector<8x3xf32>, vector<8x1xf32> -> vector<8x4xf32>
    %1284 = arith.truncf %1283 : vector<8x4xf32> to vector<8x4xbf16>
    %c0_501 = arith.constant 0 : index
    %c0_502 = arith.constant 0 : index
    %1285 = vector.load %arg21[%c0_501, %c0_502] : memref<9x4xbf16, #tpu.memory_space<vmem>>, vector<1x4xbf16>
    %1286 = vector.broadcast %1285 : vector<1x4xbf16> to vector<8x4xbf16>
    %1287 = arith.mulf %1284, %1286 : vector<8x4xbf16>
    %cst_503 = arith.constant 0.000000e+00 : f32
    %1288 = vector.broadcast %cst_503 : f32 to vector<8x2xf32>
    %1289 = vector.extract_strided_slice %1280 {offsets = [0, 0], sizes = [8, 2], strides = [1, 1]} : vector<8x4xf32> to vector<8x2xf32>
    %1290 = tpu.concatenate %1288, %1289 in 1 : vector<8x2xf32>, vector<8x2xf32> -> vector<8x4xf32>
    %1291 = arith.truncf %1290 : vector<8x4xf32> to vector<8x4xbf16>
    %c1_504 = arith.constant 1 : index
    %c0_505 = arith.constant 0 : index
    %1292 = vector.load %arg21[%c1_504, %c0_505] : memref<9x4xbf16, #tpu.memory_space<vmem>>, vector<1x4xbf16>
    %1293 = vector.broadcast %1292 : vector<1x4xbf16> to vector<8x4xbf16>
    %1294 = arith.mulf %1291, %1293 : vector<8x4xbf16>
    %cst_506 = arith.constant 0.000000e+00 : f32
    %1295 = vector.broadcast %cst_506 : f32 to vector<8x1xf32>
    %1296 = vector.extract_strided_slice %1280 {offsets = [0, 0], sizes = [8, 3], strides = [1, 1]} : vector<8x4xf32> to vector<8x3xf32>
    %1297 = tpu.concatenate %1295, %1296 in 1 : vector<8x1xf32>, vector<8x3xf32> -> vector<8x4xf32>
    %1298 = arith.truncf %1297 : vector<8x4xf32> to vector<8x4xbf16>
    %c2_507 = arith.constant 2 : index
    %c0_508 = arith.constant 0 : index
    %1299 = vector.load %arg21[%c2_507, %c0_508] : memref<9x4xbf16, #tpu.memory_space<vmem>>, vector<1x4xbf16>
    %1300 = vector.broadcast %1299 : vector<1x4xbf16> to vector<8x4xbf16>
    %1301 = arith.mulf %1298, %1300 : vector<8x4xbf16>
    %cst_509 = arith.constant 0.000000e+00 : f32
    %1302 = vector.broadcast %cst_509 : f32 to vector<8x1xf32>
    %1303 = vector.extract_strided_slice %1280 {offsets = [0, 0], sizes = [8, 3], strides = [1, 1]} : vector<8x4xf32> to vector<8x3xf32>
    %1304 = tpu.concatenate %1302, %1303 in 1 : vector<8x1xf32>, vector<8x3xf32> -> vector<8x4xf32>
    %1305 = arith.truncf %1304 : vector<8x4xf32> to vector<8x4xbf16>
    %c3_510 = arith.constant 3 : index
    %c0_511 = arith.constant 0 : index
    %1306 = vector.load %arg21[%c3_510, %c0_511] : memref<9x4xbf16, #tpu.memory_space<vmem>>, vector<1x4xbf16>
    %1307 = vector.broadcast %1306 : vector<1x4xbf16> to vector<8x4xbf16>
    %1308 = arith.mulf %1305, %1307 : vector<8x4xbf16>
    %1309 = arith.truncf %1280 : vector<8x4xf32> to vector<8x4xbf16>
    %c4_512 = arith.constant 4 : index
    %c0_513 = arith.constant 0 : index
    %1310 = vector.load %arg21[%c4_512, %c0_513] : memref<9x4xbf16, #tpu.memory_space<vmem>>, vector<1x4xbf16>
    %1311 = vector.broadcast %1310 : vector<1x4xbf16> to vector<8x4xbf16>
    %1312 = arith.mulf %1309, %1311 : vector<8x4xbf16>
    %cst_514 = arith.constant 0.000000e+00 : f32
    %1313 = vector.broadcast %cst_514 : f32 to vector<8x1xf32>
    %1314 = vector.extract_strided_slice %1280 {offsets = [0, 1], sizes = [8, 3], strides = [1, 1]} : vector<8x4xf32> to vector<8x3xf32>
    %1315 = tpu.concatenate %1314, %1313 in 1 : vector<8x3xf32>, vector<8x1xf32> -> vector<8x4xf32>
    %1316 = arith.truncf %1315 : vector<8x4xf32> to vector<8x4xbf16>
    %c5_515 = arith.constant 5 : index
    %c0_516 = arith.constant 0 : index
    %1317 = vector.load %arg21[%c5_515, %c0_516] : memref<9x4xbf16, #tpu.memory_space<vmem>>, vector<1x4xbf16>
    %1318 = vector.broadcast %1317 : vector<1x4xbf16> to vector<8x4xbf16>
    %1319 = arith.mulf %1316, %1318 : vector<8x4xbf16>
    %cst_517 = arith.constant 0.000000e+00 : f32
    %1320 = vector.broadcast %cst_517 : f32 to vector<8x1xf32>
    %1321 = vector.extract_strided_slice %1280 {offsets = [0, 1], sizes = [8, 3], strides = [1, 1]} : vector<8x4xf32> to vector<8x3xf32>
    %1322 = tpu.concatenate %1321, %1320 in 1 : vector<8x3xf32>, vector<8x1xf32> -> vector<8x4xf32>
    %1323 = arith.truncf %1322 : vector<8x4xf32> to vector<8x4xbf16>
    %c6_518 = arith.constant 6 : index
    %c0_519 = arith.constant 0 : index
    %1324 = vector.load %arg21[%c6_518, %c0_519] : memref<9x4xbf16, #tpu.memory_space<vmem>>, vector<1x4xbf16>
    %1325 = vector.broadcast %1324 : vector<1x4xbf16> to vector<8x4xbf16>
    %1326 = arith.mulf %1323, %1325 : vector<8x4xbf16>
    %cst_520 = arith.constant 0.000000e+00 : f32
    %1327 = vector.broadcast %cst_520 : f32 to vector<8x2xf32>
    %1328 = vector.extract_strided_slice %1280 {offsets = [0, 2], sizes = [8, 2], strides = [1, 1]} : vector<8x4xf32> to vector<8x2xf32>
    %1329 = tpu.concatenate %1328, %1327 in 1 : vector<8x2xf32>, vector<8x2xf32> -> vector<8x4xf32>
    %1330 = arith.truncf %1329 : vector<8x4xf32> to vector<8x4xbf16>
    %c7_521 = arith.constant 7 : index
    %c0_522 = arith.constant 0 : index
    %1331 = vector.load %arg21[%c7_521, %c0_522] : memref<9x4xbf16, #tpu.memory_space<vmem>>, vector<1x4xbf16>
    %1332 = vector.broadcast %1331 : vector<1x4xbf16> to vector<8x4xbf16>
    %1333 = arith.mulf %1330, %1332 : vector<8x4xbf16>
    %cst_523 = arith.constant 0.000000e+00 : f32
    %1334 = vector.broadcast %cst_523 : f32 to vector<8x3xf32>
    %1335 = vector.extract_strided_slice %1280 {offsets = [0, 3], sizes = [8, 1], strides = [1, 1]} : vector<8x4xf32> to vector<8x1xf32>
    %1336 = tpu.concatenate %1335, %1334 in 1 : vector<8x1xf32>, vector<8x3xf32> -> vector<8x4xf32>
    %1337 = arith.truncf %1336 : vector<8x4xf32> to vector<8x4xbf16>
    %c8_524 = arith.constant 8 : index
    %c0_525 = arith.constant 0 : index
    %1338 = vector.load %arg21[%c8_524, %c0_525] : memref<9x4xbf16, #tpu.memory_space<vmem>>, vector<1x4xbf16>
    %1339 = vector.broadcast %1338 : vector<1x4xbf16> to vector<8x4xbf16>
    %1340 = arith.mulf %1337, %1339 : vector<8x4xbf16>
    %1341 = tpu.concatenate %1287, %1294, %1301, %1308, %1312, %1319, %1326, %1333, %1340 in 0 : vector<8x4xbf16>, vector<8x4xbf16>, vector<8x4xbf16>, vector<8x4xbf16>, vector<8x4xbf16>, vector<8x4xbf16>, vector<8x4xbf16>, vector<8x4xbf16>, vector<8x4xbf16> -> vector<72x4xbf16>
    %c0_526 = arith.constant 0 : index
    %c0_527 = arith.constant 0 : index
    %1342 = vector.load %arg9[%c0_526, %c0_527] : memref<1x72xbf16, #tpu.memory_space<vmem>>, vector<1x72xbf16>
    %cst_528 = arith.constant dense<0.000000e+00> : vector<1x4xf32>
    %1343 = tpu.matmul %1342, %1341, %cst_528 {dimension_numbers = #tpu.dot_dimension_numbers<[1], [0], [0], [1], [0, 0, 1, 1], [], []>} : vector<1x72xbf16>, vector<72x4xbf16>, vector<1x4xf32> -> vector<1x4xf32>
    %c0_529 = arith.constant 0 : index
    %c0_530 = arith.constant 0 : index
    %1344 = vector.load %arg17[%c0_529, %c0_530] : memref<1x1xf32, #tpu.memory_space<vmem>>, vector<1x1xf32>
    %1345 = vector.broadcast %1344 : vector<1x1xf32> to vector<1x4xf32>
    %1346 = arith.addf %1343, %1345 : vector<1x4xf32>
    %cst_531 = arith.constant 0.000000e+00 : f32
    %1347 = vector.broadcast %cst_531 : f32 to vector<1x4xf32>
    %1348 = arith.maximumf %1346, %1347 : vector<1x4xf32>
    %c0_532 = arith.constant 0 : index
    %c0_533 = arith.constant 0 : index
    %1349 = vector.load %arg25[%c0_532, %c0_533] : memref<1x4xf32, #tpu.memory_space<vmem>>, vector<1x4xf32>
    %1350 = arith.mulf %1348, %1349 : vector<1x4xf32>
    %c0_534 = arith.constant 0 : index
    %c0_535 = arith.constant 0 : index
    %1351 = vector.load %arg26[%c0_534, %c0_535] : memref<4x32xf32, #tpu.memory_space<vmem>>, vector<4x32xf32>
    %cst_536 = arith.constant dense<0.000000e+00> : vector<1x32xf32>
    %1352 = tpu.matmul %1350, %1351, %cst_536 {dimension_numbers = #tpu.dot_dimension_numbers<[1], [0], [0], [1], [0, 0, 1, 1], [], []>} : vector<1x4xf32>, vector<4x32xf32>, vector<1x32xf32> -> vector<1x32xf32>
    %c0_537 = arith.constant 0 : index
    %c0_538 = arith.constant 0 : index
    %1353 = vector.load %arg27[%c0_537, %c0_538] : memref<1x32xf32, #tpu.memory_space<vmem>>, vector<1x32xf32>
    %1354 = arith.addf %1352, %1353 : vector<1x32xf32>
    %cst_539 = arith.constant 0.000000e+00 : f32
    %1355 = vector.broadcast %cst_539 : f32 to vector<1x32xf32>
    %1356 = arith.maximumf %1354, %1355 : vector<1x32xf32>
    %c0_540 = arith.constant 0 : index
    %c0_541 = arith.constant 0 : index
    %1357 = vector.load %arg28[%c0_540, %c0_541] : memref<32x1xf32, #tpu.memory_space<vmem>>, vector<32x1xf32>
    %cst_542 = arith.constant dense<0.000000e+00> : vector<1x1xf32>
    %1358 = tpu.matmul %1356, %1357, %cst_542 {dimension_numbers = #tpu.dot_dimension_numbers<[1], [0], [0], [1], [0, 0, 1, 1], [], []>} : vector<1x32xf32>, vector<32x1xf32>, vector<1x1xf32> -> vector<1x1xf32>
    %c0_543 = arith.constant 0 : index
    %c0_544 = arith.constant 0 : index
    %1359 = vector.load %arg29[%c0_543, %c0_544] : memref<1x1xf32, #tpu.memory_space<vmem>>, vector<1x1xf32>
    %1360 = arith.addf %1358, %1359 : vector<1x1xf32>
    %1361 = arith.negf %1360 : vector<1x1xf32>
    %1362 = math.exp %1361 : vector<1x1xf32>
    %cst_545 = arith.constant 1.000000e+00 : f32
    %1363 = vector.broadcast %cst_545 : f32 to vector<1x1xf32>
    %1364 = arith.addf %1363, %1362 : vector<1x1xf32>
    %1365 = arith.divf %1363, %1364 : vector<1x1xf32>
    %c0_546 = arith.constant 0 : index
    %c0_547 = arith.constant 0 : index
    %c0_548 = arith.constant 0 : index
    %1366 = vector.load %arg30[%c0_546, %c0_547, %c0_548] : memref<1x1x1xf32, #tpu.memory_space<vmem>>, vector<1x1x1xf32>
    %1367 = vector.shape_cast %1366 : vector<1x1x1xf32> to vector<1x1xf32>
    %1368 = vector.shape_cast %1365 : vector<1x1xf32> to vector<1x1x1xf32>
    tpu.vector_store %arg30[%c0_546, %c0_547, %c0_548], %1368 {strides = array<i32>} : memref<1x1x1xf32, #tpu.memory_space<vmem>>, vector<1x1x1xf32>,
    return
  }
  func.func @transform_0(%arg0: i32) -> (i32, i32, i32) {
    %c0_i32 = arith.constant 0 : i32
    %c0_i32_0 = arith.constant 0 : i32
    %c0_i32_1 = arith.constant 0 : i32
    return %arg0, %c0_i32, %c0_i32_0 : i32, i32, i32
  }
  func.func @transform_1(%arg0: i32) -> (i32, i32) {
    %c0_i32 = arith.constant 0 : i32
    %c0_i32_0 = arith.constant 0 : i32
    %c0_i32_1 = arith.constant 0 : i32
    return %c0_i32, %c0_i32_0 : i32, i32
  }
  func.func @transform_2(%arg0: i32) -> (i32, i32) {
    %c0_i32 = arith.constant 0 : i32
    %c0_i32_0 = arith.constant 0 : i32
    %c0_i32_1 = arith.constant 0 : i32
    return %c0_i32, %c0_i32_0 : i32, i32
  }
  func.func @transform_3(%arg0: i32) -> (i32, i32) {
    %c0_i32 = arith.constant 0 : i32
    %c0_i32_0 = arith.constant 0 : i32
    %c0_i32_1 = arith.constant 0 : i32
    return %c0_i32, %c0_i32_0 : i32, i32
  }
  func.func @transform_4(%arg0: i32) -> (i32, i32) {
    %c0_i32 = arith.constant 0 : i32
    %c0_i32_0 = arith.constant 0 : i32
    %c0_i32_1 = arith.constant 0 : i32
    return %c0_i32, %c0_i32_0 : i32, i32
  }
  func.func @transform_5(%arg0: i32) -> (i32, i32) {
    %c0_i32 = arith.constant 0 : i32
    %c0_i32_0 = arith.constant 0 : i32
    %c0_i32_1 = arith.constant 0 : i32
    return %c0_i32, %c0_i32_0 : i32, i32
  }
  func.func @transform_6(%arg0: i32) -> (i32, i32) {
    %c0_i32 = arith.constant 0 : i32
    %c0_i32_0 = arith.constant 0 : i32
    %c0_i32_1 = arith.constant 0 : i32
    return %c0_i32, %c0_i32_0 : i32, i32
  }
  func.func @transform_7(%arg0: i32) -> (i32, i32) {
    %c0_i32 = arith.constant 0 : i32
    %c0_i32_0 = arith.constant 0 : i32
    %c0_i32_1 = arith.constant 0 : i32
    return %c0_i32, %c0_i32_0 : i32, i32
  }
  func.func @transform_8(%arg0: i32) -> (i32, i32) {
    %c0_i32 = arith.constant 0 : i32
    %c0_i32_0 = arith.constant 0 : i32
    %c0_i32_1 = arith.constant 0 : i32
    return %c0_i32, %c0_i32_0 : i32, i32
  }
  func.func @transform_9(%arg0: i32) -> (i32, i32) {
    %c0_i32 = arith.constant 0 : i32
    %c0_i32_0 = arith.constant 0 : i32
    %c0_i32_1 = arith.constant 0 : i32
    return %c0_i32, %c0_i32_0 : i32, i32
  }
  func.func @transform_10(%arg0: i32) -> (i32, i32) {
    %c0_i32 = arith.constant 0 : i32
    %c0_i32_0 = arith.constant 0 : i32
    %c0_i32_1 = arith.constant 0 : i32
    return %c0_i32, %c0_i32_0 : i32, i32
  }
  func.func @transform_11(%arg0: i32) -> (i32, i32) {
    %c0_i32 = arith.constant 0 : i32
    %c0_i32_0 = arith.constant 0 : i32
    %c0_i32_1 = arith.constant 0 : i32
    return %c0_i32, %c0_i32_0 : i32, i32
  }
  func.func @transform_12(%arg0: i32) -> (i32, i32) {
    %c0_i32 = arith.constant 0 : i32
    %c0_i32_0 = arith.constant 0 : i32
    %c0_i32_1 = arith.constant 0 : i32
    return %c0_i32, %c0_i32_0 : i32, i32
  }
  func.func @transform_13(%arg0: i32) -> (i32, i32) {
    %c0_i32 = arith.constant 0 : i32
    %c0_i32_0 = arith.constant 0 : i32
    %c0_i32_1 = arith.constant 0 : i32
    return %c0_i32, %c0_i32_0 : i32, i32
  }
  func.func @transform_14(%arg0: i32) -> (i32, i32) {
    %c0_i32 = arith.constant 0 : i32
    %c0_i32_0 = arith.constant 0 : i32
    %c0_i32_1 = arith.constant 0 : i32
    return %c0_i32, %c0_i32_0 : i32, i32
  }
  func.func @transform_15(%arg0: i32) -> (i32, i32) {
    %c0_i32 = arith.constant 0 : i32
    %c0_i32_0 = arith.constant 0 : i32
    %c0_i32_1 = arith.constant 0 : i32
    return %c0_i32, %c0_i32_0 : i32, i32
  }
  func.func @transform_16(%arg0: i32) -> (i32, i32) {
    %c0_i32 = arith.constant 0 : i32
    %c0_i32_0 = arith.constant 0 : i32
    %c0_i32_1 = arith.constant 0 : i32
    return %c0_i32, %c0_i32_0 : i32, i32
  }
  func.func @transform_17(%arg0: i32) -> (i32, i32) {
    %c0_i32 = arith.constant 0 : i32
    %c0_i32_0 = arith.constant 0 : i32
    %c0_i32_1 = arith.constant 0 : i32
    return %c0_i32, %c0_i32_0 : i32, i32
  }
  func.func @transform_18(%arg0: i32) -> (i32, i32) {
    %c0_i32 = arith.constant 0 : i32
    %c0_i32_0 = arith.constant 0 : i32
    %c0_i32_1 = arith.constant 0 : i32
    return %c0_i32, %c0_i32_0 : i32, i32
  }
  func.func @transform_19(%arg0: i32) -> (i32, i32) {
    %c0_i32 = arith.constant 0 : i32
    %c0_i32_0 = arith.constant 0 : i32
    %c0_i32_1 = arith.constant 0 : i32
    return %c0_i32, %c0_i32_0 : i32, i32
  }
  func.func @transform_20(%arg0: i32) -> (i32, i32) {
    %c0_i32 = arith.constant 0 : i32
    %c0_i32_0 = arith.constant 0 : i32
    %c0_i32_1 = arith.constant 0 : i32
    return %c0_i32, %c0_i32_0 : i32, i32
  }
  func.func @transform_21(%arg0: i32) -> (i32, i32) {
    %c0_i32 = arith.constant 0 : i32
    %c0_i32_0 = arith.constant 0 : i32
    %c0_i32_1 = arith.constant 0 : i32
    return %c0_i32, %c0_i32_0 : i32, i32
  }
  func.func @transform_22(%arg0: i32) -> (i32, i32) {
    %c0_i32 = arith.constant 0 : i32
    %c0_i32_0 = arith.constant 0 : i32
    %c0_i32_1 = arith.constant 0 : i32
    return %c0_i32, %c0_i32_0 : i32, i32
  }
  func.func @transform_23(%arg0: i32) -> (i32, i32) {
    %c0_i32 = arith.constant 0 : i32
    %c0_i32_0 = arith.constant 0 : i32
    %c0_i32_1 = arith.constant 0 : i32
    return %c0_i32, %c0_i32_0 : i32, i32
  }
  func.func @transform_24(%arg0: i32) -> (i32, i32) {
    %c0_i32 = arith.constant 0 : i32
    %c0_i32_0 = arith.constant 0 : i32
    %c0_i32_1 = arith.constant 0 : i32
    return %c0_i32, %c0_i32_0 : i32, i32
  }
  func.func @transform_25(%arg0: i32) -> (i32, i32) {
    %c0_i32 = arith.constant 0 : i32
    %c0_i32_0 = arith.constant 0 : i32
    %c0_i32_1 = arith.constant 0 : i32
    return %c0_i32, %c0_i32_0 : i32, i32
  }
  func.func @transform_26(%arg0: i32) -> (i32, i32) {
    %c0_i32 = arith.constant 0 : i32
    %c0_i32_0 = arith.constant 0 : i32
    %c0_i32_1 = arith.constant 0 : i32
    return %c0_i32, %c0_i32_0 : i32, i32
  }
  func.func @transform_27(%arg0: i32) -> (i32, i32) {
    %c0_i32 = arith.constant 0 : i32
    %c0_i32_0 = arith.constant 0 : i32
    %c0_i32_1 = arith.constant 0 : i32
    return %c0_i32, %c0_i32_0 : i32, i32
  }
  func.func @transform_28(%arg0: i32) -> (i32, i32) {
    %c0_i32 = arith.constant 0 : i32
    %c0_i32_0 = arith.constant 0 : i32
    %c0_i32_1 = arith.constant 0 : i32
    return %c0_i32, %c0_i32_0 : i32, i32
  }
  func.func @transform_29(%arg0: i32) -> (i32, i32, i32) {
    %c0_i32 = arith.constant 0 : i32
    %c0_i32_0 = arith.constant 0 : i32
    %c0_i32_1 = arith.constant 0 : i32
    return %arg0, %c0_i32, %c0_i32_0 : i32, i32, i32
  }
}

</mosaic_0001>

<llo_original>
// kernel: cnn_forward.1
$region0: #{cnn_forward.1}
  #allocation0 [shape = 'u32[]', space=smem, size = 0x4, offset = 0x4, fixed_abs, tag = 'smem constant byte address 0x4 - core index']
  #allocation1 [shape = 'u32[144,128]{1,0:T(1,128)}', space=vmem, size = 0x12000, scoped, tag = 'internal scratch']
  #allocation2 [shape = 'f32[1,1]{1,0:T(1,128)S(1)}', space=vmem, size = 0x200, scoped, tag = 'scoped memory for cnn_forward.1']
  #allocation3 [shape = 'f32[1,1]{1,0:T(1,128)S(1)}', space=vmem, size = 0x200, scoped, tag = 'scoped memory for cnn_forward.1']
  %s0 = inlined_call_operand.smem [shape: u32[30], index: -1, kind: input, shape index: {}]
  %s1 = sld [smem:[%s0]]
  %s2 = scalar_lea.smem %s0, 1
  %s3 = sld [smem:[%s2]]
  %s4 = scalar_lea.smem %s0, 2
  %s5 = sld [smem:[%s4]]
  %s6 = scalar_lea.smem %s0, 3
  %s7 = sld [smem:[%s6]]
  %s8 = scalar_lea.smem %s0, 4
  %s9 = sld [smem:[%s8]]
  %s10 = scalar_lea.smem %s0, 5
  %s11 = sld [smem:[%s10]]
  %s12 = scalar_lea.smem %s0, 6
  %s13 = sld [smem:[%s12]]
  %s14 = scalar_lea.smem %s0, 7
  %s15 = sld [smem:[%s14]]
  %s16 = scalar_lea.smem %s0, 8
  %s17 = sld [smem:[%s16]]
  %s18 = scalar_lea.smem %s0, 9
  %s19 = sld [smem:[%s18]]
  %s20 = scalar_lea.smem %s0, 10
  %s21 = sld [smem:[%s20]]
  %s22 = scalar_lea.smem %s0, 11
  %s23 = sld [smem:[%s22]]
  %s24 = scalar_lea.smem %s0, 12
  %s25 = sld [smem:[%s24]]
  %s26 = scalar_lea.smem %s0, 13
  %s27 = sld [smem:[%s26]]
  %s28 = scalar_lea.smem %s0, 14
  %s29 = sld [smem:[%s28]]
  %s30 = scalar_lea.smem %s0, 15
  %s31 = sld [smem:[%s30]]
  %s32 = scalar_lea.smem %s0, 16
  %s33 = sld [smem:[%s32]]
  %s34 = scalar_lea.smem %s0, 17
  %s35 = sld [smem:[%s34]]
  %s36 = scalar_lea.smem %s0, 18
  %s37 = sld [smem:[%s36]]
  %s38 = scalar_lea.smem %s0, 19
  %s39 = sld [smem:[%s38]]
  %s40 = scalar_lea.smem %s0, 20
  %s41 = sld [smem:[%s40]]
  %s42 = scalar_lea.smem %s0, 21
  %s43 = sld [smem:[%s42]]
  %s44 = scalar_lea.smem %s0, 22
  %s45 = sld [smem:[%s44]]
  %s46 = scalar_lea.smem %s0, 23
  %s47 = sld [smem:[%s46]]
  %s48 = scalar_lea.smem %s0, 24
  %s49 = sld [smem:[%s48]]
  %s50 = scalar_lea.smem %s0, 25
  %s51 = sld [smem:[%s50]]
  %s52 = scalar_lea.smem %s0, 26
  %s53 = sld [smem:[%s52]]
  %s54 = scalar_lea.smem %s0, 27
  %s55 = sld [smem:[%s54]]
  %s56 = scalar_lea.smem %s0, 28
  %s57 = sld [smem:[%s56]]
  %s58 = scalar_lea.smem %s0, 29
  %s59 = sld [smem:[%s58]]
  %s60 = sld [smem:[#allocation0]]
  $region149: #{cnn_forward.1} parent=0
    _
  %s62 = ssub.s32 1, %s60
  %s63 = scalar_select 0, %s62, %s60
  %v64 = vstv %s33
  %65 = vst [vmem:[#allocation2] sm:$0x1] %v64
  %v66 = vstv %s57
  %67 = vst [vmem:[#allocation3] sm:$0x1] %v66
  loop: start=0, step=1, limit=4
  $region2: #{cnn_forward.1} parent=0 // loop_pre_header
    _
  $region3: #{cnn_forward.1} parent=0 // loop_header
    %s69 = sphi 0, %s73
    %p70 = scmp.ge.s32.totalorder %s69, 4
    %s79 = sphi 0, %s81
    %s82 = sphi 0, %s79
    %s83 = sphi 0, %s82
    %s99 = sphi 0, %s83
    %s103 = sphi 0, %s103
    %s105 = sphi 0, %s103
    %s106 = sphi 0, %s105
    %s120 = sphi 0, %s106
    %s124 = sphi 0, %s124
    %s126 = sphi 0, %s124
    %s127 = sphi 0, %s126
    %s141 = sphi 0, %s127
    %s145 = sphi 0, %s145
    %s147 = sphi 0, %s145
    %s148 = sphi 0, %s147
    %s162 = sphi 0, %s148
    %s166 = sphi 0, %s166
    %s168 = sphi 0, %s166
    %s169 = sphi 0, %s168
    %s183 = sphi 0, %s169
    %s187 = sphi 0, %s187
    %s189 = sphi 0, %s187
    %s190 = sphi 0, %s189
    %s204 = sphi 0, %s190
    %s208 = sphi 0, %s208
    %s210 = sphi 0, %s208
    %s211 = sphi 0, %s210
    %s225 = sphi 0, %s211
    %s229 = sphi 0, %s229
    %s231 = sphi 0, %s229
    %s232 = sphi 0, %s231
    %s246 = sphi 0, %s232
    %s250 = sphi 0, %s250
    %s252 = sphi 0, %s250
    %s253 = sphi 0, %s252
    %s267 = sphi 0, %s253
    %s271 = sphi 0, %s271
    %s273 = sphi 0, %s271
    %s274 = sphi 0, %s273
    %s288 = sphi 0, %s274
    %s292 = sphi 0, %s292
    %s294 = sphi 0, %s292
    %s295 = sphi 0, %s294
    %s309 = sphi 0, %s295
    %s313 = sphi 0, %s313
    %s315 = sphi 0, %s313
    %s316 = sphi 0, %s315
    %s330 = sphi 0, %s316
    %s334 = sphi 0, %s334
    %s336 = sphi 0, %s334
    %s337 = sphi 0, %s336
    %s351 = sphi 0, %s337
    %s355 = sphi 0, %s355
    %s357 = sphi 0, %s355
    %s358 = sphi 0, %s357
    %s372 = sphi 0, %s358
    %s376 = sphi 0, %s376
    %s378 = sphi 0, %s376
    %s379 = sphi 0, %s378
    %s393 = sphi 0, %s379
    %s397 = sphi 0, %s397
    %s399 = sphi 0, %s397
    %s400 = sphi 0, %s399
    %s414 = sphi 0, %s400
    %s418 = sphi 0, %s418
    %s420 = sphi 0, %s418
    %s421 = sphi 0, %s420
    %s435 = sphi 0, %s421
    %s439 = sphi 0, %s439
    %s441 = sphi 0, %s439
    %s442 = sphi 0, %s441
    %s456 = sphi 0, %s442
    %s460 = sphi 0, %s460
    %s462 = sphi 0, %s460
    %s463 = sphi 0, %s462
    %s477 = sphi 0, %s463
    %s481 = sphi 0, %s481
    %s483 = sphi 0, %s481
    %s484 = sphi 0, %s483
    %s498 = sphi 0, %s484
    %s502 = sphi 0, %s502
    %s504 = sphi 0, %s502
    %s505 = sphi 0, %s504
    %s519 = sphi 0, %s505
    %s523 = sphi 0, %s523
    %s525 = sphi 0, %s523
    %s526 = sphi 0, %s525
    %s540 = sphi 0, %s526
    %s544 = sphi 0, %s544
    %s546 = sphi 0, %s544
    %s547 = sphi 0, %s546
    %s561 = sphi 0, %s547
    %s565 = sphi 0, %s565
    %s567 = sphi 0, %s565
    %s568 = sphi 0, %s567
    %s582 = sphi 0, %s568
    %s586 = sphi 0, %s586
    %s588 = sphi 0, %s586
    %s589 = sphi 0, %s588
    %s603 = sphi 0, %s589
    %s607 = sphi 0, %s607
    %s609 = sphi 0, %s607
    %s610 = sphi 0, %s609
    %s624 = sphi 0, %s610
    %s628 = sphi 0, %s628
    %s630 = sphi 0, %s628
    %s631 = sphi 0, %s630
    %s645 = sphi 0, %s631
    %s649 = sphi 0, %s649
    %s651 = sphi 0, %s649
    %s652 = sphi 0, %s651
    %s666 = sphi 0, %s652
    %s670 = sphi 0, %s670
    %s672 = sphi 0, %s670
    %s673 = sphi 0, %s672
    %s687 = sphi 0, %s673
    %s693 = sphi 0, %s695
    %s696 = sphi 0, %s693
    %s697 = sphi 0, %s696
    %s713 = sphi 0, %s697
  $region4: #{cnn_forward.1} parent=0 // loop_header_branch
    %72 = sbr.rel (%p70) target = $region8
  $region5: #{cnn_forward.1} parent=0 // loop_body
    %s74 = ssub.s32 %s69, 1
    %s75 = ssub.s32 %s69, 2
    %s76 = sadd.s32 %s69, 1
    %s77 = ssub.s32 %s69, %s76
    %p78 = scmp.eq.s32.totalorder %s77, 0
    %s80 = sadd.s32 %s79, 1
    %s81 = scalar_select %p78, %s79, %s80
    %p84 = pneg %p78
    %p85 = scmp.eq.s32.totalorder %s69, 1
    %p86 = por %p84, %p85
    %p87 = scmp.ne.s32.totalorder %s79, %s82
    %p88 = scmp.eq.s32.totalorder %s69, 0
    %p89 = por %p87, %p88
    %p90 = scmp.ne.s32.totalorder %s79, %s82
    %p91 = scmp.eq.s32.totalorder %s74, 1
    %p92 = por %p90, %p91
    %p93 = scmp.ne.s32.totalorder %s82, %s83
    %p94 = scmp.eq.s32.totalorder %s74, 0
    %p95 = por %p93, %p94
    %p96 = scmp.ne.s32.totalorder %s82, %s83
    %p97 = scmp.eq.s32.totalorder %s75, 1
    %p98 = por %p96, %p97
    %p100 = scmp.ne.s32.totalorder %s83, %s99
    %p101 = scmp.eq.s32.totalorder %s75, 0
    %p102 = por %p100, %p101
    %s104 = sadd.s32 %s103, 1
    %p107 = scmp.eq.s32.totalorder %s69, 1
    %p108 = scmp.ne.s32.totalorder %s103, %s105
    %p109 = scmp.eq.s32.totalorder %s69, 0
    %p110 = por %p108, %p109
    %p111 = scmp.ne.s32.totalorder %s103, %s105
    %p112 = scmp.eq.s32.totalorder %s74, 1
    %p113 = por %p111, %p112
    %p114 = scmp.ne.s32.totalorder %s105, %s106
    %p115 = scmp.eq.s32.totalorder %s74, 0
    %p116 = por %p114, %p115
    %p117 = scmp.ne.s32.totalorder %s105, %s106
    %p118 = scmp.eq.s32.totalorder %s75, 1
    %p119 = por %p117, %p118
    %p121 = scmp.ne.s32.totalorder %s106, %s120
    %p122 = scmp.eq.s32.totalorder %s75, 0
    %p123 = por %p121, %p122
    %s125 = sadd.s32 %s124, 1
    %p128 = scmp.eq.s32.totalorder %s69, 1
    %p129 = scmp.ne.s32.totalorder %s124, %s126
    %p130 = scmp.eq.s32.totalorder %s69, 0
    %p131 = por %p129, %p130
    %p132 = scmp.ne.s32.totalorder %s124, %s126
    %p133 = scmp.eq.s32.totalorder %s74, 1
    %p134 = por %p132, %p133
    %p135 = scmp.ne.s32.totalorder %s126, %s127
    %p136 = scmp.eq.s32.totalorder %s74, 0
    %p137 = por %p135, %p136
    %p138 = scmp.ne.s32.totalorder %s126, %s127
    %p139 = scmp.eq.s32.totalorder %s75, 1
    %p140 = por %p138, %p139
    %p142 = scmp.ne.s32.totalorder %s127, %s141
    %p143 = scmp.eq.s32.totalorder %s75, 0
    %p144 = por %p142, %p143
    %s146 = sadd.s32 %s145, 1
    %p149 = scmp.eq.s32.totalorder %s69, 1
    %p150 = scmp.ne.s32.totalorder %s145, %s147
    %p151 = scmp.eq.s32.totalorder %s69, 0
    %p152 = por %p150, %p151
    %p153 = scmp.ne.s32.totalorder %s145, %s147
    %p154 = scmp.eq.s32.totalorder %s74, 1
    %p155 = por %p153, %p154
    %p156 = scmp.ne.s32.totalorder %s147, %s148
    %p157 = scmp.eq.s32.totalorder %s74, 0
    %p158 = por %p156, %p157
    %p159 = scmp.ne.s32.totalorder %s147, %s148
    %p160 = scmp.eq.s32.totalorder %s75, 1
    %p161 = por %p159, %p160
    %p163 = scmp.ne.s32.totalorder %s148, %s162
    %p164 = scmp.eq.s32.totalorder %s75, 0
    %p165 = por %p163, %p164
    %s167 = sadd.s32 %s166, 1
    %p170 = scmp.eq.s32.totalorder %s69, 1
    %p171 = scmp.ne.s32.totalorder %s166, %s168
    %p172 = scmp.eq.s32.totalorder %s69, 0
    %p173 = por %p171, %p172
    %p174 = scmp.ne.s32.totalorder %s166, %s168
    %p175 = scmp.eq.s32.totalorder %s74, 1
    %p176 = por %p174, %p175
    %p177 = scmp.ne.s32.totalorder %s168, %s169
    %p178 = scmp.eq.s32.totalorder %s74, 0
    %p179 = por %p177, %p178
    %p180 = scmp.ne.s32.totalorder %s168, %s169
    %p181 = scmp.eq.s32.totalorder %s75, 1
    %p182 = por %p180, %p181
    %p184 = scmp.ne.s32.totalorder %s169, %s183
    %p185 = scmp.eq.s32.totalorder %s75, 0
    %p186 = por %p184, %p185
    %s188 = sadd.s32 %s187, 1
    %p191 = scmp.eq.s32.totalorder %s69, 1
    %p192 = scmp.ne.s32.totalorder %s187, %s189
    %p193 = scmp.eq.s32.totalorder %s69, 0
    %p194 = por %p192, %p193
    %p195 = scmp.ne.s32.totalorder %s187, %s189
    %p196 = scmp.eq.s32.totalorder %s74, 1
    %p197 = por %p195, %p196
    %p198 = scmp.ne.s32.totalorder %s189, %s190
    %p199 = scmp.eq.s32.totalorder %s74, 0
    %p200 = por %p198, %p199
    %p201 = scmp.ne.s32.totalorder %s189, %s190
    %p202 = scmp.eq.s32.totalorder %s75, 1
    %p203 = por %p201, %p202
    %p205 = scmp.ne.s32.totalorder %s190, %s204
    %p206 = scmp.eq.s32.totalorder %s75, 0
    %p207 = por %p205, %p206
    %s209 = sadd.s32 %s208, 1
    %p212 = scmp.eq.s32.totalorder %s69, 1
    %p213 = scmp.ne.s32.totalorder %s208, %s210
    %p214 = scmp.eq.s32.totalorder %s69, 0
    %p215 = por %p213, %p214
    %p216 = scmp.ne.s32.totalorder %s208, %s210
    %p217 = scmp.eq.s32.totalorder %s74, 1
    %p218 = por %p216, %p217
    %p219 = scmp.ne.s32.totalorder %s210, %s211
    %p220 = scmp.eq.s32.totalorder %s74, 0
    %p221 = por %p219, %p220
    %p222 = scmp.ne.s32.totalorder %s210, %s211
    %p223 = scmp.eq.s32.totalorder %s75, 1
    %p224 = por %p222, %p223
    %p226 = scmp.ne.s32.totalorder %s211, %s225
    %p227 = scmp.eq.s32.totalorder %s75, 0
    %p228 = por %p226, %p227
    %s230 = sadd.s32 %s229, 1
    %p233 = scmp.eq.s32.totalorder %s69, 1
    %p234 = scmp.ne.s32.totalorder %s229, %s231
    %p235 = scmp.eq.s32.totalorder %s69, 0
    %p236 = por %p234, %p235
    %p237 = scmp.ne.s32.totalorder %s229, %s231
    %p238 = scmp.eq.s32.totalorder %s74, 1
    %p239 = por %p237, %p238
    %p240 = scmp.ne.s32.totalorder %s231, %s232
    %p241 = scmp.eq.s32.totalorder %s74, 0
    %p242 = por %p240, %p241
    %p243 = scmp.ne.s32.totalorder %s231, %s232
    %p244 = scmp.eq.s32.totalorder %s75, 1
    %p245 = por %p243, %p244
    %p247 = scmp.ne.s32.totalorder %s232, %s246
    %p248 = scmp.eq.s32.totalorder %s75, 0
    %p249 = por %p247, %p248
    %s251 = sadd.s32 %s250, 1
    %p254 = scmp.eq.s32.totalorder %s69, 1
    %p255 = scmp.ne.s32.totalorder %s250, %s252
    %p256 = scmp.eq.s32.totalorder %s69, 0
    %p257 = por %p255, %p256
    %p258 = scmp.ne.s32.totalorder %s250, %s252
    %p259 = scmp.eq.s32.totalorder %s74, 1
    %p260 = por %p258, %p259
    %p261 = scmp.ne.s32.totalorder %s252, %s253
    %p262 = scmp.eq.s32.totalorder %s74, 0
    %p263 = por %p261, %p262
    %p264 = scmp.ne.s32.totalorder %s252, %s253
    %p265 = scmp.eq.s32.totalorder %s75, 1
    %p266 = por %p264, %p265
    %p268 = scmp.ne.s32.totalorder %s253, %s267
    %p269 = scmp.eq.s32.totalorder %s75, 0
    %p270 = por %p268, %p269
    %s272 = sadd.s32 %s271, 1
    %p275 = scmp.eq.s32.totalorder %s69, 1
    %p276 = scmp.ne.s32.totalorder %s271, %s273
    %p277 = scmp.eq.s32.totalorder %s69, 0
    %p278 = por %p276, %p277
    %p279 = scmp.ne.s32.totalorder %s271, %s273
    %p280 = scmp.eq.s32.totalorder %s74, 1
    %p281 = por %p279, %p280
    %p282 = scmp.ne.s32.totalorder %s273, %s274
    %p283 = scmp.eq.s32.totalorder %s74, 0
    %p284 = por %p282, %p283
    %p285 = scmp.ne.s32.totalorder %s273, %s274
    %p286 = scmp.eq.s32.totalorder %s75, 1
    %p287 = por %p285, %p286
    %p289 = scmp.ne.s32.totalorder %s274, %s288
    %p290 = scmp.eq.s32.totalorder %s75, 0
    %p291 = por %p289, %p290
    %s293 = sadd.s32 %s292, 1
    %p296 = scmp.eq.s32.totalorder %s69, 1
    %p297 = scmp.ne.s32.totalorder %s292, %s294
    %p298 = scmp.eq.s32.totalorder %s69, 0
    %p299 = por %p297, %p298
    %p300 = scmp.ne.s32.totalorder %s292, %s294
    %p301 = scmp.eq.s32.totalorder %s74, 1
    %p302 = por %p300, %p301
    %p303 = scmp.ne.s32.totalorder %s294, %s295
    %p304 = scmp.eq.s32.totalorder %s74, 0
    %p305 = por %p303, %p304
    %p306 = scmp.ne.s32.totalorder %s294, %s295
    %p307 = scmp.eq.s32.totalorder %s75, 1
    %p308 = por %p306, %p307
    %p310 = scmp.ne.s32.totalorder %s295, %s309
    %p311 = scmp.eq.s32.totalorder %s75, 0
    %p312 = por %p310, %p311
    %s314 = sadd.s32 %s313, 1
    %p317 = scmp.eq.s32.totalorder %s69, 1
    %p318 = scmp.ne.s32.totalorder %s313, %s315
    %p319 = scmp.eq.s32.totalorder %s69, 0
    %p320 = por %p318, %p319
    %p321 = scmp.ne.s32.totalorder %s313, %s315
    %p322 = scmp.eq.s32.totalorder %s74, 1
    %p323 = por %p321, %p322
    %p324 = scmp.ne.s32.totalorder %s315, %s316
    %p325 = scmp.eq.s32.totalorder %s74, 0
    %p326 = por %p324, %p325
    %p327 = scmp.ne.s32.totalorder %s315, %s316
    %p328 = scmp.eq.s32.totalorder %s75, 1
    %p329 = por %p327, %p328
    %p331 = scmp.ne.s32.totalorder %s316, %s330
    %p332 = scmp.eq.s32.totalorder %s75, 0
    %p333 = por %p331, %p332
    %s335 = sadd.s32 %s334, 1
    %p338 = scmp.eq.s32.totalorder %s69, 1
    %p339 = scmp.ne.s32.totalorder %s334, %s336
    %p340 = scmp.eq.s32.totalorder %s69, 0
    %p341 = por %p339, %p340
    %p342 = scmp.ne.s32.totalorder %s334, %s336
    %p343 = scmp.eq.s32.totalorder %s74, 1
    %p344 = por %p342, %p343
    %p345 = scmp.ne.s32.totalorder %s336, %s337
    %p346 = scmp.eq.s32.totalorder %s74, 0
    %p347 = por %p345, %p346
    %p348 = scmp.ne.s32.totalorder %s336, %s337
    %p349 = scmp.eq.s32.totalorder %s75, 1
    %p350 = por %p348, %p349
    %p352 = scmp.ne.s32.totalorder %s337, %s351
    %p353 = scmp.eq.s32.totalorder %s75, 0
    %p354 = por %p352, %p353
    %s356 = sadd.s32 %s355, 1
    %p359 = scmp.eq.s32.totalorder %s69, 1
    %p360 = scmp.ne.s32.totalorder %s355, %s357
    %p361 = scmp.eq.s32.totalorder %s69, 0
    %p362 = por %p360, %p361
    %p363 = scmp.ne.s32.totalorder %s355, %s357
    %p364 = scmp.eq.s32.totalorder %s74, 1
    %p365 = por %p363, %p364
    %p366 = scmp.ne.s32.totalorder %s357, %s358
    %p367 = scmp.eq.s32.totalorder %s74, 0
    %p368 = por %p366, %p367
    %p369 = scmp.ne.s32.totalorder %s357, %s358
    %p370 = scmp.eq.s32.totalorder %s75, 1
    %p371 = por %p369, %p370
    %p373 = scmp.ne.s32.totalorder %s358, %s372
    %p374 = scmp.eq.s32.totalorder %s75, 0
    %p375 = por %p373, %p374
    %s377 = sadd.s32 %s376, 1
    %p380 = scmp.eq.s32.totalorder %s69, 1
    %p381 = scmp.ne.s32.totalorder %s376, %s378
    %p382 = scmp.eq.s32.totalorder %s69, 0
    %p383 = por %p381, %p382
    %p384 = scmp.ne.s32.totalorder %s376, %s378
    %p385 = scmp.eq.s32.totalorder %s74, 1
    %p386 = por %p384, %p385
    %p387 = scmp.ne.s32.totalorder %s378, %s379
    %p388 = scmp.eq.s32.totalorder %s74, 0
    %p389 = por %p387, %p388
    %p390 = scmp.ne.s32.totalorder %s378, %s379
    %p391 = scmp.eq.s32.totalorder %s75, 1
    %p392 = por %p390, %p391
    %p394 = scmp.ne.s32.totalorder %s379, %s393
    %p395 = scmp.eq.s32.totalorder %s75, 0
    %p396 = por %p394, %p395
    %s398 = sadd.s32 %s397, 1
    %p401 = scmp.eq.s32.totalorder %s69, 1
    %p402 = scmp.ne.s32.totalorder %s397, %s399
    %p403 = scmp.eq.s32.totalorder %s69, 0
    %p404 = por %p402, %p403
    %p405 = scmp.ne.s32.totalorder %s397, %s399
    %p406 = scmp.eq.s32.totalorder %s74, 1
    %p407 = por %p405, %p406
    %p408 = scmp.ne.s32.totalorder %s399, %s400
    %p409 = scmp.eq.s32.totalorder %s74, 0
    %p410 = por %p408, %p409
    %p411 = scmp.ne.s32.totalorder %s399, %s400
    %p412 = scmp.eq.s32.totalorder %s75, 1
    %p413 = por %p411, %p412
    %p415 = scmp.ne.s32.totalorder %s400, %s414
    %p416 = scmp.eq.s32.totalorder %s75, 0
    %p417 = por %p415, %p416
    %s419 = sadd.s32 %s418, 1
    %p422 = scmp.eq.s32.totalorder %s69, 1
    %p423 = scmp.ne.s32.totalorder %s418, %s420
    %p424 = scmp.eq.s32.totalorder %s69, 0
    %p425 = por %p423, %p424
    %p426 = scmp.ne.s32.totalorder %s418, %s420
    %p427 = scmp.eq.s32.totalorder %s74, 1
    %p428 = por %p426, %p427
    %p429 = scmp.ne.s32.totalorder %s420, %s421
    %p430 = scmp.eq.s32.totalorder %s74, 0
    %p431 = por %p429, %p430
    %p432 = scmp.ne.s32.totalorder %s420, %s421
    %p433 = scmp.eq.s32.totalorder %s75, 1
    %p434 = por %p432, %p433
    %p436 = scmp.ne.s32.totalorder %s421, %s435
    %p437 = scmp.eq.s32.totalorder %s75, 0
    %p438 = por %p436, %p437
    %s440 = sadd.s32 %s439, 1
    %p443 = scmp.eq.s32.totalorder %s69, 1
    %p444 = scmp.ne.s32.totalorder %s439, %s441
    %p445 = scmp.eq.s32.totalorder %s69, 0
    %p446 = por %p444, %p445
    %p447 = scmp.ne.s32.totalorder %s439, %s441
    %p448 = scmp.eq.s32.totalorder %s74, 1
    %p449 = por %p447, %p448
    %p450 = scmp.ne.s32.totalorder %s441, %s442
    %p451 = scmp.eq.s32.totalorder %s74, 0
    %p452 = por %p450, %p451
    %p453 = scmp.ne.s32.totalorder %s441, %s442
    %p454 = scmp.eq.s32.totalorder %s75, 1
    %p455 = por %p453, %p454
    %p457 = scmp.ne.s32.totalorder %s442, %s456
    %p458 = scmp.eq.s32.totalorder %s75, 0
    %p459 = por %p457, %p458
    %s461 = sadd.s32 %s460, 1
    %p464 = scmp.eq.s32.totalorder %s69, 1
    %p465 = scmp.ne.s32.totalorder %s460, %s462
    %p466 = scmp.eq.s32.totalorder %s69, 0
    %p467 = por %p465, %p466
    %p468 = scmp.ne.s32.totalorder %s460, %s462
    %p469 = scmp.eq.s32.totalorder %s74, 1
    %p470 = por %p468, %p469
    %p471 = scmp.ne.s32.totalorder %s462, %s463
    %p472 = scmp.eq.s32.totalorder %s74, 0
    %p473 = por %p471, %p472
    %p474 = scmp.ne.s32.totalorder %s462, %s463
    %p475 = scmp.eq.s32.totalorder %s75, 1
    %p476 = por %p474, %p475
    %p478 = scmp.ne.s32.totalorder %s463, %s477
    %p479 = scmp.eq.s32.totalorder %s75, 0
    %p480 = por %p478, %p479
    %s482 = sadd.s32 %s481, 1
    %p485 = scmp.eq.s32.totalorder %s69, 1
    %p486 = scmp.ne.s32.totalorder %s481, %s483
    %p487 = scmp.eq.s32.totalorder %s69, 0
    %p488 = por %p486, %p487
    %p489 = scmp.ne.s32.totalorder %s481, %s483
    %p490 = scmp.eq.s32.totalorder %s74, 1
    %p491 = por %p489, %p490
    %p492 = scmp.ne.s32.totalorder %s483, %s484
    %p493 = scmp.eq.s32.totalorder %s74, 0
    %p494 = por %p492, %p493
    %p495 = scmp.ne.s32.totalorder %s483, %s484
    %p496 = scmp.eq.s32.totalorder %s75, 1
    %p497 = por %p495, %p496
    %p499 = scmp.ne.s32.totalorder %s484, %s498
    %p500 = scmp.eq.s32.totalorder %s75, 0
    %p501 = por %p499, %p500
    %s503 = sadd.s32 %s502, 1
    %p506 = scmp.eq.s32.totalorder %s69, 1
    %p507 = scmp.ne.s32.totalorder %s502, %s504
    %p508 = scmp.eq.s32.totalorder %s69, 0
    %p509 = por %p507, %p508
    %p510 = scmp.ne.s32.totalorder %s502, %s504
    %p511 = scmp.eq.s32.totalorder %s74, 1
    %p512 = por %p510, %p511
    %p513 = scmp.ne.s32.totalorder %s504, %s505
    %p514 = scmp.eq.s32.totalorder %s74, 0
    %p515 = por %p513, %p514
    %p516 = scmp.ne.s32.totalorder %s504, %s505
    %p517 = scmp.eq.s32.totalorder %s75, 1
    %p518 = por %p516, %p517
    %p520 = scmp.ne.s32.totalorder %s505, %s519
    %p521 = scmp.eq.s32.totalorder %s75, 0
    %p522 = por %p520, %p521
    %s524 = sadd.s32 %s523, 1
    %p527 = scmp.eq.s32.totalorder %s69, 1
    %p528 = scmp.ne.s32.totalorder %s523, %s525
    %p529 = scmp.eq.s32.totalorder %s69, 0
    %p530 = por %p528, %p529
    %p531 = scmp.ne.s32.totalorder %s523, %s525
    %p532 = scmp.eq.s32.totalorder %s74, 1
    %p533 = por %p531, %p532
    %p534 = scmp.ne.s32.totalorder %s525, %s526
    %p535 = scmp.eq.s32.totalorder %s74, 0
    %p536 = por %p534, %p535
    %p537 = scmp.ne.s32.totalorder %s525, %s526
    %p538 = scmp.eq.s32.totalorder %s75, 1
    %p539 = por %p537, %p538
    %p541 = scmp.ne.s32.totalorder %s526, %s540
    %p542 = scmp.eq.s32.totalorder %s75, 0
    %p543 = por %p541, %p542
    %s545 = sadd.s32 %s544, 1
    %p548 = scmp.eq.s32.totalorder %s69, 1
    %p549 = scmp.ne.s32.totalorder %s544, %s546
    %p550 = scmp.eq.s32.totalorder %s69, 0
    %p551 = por %p549, %p550
    %p552 = scmp.ne.s32.totalorder %s544, %s546
    %p553 = scmp.eq.s32.totalorder %s74, 1
    %p554 = por %p552, %p553
    %p555 = scmp.ne.s32.totalorder %s546, %s547
    %p556 = scmp.eq.s32.totalorder %s74, 0
    %p557 = por %p555, %p556
    %p558 = scmp.ne.s32.totalorder %s546, %s547
    %p559 = scmp.eq.s32.totalorder %s75, 1
    %p560 = por %p558, %p559
    %p562 = scmp.ne.s32.totalorder %s547, %s561
    %p563 = scmp.eq.s32.totalorder %s75, 0
    %p564 = por %p562, %p563
    %s566 = sadd.s32 %s565, 1
    %p569 = scmp.eq.s32.totalorder %s69, 1
    %p570 = scmp.ne.s32.totalorder %s565, %s567
    %p571 = scmp.eq.s32.totalorder %s69, 0
    %p572 = por %p570, %p571
    %p573 = scmp.ne.s32.totalorder %s565, %s567
    %p574 = scmp.eq.s32.totalorder %s74, 1
    %p575 = por %p573, %p574
    %p576 = scmp.ne.s32.totalorder %s567, %s568
    %p577 = scmp.eq.s32.totalorder %s74, 0
    %p578 = por %p576, %p577
    %p579 = scmp.ne.s32.totalorder %s567, %s568
    %p580 = scmp.eq.s32.totalorder %s75, 1
    %p581 = por %p579, %p580
    %p583 = scmp.ne.s32.totalorder %s568, %s582
    %p584 = scmp.eq.s32.totalorder %s75, 0
    %p585 = por %p583, %p584
    %s587 = sadd.s32 %s586, 1
    %p590 = scmp.eq.s32.totalorder %s69, 1
    %p591 = scmp.ne.s32.totalorder %s586, %s588
    %p592 = scmp.eq.s32.totalorder %s69, 0
    %p593 = por %p591, %p592
    %p594 = scmp.ne.s32.totalorder %s586, %s588
    %p595 = scmp.eq.s32.totalorder %s74, 1
    %p596 = por %p594, %p595
    %p597 = scmp.ne.s32.totalorder %s588, %s589
    %p598 = scmp.eq.s32.totalorder %s74, 0
    %p599 = por %p597, %p598
    %p600 = scmp.ne.s32.totalorder %s588, %s589
    %p601 = scmp.eq.s32.totalorder %s75, 1
    %p602 = por %p600, %p601
    %p604 = scmp.ne.s32.totalorder %s589, %s603
    %p605 = scmp.eq.s32.totalorder %s75, 0
    %p606 = por %p604, %p605
    %s608 = sadd.s32 %s607, 1
    %p611 = scmp.eq.s32.totalorder %s69, 1
    %p612 = scmp.ne.s32.totalorder %s607, %s609
    %p613 = scmp.eq.s32.totalorder %s69, 0
    %p614 = por %p612, %p613
    %p615 = scmp.ne.s32.totalorder %s607, %s609
    %p616 = scmp.eq.s32.totalorder %s74, 1
    %p617 = por %p615, %p616
    %p618 = scmp.ne.s32.totalorder %s609, %s610
    %p619 = scmp.eq.s32.totalorder %s74, 0
    %p620 = por %p618, %p619
    %p621 = scmp.ne.s32.totalorder %s609, %s610
    %p622 = scmp.eq.s32.totalorder %s75, 1
    %p623 = por %p621, %p622
    %p625 = scmp.ne.s32.totalorder %s610, %s624
    %p626 = scmp.eq.s32.totalorder %s75, 0
    %p627 = por %p625, %p626
    %s629 = sadd.s32 %s628, 1
    %p632 = scmp.eq.s32.totalorder %s69, 1
    %p633 = scmp.ne.s32.totalorder %s628, %s630
    %p634 = scmp.eq.s32.totalorder %s69, 0
    %p635 = por %p633, %p634
    %p636 = scmp.ne.s32.totalorder %s628, %s630
    %p637 = scmp.eq.s32.totalorder %s74, 1
    %p638 = por %p636, %p637
    %p639 = scmp.ne.s32.totalorder %s630, %s631
    %p640 = scmp.eq.s32.totalorder %s74, 0
    %p641 = por %p639, %p640
    %p642 = scmp.ne.s32.totalorder %s630, %s631
    %p643 = scmp.eq.s32.totalorder %s75, 1
    %p644 = por %p642, %p643
    %p646 = scmp.ne.s32.totalorder %s631, %s645
    %p647 = scmp.eq.s32.totalorder %s75, 0
    %p648 = por %p646, %p647
    %s650 = sadd.s32 %s649, 1
    %p653 = scmp.eq.s32.totalorder %s69, 1
    %p654 = scmp.ne.s32.totalorder %s649, %s651
    %p655 = scmp.eq.s32.totalorder %s69, 0
    %p656 = por %p654, %p655
    %p657 = scmp.ne.s32.totalorder %s649, %s651
    %p658 = scmp.eq.s32.totalorder %s74, 1
    %p659 = por %p657, %p658
    %p660 = scmp.ne.s32.totalorder %s651, %s652
    %p661 = scmp.eq.s32.totalorder %s74, 0
    %p662 = por %p660, %p661
    %p663 = scmp.ne.s32.totalorder %s651, %s652
    %p664 = scmp.eq.s32.totalorder %s75, 1
    %p665 = por %p663, %p664
    %p667 = scmp.ne.s32.totalorder %s652, %s666
    %p668 = scmp.eq.s32.totalorder %s75, 0
    %p669 = por %p667, %p668
    %s671 = sadd.s32 %s670, 1
    %p674 = scmp.eq.s32.totalorder %s69, 1
    %p675 = scmp.ne.s32.totalorder %s670, %s672
    %p676 = scmp.eq.s32.totalorder %s69, 0
    %p677 = por %p675, %p676
    %p678 = scmp.ne.s32.totalorder %s670, %s672
    %p679 = scmp.eq.s32.totalorder %s74, 1
    %p680 = por %p678, %p679
    %p681 = scmp.ne.s32.totalorder %s672, %s673
    %p682 = scmp.eq.s32.totalorder %s74, 0
    %p683 = por %p681, %p682
    %p684 = scmp.ne.s32.totalorder %s672, %s673
    %p685 = scmp.eq.s32.totalorder %s75, 1
    %p686 = por %p684, %p685
    %p688 = scmp.ne.s32.totalorder %s673, %s687
    %p689 = scmp.eq.s32.totalorder %s75, 0
    %p690 = por %p688, %p689
    %s691 = ssub.s32 %s69, %s76
    %p692 = scmp.eq.s32.totalorder %s691, 0
    %s694 = sadd.s32 %s693, 1
    %s695 = scalar_select %p692, %s693, %s694
    %p698 = pneg %p692
    %p699 = scmp.eq.s32.totalorder %s69, 1
    %p700 = por %p698, %p699
    %p701 = scmp.ne.s32.totalorder %s693, %s696
    %p702 = scmp.eq.s32.totalorder %s69, 0
    %p703 = por %p701, %p702
    %p704 = scmp.ne.s32.totalorder %s693, %s696
    %p705 = scmp.eq.s32.totalorder %s74, 1
    %p706 = por %p704, %p705
    %p707 = scmp.ne.s32.totalorder %s696, %s697
    %p708 = scmp.eq.s32.totalorder %s74, 0
    %p709 = por %p707, %p708
    %p710 = scmp.ne.s32.totalorder %s696, %s697
    %p711 = scmp.eq.s32.totalorder %s75, 1
    %p712 = por %p710, %p711
    %p714 = scmp.ne.s32.totalorder %s697, %s713
    %p715 = scmp.eq.s32.totalorder %s75, 0
    %p716 = por %p714, %p715
    %p717 = scmp.le.s32.totalorder 1, %s69
    %p718 = scmp.lt.s32.totalorder %s69, 3
    %p719 = pnand %p717, %p718
    %p720 = pneg %p719
    // Predicated region
    $region9: #{cnn_forward.1} parent=5 // pred_check
      _
    $region10: #{cnn_forward.1} parent=5 // pred_check_branch
      %722 = sbr.rel (%p719) target = $region12
    $region11: #{cnn_forward.1} parent=5 // pred_region
      %s723 = ssub.s32 %s69, 1
      // Predicated region
      $region13: #{cnn_forward.1} parent=11 // pred_check
        %p724 = pneg %p116
      $region14: #{cnn_forward.1} parent=11 // pred_check_branch
        %726 = sbr.rel (%p724) target = $region16
      $region15: #{cnn_forward.1} parent=11 // pred_region
        _
      $region16: #{cnn_forward.1} parent=11 // pred_fallthru
        _
      // Predicated region
      $region17: #{cnn_forward.1} parent=11 // pred_check
        %p727 = pneg %p137
      $region18: #{cnn_forward.1} parent=11 // pred_check_branch
        %729 = sbr.rel (%p727) target = $region20
      $region19: #{cnn_forward.1} parent=11 // pred_region
        _
      $region20: #{cnn_forward.1} parent=11 // pred_fallthru
        _
      // Predicated region
      $region21: #{cnn_forward.1} parent=11 // pred_check
        %p730 = pneg %p158
      $region22: #{cnn_forward.1} parent=11 // pred_check_branch
        %732 = sbr.rel (%p730) target = $region24
      $region23: #{cnn_forward.1} parent=11 // pred_region
        _
      $region24: #{cnn_forward.1} parent=11 // pred_fallthru
        _
      // Predicated region
      $region25: #{cnn_forward.1} parent=11 // pred_check
        %p733 = pneg %p179
      $region26: #{cnn_forward.1} parent=11 // pred_check_branch
        %735 = sbr.rel (%p733) target = $region28
      $region27: #{cnn_forward.1} parent=11 // pred_region
        _
      $region28: #{cnn_forward.1} parent=11 // pred_fallthru
        _
      // Predicated region
      $region29: #{cnn_forward.1} parent=11 // pred_check
        %p736 = pneg %p200
      $region30: #{cnn_forward.1} parent=11 // pred_check_branch
        %738 = sbr.rel (%p736) target = $region32
      $region31: #{cnn_forward.1} parent=11 // pred_region
        _
      $region32: #{cnn_forward.1} parent=11 // pred_fallthru
        _
      // Predicated region
      $region33: #{cnn_forward.1} parent=11 // pred_check
        %p739 = pneg %p221
      $region34: #{cnn_forward.1} parent=11 // pred_check_branch
        %741 = sbr.rel (%p739) target = $region36
      $region35: #{cnn_forward.1} parent=11 // pred_region
        _
      $region36: #{cnn_forward.1} parent=11 // pred_fallthru
        _
      // Predicated region
      $region37: #{cnn_forward.1} parent=11 // pred_check
        %p742 = pneg %p242
      $region38: #{cnn_forward.1} parent=11 // pred_check_branch
        %744 = sbr.rel (%p742) target = $region40
      $region39: #{cnn_forward.1} parent=11 // pred_region
        _
      $region40: #{cnn_forward.1} parent=11 // pred_fallthru
        _
      // Predicated region
      $region41: #{cnn_forward.1} parent=11 // pred_check
        %p745 = pneg %p263
      $region42: #{cnn_forward.1} parent=11 // pred_check_branch
        %747 = sbr.rel (%p745) target = $region44
      $region43: #{cnn_forward.1} parent=11 // pred_region
        _
      $region44: #{cnn_forward.1} parent=11 // pred_fallthru
        _
      // Predicated region
      $region45: #{cnn_forward.1} parent=11 // pred_check
        %p748 = pneg %p284
      $region46: #{cnn_forward.1} parent=11 // pred_check_branch
        %750 = sbr.rel (%p748) target = $region48
      $region47: #{cnn_forward.1} parent=11 // pred_region
        _
      $region48: #{cnn_forward.1} parent=11 // pred_fallthru
        _
      // Predicated region
      $region49: #{cnn_forward.1} parent=11 // pred_check
        %p751 = pneg %p305
      $region50: #{cnn_forward.1} parent=11 // pred_check_branch
        %753 = sbr.rel (%p751) target = $region52
      $region51: #{cnn_forward.1} parent=11 // pred_region
        _
      $region52: #{cnn_forward.1} parent=11 // pred_fallthru
        _
      // Predicated region
      $region53: #{cnn_forward.1} parent=11 // pred_check
        %p754 = pneg %p326
      $region54: #{cnn_forward.1} parent=11 // pred_check_branch
        %756 = sbr.rel (%p754) target = $region56
      $region55: #{cnn_forward.1} parent=11 // pred_region
        _
      $region56: #{cnn_forward.1} parent=11 // pred_fallthru
        _
      // Predicated region
      $region57: #{cnn_forward.1} parent=11 // pred_check
        %p757 = pneg %p347
      $region58: #{cnn_forward.1} parent=11 // pred_check_branch
        %759 = sbr.rel (%p757) target = $region60
      $region59: #{cnn_forward.1} parent=11 // pred_region
        _
      $region60: #{cnn_forward.1} parent=11 // pred_fallthru
        _
      // Predicated region
      $region61: #{cnn_forward.1} parent=11 // pred_check
        %p760 = pneg %p368
      $region62: #{cnn_forward.1} parent=11 // pred_check_branch
        %762 = sbr.rel (%p760) target = $region64
      $region63: #{cnn_forward.1} parent=11 // pred_region
        _
      $region64: #{cnn_forward.1} parent=11 // pred_fallthru
        _
      // Predicated region
      $region65: #{cnn_forward.1} parent=11 // pred_check
        %p763 = pneg %p389
      $region66: #{cnn_forward.1} parent=11 // pred_check_branch
        %765 = sbr.rel (%p763) target = $region68
      $region67: #{cnn_forward.1} parent=11 // pred_region
        _
      $region68: #{cnn_forward.1} parent=11 // pred_fallthru
        _
      // Predicated region
      $region69: #{cnn_forward.1} parent=11 // pred_check
        %p766 = pneg %p410
      $region70: #{cnn_forward.1} parent=11 // pred_check_branch
        %768 = sbr.rel (%p766) target = $region72
      $region71: #{cnn_forward.1} parent=11 // pred_region
        _
      $region72: #{cnn_forward.1} parent=11 // pred_fallthru
        _
      // Predicated region
      $region73: #{cnn_forward.1} parent=11 // pred_check
        %p769 = pneg %p431
      $region74: #{cnn_forward.1} parent=11 // pred_check_branch
        %771 = sbr.rel (%p769) target = $region76
      $region75: #{cnn_forward.1} parent=11 // pred_region
        _
      $region76: #{cnn_forward.1} parent=11 // pred_fallthru
        _
      // Predicated region
      $region77: #{cnn_forward.1} parent=11 // pred_check
        %p772 = pneg %p452
      $region78: #{cnn_forward.1} parent=11 // pred_check_branch
        %774 = sbr.rel (%p772) target = $region80
      $region79: #{cnn_forward.1} parent=11 // pred_region
        _
      $region80: #{cnn_forward.1} parent=11 // pred_fallthru
        _
      // Predicated region
      $region81: #{cnn_forward.1} parent=11 // pred_check
        %p775 = pneg %p473
      $region82: #{cnn_forward.1} parent=11 // pred_check_branch
        %777 = sbr.rel (%p775) target = $region84
      $region83: #{cnn_forward.1} parent=11 // pred_region
        _
      $region84: #{cnn_forward.1} parent=11 // pred_fallthru
        _
      // Predicated region
      $region85: #{cnn_forward.1} parent=11 // pred_check
        %p778 = pneg %p494
      $region86: #{cnn_forward.1} parent=11 // pred_check_branch
        %780 = sbr.rel (%p778) target = $region88
      $region87: #{cnn_forward.1} parent=11 // pred_region
        _
      $region88: #{cnn_forward.1} parent=11 // pred_fallthru
        _
      // Predicated region
      $region89: #{cnn_forward.1} parent=11 // pred_check
        %p781 = pneg %p515
      $region90: #{cnn_forward.1} parent=11 // pred_check_branch
        %783 = sbr.rel (%p781) target = $region92
      $region91: #{cnn_forward.1} parent=11 // pred_region
        _
      $region92: #{cnn_forward.1} parent=11 // pred_fallthru
        _
      // Predicated region
      $region93: #{cnn_forward.1} parent=11 // pred_check
        %p784 = pneg %p536
      $region94: #{cnn_forward.1} parent=11 // pred_check_branch
        %786 = sbr.rel (%p784) target = $region96
      $region95: #{cnn_forward.1} parent=11 // pred_region
        _
      $region96: #{cnn_forward.1} parent=11 // pred_fallthru
        _
      // Predicated region
      $region97: #{cnn_forward.1} parent=11 // pred_check
        %p787 = pneg %p557
      $region98: #{cnn_forward.1} parent=11 // pred_check_branch
        %789 = sbr.rel (%p787) target = $region100
      $region99: #{cnn_forward.1} parent=11 // pred_region
        _
      $region100: #{cnn_forward.1} parent=11 // pred_fallthru
        _
      // Predicated region
      $region101: #{cnn_forward.1} parent=11 // pred_check
        %p790 = pneg %p578
      $region102: #{cnn_forward.1} parent=11 // pred_check_branch
        %792 = sbr.rel (%p790) target = $region104
      $region103: #{cnn_forward.1} parent=11 // pred_region
        _
      $region104: #{cnn_forward.1} parent=11 // pred_fallthru
        _
      // Predicated region
      $region105: #{cnn_forward.1} parent=11 // pred_check
        %p793 = pneg %p599
      $region106: #{cnn_forward.1} parent=11 // pred_check_branch
        %795 = sbr.rel (%p793) target = $region108
      $region107: #{cnn_forward.1} parent=11 // pred_region
        _
      $region108: #{cnn_forward.1} parent=11 // pred_fallthru
        _
      // Predicated region
      $region109: #{cnn_forward.1} parent=11 // pred_check
        %p796 = pneg %p620
      $region110: #{cnn_forward.1} parent=11 // pred_check_branch
        %798 = sbr.rel (%p796) target = $region112
      $region111: #{cnn_forward.1} parent=11 // pred_region
        _
      $region112: #{cnn_forward.1} parent=11 // pred_fallthru
        _
      // Predicated region
      $region113: #{cnn_forward.1} parent=11 // pred_check
        %p799 = pneg %p641
      $region114: #{cnn_forward.1} parent=11 // pred_check_branch
        %801 = sbr.rel (%p799) target = $region116
      $region115: #{cnn_forward.1} parent=11 // pred_region
        _
      $region116: #{cnn_forward.1} parent=11 // pred_fallthru
        _
      // Predicated region
      $region117: #{cnn_forward.1} parent=11 // pred_check
        %p802 = pneg %p662
      $region118: #{cnn_forward.1} parent=11 // pred_check_branch
        %804 = sbr.rel (%p802) target = $region120
      $region119: #{cnn_forward.1} parent=11 // pred_region
        _
      $region120: #{cnn_forward.1} parent=11 // pred_fallthru
        _
      // Predicated region
      $region121: #{cnn_forward.1} parent=11 // pred_check
        %p805 = pneg %p683
      $region122: #{cnn_forward.1} parent=11 // pred_check_branch
        %807 = sbr.rel (%p805) target = $region124
      $region123: #{cnn_forward.1} parent=11 // pred_region
        _
      $region124: #{cnn_forward.1} parent=11 // pred_fallthru
        _
    $region12: #{cnn_forward.1} parent=5 // pred_fallthru
      _
    %p808 = scmp.lt.s32.totalorder %s69, 2
    // Predicated region
    $region125: #{cnn_forward.1} parent=5 // pred_check
      %p809 = pneg %p808
    $region126: #{cnn_forward.1} parent=5 // pred_check_branch
      %811 = sbr.rel (%p809) target = $region128
    $region127: #{cnn_forward.1} parent=5 // pred_region
      // Predicated region
      $region129: #{cnn_forward.1} parent=127 // pred_check
        %p812 = pneg %p89
      $region130: #{cnn_forward.1} parent=127 // pred_check_branch
        %814 = sbr.rel (%p812) target = $region132
      $region131: #{cnn_forward.1} parent=127 // pred_region
        %p815 = scmp.lt.s32.totalorder %s69, 1
        %s816 = scalar_select %p815, %s69, 1
        %s817 = smul.addr %s816, 2
        %s818 = scalar_lea.vmem %s1, %s817
      $region132: #{cnn_forward.1} parent=127 // pred_fallthru
        _
    $region128: #{cnn_forward.1} parent=5 // pred_fallthru
      _
    %p819 = scmp.le.s32.totalorder 1, %s69
    %p820 = scmp.lt.s32.totalorder %s69, 3
    %p821 = pnand %p819, %p820
    %p822 = pneg %p821
    // Predicated region
    $region133: #{cnn_forward.1} parent=5 // pred_check
      _
    $region134: #{cnn_forward.1} parent=5 // pred_check_branch
      %824 = sbr.rel (%p821) target = $region136
    $region135: #{cnn_forward.1} parent=5 // pred_region
      %s825 = ssub.s32 %s69, 1
      %p826 = scmp.lt.s32.totalorder %s74, 1
      %s827 = scalar_select %p826, %s74, 1
      %s828 = smul.addr %s827, 2
      %s829 = scalar_lea.vmem %s1, %s828
      %p830 = pneg %p95
      %p831 = pneg %p92
      %p832 = pneg %p116
      %p833 = pneg %p113
      %p834 = pneg %p137
      %p835 = pneg %p134
      %p836 = pneg %p158
      %p837 = pneg %p155
      %p838 = pneg %p179
      %p839 = pneg %p176
      %p840 = pneg %p200
      %p841 = pneg %p197
      %p842 = pneg %p221
      %p843 = pneg %p218
      %p844 = pneg %p242
      %p845 = pneg %p239
      %p846 = pneg %p263
      %p847 = pneg %p260
      %p848 = pneg %p284
      %p849 = pneg %p281
      %p850 = pneg %p305
      %p851 = pneg %p302
      %p852 = pneg %p326
      %p853 = pneg %p323
      %p854 = pneg %p347
      %p855 = pneg %p344
      %p856 = pneg %p368
      %p857 = pneg %p365
      %p858 = pneg %p389
      %p859 = pneg %p386
      %p860 = pneg %p410
      %p861 = pneg %p407
      %p862 = pneg %p431
      %p863 = pneg %p428
      %p864 = pneg %p452
      %p865 = pneg %p449
      %p866 = pneg %p473
      %p867 = pneg %p470
      %p868 = pneg %p494
      %p869 = pneg %p491
      %p870 = pneg %p515
      %p871 = pneg %p512
      %p872 = pneg %p536
      %p873 = pneg %p533
      %p874 = pneg %p557
      %p875 = pneg %p554
      %p876 = pneg %p578
      %p877 = pneg %p575
      %p878 = pneg %p599
      %p879 = pneg %p596
      %p880 = pneg %p620
      %p881 = pneg %p617
      %p882 = pneg %p641
      %p883 = pneg %p638
      %p884 = pneg %p662
      %p885 = pneg %p659
      %p886 = pneg %p683
      %p887 = pneg %p680
      %p888 = pneg %p709
      %p889 = pneg %p706
      %p890 = scmp.lt.s32.totalorder %s74, 1
      %s891 = scalar_select %p890, %s74, 1
      %s892 = scalar_lea.vmem %s59, %s891
      %p893 = scmp.lt.s32.totalorder %s74, 1
      %s894 = scalar_select %p893, %s74, 1
      %s895 = smul.addr %s894, 2
      %s896 = scalar_lea.vmem %s1, %s895
      %p897 = scmp.lt.s32.totalorder %s74, 1
      %s898 = scalar_select %p897, %s74, 1
      %s899 = scalar_lea.vmem %s59, %s898
      %v901 = vld [vmem:[%s896] sm:$0x3]
      %v902 = vld [vmem:[%s3] sm:$0xff]
      %v904 = vlaneseq
      %v905 = vshrl.u32 %v904, 7
      %v906 = vsub.s32 0, %v905
      %v907 = vrot.slane %v901, %v906
      %v908 = vlaneseq
      %v909 = vshrl.u32 %v908, 7
      %v910 = vsub.s32 1, %v909
      %v911 = vrot.slane %v901, %v910
      %912 = vrot.lane.b32.xlu0 %v907, 34
      %v913 = vpop.permute.xlu0 %912
      %914 = vrot.lane.b32.xlu0 %v911, 34
      %v915 = vpop.permute.xlu0 %914
      %vm916 = vcmask 277504
      %v917 = vsel %vm916, %v913, %v915
      %v920 = vsel %vm916, 0.0, %v913
      %v921 = vld [vmem:[%s35] sm:$0x11]
      %v922 = vunpack.c.l.bf16 %v921
      %v923 = vunpack.c.h.bf16 %v921
      %v924 = vmul.f32 %v920, %v922
      %v925 = vmul.f32 %v917, %v923
      %927 = vset.pattern.permute.xlu0 0
      %928 = vperm.xlu0 %927, %v902
      %v929 = vpop.permute.xlu0 %928
      %v931 = vlaneseq
      %v932 = vshrl.u32 %v931, 7
      %v933 = vsub.s32 0, %v932
      %v934 = vrot.slane %v924, %v933
      %v935 = vlaneseq
      %v936 = vshrl.u32 %v935, 7
      %v937 = vsub.s32 0, %v936
      %v938 = vrot.slane %v925, %v937
      %v939 = vmul.f32 %v929, %v934
      %v940 = vmul.f32 %v929, %v938
      %v941 = vadd.f32 %v939, 0.0
      %v942 = vadd.f32 %v940, 0.0
      %943 = vrot.lane.b32.xlu0 %v907, 33
      %v944 = vpop.permute.xlu0 %943
      %945 = vrot.lane.b32.xlu0 %v911, 33
      %v946 = vpop.permute.xlu0 %945
      %vm947 = vcmask 269312
      %v948 = vsel %vm947, %v944, %v946
      %v951 = vsel %vm947, 0.0, %v944
      %v954 = vrot.slane %v922, 1
      %v955 = vrot.slane %v923, 1
      %v958 = vmul.f32 %v951, %v954
      %v959 = vmul.f32 %v948, %v955
      %960 = vset.pattern.permute.xlu0 1
      %961 = vperm.xlu0 %960, %v902
      %v962 = vpop.permute.xlu0 %961
      %v964 = vlaneseq
      %v965 = vshrl.u32 %v964, 7
      %v966 = vsub.s32 0, %v965
      %v967 = vrot.slane %v958, %v966
      %v968 = vlaneseq
      %v969 = vshrl.u32 %v968, 7
      %v970 = vsub.s32 0, %v969
      %v971 = vrot.slane %v959, %v970
      %v972 = vmul.f32 %v962, %v967
      %v973 = vmul.f32 %v962, %v971
      %v974 = vadd.f32 %v941, %v972
      %v975 = vadd.f32 %v942, %v973
      %976 = vrot.lane.b32.xlu0 %v907, 32
      %v977 = vpop.permute.xlu0 %976
      %978 = vrot.lane.b32.xlu0 %v911, 32
      %v979 = vpop.permute.xlu0 %978
      %vm980 = vcmask 261120
      %v981 = vsel %vm980, %v977, %v979
      %v984 = vsel %vm980, 0.0, %v977
      %v985 = vld [vmem:[%s35] sm:$0x22]
      %v986 = vunpack.c.l.bf16 %v985
      %v987 = vunpack.c.h.bf16 %v985
      %v990 = vrot.slane %v986, 2
      %v991 = vrot.slane %v987, 2
      %v994 = vmul.f32 %v984, %v990
      %v995 = vmul.f32 %v981, %v991
      %996 = vset.pattern.permute.xlu0 2
      %997 = vperm.xlu0 %996, %v902
      %v998 = vpop.permute.xlu0 %997
      %v1000 = vlaneseq
      %v1001 = vshrl.u32 %v1000, 7
      %v1002 = vsub.s32 0, %v1001
      %v1003 = vrot.slane %v994, %v1002
      %v1004 = vlaneseq
      %v1005 = vshrl.u32 %v1004, 7
      %v1006 = vsub.s32 0, %v1005
      %v1007 = vrot.slane %v995, %v1006
      %v1008 = vmul.f32 %v998, %v1003
      %v1009 = vmul.f32 %v998, %v1007
      %v1010 = vadd.f32 %v974, %v1008
      %v1011 = vadd.f32 %v975, %v1009
      %1012 = vrot.lane.b32.xlu0 %v907, 31
      %v1013 = vpop.permute.xlu0 %1012
      %1014 = vrot.lane.b32.xlu0 %v911, 31
      %v1015 = vpop.permute.xlu0 %1014
      %vm1016 = vcmask 252928
      %v1017 = vsel %vm1016, %v1013, %v1015
      %v1020 = vsel %vm1016, 0.0, %v1013
      %v1021 = vrot.slane %v986, 3
      %v1022 = vrot.slane %v987, 3
      %v1025 = vmul.f32 %v1020, %v1021
      %v1026 = vmul.f32 %v1017, %v1022
      %1027 = vset.pattern.permute.xlu0 3
      %1028 = vperm.xlu0 %1027, %v902
      %v1029 = vpop.permute.xlu0 %1028
      %v1031 = vlaneseq
      %v1032 = vshrl.u32 %v1031, 7
      %v1033 = vsub.s32 0, %v1032
      %v1034 = vrot.slane %v1025, %v1033
      %v1035 = vlaneseq
      %v1036 = vshrl.u32 %v1035, 7
      %v1037 = vsub.s32 0, %v1036
      %v1038 = vrot.slane %v1026, %v1037
      %v1039 = vmul.f32 %v1029, %v1034
      %v1040 = vmul.f32 %v1029, %v1038
      %v1041 = vadd.f32 %v1010, %v1039
      %v1042 = vadd.f32 %v1011, %v1040
      %1043 = vrot.lane.b32.xlu0 %v907, 30
      %v1044 = vpop.permute.xlu0 %1043
      %1045 = vrot.lane.b32.xlu0 %v911, 30
      %v1046 = vpop.permute.xlu0 %1045
      %vm1047 = vcmask 244736
      %v1048 = vsel %vm1047, %v1044, %v1046
      %v1051 = vsel %vm1047, 0.0, %v1044
      %v1052 = vld [vmem:[%s35] sm:$0x44]
      %v1053 = vunpack.c.l.bf16 %v1052
      %v1054 = vunpack.c.h.bf16 %v1052
      %v1057 = vrot.slane %v1053, 4
      %v1058 = vrot.slane %v1054, 4
      %v1061 = vmul.f32 %v1051, %v1057
      %v1062 = vmul.f32 %v1048, %v1058
      %1063 = vset.pattern.permute.xlu0 4
      %1064 = vperm.xlu0 %1063, %v902
      %v1065 = vpop.permute.xlu0 %1064
      %v1067 = vlaneseq
      %v1068 = vshrl.u32 %v1067, 7
      %v1069 = vsub.s32 0, %v1068
      %v1070 = vrot.slane %v1061, %v1069
      %v1071 = vlaneseq
      %v1072 = vshrl.u32 %v1071, 7
      %v1073 = vsub.s32 0, %v1072
      %v1074 = vrot.slane %v1062, %v1073
      %v1075 = vmul.f32 %v1065, %v1070
      %v1076 = vmul.f32 %v1065, %v1074
      %v1077 = vadd.f32 %v1041, %v1075
      %v1078 = vadd.f32 %v1042, %v1076
      %1079 = vrot.lane.b32.xlu0 %v907, 18
      %v1080 = vpop.permute.xlu0 %1079
      %1081 = vrot.lane.b32.xlu0 %v911, 18
      %v1082 = vpop.permute.xlu0 %1081
      %vm1083 = vcmask 146432
      %v1084 = vsel %vm1083, %v1080, %v1082
      %v1087 = vsel %vm1083, 0.0, %v1080
      %v1088 = vrot.slane %v1053, 5
      %v1089 = vrot.slane %v1054, 5
      %v1092 = vmul.f32 %v1087, %v1088
      %v1093 = vmul.f32 %v1084, %v1089
      %1094 = vset.pattern.permute.xlu0 5
      %1095 = vperm.xlu0 %1094, %v902
      %v1096 = vpop.permute.xlu0 %1095
      %v1098 = vlaneseq
      %v1099 = vshrl.u32 %v1098, 7
      %v1100 = vsub.s32 0, %v1099
      %v1101 = vrot.slane %v1092, %v1100
      %v1102 = vlaneseq
      %v1103 = vshrl.u32 %v1102, 7
      %v1104 = vsub.s32 0, %v1103
      %v1105 = vrot.slane %v1093, %v1104
      %v1106 = vmul.f32 %v1096, %v1101
      %v1107 = vmul.f32 %v1096, %v1105
      %v1108 = vadd.f32 %v1077, %v1106
      %v1109 = vadd.f32 %v1078, %v1107
      %1110 = vrot.lane.b32.xlu0 %v907, 17
      %v1111 = vpop.permute.xlu0 %1110
      %1112 = vrot.lane.b32.xlu0 %v911, 17
      %v1113 = vpop.permute.xlu0 %1112
      %vm1114 = vcmask 138240
      %v1115 = vsel %vm1114, %v1111, %v1113
      %v1118 = vsel %vm1114, 0.0, %v1111
      %v1119 = vld [vmem:[%s35] sm:$0x88]
      %v1120 = vunpack.c.l.bf16 %v1119
      %v1121 = vunpack.c.h.bf16 %v1119
      %v1124 = vrot.slane %v1120, 6
      %v1125 = vrot.slane %v1121, 6
      %v1128 = vmul.f32 %v1118, %v1124
      %v1129 = vmul.f32 %v1115, %v1125
      %1130 = vset.pattern.permute.xlu0 6
      %1131 = vperm.xlu0 %1130, %v902
      %v1132 = vpop.permute.xlu0 %1131
      %v1134 = vlaneseq
      %v1135 = vshrl.u32 %v1134, 7
      %v1136 = vsub.s32 0, %v1135
      %v1137 = vrot.slane %v1128, %v1136
      %v1138 = vlaneseq
      %v1139 = vshrl.u32 %v1138, 7
      %v1140 = vsub.s32 0, %v1139
      %v1141 = vrot.slane %v1129, %v1140
      %v1142 = vmul.f32 %v1132, %v1137
      %v1143 = vmul.f32 %v1132, %v1141
      %v1144 = vadd.f32 %v1108, %v1142
      %v1145 = vadd.f32 %v1109, %v1143
      %1146 = vrot.lane.b32.xlu0 %v907, 16
      %v1147 = vpop.permute.xlu0 %1146
      %1148 = vrot.lane.b32.xlu0 %v911, 16
      %v1149 = vpop.permute.xlu0 %1148
      %vm1150 = vcmask 130048
      %v1151 = vsel %vm1150, %v1147, %v1149
      %v1154 = vsel %vm1150, 0.0, %v1147
      %v1155 = vrot.slane %v1120, 7
      %v1156 = vrot.slane %v1121, 7
      %v1159 = vmul.f32 %v1154, %v1155
      %v1160 = vmul.f32 %v1151, %v1156
      %1161 = vset.pattern.permute.xlu0 7
      %1162 = vperm.xlu0 %1161, %v902
      %v1163 = vpop.permute.xlu0 %1162
      %v1165 = vlaneseq
      %v1166 = vshrl.u32 %v1165, 7
      %v1167 = vsub.s32 0, %v1166
      %v1168 = vrot.slane %v1159, %v1167
      %v1169 = vlaneseq
      %v1170 = vshrl.u32 %v1169, 7
      %v1171 = vsub.s32 0, %v1170
      %v1172 = vrot.slane %v1160, %v1171
      %v1173 = vmul.f32 %v1163, %v1168
      %v1174 = vmul.f32 %v1163, %v1172
      %v1175 = vadd.f32 %v1144, %v1173
      %v1176 = vadd.f32 %v1145, %v1174
      %1177 = vrot.lane.b32.xlu0 %v907, 15
      %v1178 = vpop.permute.xlu0 %1177
      %1179 = vrot.lane.b32.xlu0 %v911, 15
      %v1180 = vpop.permute.xlu0 %1179
      %vm1181 = vcmask 121856
      %v1182 = vsel %vm1181, %v1178, %v1180
      %v1185 = vsel %vm1181, 0.0, %v1178
      %v1186 = vld [vmem:[%s35 + $0x8] sm:$0x11]
      %v1187 = vunpack.c.l.bf16 %v1186
      %v1188 = vunpack.c.h.bf16 %v1186
      %v1189 = vmul.f32 %v1185, %v1187
      %v1190 = vmul.f32 %v1182, %v1188
      %1191 = vset.pattern.permute.xlu0 8
      %1192 = vperm.xlu0 %1191, %v902
      %v1193 = vpop.permute.xlu0 %1192
      %v1195 = vlaneseq
      %v1196 = vshrl.u32 %v1195, 7
      %v1197 = vsub.s32 0, %v1196
      %v1198 = vrot.slane %v1189, %v1197
      %v1199 = vlaneseq
      %v1200 = vshrl.u32 %v1199, 7
      %v1201 = vsub.s32 0, %v1200
      %v1202 = vrot.slane %v1190, %v1201
      %v1203 = vmul.f32 %v1193, %v1198
      %v1204 = vmul.f32 %v1193, %v1202
      %v1205 = vadd.f32 %v1175, %v1203
      %v1206 = vadd.f32 %v1176, %v1204
      %1207 = vrot.lane.b32.xlu0 %v907, 14
      %v1208 = vpop.permute.xlu0 %1207
      %1209 = vrot.lane.b32.xlu0 %v911, 14
      %v1210 = vpop.permute.xlu0 %1209
      %vm1211 = vcmask 113664
      %v1212 = vsel %vm1211, %v1208, %v1210
      %v1215 = vsel %vm1211, 0.0, %v1208
      %v1218 = vrot.slane %v1187, 1
      %v1219 = vrot.slane %v1188, 1
      %v1222 = vmul.f32 %v1215, %v1218
      %v1223 = vmul.f32 %v1212, %v1219
      %1224 = vset.pattern.permute.xlu0 9
      %1225 = vperm.xlu0 %1224, %v902
      %v1226 = vpop.permute.xlu0 %1225
      %v1228 = vlaneseq
      %v1229 = vshrl.u32 %v1228, 7
      %v1230 = vsub.s32 0, %v1229
      %v1231 = vrot.slane %v1222, %v1230
      %v1232 = vlaneseq
      %v1233 = vshrl.u32 %v1232, 7
      %v1234 = vsub.s32 0, %v1233
      %v1235 = vrot.slane %v1223, %v1234
      %v1236 = vmul.f32 %v1226, %v1231
      %v1237 = vmul.f32 %v1226, %v1235
      %v1238 = vadd.f32 %v1205, %v1236
      %v1239 = vadd.f32 %v1206, %v1237
      %1240 = vrot.lane.b32.xlu0 %v907, 2
      %v1241 = vpop.permute.xlu0 %1240
      %1242 = vrot.lane.b32.xlu0 %v911, 2
      %v1243 = vpop.permute.xlu0 %1242
      %vm1244 = vcmask 15360
      %v1245 = vsel %vm1244, %v1241, %v1243
      %v1248 = vsel %vm1244, 0.0, %v1241
      %v1249 = vld [vmem:[%s35 + $0x8] sm:$0x22]
      %v1250 = vunpack.c.l.bf16 %v1249
      %v1251 = vunpack.c.h.bf16 %v1249
      %v1254 = vrot.slane %v1250, 2
      %v1255 = vrot.slane %v1251, 2
      %v1258 = vmul.f32 %v1248, %v1254
      %v1259 = vmul.f32 %v1245, %v1255
      %1260 = vset.pattern.permute.xlu0 10
      %1261 = vperm.xlu0 %1260, %v902
      %v1262 = vpop.permute.xlu0 %1261
      %v1264 = vlaneseq
      %v1265 = vshrl.u32 %v1264, 7
      %v1266 = vsub.s32 0, %v1265
      %v1267 = vrot.slane %v1258, %v1266
      %v1268 = vlaneseq
      %v1269 = vshrl.u32 %v1268, 7
      %v1270 = vsub.s32 0, %v1269
      %v1271 = vrot.slane %v1259, %v1270
      %v1272 = vmul.f32 %v1262, %v1267
      %v1273 = vmul.f32 %v1262, %v1271
      %v1274 = vadd.f32 %v1238, %v1272
      %v1275 = vadd.f32 %v1239, %v1273
      %1276 = vrot.lane.b32.xlu0 %v907, 1
      %v1277 = vpop.permute.xlu0 %1276
      %1278 = vrot.lane.b32.xlu0 %v911, 1
      %v1279 = vpop.permute.xlu0 %1278
      %vm1280 = vcmask 7168
      %v1281 = vsel %vm1280, %v1277, %v1279
      %v1284 = vsel %vm1280, 0.0, %v1277
      %v1285 = vrot.slane %v1250, 3
      %v1286 = vrot.slane %v1251, 3
      %v1289 = vmul.f32 %v1284, %v1285
      %v1290 = vmul.f32 %v1281, %v1286
      %1291 = vset.pattern.permute.xlu0 11
      %1292 = vperm.xlu0 %1291, %v902
      %v1293 = vpop.permute.xlu0 %1292
      %v1295 = vlaneseq
      %v1296 = vshrl.u32 %v1295, 7
      %v1297 = vsub.s32 0, %v1296
      %v1298 = vrot.slane %v1289, %v1297
      %v1299 = vlaneseq
      %v1300 = vshrl.u32 %v1299, 7
      %v1301 = vsub.s32 0, %v1300
      %v1302 = vrot.slane %v1290, %v1301
      %v1303 = vmul.f32 %v1293, %v1298
      %v1304 = vmul.f32 %v1293, %v1302
      %v1305 = vadd.f32 %v1274, %v1303
      %v1306 = vadd.f32 %v1275, %v1304
      %v1307 = vld [vmem:[%s35 + $0x8] sm:$0x44]
      %v1308 = vunpack.c.l.bf16 %v1307
      %v1309 = vunpack.c.h.bf16 %v1307
      %v1312 = vcombine.high %v1308, %v1309
      %v1314 = vunpack.c.l.s4 1966171168
      %v1315 = vunpack.c.0.s8 %v1314
      %v1316 = vlaneseq
      %v1317 = vshrl.u32 %v1316, 7
      %v1318 = vsub.s32 %v1315, %v1317
      %v1319 = vrot.slane %v1312, %v1318
      %v1321 = vunpack.c.l.s4 1966171168
      %v1322 = vunpack.c.0.s8 %v1321
      %v1323 = vlaneseq
      %v1324 = vshrl.u32 %v1323, 7
      %v1325 = vsub.s32 %v1322, %v1324
      %v1326 = vrot.slane %v1319, %v1325
      %v1328 = vmul.f32 %v901, %v1326
      %1329 = vset.pattern.permute.xlu0 12
      %1330 = vperm.xlu0 %1329, %v902
      %v1331 = vpop.permute.xlu0 %1330
      %v1334 = vlaneseq
      %v1335 = vshrl.u32 %v1334, 7
      %v1336 = vsub.s32 0, %v1335
      %v1337 = vrot.slane %v1328, %v1336
      %v1338 = vlaneseq
      %v1339 = vshrl.u32 %v1338, 7
      %v1340 = vsub.s32 1, %v1339
      %v1341 = vrot.slane %v1328, %v1340
      %v1344 = vmul.f32 %v1331, %v1337
      %v1345 = vmul.f32 %v1331, %v1341
      %v1346 = vadd.f32 %v1305, %v1344
      %v1347 = vadd.f32 %v1306, %v1345
      %1348 = vrot.lane.b32.xlu0 %v907, 127
      %v1349 = vpop.permute.xlu0 %1348
      %1350 = vrot.lane.b32.xlu0 %v911, 127
      %v1351 = vpop.permute.xlu0 %1350
      %vm1352 = vcmask 1039360
      %v1353 = vsel %vm1352, %v1349, %v1351
      %v1356 = vsel %vm1352, %v1351, 0.0
      %v1357 = vld [vmem:[%s35 + $0x8] sm:$0x44]
      %v1358 = vunpack.c.l.bf16 %v1357
      %v1359 = vunpack.c.h.bf16 %v1357
      %v1362 = vrot.slane %v1358, 5
      %v1363 = vrot.slane %v1359, 5
      %v1366 = vmul.f32 %v1353, %v1362
      %v1367 = vmul.f32 %v1356, %v1363
      %1368 = vset.pattern.permute.xlu0 13
      %1369 = vperm.xlu0 %1368, %v902
      %v1370 = vpop.permute.xlu0 %1369
      %v1372 = vlaneseq
      %v1373 = vshrl.u32 %v1372, 7
      %v1374 = vsub.s32 0, %v1373
      %v1375 = vrot.slane %v1366, %v1374
      %v1376 = vlaneseq
      %v1377 = vshrl.u32 %v1376, 7
      %v1378 = vsub.s32 0, %v1377
      %v1379 = vrot.slane %v1367, %v1378
      %v1380 = vmul.f32 %v1370, %v1375
      %v1381 = vmul.f32 %v1370, %v1379
      %v1382 = vadd.f32 %v1346, %v1380
      %v1383 = vadd.f32 %v1347, %v1381
      %1384 = vrot.lane.b32.xlu0 %v907, 126
      %v1385 = vpop.permute.xlu0 %1384
      %1386 = vrot.lane.b32.xlu0 %v911, 126
      %v1387 = vpop.permute.xlu0 %1386
      %vm1388 = vcmask 1031168
      %v1389 = vsel %vm1388, %v1385, %v1387
      %v1392 = vsel %vm1388, %v1387, 0.0
      %v1393 = vld [vmem:[%s35 + $0x8] sm:$0x88]
      %v1394 = vunpack.c.l.bf16 %v1393
      %v1395 = vunpack.c.h.bf16 %v1393
      %v1398 = vrot.slane %v1394, 6
      %v1399 = vrot.slane %v1395, 6
      %v1402 = vmul.f32 %v1389, %v1398
      %v1403 = vmul.f32 %v1392, %v1399
      %1404 = vset.pattern.permute.xlu0 14
      %1405 = vperm.xlu0 %1404, %v902
      %v1406 = vpop.permute.xlu0 %1405
      %v1408 = vlaneseq
      %v1409 = vshrl.u32 %v1408, 7
      %v1410 = vsub.s32 0, %v1409
      %v1411 = vrot.slane %v1402, %v1410
      %v1412 = vlaneseq
      %v1413 = vshrl.u32 %v1412, 7
      %v1414 = vsub.s32 0, %v1413
      %v1415 = vrot.slane %v1403, %v1414
      %v1416 = vmul.f32 %v1406, %v1411
      %v1417 = vmul.f32 %v1406, %v1415
      %v1418 = vadd.f32 %v1382, %v1416
      %v1419 = vadd.f32 %v1383, %v1417
      %1420 = vrot.lane.b32.xlu0 %v907, 114
      %v1421 = vpop.permute.xlu0 %1420
      %1422 = vrot.lane.b32.xlu0 %v911, 114
      %v1423 = vpop.permute.xlu0 %1422
      %vm1424 = vcmask 932864
      %v1425 = vsel %vm1424, %v1421, %v1423
      %v1428 = vsel %vm1424, %v1423, 0.0
      %v1429 = vrot.slane %v1394, 7
      %v1430 = vrot.slane %v1395, 7
      %v1433 = vmul.f32 %v1425, %v1429
      %v1434 = vmul.f32 %v1428, %v1430
      %1435 = vset.pattern.permute.xlu0 15
      %1436 = vperm.xlu0 %1435, %v902
      %v1437 = vpop.permute.xlu0 %1436
      %v1439 = vlaneseq
      %v1440 = vshrl.u32 %v1439, 7
      %v1441 = vsub.s32 0, %v1440
      %v1442 = vrot.slane %v1433, %v1441
      %v1443 = vlaneseq
      %v1444 = vshrl.u32 %v1443, 7
      %v1445 = vsub.s32 0, %v1444
      %v1446 = vrot.slane %v1434, %v1445
      %v1447 = vmul.f32 %v1437, %v1442
      %v1448 = vmul.f32 %v1437, %v1446
      %v1449 = vadd.f32 %v1418, %v1447
      %v1450 = vadd.f32 %v1419, %v1448
      %1451 = vrot.lane.b32.xlu0 %v907, 113
      %v1452 = vpop.permute.xlu0 %1451
      %1453 = vrot.lane.b32.xlu0 %v911, 113
      %v1454 = vpop.permute.xlu0 %1453
      %vm1455 = vcmask 924672
      %v1456 = vsel %vm1455, %v1452, %v1454
      %v1459 = vsel %vm1455, %v1454, 0.0
      %v1460 = vld [vmem:[%s35 + $0x10] sm:$0x11]
      %v1461 = vunpack.c.l.bf16 %v1460
      %v1462 = vunpack.c.h.bf16 %v1460
      %v1463 = vmul.f32 %v1456, %v1461
      %v1464 = vmul.f32 %v1459, %v1462
      %1465 = vset.pattern.permute.xlu0 16
      %1466 = vperm.xlu0 %1465, %v902
      %v1467 = vpop.permute.xlu0 %1466
      %v1469 = vlaneseq
      %v1470 = vshrl.u32 %v1469, 7
      %v1471 = vsub.s32 0, %v1470
      %v1472 = vrot.slane %v1463, %v1471
      %v1473 = vlaneseq
      %v1474 = vshrl.u32 %v1473, 7
      %v1475 = vsub.s32 0, %v1474
      %v1476 = vrot.slane %v1464, %v1475
      %v1477 = vmul.f32 %v1467, %v1472
      %v1478 = vmul.f32 %v1467, %v1476
      %v1479 = vadd.f32 %v1449, %v1477
      %v1480 = vadd.f32 %v1450, %v1478
      %1481 = vrot.lane.b32.xlu0 %v907, 112
      %v1482 = vpop.permute.xlu0 %1481
      %1483 = vrot.lane.b32.xlu0 %v911, 112
      %v1484 = vpop.permute.xlu0 %1483
      %vm1485 = vcmask 916480
      %v1486 = vsel %vm1485, %v1482, %v1484
      %v1489 = vsel %vm1485, %v1484, 0.0
      %v1492 = vrot.slane %v1461, 1
      %v1493 = vrot.slane %v1462, 1
      %v1496 = vmul.f32 %v1486, %v1492
      %v1497 = vmul.f32 %v1489, %v1493
      %1498 = vset.pattern.permute.xlu0 17
      %1499 = vperm.xlu0 %1498, %v902
      %v1500 = vpop.permute.xlu0 %1499
      %v1502 = vlaneseq
      %v1503 = vshrl.u32 %v1502, 7
      %v1504 = vsub.s32 0, %v1503
      %v1505 = vrot.slane %v1496, %v1504
      %v1506 = vlaneseq
      %v1507 = vshrl.u32 %v1506, 7
      %v1508 = vsub.s32 0, %v1507
      %v1509 = vrot.slane %v1497, %v1508
      %v1510 = vmul.f32 %v1500, %v1505
      %v1511 = vmul.f32 %v1500, %v1509
      %v1512 = vadd.f32 %v1479, %v1510
      %v1513 = vadd.f32 %v1480, %v1511
      %1514 = vrot.lane.b32.xlu0 %v907, 111
      %v1515 = vpop.permute.xlu0 %1514
      %1516 = vrot.lane.b32.xlu0 %v911, 111
      %v1517 = vpop.permute.xlu0 %1516
      %vm1518 = vcmask 908288
      %v1519 = vsel %vm1518, %v1515, %v1517
      %v1522 = vsel %vm1518, %v1517, 0.0
      %v1523 = vld [vmem:[%s35 + $0x10] sm:$0x22]
      %v1524 = vunpack.c.l.bf16 %v1523
      %v1525 = vunpack.c.h.bf16 %v1523
      %v1528 = vrot.slane %v1524, 2
      %v1529 = vrot.slane %v1525, 2
      %v1532 = vmul.f32 %v1519, %v1528
      %v1533 = vmul.f32 %v1522, %v1529
      %1534 = vset.pattern.permute.xlu0 18
      %1535 = vperm.xlu0 %1534, %v902
      %v1536 = vpop.permute.xlu0 %1535
      %v1538 = vlaneseq
      %v1539 = vshrl.u32 %v1538, 7
      %v1540 = vsub.s32 0, %v1539
      %v1541 = vrot.slane %v1532, %v1540
      %v1542 = vlaneseq
      %v1543 = vshrl.u32 %v1542, 7
      %v1544 = vsub.s32 0, %v1543
      %v1545 = vrot.slane %v1533, %v1544
      %v1546 = vmul.f32 %v1536, %v1541
      %v1547 = vmul.f32 %v1536, %v1545
      %v1548 = vadd.f32 %v1512, %v1546
      %v1549 = vadd.f32 %v1513, %v1547
      %1550 = vrot.lane.b32.xlu0 %v907, 110
      %v1551 = vpop.permute.xlu0 %1550
      %1552 = vrot.lane.b32.xlu0 %v911, 110
      %v1553 = vpop.permute.xlu0 %1552
      %vm1554 = vcmask 900096
      %v1555 = vsel %vm1554, %v1551, %v1553
      %v1558 = vsel %vm1554, %v1553, 0.0
      %v1559 = vrot.slane %v1524, 3
      %v1560 = vrot.slane %v1525, 3
      %v1563 = vmul.f32 %v1555, %v1559
      %v1564 = vmul.f32 %v1558, %v1560
      %1565 = vset.pattern.permute.xlu0 19
      %1566 = vperm.xlu0 %1565, %v902
      %v1567 = vpop.permute.xlu0 %1566
      %v1569 = vlaneseq
      %v1570 = vshrl.u32 %v1569, 7
      %v1571 = vsub.s32 0, %v1570
      %v1572 = vrot.slane %v1563, %v1571
      %v1573 = vlaneseq
      %v1574 = vshrl.u32 %v1573, 7
      %v1575 = vsub.s32 0, %v1574
      %v1576 = vrot.slane %v1564, %v1575
      %v1577 = vmul.f32 %v1567, %v1572
      %v1578 = vmul.f32 %v1567, %v1576
      %v1579 = vadd.f32 %v1548, %v1577
      %v1580 = vadd.f32 %v1549, %v1578
      %1581 = vrot.lane.b32.xlu0 %v907, 98
      %v1582 = vpop.permute.xlu0 %1581
      %1583 = vrot.lane.b32.xlu0 %v911, 98
      %v1584 = vpop.permute.xlu0 %1583
      %vm1585 = vcmask 801792
      %v1586 = vsel %vm1585, %v1582, %v1584
      %v1589 = vsel %vm1585, %v1584, 0.0
      %v1590 = vld [vmem:[%s35 + $0x10] sm:$0x44]
      %v1591 = vunpack.c.l.bf16 %v1590
      %v1592 = vunpack.c.h.bf16 %v1590
      %v1595 = vrot.slane %v1591, 4
      %v1596 = vrot.slane %v1592, 4
      %v1599 = vmul.f32 %v1586, %v1595
      %v1600 = vmul.f32 %v1589, %v1596
      %1601 = vset.pattern.permute.xlu0 20
      %1602 = vperm.xlu0 %1601, %v902
      %v1603 = vpop.permute.xlu0 %1602
      %v1605 = vlaneseq
      %v1606 = vshrl.u32 %v1605, 7
      %v1607 = vsub.s32 0, %v1606
      %v1608 = vrot.slane %v1599, %v1607
      %v1609 = vlaneseq
      %v1610 = vshrl.u32 %v1609, 7
      %v1611 = vsub.s32 0, %v1610
      %v1612 = vrot.slane %v1600, %v1611
      %v1613 = vmul.f32 %v1603, %v1608
      %v1614 = vmul.f32 %v1603, %v1612
      %v1615 = vadd.f32 %v1579, %v1613
      %v1616 = vadd.f32 %v1580, %v1614
      %1617 = vrot.lane.b32.xlu0 %v907, 97
      %v1618 = vpop.permute.xlu0 %1617
      %1619 = vrot.lane.b32.xlu0 %v911, 97
      %v1620 = vpop.permute.xlu0 %1619
      %vm1621 = vcmask 793600
      %v1622 = vsel %vm1621, %v1618, %v1620
      %v1625 = vsel %vm1621, %v1620, 0.0
      %v1626 = vrot.slane %v1591, 5
      %v1627 = vrot.slane %v1592, 5
      %v1630 = vmul.f32 %v1622, %v1626
      %v1631 = vmul.f32 %v1625, %v1627
      %1632 = vset.pattern.permute.xlu0 21
      %1633 = vperm.xlu0 %1632, %v902
      %v1634 = vpop.permute.xlu0 %1633
      %v1636 = vlaneseq
      %v1637 = vshrl.u32 %v1636, 7
      %v1638 = vsub.s32 0, %v1637
      %v1639 = vrot.slane %v1630, %v1638
      %v1640 = vlaneseq
      %v1641 = vshrl.u32 %v1640, 7
      %v1642 = vsub.s32 0, %v1641
      %v1643 = vrot.slane %v1631, %v1642
      %v1644 = vmul.f32 %v1634, %v1639
      %v1645 = vmul.f32 %v1634, %v1643
      %v1646 = vadd.f32 %v1615, %v1644
      %v1647 = vadd.f32 %v1616, %v1645
      %1648 = vrot.lane.b32.xlu0 %v907, 96
      %v1649 = vpop.permute.xlu0 %1648
      %1650 = vrot.lane.b32.xlu0 %v911, 96
      %v1651 = vpop.permute.xlu0 %1650
      %vm1652 = vcmask 785408
      %v1653 = vsel %vm1652, %v1649, %v1651
      %v1656 = vsel %vm1652, %v1651, 0.0
      %v1657 = vld [vmem:[%s35 + $0x10] sm:$0x88]
      %v1658 = vunpack.c.l.bf16 %v1657
      %v1659 = vunpack.c.h.bf16 %v1657
      %v1662 = vrot.slane %v1658, 6
      %v1663 = vrot.slane %v1659, 6
      %v1666 = vmul.f32 %v1653, %v1662
      %v1667 = vmul.f32 %v1656, %v1663
      %1668 = vset.pattern.permute.xlu0 22
      %1669 = vperm.xlu0 %1668, %v902
      %v1670 = vpop.permute.xlu0 %1669
      %v1672 = vlaneseq
      %v1673 = vshrl.u32 %v1672, 7
      %v1674 = vsub.s32 0, %v1673
      %v1675 = vrot.slane %v1666, %v1674
      %v1676 = vlaneseq
      %v1677 = vshrl.u32 %v1676, 7
      %v1678 = vsub.s32 0, %v1677
      %v1679 = vrot.slane %v1667, %v1678
      %v1680 = vmul.f32 %v1670, %v1675
      %v1681 = vmul.f32 %v1670, %v1679
      %v1682 = vadd.f32 %v1646, %v1680
      %v1683 = vadd.f32 %v1647, %v1681
      %1684 = vrot.lane.b32.xlu0 %v907, 95
      %v1685 = vpop.permute.xlu0 %1684
      %1686 = vrot.lane.b32.xlu0 %v911, 95
      %v1687 = vpop.permute.xlu0 %1686
      %vm1688 = vcmask 777216
      %v1689 = vsel %vm1688, %v1685, %v1687
      %v1692 = vsel %vm1688, %v1687, 0.0
      %v1693 = vrot.slane %v1658, 7
      %v1694 = vrot.slane %v1659, 7
      %v1697 = vmul.f32 %v1689, %v1693
      %v1698 = vmul.f32 %v1692, %v1694
      %1699 = vset.pattern.permute.xlu0 23
      %1700 = vperm.xlu0 %1699, %v902
      %v1701 = vpop.permute.xlu0 %1700
      %v1703 = vlaneseq
      %v1704 = vshrl.u32 %v1703, 7
      %v1705 = vsub.s32 0, %v1704
      %v1706 = vrot.slane %v1697, %v1705
      %v1707 = vlaneseq
      %v1708 = vshrl.u32 %v1707, 7
      %v1709 = vsub.s32 0, %v1708
      %v1710 = vrot.slane %v1698, %v1709
      %v1711 = vmul.f32 %v1701, %v1706
      %v1712 = vmul.f32 %v1701, %v1710
      %v1713 = vadd.f32 %v1682, %v1711
      %v1714 = vadd.f32 %v1683, %v1712
      %1715 = vrot.lane.b32.xlu0 %v907, 94
      %v1716 = vpop.permute.xlu0 %1715
      %1717 = vrot.lane.b32.xlu0 %v911, 94
      %v1718 = vpop.permute.xlu0 %1717
      %vm1719 = vcmask 769024
      %v1720 = vsel %vm1719, %v1716, %v1718
      %v1723 = vsel %vm1719, %v1718, 0.0
      %v1724 = vld [vmem:[%s35 + $0x18] sm:$0x11]
      %v1725 = vunpack.c.l.bf16 %v1724
      %v1726 = vunpack.c.h.bf16 %v1724
      %v1727 = vmul.f32 %v1720, %v1725
      %v1728 = vmul.f32 %v1723, %v1726
      %1729 = vset.pattern.permute.xlu0 24
      %1730 = vperm.xlu0 %1729, %v902
      %v1731 = vpop.permute.xlu0 %1730
      %v1733 = vlaneseq
      %v1734 = vshrl.u32 %v1733, 7
      %v1735 = vsub.s32 0, %v1734
      %v1736 = vrot.slane %v1727, %v1735
      %v1737 = vlaneseq
      %v1738 = vshrl.u32 %v1737, 7
      %v1739 = vsub.s32 0, %v1738
      %v1740 = vrot.slane %v1728, %v1739
      %v1741 = vmul.f32 %v1731, %v1736
      %v1742 = vmul.f32 %v1731, %v1740
      %v1743 = vadd.f32 %v1713, %v1741
      %v1744 = vadd.f32 %v1714, %v1742
      %v1745 = vld [vmem:[%s19] sm:$0xff]
      %1747 = vset.pattern.permute.xlu0 0
      %1748 = vperm.xlu0 %1747, %v1745
      %v1749 = vpop.permute.xlu0 %1748
      %v1751 = vadd.f32 %v1743, %v1749
      %v1752 = vadd.f32 %v1744, %v1749
      %1755 = vrot.lane.b32.xlu0 %v1751, 34
      %v1756 = vpop.permute.xlu0 %1755
      %1757 = vrot.lane.b32.xlu0 %v1752, 34
      %v1758 = vpop.permute.xlu0 %1757
      %v1759 = vsel %vm916, %v1756, %v1758
      %v1762 = vsel %vm916, 0.0, %v1756
      %v1763 = vpack.c.bf16 %v1762, %v1762
      %v1764 = vpack.c.bf16 %v1759, %v1759
      %v1766 = vunpack.c.l.b16 %v921
      %v1767 = vunpack.c.h.b16 %v921
      %v1768 = vpack.c.b16 %v1766, %v1766
      %v1769 = vpack.c.b16 %v1767, %v1767
      %v1771 = vpack.i.b16 %v1768, %v1768
      %v1773 = vlaneseq
      %v1774 = vshrl.u32 %v1773, 7
      %v1775 = vsub.s32 0, %v1774
      %v1776 = vrot.slane %v1771, %v1775
      %v1778 = vpack.i.b16 %v1769, %v1769
      %v1780 = vlaneseq
      %v1781 = vshrl.u32 %v1780, 7
      %v1782 = vsub.s32 0, %v1781
      %v1783 = vrot.slane %v1778, %v1782
      %v1784 = vmul.bf16 %v1763, %v1776
      %v1785 = vmul.bf16 %v1764, %v1783
      %1786 = vrot.lane.b32.xlu0 %v1751, 33
      %v1787 = vpop.permute.xlu0 %1786
      %1788 = vrot.lane.b32.xlu0 %v1752, 33
      %v1789 = vpop.permute.xlu0 %1788
      %v1790 = vsel %vm947, %v1787, %v1789
      %v1793 = vsel %vm947, 0.0, %v1787
      %v1794 = vpack.c.bf16 %v1793, %v1793
      %v1795 = vpack.c.bf16 %v1790, %v1790
      %v1796 = vshrl.u32 %v1768, 16
      %v1797 = vpack.i.b16 %v1796, %v1796
      %v1799 = vlaneseq
      %v1800 = vshrl.u32 %v1799, 7
      %v1801 = vsub.s32 0, %v1800
      %v1802 = vrot.slane %v1797, %v1801
      %v1803 = vshrl.u32 %v1769, 16
      %v1804 = vpack.i.b16 %v1803, %v1803
      %v1806 = vlaneseq
      %v1807 = vshrl.u32 %v1806, 7
      %v1808 = vsub.s32 0, %v1807
      %v1809 = vrot.slane %v1804, %v1808
      %v1810 = vmul.bf16 %v1794, %v1802
      %v1811 = vmul.bf16 %v1795, %v1809
      %1812 = vrot.lane.b32.xlu0 %v1751, 32
      %v1813 = vpop.permute.xlu0 %1812
      %1814 = vrot.lane.b32.xlu0 %v1752, 32
      %v1815 = vpop.permute.xlu0 %1814
      %v1816 = vsel %vm980, %v1813, %v1815
      %v1819 = vsel %vm980, 0.0, %v1813
      %v1820 = vpack.c.bf16 %v1819, %v1819
      %v1821 = vpack.c.bf16 %v1816, %v1816
      %v1823 = vunpack.c.l.b16 %v985
      %v1824 = vunpack.c.h.b16 %v985
      %v1825 = vpack.c.b16 %v1823, %v1823
      %v1826 = vpack.c.b16 %v1824, %v1824
      %v1828 = vpack.i.b16 %v1825, %v1825
      %v1830 = vlaneseq
      %v1831 = vshrl.u32 %v1830, 7
      %v1832 = vsub.s32 1, %v1831
      %v1833 = vrot.slane %v1828, %v1832
      %v1835 = vpack.i.b16 %v1826, %v1826
      %v1837 = vlaneseq
      %v1838 = vshrl.u32 %v1837, 7
      %v1839 = vsub.s32 1, %v1838
      %v1840 = vrot.slane %v1835, %v1839
      %v1841 = vmul.bf16 %v1820, %v1833
      %v1842 = vmul.bf16 %v1821, %v1840
      %1843 = vrot.lane.b32.xlu0 %v1751, 31
      %v1844 = vpop.permute.xlu0 %1843
      %1845 = vrot.lane.b32.xlu0 %v1752, 31
      %v1846 = vpop.permute.xlu0 %1845
      %v1847 = vsel %vm1016, %v1844, %v1846
      %v1850 = vsel %vm1016, 0.0, %v1844
      %v1851 = vpack.c.bf16 %v1850, %v1850
      %v1852 = vpack.c.bf16 %v1847, %v1847
      %v1853 = vshrl.u32 %v1825, 16
      %v1854 = vpack.i.b16 %v1853, %v1853
      %v1856 = vlaneseq
      %v1857 = vshrl.u32 %v1856, 7
      %v1858 = vsub.s32 1, %v1857
      %v1859 = vrot.slane %v1854, %v1858
      %v1860 = vshrl.u32 %v1826, 16
      %v1861 = vpack.i.b16 %v1860, %v1860
      %v1863 = vlaneseq
      %v1864 = vshrl.u32 %v1863, 7
      %v1865 = vsub.s32 1, %v1864
      %v1866 = vrot.slane %v1861, %v1865
      %v1867 = vmul.bf16 %v1851, %v1859
      %v1868 = vmul.bf16 %v1852, %v1866
      %1869 = vrot.lane.b32.xlu0 %v1751, 30
      %v1870 = vpop.permute.xlu0 %1869
      %1871 = vrot.lane.b32.xlu0 %v1752, 30
      %v1872 = vpop.permute.xlu0 %1871
      %v1873 = vsel %vm1047, %v1870, %v1872
      %v1876 = vsel %vm1047, 0.0, %v1870
      %v1877 = vpack.c.bf16 %v1876, %v1876
      %v1878 = vpack.c.bf16 %v1873, %v1873
      %v1880 = vunpack.c.l.b16 %v1052
      %v1881 = vunpack.c.h.b16 %v1052
      %v1882 = vpack.c.b16 %v1880, %v1880
      %v1883 = vpack.c.b16 %v1881, %v1881
      %v1885 = vpack.i.b16 %v1882, %v1882
      %v1887 = vlaneseq
      %v1888 = vshrl.u32 %v1887, 7
      %v1889 = vsub.s32 2, %v1888
      %v1890 = vrot.slane %v1885, %v1889
      %v1892 = vpack.i.b16 %v1883, %v1883
      %v1894 = vlaneseq
      %v1895 = vshrl.u32 %v1894, 7
      %v1896 = vsub.s32 2, %v1895
      %v1897 = vrot.slane %v1892, %v1896
      %v1898 = vmul.bf16 %v1877, %v1890
      %v1899 = vmul.bf16 %v1878, %v1897
      %1900 = vrot.lane.b32.xlu0 %v1751, 18
      %v1901 = vpop.permute.xlu0 %1900
      %1902 = vrot.lane.b32.xlu0 %v1752, 18
      %v1903 = vpop.permute.xlu0 %1902
      %v1904 = vsel %vm1083, %v1901, %v1903
      %v1907 = vsel %vm1083, 0.0, %v1901
      %v1908 = vpack.c.bf16 %v1907, %v1907
      %v1909 = vpack.c.bf16 %v1904, %v1904
      %v1910 = vshrl.u32 %v1882, 16
      %v1911 = vpack.i.b16 %v1910, %v1910
      %v1913 = vlaneseq
      %v1914 = vshrl.u32 %v1913, 7
      %v1915 = vsub.s32 2, %v1914
      %v1916 = vrot.slane %v1911, %v1915
      %v1917 = vshrl.u32 %v1883, 16
      %v1918 = vpack.i.b16 %v1917, %v1917
      %v1920 = vlaneseq
      %v1921 = vshrl.u32 %v1920, 7
      %v1922 = vsub.s32 2, %v1921
      %v1923 = vrot.slane %v1918, %v1922
      %v1924 = vmul.bf16 %v1908, %v1916
      %v1925 = vmul.bf16 %v1909, %v1923
      %1926 = vrot.lane.b32.xlu0 %v1751, 17
      %v1927 = vpop.permute.xlu0 %1926
      %1928 = vrot.lane.b32.xlu0 %v1752, 17
      %v1929 = vpop.permute.xlu0 %1928
      %v1930 = vsel %vm1114, %v1927, %v1929
      %v1933 = vsel %vm1114, 0.0, %v1927
      %v1934 = vpack.c.bf16 %v1933, %v1933
      %v1935 = vpack.c.bf16 %v1930, %v1930
      %v1937 = vunpack.c.l.b16 %v1119
      %v1938 = vunpack.c.h.b16 %v1119
      %v1939 = vpack.c.b16 %v1937, %v1937
      %v1940 = vpack.c.b16 %v1938, %v1938
      %v1942 = vpack.i.b16 %v1939, %v1939
      %v1944 = vlaneseq
      %v1945 = vshrl.u32 %v1944, 7
      %v1946 = vsub.s32 3, %v1945
      %v1947 = vrot.slane %v1942, %v1946
      %v1949 = vpack.i.b16 %v1940, %v1940
      %v1951 = vlaneseq
      %v1952 = vshrl.u32 %v1951, 7
      %v1953 = vsub.s32 3, %v1952
      %v1954 = vrot.slane %v1949, %v1953
      %v1955 = vmul.bf16 %v1934, %v1947
      %v1956 = vmul.bf16 %v1935, %v1954
      %1957 = vrot.lane.b32.xlu0 %v1751, 16
      %v1958 = vpop.permute.xlu0 %1957
      %1959 = vrot.lane.b32.xlu0 %v1752, 16
      %v1960 = vpop.permute.xlu0 %1959
      %v1961 = vsel %vm1150, %v1958, %v1960
      %v1964 = vsel %vm1150, 0.0, %v1958
      %v1965 = vpack.c.bf16 %v1964, %v1964
      %v1966 = vpack.c.bf16 %v1961, %v1961
      %v1967 = vshrl.u32 %v1939, 16
      %v1968 = vpack.i.b16 %v1967, %v1967
      %v1970 = vlaneseq
      %v1971 = vshrl.u32 %v1970, 7
      %v1972 = vsub.s32 3, %v1971
      %v1973 = vrot.slane %v1968, %v1972
      %v1974 = vshrl.u32 %v1940, 16
      %v1975 = vpack.i.b16 %v1974, %v1974
      %v1977 = vlaneseq
      %v1978 = vshrl.u32 %v1977, 7
      %v1979 = vsub.s32 3, %v1978
      %v1980 = vrot.slane %v1975, %v1979
      %v1981 = vmul.bf16 %v1965, %v1973
      %v1982 = vmul.bf16 %v1966, %v1980
      %1983 = vrot.lane.b32.xlu0 %v1751, 15
      %v1984 = vpop.permute.xlu0 %1983
      %1985 = vrot.lane.b32.xlu0 %v1752, 15
      %v1986 = vpop.permute.xlu0 %1985
      %v1987 = vsel %vm1181, %v1984, %v1986
      %v1990 = vsel %vm1181, 0.0, %v1984
      %v1991 = vpack.c.bf16 %v1990, %v1990
      %v1992 = vpack.c.bf16 %v1987, %v1987
      %v1994 = vunpack.c.l.b16 %v1186
      %v1995 = vunpack.c.h.b16 %v1186
      %v1996 = vpack.c.b16 %v1994, %v1994
      %v1997 = vpack.c.b16 %v1995, %v1995
      %v1999 = vpack.i.b16 %v1996, %v1996
      %v2001 = vlaneseq
      %v2002 = vshrl.u32 %v2001, 7
      %v2003 = vsub.s32 0, %v2002
      %v2004 = vrot.slane %v1999, %v2003
      %v2006 = vpack.i.b16 %v1997, %v1997
      %v2008 = vlaneseq
      %v2009 = vshrl.u32 %v2008, 7
      %v2010 = vsub.s32 0, %v2009
      %v2011 = vrot.slane %v2006, %v2010
      %v2012 = vmul.bf16 %v1991, %v2004
      %v2013 = vmul.bf16 %v1992, %v2011
      %2014 = vrot.lane.b32.xlu0 %v1751, 14
      %v2015 = vpop.permute.xlu0 %2014
      %2016 = vrot.lane.b32.xlu0 %v1752, 14
      %v2017 = vpop.permute.xlu0 %2016
      %v2018 = vsel %vm1211, %v2015, %v2017
      %v2021 = vsel %vm1211, 0.0, %v2015
      %v2022 = vpack.c.bf16 %v2021, %v2021
      %v2023 = vpack.c.bf16 %v2018, %v2018
      %v2024 = vshrl.u32 %v1996, 16
      %v2025 = vpack.i.b16 %v2024, %v2024
      %v2027 = vlaneseq
      %v2028 = vshrl.u32 %v2027, 7
      %v2029 = vsub.s32 0, %v2028
      %v2030 = vrot.slane %v2025, %v2029
      %v2031 = vshrl.u32 %v1997, 16
      %v2032 = vpack.i.b16 %v2031, %v2031
      %v2034 = vlaneseq
      %v2035 = vshrl.u32 %v2034, 7
      %v2036 = vsub.s32 0, %v2035
      %v2037 = vrot.slane %v2032, %v2036
      %v2038 = vmul.bf16 %v2022, %v2030
      %v2039 = vmul.bf16 %v2023, %v2037
      %2040 = vrot.lane.b32.xlu0 %v1751, 2
      %v2041 = vpop.permute.xlu0 %2040
      %2042 = vrot.lane.b32.xlu0 %v1752, 2
      %v2043 = vpop.permute.xlu0 %2042
      %v2044 = vsel %vm1244, %v2041, %v2043
      %v2047 = vsel %vm1244, 0.0, %v2041
      %v2048 = vpack.c.bf16 %v2047, %v2047
      %v2049 = vpack.c.bf16 %v2044, %v2044
      %v2051 = vunpack.c.l.b16 %v1249
      %v2052 = vunpack.c.h.b16 %v1249
      %v2053 = vpack.c.b16 %v2051, %v2051
      %v2054 = vpack.c.b16 %v2052, %v2052
      %v2056 = vpack.i.b16 %v2053, %v2053
      %v2058 = vlaneseq
      %v2059 = vshrl.u32 %v2058, 7
      %v2060 = vsub.s32 1, %v2059
      %v2061 = vrot.slane %v2056, %v2060
      %v2063 = vpack.i.b16 %v2054, %v2054
      %v2065 = vlaneseq
      %v2066 = vshrl.u32 %v2065, 7
      %v2067 = vsub.s32 1, %v2066
      %v2068 = vrot.slane %v2063, %v2067
      %v2069 = vmul.bf16 %v2048, %v2061
      %v2070 = vmul.bf16 %v2049, %v2068
      %2071 = vrot.lane.b32.xlu0 %v1751, 1
      %v2072 = vpop.permute.xlu0 %2071
      %2073 = vrot.lane.b32.xlu0 %v1752, 1
      %v2074 = vpop.permute.xlu0 %2073
      %v2075 = vsel %vm1280, %v2072, %v2074
      %v2078 = vsel %vm1280, 0.0, %v2072
      %v2079 = vpack.c.bf16 %v2078, %v2078
      %v2080 = vpack.c.bf16 %v2075, %v2075
      %v2081 = vshrl.u32 %v2053, 16
      %v2082 = vpack.i.b16 %v2081, %v2081
      %v2084 = vlaneseq
      %v2085 = vshrl.u32 %v2084, 7
      %v2086 = vsub.s32 1, %v2085
      %v2087 = vrot.slane %v2082, %v2086
      %v2088 = vshrl.u32 %v2054, 16
      %v2089 = vpack.i.b16 %v2088, %v2088
      %v2091 = vlaneseq
      %v2092 = vshrl.u32 %v2091, 7
      %v2093 = vsub.s32 1, %v2092
      %v2094 = vrot.slane %v2089, %v2093
      %v2095 = vmul.bf16 %v2079, %v2087
      %v2096 = vmul.bf16 %v2080, %v2094
      %v2097 = vpack.c.bf16 %v1751, %v1751
      %v2098 = vpack.c.bf16 %v1752, %v1752
      %v2100 = vunpack.c.l.b16 %v1307
      %v2101 = vunpack.c.h.b16 %v1307
      %v2102 = vpack.c.b16 %v2100, %v2100
      %v2103 = vpack.c.b16 %v2101, %v2101
      %v2105 = vpack.i.b16 %v2102, %v2102
      %v2107 = vlaneseq
      %v2108 = vshrl.u32 %v2107, 7
      %v2109 = vsub.s32 2, %v2108
      %v2110 = vrot.slane %v2105, %v2109
      %v2112 = vpack.i.b16 %v2103, %v2103
      %v2114 = vlaneseq
      %v2115 = vshrl.u32 %v2114, 7
      %v2116 = vsub.s32 2, %v2115
      %v2117 = vrot.slane %v2112, %v2116
      %v2118 = vmul.bf16 %v2097, %v2110
      %v2119 = vmul.bf16 %v2098, %v2117
      %2120 = vrot.lane.b32.xlu0 %v1751, 127
      %v2121 = vpop.permute.xlu0 %2120
      %2122 = vrot.lane.b32.xlu0 %v1752, 127
      %v2123 = vpop.permute.xlu0 %2122
      %v2124 = vsel %vm1352, %v2121, %v2123
      %v2127 = vsel %vm1352, %v2123, 0.0
      %v2128 = vpack.c.bf16 %v2124, %v2124
      %v2129 = vpack.c.bf16 %v2127, %v2127
      %v2131 = vunpack.c.l.b16 %v1357
      %v2132 = vunpack.c.h.b16 %v1357
      %v2133 = vpack.c.b16 %v2131, %v2131
      %v2134 = vpack.c.b16 %v2132, %v2132
      %v2136 = vshrl.u32 %v2133, 16
      %v2137 = vpack.i.b16 %v2136, %v2136
      %v2139 = vlaneseq
      %v2140 = vshrl.u32 %v2139, 7
      %v2141 = vsub.s32 2, %v2140
      %v2142 = vrot.slane %v2137, %v2141
      %v2144 = vshrl.u32 %v2134, 16
      %v2145 = vpack.i.b16 %v2144, %v2144
      %v2147 = vlaneseq
      %v2148 = vshrl.u32 %v2147, 7
      %v2149 = vsub.s32 2, %v2148
      %v2150 = vrot.slane %v2145, %v2149
      %v2151 = vmul.bf16 %v2128, %v2142
      %v2152 = vmul.bf16 %v2129, %v2150
      %2153 = vrot.lane.b32.xlu0 %v1751, 126
      %v2154 = vpop.permute.xlu0 %2153
      %2155 = vrot.lane.b32.xlu0 %v1752, 126
      %v2156 = vpop.permute.xlu0 %2155
      %v2157 = vsel %vm1388, %v2154, %v2156
      %v2160 = vsel %vm1388, %v2156, 0.0
      %v2161 = vpack.c.bf16 %v2157, %v2157
      %v2162 = vpack.c.bf16 %v2160, %v2160
      %v2164 = vunpack.c.l.b16 %v1393
      %v2165 = vunpack.c.h.b16 %v1393
      %v2166 = vpack.c.b16 %v2164, %v2164
      %v2167 = vpack.c.b16 %v2165, %v2165
      %v2169 = vpack.i.b16 %v2166, %v2166
      %v2171 = vlaneseq
      %v2172 = vshrl.u32 %v2171, 7
      %v2173 = vsub.s32 3, %v2172
      %v2174 = vrot.slane %v2169, %v2173
      %v2176 = vpack.i.b16 %v2167, %v2167
      %v2178 = vlaneseq
      %v2179 = vshrl.u32 %v2178, 7
      %v2180 = vsub.s32 3, %v2179
      %v2181 = vrot.slane %v2176, %v2180
      %v2182 = vmul.bf16 %v2161, %v2174
      %v2183 = vmul.bf16 %v2162, %v2181
      %2184 = vrot.lane.b32.xlu0 %v1751, 114
      %v2185 = vpop.permute.xlu0 %2184
      %2186 = vrot.lane.b32.xlu0 %v1752, 114
      %v2187 = vpop.permute.xlu0 %2186
      %v2188 = vsel %vm1424, %v2185, %v2187
      %v2191 = vsel %vm1424, %v2187, 0.0
      %v2192 = vpack.c.bf16 %v2188, %v2188
      %v2193 = vpack.c.bf16 %v2191, %v2191
      %v2194 = vshrl.u32 %v2166, 16
      %v2195 = vpack.i.b16 %v2194, %v2194
      %v2197 = vlaneseq
      %v2198 = vshrl.u32 %v2197, 7
      %v2199 = vsub.s32 3, %v2198
      %v2200 = vrot.slane %v2195, %v2199
      %v2201 = vshrl.u32 %v2167, 16
      %v2202 = vpack.i.b16 %v2201, %v2201
      %v2204 = vlaneseq
      %v2205 = vshrl.u32 %v2204, 7
      %v2206 = vsub.s32 3, %v2205
      %v2207 = vrot.slane %v2202, %v2206
      %v2208 = vmul.bf16 %v2192, %v2200
      %v2209 = vmul.bf16 %v2193, %v2207
      %2210 = vrot.lane.b32.xlu0 %v1751, 113
      %v2211 = vpop.permute.xlu0 %2210
      %2212 = vrot.lane.b32.xlu0 %v1752, 113
      %v2213 = vpop.permute.xlu0 %2212
      %v2214 = vsel %vm1455, %v2211, %v2213
      %v2217 = vsel %vm1455, %v2213, 0.0
      %v2218 = vpack.c.bf16 %v2214, %v2214
      %v2219 = vpack.c.bf16 %v2217, %v2217
      %v2221 = vunpack.c.l.b16 %v1460
      %v2222 = vunpack.c.h.b16 %v1460
      %v2223 = vpack.c.b16 %v2221, %v2221
      %v2224 = vpack.c.b16 %v2222, %v2222
      %v2226 = vpack.i.b16 %v2223, %v2223
      %v2228 = vlaneseq
      %v2229 = vshrl.u32 %v2228, 7
      %v2230 = vsub.s32 0, %v2229
      %v2231 = vrot.slane %v2226, %v2230
      %v2233 = vpack.i.b16 %v2224, %v2224
      %v2235 = vlaneseq
      %v2236 = vshrl.u32 %v2235, 7
      %v2237 = vsub.s32 0, %v2236
      %v2238 = vrot.slane %v2233, %v2237
      %v2239 = vmul.bf16 %v2218, %v2231
      %v2240 = vmul.bf16 %v2219, %v2238
      %2241 = vrot.lane.b32.xlu0 %v1751, 112
      %v2242 = vpop.permute.xlu0 %2241
      %2243 = vrot.lane.b32.xlu0 %v1752, 112
      %v2244 = vpop.permute.xlu0 %2243
      %v2245 = vsel %vm1485, %v2242, %v2244
      %v2248 = vsel %vm1485, %v2244, 0.0
      %v2249 = vpack.c.bf16 %v2245, %v2245
      %v2250 = vpack.c.bf16 %v2248, %v2248
      %v2251 = vshrl.u32 %v2223, 16
      %v2252 = vpack.i.b16 %v2251, %v2251
      %v2254 = vlaneseq
      %v2255 = vshrl.u32 %v2254, 7
      %v2256 = vsub.s32 0, %v2255
      %v2257 = vrot.slane %v2252, %v2256
      %v2258 = vshrl.u32 %v2224, 16
      %v2259 = vpack.i.b16 %v2258, %v2258
      %v2261 = vlaneseq
      %v2262 = vshrl.u32 %v2261, 7
      %v2263 = vsub.s32 0, %v2262
      %v2264 = vrot.slane %v2259, %v2263
      %v2265 = vmul.bf16 %v2249, %v2257
      %v2266 = vmul.bf16 %v2250, %v2264
      %2267 = vrot.lane.b32.xlu0 %v1751, 111
      %v2268 = vpop.permute.xlu0 %2267
      %2269 = vrot.lane.b32.xlu0 %v1752, 111
      %v2270 = vpop.permute.xlu0 %2269
      %v2271 = vsel %vm1518, %v2268, %v2270
      %v2274 = vsel %vm1518, %v2270, 0.0
      %v2275 = vpack.c.bf16 %v2271, %v2271
      %v2276 = vpack.c.bf16 %v2274, %v2274
      %v2278 = vunpack.c.l.b16 %v1523
      %v2279 = vunpack.c.h.b16 %v1523
      %v2280 = vpack.c.b16 %v2278, %v2278
      %v2281 = vpack.c.b16 %v2279, %v2279
      %v2283 = vpack.i.b16 %v2280, %v2280
      %v2285 = vlaneseq
      %v2286 = vshrl.u32 %v2285, 7
      %v2287 = vsub.s32 1, %v2286
      %v2288 = vrot.slane %v2283, %v2287
      %v2290 = vpack.i.b16 %v2281, %v2281
      %v2292 = vlaneseq
      %v2293 = vshrl.u32 %v2292, 7
      %v2294 = vsub.s32 1, %v2293
      %v2295 = vrot.slane %v2290, %v2294
      %v2296 = vmul.bf16 %v2275, %v2288
      %v2297 = vmul.bf16 %v2276, %v2295
      %2298 = vrot.lane.b32.xlu0 %v1751, 110
      %v2299 = vpop.permute.xlu0 %2298
      %2300 = vrot.lane.b32.xlu0 %v1752, 110
      %v2301 = vpop.permute.xlu0 %2300
      %v2302 = vsel %vm1554, %v2299, %v2301
      %v2305 = vsel %vm1554, %v2301, 0.0
      %v2306 = vpack.c.bf16 %v2302, %v2302
      %v2307 = vpack.c.bf16 %v2305, %v2305
      %v2308 = vshrl.u32 %v2280, 16
      %v2309 = vpack.i.b16 %v2308, %v2308
      %v2311 = vlaneseq
      %v2312 = vshrl.u32 %v2311, 7
      %v2313 = vsub.s32 1, %v2312
      %v2314 = vrot.slane %v2309, %v2313
      %v2315 = vshrl.u32 %v2281, 16
      %v2316 = vpack.i.b16 %v2315, %v2315
      %v2318 = vlaneseq
      %v2319 = vshrl.u32 %v2318, 7
      %v2320 = vsub.s32 1, %v2319
      %v2321 = vrot.slane %v2316, %v2320
      %v2322 = vmul.bf16 %v2306, %v2314
      %v2323 = vmul.bf16 %v2307, %v2321
      %2324 = vrot.lane.b32.xlu0 %v1751, 98
      %v2325 = vpop.permute.xlu0 %2324
      %2326 = vrot.lane.b32.xlu0 %v1752, 98
      %v2327 = vpop.permute.xlu0 %2326
      %v2328 = vsel %vm1585, %v2325, %v2327
      %v2331 = vsel %vm1585, %v2327, 0.0
      %v2332 = vpack.c.bf16 %v2328, %v2328
      %v2333 = vpack.c.bf16 %v2331, %v2331
      %v2335 = vunpack.c.l.b16 %v1590
      %v2336 = vunpack.c.h.b16 %v1590
      %v2337 = vpack.c.b16 %v2335, %v2335
      %v2338 = vpack.c.b16 %v2336, %v2336
      %v2340 = vpack.i.b16 %v2337, %v2337
      %v2342 = vlaneseq
      %v2343 = vshrl.u32 %v2342, 7
      %v2344 = vsub.s32 2, %v2343
      %v2345 = vrot.slane %v2340, %v2344
      %v2347 = vpack.i.b16 %v2338, %v2338
      %v2349 = vlaneseq
      %v2350 = vshrl.u32 %v2349, 7
      %v2351 = vsub.s32 2, %v2350
      %v2352 = vrot.slane %v2347, %v2351
      %v2353 = vmul.bf16 %v2332, %v2345
      %v2354 = vmul.bf16 %v2333, %v2352
      %2355 = vrot.lane.b32.xlu0 %v1751, 97
      %v2356 = vpop.permute.xlu0 %2355
      %2357 = vrot.lane.b32.xlu0 %v1752, 97
      %v2358 = vpop.permute.xlu0 %2357
      %v2359 = vsel %vm1621, %v2356, %v2358
      %v2362 = vsel %vm1621, %v2358, 0.0
      %v2363 = vpack.c.bf16 %v2359, %v2359
      %v2364 = vpack.c.bf16 %v2362, %v2362
      %v2365 = vshrl.u32 %v2337, 16
      %v2366 = vpack.i.b16 %v2365, %v2365
      %v2368 = vlaneseq
      %v2369 = vshrl.u32 %v2368, 7
      %v2370 = vsub.s32 2, %v2369
      %v2371 = vrot.slane %v2366, %v2370
      %v2372 = vshrl.u32 %v2338, 16
      %v2373 = vpack.i.b16 %v2372, %v2372
      %v2375 = vlaneseq
      %v2376 = vshrl.u32 %v2375, 7
      %v2377 = vsub.s32 2, %v2376
      %v2378 = vrot.slane %v2373, %v2377
      %v2379 = vmul.bf16 %v2363, %v2371
      %v2380 = vmul.bf16 %v2364, %v2378
      %2381 = vrot.lane.b32.xlu0 %v1751, 96
      %v2382 = vpop.permute.xlu0 %2381
      %2383 = vrot.lane.b32.xlu0 %v1752, 96
      %v2384 = vpop.permute.xlu0 %2383
      %v2385 = vsel %vm1652, %v2382, %v2384
      %v2388 = vsel %vm1652, %v2384, 0.0
      %v2389 = vpack.c.bf16 %v2385, %v2385
      %v2390 = vpack.c.bf16 %v2388, %v2388
      %v2392 = vunpack.c.l.b16 %v1657
      %v2393 = vunpack.c.h.b16 %v1657
      %v2394 = vpack.c.b16 %v2392, %v2392
      %v2395 = vpack.c.b16 %v2393, %v2393
      %v2397 = vpack.i.b16 %v2394, %v2394
      %v2399 = vlaneseq
      %v2400 = vshrl.u32 %v2399, 7
      %v2401 = vsub.s32 3, %v2400
      %v2402 = vrot.slane %v2397, %v2401
      %v2404 = vpack.i.b16 %v2395, %v2395
      %v2406 = vlaneseq
      %v2407 = vshrl.u32 %v2406, 7
      %v2408 = vsub.s32 3, %v2407
      %v2409 = vrot.slane %v2404, %v2408
      %v2410 = vmul.bf16 %v2389, %v2402
      %v2411 = vmul.bf16 %v2390, %v2409
      %2412 = vrot.lane.b32.xlu0 %v1751, 95
      %v2413 = vpop.permute.xlu0 %2412
      %2414 = vrot.lane.b32.xlu0 %v1752, 95
      %v2415 = vpop.permute.xlu0 %2414
      %v2416 = vsel %vm1688, %v2413, %v2415
      %v2419 = vsel %vm1688, %v2415, 0.0
      %v2420 = vpack.c.bf16 %v2416, %v2416
      %v2421 = vpack.c.bf16 %v2419, %v2419
      %v2422 = vshrl.u32 %v2394, 16
      %v2423 = vpack.i.b16 %v2422, %v2422
      %v2425 = vlaneseq
      %v2426 = vshrl.u32 %v2425, 7
      %v2427 = vsub.s32 3, %v2426
      %v2428 = vrot.slane %v2423, %v2427
      %v2429 = vshrl.u32 %v2395, 16
      %v2430 = vpack.i.b16 %v2429, %v2429
      %v2432 = vlaneseq
      %v2433 = vshrl.u32 %v2432, 7
      %v2434 = vsub.s32 3, %v2433
      %v2435 = vrot.slane %v2430, %v2434
      %v2436 = vmul.bf16 %v2420, %v2428
      %v2437 = vmul.bf16 %v2421, %v2435
      %2438 = vrot.lane.b32.xlu0 %v1751, 94
      %v2439 = vpop.permute.xlu0 %2438
      %2440 = vrot.lane.b32.xlu0 %v1752, 94
      %v2441 = vpop.permute.xlu0 %2440
      %v2442 = vsel %vm1719, %v2439, %v2441
      %v2445 = vsel %vm1719, %v2441, 0.0
      %v2446 = vpack.c.bf16 %v2442, %v2442
      %v2447 = vpack.c.bf16 %v2445, %v2445
      %v2449 = vunpack.c.l.b16 %v1724
      %v2450 = vunpack.c.h.b16 %v1724
      %v2451 = vpack.c.b16 %v2449, %v2449
      %v2452 = vpack.c.b16 %v2450, %v2450
      %v2454 = vpack.i.b16 %v2451, %v2451
      %v2456 = vlaneseq
      %v2457 = vshrl.u32 %v2456, 7
      %v2458 = vsub.s32 0, %v2457
      %v2459 = vrot.slane %v2454, %v2458
      %v2461 = vpack.i.b16 %v2452, %v2452
      %v2463 = vlaneseq
      %v2464 = vshrl.u32 %v2463, 7
      %v2465 = vsub.s32 0, %v2464
      %v2466 = vrot.slane %v2461, %v2465
      %v2467 = vmul.bf16 %v2446, %v2459
      %v2468 = vmul.bf16 %v2447, %v2466
      %v2471 = vrot.slane %v1810, 4
      %v2472 = vrot.slane %v1811, 4
      %v2475 = vrot.slane %v1867, 4
      %v2476 = vrot.slane %v1868, 4
      %v2479 = vrot.slane %v1924, 4
      %v2480 = vrot.slane %v1925, 4
      %v2483 = vrot.slane %v1981, 4
      %v2484 = vrot.slane %v1982, 4
      %v2487 = vrot.slane %v2038, 4
      %v2488 = vrot.slane %v2039, 4
      %v2491 = vrot.slane %v2095, 4
      %v2492 = vrot.slane %v2096, 4
      %v2495 = vrot.slane %v2151, 4
      %v2496 = vrot.slane %v2152, 4
      %v2499 = vrot.slane %v2208, 4
      %v2500 = vrot.slane %v2209, 4
      %vm2501 = vcmask 1043456
      %v2504 = vsel %vm2501, %v1784, %v2471
      %v2508 = vsel %vm2501, %v1785, %v2472
      %v2512 = vsel %vm2501, %v1841, %v2475
      %v2516 = vsel %vm2501, %v1842, %v2476
      %v2520 = vsel %vm2501, %v1898, %v2479
      %v2524 = vsel %vm2501, %v1899, %v2480
      %v2528 = vsel %vm2501, %v1955, %v2483
      %v2532 = vsel %vm2501, %v1956, %v2484
      %v2536 = vsel %vm2501, %v2012, %v2487
      %v2540 = vsel %vm2501, %v2013, %v2488
      %v2544 = vsel %vm2501, %v2069, %v2491
      %v2548 = vsel %vm2501, %v2070, %v2492
      %v2552 = vsel %vm2501, %v2118, %v2495
      %v2556 = vsel %vm2501, %v2119, %v2496
      %v2560 = vsel %vm2501, %v2182, %v2499
      %v2564 = vsel %vm2501, %v2183, %v2500
      %v2568 = vrot.slane %v2265, 4
      %v2569 = vrot.slane %v2266, 4
      %v2572 = vrot.slane %v2322, 4
      %v2573 = vrot.slane %v2323, 4
      %v2576 = vrot.slane %v2379, 4
      %v2577 = vrot.slane %v2380, 4
      %v2580 = vrot.slane %v2436, 4
      %v2581 = vrot.slane %v2437, 4
      %v2584 = vsel %vm2501, %v2239, %v2568
      %v2588 = vsel %vm2501, %v2240, %v2569
      %v2592 = vsel %vm2501, %v2296, %v2572
      %v2596 = vsel %vm2501, %v2297, %v2573
      %v2600 = vsel %vm2501, %v2353, %v2576
      %v2604 = vsel %vm2501, %v2354, %v2577
      %v2608 = vsel %vm2501, %v2410, %v2580
      %v2612 = vsel %vm2501, %v2411, %v2581
      %v2614 = vld [vmem:[%s5] sm:$0xff]
      %v2615 = vld [vmem:[%s21] sm:$0xff]
      %2617 = vset.pattern.permute.xlu0 0
      %2618 = vperm.xlu0 %2617, %v2615
      %v2619 = vpop.permute.xlu0 %2618
      %v2622 = vunpack.c.l.b16 %v2614
      %v2623 = vunpack.c.h.b16 %v2614
      %v2624 = vpack.c.b16 %v2622, %v2622
      %v2625 = vpack.c.b16 %v2623, %v2623
      %vm2627 = vcmask 588800
      %v2629 = vsel %vm2627, %v2625, 0
      %v2632 = vsel %vm2501, %v2467, 0
      %v2635 = vsel %vm2501, %v2468, 0
      %2637 = vmatprep.subr.bf16.mxu0 %v2508
      %2638 = vmatpush1.bf16.msra.mxu0 %v2504
      %2639 = vmatprep.subr.bf16.mxu0 %v2516
      %2640 = vmatpush1.bf16.msra.mxu0 %v2512
      %2641 = vmatprep.subr.bf16.mxu0 %v2524
      %2642 = vmatpush1.bf16.msra.mxu0 %v2520
      %2643 = vmatprep.subr.bf16.mxu0 %v2532
      %2644 = vmatpush1.bf16.msra.mxu0 %v2528
      %2645 = vmatprep.subr.bf16.mxu0 %v2540
      %2646 = vmatpush1.bf16.msra.mxu0 %v2536
      %2647 = vmatprep.subr.bf16.mxu0 %v2548
      %2648 = vmatpush1.bf16.msra.mxu0 %v2544
      %2649 = vmatprep.subr.bf16.mxu0 %v2556
      %2650 = vmatpush1.bf16.msra.mxu0 %v2552
      %2651 = vmatprep.subr.bf16.mxu0 %v2564
      %2652 = vmatpush1.bf16.msra.mxu0 %v2560
      %2653 = vmatprep.subr.bf16.mxu0 %v2588
      %2654 = vmatpush1.bf16.msra.mxu0 %v2584
      %2655 = vmatprep.subr.bf16.mxu0 %v2596
      %2656 = vmatpush1.bf16.msra.mxu0 %v2592
      %2657 = vmatprep.subr.bf16.mxu0 %v2604
      %2658 = vmatpush1.bf16.msra.mxu0 %v2600
      %2659 = vmatprep.subr.bf16.mxu0 %v2612
      %2660 = vmatpush1.bf16.msra.mxu0 %v2608
      %2661 = vmatprep.subr.bf16.mxu0 %v2635
      %2662 = vmatpush1.bf16.msra.mxu0 %v2632
      %2663 = vmatprep.subr.bf16.mxu0 0
      %2664 = vmatpush1.bf16.msra.mxu0 0
      %2665 = vmatprep.subr.bf16.mxu0 0
      %2666 = vmatpush1.bf16.msra.mxu0 0
      %2667 = vmatprep.subr.bf16.mxu0 0
      %2668 = vmatpush1.bf16.msra.mxu0 0
      %2669 = vmatprep.mubr.bf16.mxu0 %v2629
      %2670 = vmatmul.mubr.bf16.gmra.mrb[0].mxu0 %v2624
      %v2671 = vpop.f32.mrb[0].mxu0
      %v2672 = vadd.f32 %v2619, %v2671
      %v2673 = vpop.f32.mrb[0].mxu0
      %v2674 = vadd.f32 %v2619, %v2673
      %v2675 = vpop.f32.mrb[0].mxu0
      %v2676 = vpop.f32.mrb[0].mxu0
      %2677 = vdwg.mxu0
      %v2678 = vmax.f32 %v2672, 0.0
      %v2679 = vmax.f32 %v2674, 0.0
      %2682 = vrot.lane.b32.xlu0 %v2678, 127
      %v2683 = vpop.permute.xlu0 %2682
      %2684 = vrot.lane.b32.xlu0 %v2679, 127
      %v2685 = vpop.permute.xlu0 %2684
      %v2686 = vsel %vm1352, %v2683, %v2685
      %v2689 = vsel %vm1352, %v2685, 0.0
      %v2690 = vmax.f32 %v2678, %v2686
      %v2691 = vmax.f32 %v2679, %v2689
      %2694 = vrot.lane.b32.xlu0 %v2690, 112
      %v2695 = vpop.permute.xlu0 %2694
      %2696 = vrot.lane.b32.xlu0 %v2691, 112
      %v2697 = vpop.permute.xlu0 %2696
      %v2698 = vsel %vm1485, %v2695, %v2697
      %v2701 = vsel %vm1485, %v2697, 0.0
      %v2702 = vmax.f32 %v2690, %v2698
      %v2703 = vmax.f32 %v2691, %v2701
      %v2704 = vld [vmem:[%s43] sm:$0xff]
      %v2705 = vld [vmem:[%s43 + $0x8] sm:$0xff]
      %v2706 = vld [vmem:[%s43 + $0x10] sm:$0xff]
      %v2707 = vld [vmem:[%s43 + $0x18] sm:$0xff]
      %v2708 = vld [vmem:[%s43 + $0x20] sm:$0xff]
      %v2709 = vld [vmem:[%s43 + $0x28] sm:$0xff]
      %v2710 = vld [vmem:[%s43 + $0x30] sm:$0xff]
      %v2711 = vld [vmem:[%s43 + $0x38] sm:$0xff]
      %v2712 = vld [vmem:[%s43 + $0x40] sm:$0xff]
      %v2713 = vld [vmem:[%s43 + $0x48] sm:$0xff]
      %v2714 = vld [vmem:[%s43 + $0x50] sm:$0xff]
      %v2715 = vld [vmem:[%s43 + $0x58] sm:$0xff]
      %v2716 = vld [vmem:[%s43 + $0x60] sm:$0xff]
      %v2717 = vld [vmem:[%s43 + $0x68] sm:$0xff]
      %v2718 = vld [vmem:[%s43 + $0x70] sm:$0xff]
      %v2719 = vld [vmem:[%s43 + $0x78] sm:$0xff]
      %v2720 = vld [vmem:[%s43 + $0x80] sm:$0xff]
      %v2721 = vld [vmem:[%s43 + $0x88] sm:$0xff]
      %v2722 = vld [vmem:[%s43 + $0x90] sm:$0xff]
      %v2723 = vld [vmem:[%s43 + $0x98] sm:$0xff]
      %v2724 = vld [vmem:[%s43 + $0xa0] sm:$0xff]
      %v2725 = vld [vmem:[%s43 + $0xa8] sm:$0xff]
      %v2726 = vld [vmem:[%s43 + $0xb0] sm:$0xff]
      %v2727 = vld [vmem:[%s43 + $0xb8] sm:$0xff]
      %v2728 = vld [vmem:[%s43 + $0xc0] sm:$0xff]
      %v2729 = vld [vmem:[%s43 + $0xc8] sm:$0xff]
      %v2730 = vld [vmem:[%s43 + $0xd0] sm:$0xff]
      %v2731 = vld [vmem:[%s43 + $0xd8] sm:$0xff]
      %v2732 = vld [vmem:[%s43 + $0xe0] sm:$0xff]
      %v2733 = vld [vmem:[%s43 + $0xe8] sm:$0xff]
      %v2734 = vld [vmem:[%s43 + $0xf0] sm:$0xff]
      %v2735 = vld [vmem:[%s43 + $0xf8] sm:$0xff]
      %2736 = vmatprep.subr.mxu0 0.0
      %2737 = vmatpush1.msra.mxu0 %v2704
      %2738 = vmatprep.subr.mxu0 0.0
      %2739 = vmatpush1.msra.mxu0 %v2705
      %2740 = vmatprep.subr.mxu0 0.0
      %2741 = vmatpush1.msra.mxu0 %v2706
      %2742 = vmatprep.subr.mxu0 0.0
      %2743 = vmatpush1.msra.mxu0 %v2707
      %2744 = vmatprep.subr.mxu0 0.0
      %2745 = vmatpush1.msra.mxu0 %v2708
      %2746 = vmatprep.subr.mxu0 0.0
      %2747 = vmatpush1.msra.mxu0 %v2709
      %2748 = vmatprep.subr.mxu0 0.0
      %2749 = vmatpush1.msra.mxu0 %v2710
      %2750 = vmatprep.subr.mxu0 0.0
      %2751 = vmatpush1.msra.mxu0 %v2711
      %2752 = vmatprep.subr.mxu0 0.0
      %2753 = vmatpush1.msra.mxu0 %v2712
      %2754 = vmatprep.subr.mxu0 0.0
      %2755 = vmatpush1.msra.mxu0 %v2713
      %2756 = vmatprep.subr.mxu0 0.0
      %2757 = vmatpush1.msra.mxu0 %v2714
      %2758 = vmatprep.subr.mxu0 0.0
      %2759 = vmatpush1.msra.mxu0 %v2715
      %2760 = vmatprep.subr.mxu0 0.0
      %2761 = vmatpush1.msra.mxu0 %v2716
      %2762 = vmatprep.subr.mxu0 0.0
      %2763 = vmatpush1.msra.mxu0 %v2717
      %2764 = vmatprep.subr.mxu0 0.0
      %2765 = vmatpush1.msra.mxu0 %v2718
      %2766 = vmatprep.subr.mxu0 0.0
      %2767 = vmatpush1.msra.mxu0 %v2719
      %2768 = vmatprep.subr.mxu0 0.0
      %2769 = vmatpush1.msra.mxu0 %v2720
      %2770 = vmatprep.subr.mxu0 0.0
      %2771 = vmatpush1.msra.mxu0 %v2721
      %2772 = vmatprep.subr.mxu0 0.0
      %2773 = vmatpush1.msra.mxu0 %v2722
      %2774 = vmatprep.subr.mxu0 0.0
      %2775 = vmatpush1.msra.mxu0 %v2723
      %2776 = vmatprep.subr.mxu0 0.0
      %2777 = vmatpush1.msra.mxu0 %v2724
      %2778 = vmatprep.subr.mxu0 0.0
      %2779 = vmatpush1.msra.mxu0 %v2725
      %2780 = vmatprep.subr.mxu0 0.0
      %2781 = vmatpush1.msra.mxu0 %v2726
      %2782 = vmatprep.subr.mxu0 0.0
      %2783 = vmatpush1.msra.mxu0 %v2727
      %2784 = vmatprep.subr.mxu0 0.0
      %2785 = vmatpush1.msra.mxu0 %v2728
      %2786 = vmatprep.subr.mxu0 0.0
      %2787 = vmatpush1.msra.mxu0 %v2729
      %2788 = vmatprep.subr.mxu0 0.0
      %2789 = vmatpush1.msra.mxu0 %v2730
      %2790 = vmatprep.subr.mxu0 0.0
      %2791 = vmatpush1.msra.mxu0 %v2731
      %2792 = vmatprep.subr.mxu0 0.0
      %2793 = vmatpush1.msra.mxu0 %v2732
      %2794 = vmatprep.subr.mxu0 0.0
      %2795 = vmatpush1.msra.mxu0 %v2733
      %2796 = vmatprep.subr.mxu0 0.0
      %2797 = vmatpush1.msra.mxu0 %v2734
      %2798 = vmatprep.subr.mxu0 0.0
      %2799 = vmatpush1.msra.mxu0 %v2735
      %2800 = vmatprep.mubr.f32.mxu0 %v2703
      %2801 = vmatmul.mubr.f32.gmra.mrb[0].mxu0 %v2702
      %v2802 = vpop.f32.mrb[0].mxu0
      %v2803 = vadd.f32 0.0, %v2802
      %v2804 = vpop.f32.mrb[0].mxu0
      %2805 = vdwg.mxu0
      %2807 = vrot.lane.b32.xlu0 %v2803, 18
      %v2808 = vpop.permute.xlu0 %2807
      %v2810 = vsel %vm1083, 0.0, %v2808
      %v2811 = vpack.c.bf16 %v2810, %v2810
      %v2812 = vld [vmem:[%s37] sm:$0x1]
      %v2814 = vpack.i.b16 %v2812, %v2812
      %v2816 = vlaneseq
      %v2817 = vshrl.u32 %v2816, 7
      %v2818 = vsub.s32 0, %v2817
      %v2819 = vrot.slane %v2814, %v2818
      %v2820 = vmul.bf16 %v2811, %v2819
      %2821 = vrot.lane.b32.xlu0 %v2803, 17
      %v2822 = vpop.permute.xlu0 %2821
      %v2824 = vsel %vm1114, 0.0, %v2822
      %v2825 = vpack.c.bf16 %v2824, %v2824
      %v2826 = vshrl.u32 %v2812, 16
      %v2827 = vpack.i.b16 %v2826, %v2826
      %v2829 = vlaneseq
      %v2830 = vshrl.u32 %v2829, 7
      %v2831 = vsub.s32 0, %v2830
      %v2832 = vrot.slane %v2827, %v2831
      %v2833 = vmul.bf16 %v2825, %v2832
      %2834 = vrot.lane.b32.xlu0 %v2803, 16
      %v2835 = vpop.permute.xlu0 %2834
      %v2837 = vsel %vm1150, 0.0, %v2835
      %v2838 = vpack.c.bf16 %v2837, %v2837
      %v2839 = vld [vmem:[%s37] sm:$0x2]
      %v2841 = vpack.i.b16 %v2839, %v2839
      %v2843 = vlaneseq
      %v2844 = vshrl.u32 %v2843, 7
      %v2845 = vsub.s32 1, %v2844
      %v2846 = vrot.slane %v2841, %v2845
      %v2847 = vmul.bf16 %v2838, %v2846
      %2848 = vrot.lane.b32.xlu0 %v2803, 15
      %v2849 = vpop.permute.xlu0 %2848
      %v2851 = vsel %vm1181, 0.0, %v2849
      %v2852 = vpack.c.bf16 %v2851, %v2851
      %v2853 = vshrl.u32 %v2839, 16
      %v2854 = vpack.i.b16 %v2853, %v2853
      %v2856 = vlaneseq
      %v2857 = vshrl.u32 %v2856, 7
      %v2858 = vsub.s32 1, %v2857
      %v2859 = vrot.slane %v2854, %v2858
      %v2860 = vmul.bf16 %v2852, %v2859
      %2861 = vrot.lane.b32.xlu0 %v2803, 14
      %v2862 = vpop.permute.xlu0 %2861
      %v2864 = vsel %vm1211, 0.0, %v2862
      %v2865 = vpack.c.bf16 %v2864, %v2864
      %v2866 = vld [vmem:[%s37] sm:$0x4]
      %v2868 = vpack.i.b16 %v2866, %v2866
      %v2870 = vlaneseq
      %v2871 = vshrl.u32 %v2870, 7
      %v2872 = vsub.s32 2, %v2871
      %v2873 = vrot.slane %v2868, %v2872
      %v2874 = vmul.bf16 %v2865, %v2873
      %2875 = vrot.lane.b32.xlu0 %v2803, 10
      %v2876 = vpop.permute.xlu0 %2875
      %vm2878 = vcmask 80896
      %v2879 = vsel %vm2878, 0.0, %v2876
      %v2880 = vpack.c.bf16 %v2879, %v2879
      %v2881 = vshrl.u32 %v2866, 16
      %v2882 = vpack.i.b16 %v2881, %v2881
      %v2884 = vlaneseq
      %v2885 = vshrl.u32 %v2884, 7
      %v2886 = vsub.s32 2, %v2885
      %v2887 = vrot.slane %v2882, %v2886
      %v2888 = vmul.bf16 %v2880, %v2887
      %2889 = vrot.lane.b32.xlu0 %v2803, 9
      %v2890 = vpop.permute.xlu0 %2889
      %vm2892 = vcmask 72704
      %v2893 = vsel %vm2892, 0.0, %v2890
      %v2894 = vpack.c.bf16 %v2893, %v2893
      %v2895 = vld [vmem:[%s37] sm:$0x8]
      %v2897 = vpack.i.b16 %v2895, %v2895
      %v2899 = vlaneseq
      %v2900 = vshrl.u32 %v2899, 7
      %v2901 = vsub.s32 3, %v2900
      %v2902 = vrot.slane %v2897, %v2901
      %v2903 = vmul.bf16 %v2894, %v2902
      %2904 = vrot.lane.b32.xlu0 %v2803, 8
      %v2905 = vpop.permute.xlu0 %2904
      %vm2907 = vcmask 64512
      %v2908 = vsel %vm2907, 0.0, %v2905
      %v2909 = vpack.c.bf16 %v2908, %v2908
      %v2910 = vshrl.u32 %v2895, 16
      %v2911 = vpack.i.b16 %v2910, %v2910
      %v2913 = vlaneseq
      %v2914 = vshrl.u32 %v2913, 7
      %v2915 = vsub.s32 3, %v2914
      %v2916 = vrot.slane %v2911, %v2915
      %v2917 = vmul.bf16 %v2909, %v2916
      %2918 = vrot.lane.b32.xlu0 %v2803, 7
      %v2919 = vpop.permute.xlu0 %2918
      %vm2921 = vcmask 56320
      %v2922 = vsel %vm2921, 0.0, %v2919
      %v2923 = vpack.c.bf16 %v2922, %v2922
      %v2924 = vld [vmem:[%s37 + $0x4] sm:$0x1]
      %v2926 = vpack.i.b16 %v2924, %v2924
      %v2928 = vlaneseq
      %v2929 = vshrl.u32 %v2928, 7
      %v2930 = vsub.s32 0, %v2929
      %v2931 = vrot.slane %v2926, %v2930
      %v2932 = vmul.bf16 %v2923, %v2931
      %2933 = vrot.lane.b32.xlu0 %v2803, 6
      %v2934 = vpop.permute.xlu0 %2933
      %vm2936 = vcmask 48128
      %v2937 = vsel %vm2936, 0.0, %v2934
      %v2938 = vpack.c.bf16 %v2937, %v2937
      %v2939 = vshrl.u32 %v2924, 16
      %v2940 = vpack.i.b16 %v2939, %v2939
      %v2942 = vlaneseq
      %v2943 = vshrl.u32 %v2942, 7
      %v2944 = vsub.s32 0, %v2943
      %v2945 = vrot.slane %v2940, %v2944
      %v2946 = vmul.bf16 %v2938, %v2945
      %2947 = vrot.lane.b32.xlu0 %v2803, 2
      %v2948 = vpop.permute.xlu0 %2947
      %v2950 = vsel %vm1244, 0.0, %v2948
      %v2951 = vpack.c.bf16 %v2950, %v2950
      %v2952 = vld [vmem:[%s37 + $0x4] sm:$0x2]
      %v2954 = vpack.i.b16 %v2952, %v2952
      %v2956 = vlaneseq
      %v2957 = vshrl.u32 %v2956, 7
      %v2958 = vsub.s32 1, %v2957
      %v2959 = vrot.slane %v2954, %v2958
      %v2960 = vmul.bf16 %v2951, %v2959
      %2961 = vrot.lane.b32.xlu0 %v2803, 1
      %v2962 = vpop.permute.xlu0 %2961
      %v2964 = vsel %vm1280, 0.0, %v2962
      %v2965 = vpack.c.bf16 %v2964, %v2964
      %v2966 = vshrl.u32 %v2952, 16
      %v2967 = vpack.i.b16 %v2966, %v2966
      %v2969 = vlaneseq
      %v2970 = vshrl.u32 %v2969, 7
      %v2971 = vsub.s32 1, %v2970
      %v2972 = vrot.slane %v2967, %v2971
      %v2973 = vmul.bf16 %v2965, %v2972
      %v2974 = vpack.c.bf16 %v2803, %v2803
      %v2975 = vld [vmem:[%s37 + $0x4] sm:$0x4]
      %v2977 = vpack.i.b16 %v2975, %v2975
      %v2979 = vlaneseq
      %v2980 = vshrl.u32 %v2979, 7
      %v2981 = vsub.s32 2, %v2980
      %v2982 = vrot.slane %v2977, %v2981
      %v2983 = vmul.bf16 %v2974, %v2982
      %2984 = vrot.lane.b32.xlu0 %v2803, 127
      %v2985 = vpop.permute.xlu0 %2984
      %vm2987 = vcmask 515072
      %v2988 = vsel %vm2987, %v2985, 0.0
      %v2989 = vpack.c.bf16 %v2988, %v2988
      %v2990 = vshrl.u32 %v2975, 16
      %v2991 = vpack.i.b16 %v2990, %v2990
      %v2993 = vlaneseq
      %v2994 = vshrl.u32 %v2993, 7
      %v2995 = vsub.s32 2, %v2994
      %v2996 = vrot.slane %v2991, %v2995
      %v2997 = vmul.bf16 %v2989, %v2996
      %2998 = vrot.lane.b32.xlu0 %v2803, 126
      %v2999 = vpop.permute.xlu0 %2998
      %vm3001 = vcmask 506880
      %v3002 = vsel %vm3001, %v2999, 0.0
      %v3003 = vpack.c.bf16 %v3002, %v3002
      %v3004 = vld [vmem:[%s37 + $0x4] sm:$0x8]
      %v3006 = vpack.i.b16 %v3004, %v3004
      %v3008 = vlaneseq
      %v3009 = vshrl.u32 %v3008, 7
      %v3010 = vsub.s32 3, %v3009
      %v3011 = vrot.slane %v3006, %v3010
      %v3012 = vmul.bf16 %v3003, %v3011
      %3013 = vrot.lane.b32.xlu0 %v2803, 122
      %v3014 = vpop.permute.xlu0 %3013
      %vm3016 = vcmask 474112
      %v3017 = vsel %vm3016, %v3014, 0.0
      %v3018 = vpack.c.bf16 %v3017, %v3017
      %v3019 = vshrl.u32 %v3004, 16
      %v3020 = vpack.i.b16 %v3019, %v3019
      %v3022 = vlaneseq
      %v3023 = vshrl.u32 %v3022, 7
      %v3024 = vsub.s32 3, %v3023
      %v3025 = vrot.slane %v3020, %v3024
      %v3026 = vmul.bf16 %v3018, %v3025
      %3027 = vrot.lane.b32.xlu0 %v2803, 121
      %v3028 = vpop.permute.xlu0 %3027
      %vm3030 = vcmask 465920
      %v3031 = vsel %vm3030, %v3028, 0.0
      %v3032 = vpack.c.bf16 %v3031, %v3031
      %v3033 = vld [vmem:[%s37 + $0x8] sm:$0x1]
      %v3035 = vpack.i.b16 %v3033, %v3033
      %v3037 = vlaneseq
      %v3038 = vshrl.u32 %v3037, 7
      %v3039 = vsub.s32 0, %v3038
      %v3040 = vrot.slane %v3035, %v3039
      %v3041 = vmul.bf16 %v3032, %v3040
      %3042 = vrot.lane.b32.xlu0 %v2803, 120
      %v3043 = vpop.permute.xlu0 %3042
      %vm3045 = vcmask 457728
      %v3046 = vsel %vm3045, %v3043, 0.0
      %v3047 = vpack.c.bf16 %v3046, %v3046
      %v3048 = vshrl.u32 %v3033, 16
      %v3049 = vpack.i.b16 %v3048, %v3048
      %v3051 = vlaneseq
      %v3052 = vshrl.u32 %v3051, 7
      %v3053 = vsub.s32 0, %v3052
      %v3054 = vrot.slane %v3049, %v3053
      %v3055 = vmul.bf16 %v3047, %v3054
      %3056 = vrot.lane.b32.xlu0 %v2803, 119
      %v3057 = vpop.permute.xlu0 %3056
      %vm3059 = vcmask 449536
      %v3060 = vsel %vm3059, %v3057, 0.0
      %v3061 = vpack.c.bf16 %v3060, %v3060
      %v3062 = vld [vmem:[%s37 + $0x8] sm:$0x2]
      %v3064 = vpack.i.b16 %v3062, %v3062
      %v3066 = vlaneseq
      %v3067 = vshrl.u32 %v3066, 7
      %v3068 = vsub.s32 1, %v3067
      %v3069 = vrot.slane %v3064, %v3068
      %v3070 = vmul.bf16 %v3061, %v3069
      %3071 = vrot.lane.b32.xlu0 %v2803, 118
      %v3072 = vpop.permute.xlu0 %3071
      %vm3074 = vcmask 441344
      %v3075 = vsel %vm3074, %v3072, 0.0
      %v3076 = vpack.c.bf16 %v3075, %v3075
      %v3077 = vshrl.u32 %v3062, 16
      %v3078 = vpack.i.b16 %v3077, %v3077
      %v3080 = vlaneseq
      %v3081 = vshrl.u32 %v3080, 7
      %v3082 = vsub.s32 1, %v3081
      %v3083 = vrot.slane %v3078, %v3082
      %v3084 = vmul.bf16 %v3076, %v3083
      %3085 = vrot.lane.b32.xlu0 %v2803, 114
      %v3086 = vpop.permute.xlu0 %3085
      %vm3088 = vcmask 408576
      %v3089 = vsel %vm3088, %v3086, 0.0
      %v3090 = vpack.c.bf16 %v3089, %v3089
      %v3091 = vld [vmem:[%s37 + $0x8] sm:$0x4]
      %v3093 = vpack.i.b16 %v3091, %v3091
      %v3095 = vlaneseq
      %v3096 = vshrl.u32 %v3095, 7
      %v3097 = vsub.s32 2, %v3096
      %v3098 = vrot.slane %v3093, %v3097
      %v3099 = vmul.bf16 %v3090, %v3098
      %3100 = vrot.lane.b32.xlu0 %v2803, 113
      %v3101 = vpop.permute.xlu0 %3100
      %vm3103 = vcmask 400384
      %v3104 = vsel %vm3103, %v3101, 0.0
      %v3105 = vpack.c.bf16 %v3104, %v3104
      %v3106 = vshrl.u32 %v3091, 16
      %v3107 = vpack.i.b16 %v3106, %v3106
      %v3109 = vlaneseq
      %v3110 = vshrl.u32 %v3109, 7
      %v3111 = vsub.s32 2, %v3110
      %v3112 = vrot.slane %v3107, %v3111
      %v3113 = vmul.bf16 %v3105, %v3112
      %3114 = vrot.lane.b32.xlu0 %v2803, 112
      %v3115 = vpop.permute.xlu0 %3114
      %vm3117 = vcmask 392192
      %v3118 = vsel %vm3117, %v3115, 0.0
      %v3119 = vpack.c.bf16 %v3118, %v3118
      %v3120 = vld [vmem:[%s37 + $0x8] sm:$0x8]
      %v3122 = vpack.i.b16 %v3120, %v3120
      %v3124 = vlaneseq
      %v3125 = vshrl.u32 %v3124, 7
      %v3126 = vsub.s32 3, %v3125
      %v3127 = vrot.slane %v3122, %v3126
      %v3128 = vmul.bf16 %v3119, %v3127
      %3129 = vrot.lane.b32.xlu0 %v2803, 111
      %v3130 = vpop.permute.xlu0 %3129
      %vm3132 = vcmask 384000
      %v3133 = vsel %vm3132, %v3130, 0.0
      %v3134 = vpack.c.bf16 %v3133, %v3133
      %v3135 = vshrl.u32 %v3120, 16
      %v3136 = vpack.i.b16 %v3135, %v3135
      %v3138 = vlaneseq
      %v3139 = vshrl.u32 %v3138, 7
      %v3140 = vsub.s32 3, %v3139
      %v3141 = vrot.slane %v3136, %v3140
      %v3142 = vmul.bf16 %v3134, %v3141
      %3143 = vrot.lane.b32.xlu0 %v2803, 110
      %v3144 = vpop.permute.xlu0 %3143
      %vm3146 = vcmask 375808
      %v3147 = vsel %vm3146, %v3144, 0.0
      %v3148 = vpack.c.bf16 %v3147, %v3147
      %v3149 = vld [vmem:[%s37 + $0xc] sm:$0x1]
      %v3151 = vpack.i.b16 %v3149, %v3149
      %v3153 = vlaneseq
      %v3154 = vshrl.u32 %v3153, 7
      %v3155 = vsub.s32 0, %v3154
      %v3156 = vrot.slane %v3151, %v3155
      %v3157 = vmul.bf16 %v3148, %v3156
      %v3159 = vrot.slane %v2833, 4
      %v3161 = vrot.slane %v2860, 4
      %v3163 = vrot.slane %v2888, 4
      %v3165 = vrot.slane %v2917, 4
      %v3167 = vrot.slane %v2946, 4
      %v3169 = vrot.slane %v2973, 4
      %v3171 = vrot.slane %v2997, 4
      %v3173 = vrot.slane %v3026, 4
      %v3176 = vsel %vm2501, %v2820, %v3159
      %v3180 = vsel %vm2501, %v2847, %v3161
      %v3184 = vsel %vm2501, %v2874, %v3163
      %v3188 = vsel %vm2501, %v2903, %v3165
      %v3192 = vsel %vm2501, %v2932, %v3167
      %v3196 = vsel %vm2501, %v2960, %v3169
      %v3200 = vsel %vm2501, %v2983, %v3171
      %v3204 = vsel %vm2501, %v3012, %v3173
      %v3207 = vrot.slane %v3055, 4
      %v3209 = vrot.slane %v3084, 4
      %v3211 = vrot.slane %v3113, 4
      %v3213 = vrot.slane %v3142, 4
      %v3216 = vsel %vm2501, %v3041, %v3207
      %v3220 = vsel %vm2501, %v3070, %v3209
      %v3224 = vsel %vm2501, %v3099, %v3211
      %v3228 = vsel %vm2501, %v3128, %v3213
      %v3230 = vld [vmem:[%s7] sm:$0xff]
      %v3231 = vld [vmem:[%s7 + $0x8] sm:$0xff]
      %v3232 = vld [vmem:[%s23] sm:$0xff]
      %v3233 = vld [vmem:[%s23 + $0x8] sm:$0xff]
      %3235 = vset.pattern.permute.xlu0 0
      %3236 = vperm.xlu0 %3235, %v3232
      %v3237 = vpop.permute.xlu0 %3236
      %3240 = vset.pattern.permute.xlu0 0
      %3241 = vperm.xlu0 %3240, %v3233
      %v3242 = vpop.permute.xlu0 %3241
      %v3246 = vunpack.c.l.b16 %v3230
      %v3247 = vunpack.c.h.b16 %v3230
      %v3248 = vunpack.c.l.b16 %v3231
      %v3249 = vunpack.c.h.b16 %v3231
      %v3250 = vpack.c.b16 %v3248, %v3246
      %v3251 = vpack.c.b16 %v3249, %v3247
      %v3254 = vsel %vm2627, %v3251, 0
      %v3257 = vsel %vm2501, %v3157, 0
      %3259 = vmatprep.subr.bf16.mxu0 0
      %3260 = vmatpush1.bf16.msra.mxu0 %v3176
      %3261 = vmatprep.subr.bf16.mxu0 0
      %3262 = vmatpush1.bf16.msra.mxu0 %v3180
      %3263 = vmatprep.subr.bf16.mxu0 0
      %3264 = vmatpush1.bf16.msra.mxu0 %v3184
      %3265 = vmatprep.subr.bf16.mxu0 0
      %3266 = vmatpush1.bf16.msra.mxu0 %v3188
      %3267 = vmatprep.subr.bf16.mxu0 0
      %3268 = vmatpush1.bf16.msra.mxu0 %v3192
      %3269 = vmatprep.subr.bf16.mxu0 0
      %3270 = vmatpush1.bf16.msra.mxu0 %v3196
      %3271 = vmatprep.subr.bf16.mxu0 0
      %3272 = vmatpush1.bf16.msra.mxu0 %v3200
      %3273 = vmatprep.subr.bf16.mxu0 0
      %3274 = vmatpush1.bf16.msra.mxu0 %v3204
      %3275 = vmatprep.subr.bf16.mxu0 0
      %3276 = vmatpush1.bf16.msra.mxu0 %v3216
      %3277 = vmatprep.subr.bf16.mxu0 0
      %3278 = vmatpush1.bf16.msra.mxu0 %v3220
      %3279 = vmatprep.subr.bf16.mxu0 0
      %3280 = vmatpush1.bf16.msra.mxu0 %v3224
      %3281 = vmatprep.subr.bf16.mxu0 0
      %3282 = vmatpush1.bf16.msra.mxu0 %v3228
      %3283 = vmatprep.subr.bf16.mxu0 0
      %3284 = vmatpush1.bf16.msra.mxu0 %v3257
      %3285 = vmatprep.subr.bf16.mxu0 0
      %3286 = vmatpush1.bf16.msra.mxu0 0
      %3287 = vmatprep.subr.bf16.mxu0 0
      %3288 = vmatpush1.bf16.msra.mxu0 0
      %3289 = vmatprep.subr.bf16.mxu0 0
      %3290 = vmatpush1.bf16.msra.mxu0 0
      %3291 = vmatprep.mubr.bf16.mxu0 %v3254
      %3292 = vmatmul.mubr.bf16.gmra.mrb[0].mxu0 %v3250
      %v3293 = vpop.f32.mrb[0].mxu0
      %v3294 = vadd.f32 %v3237, %v3293
      %v3295 = vpop.f32.mrb[0].mxu0
      %v3296 = vpop.f32.mrb[0].mxu0
      %v3297 = vadd.f32 %v3242, %v3296
      %v3298 = vpop.f32.mrb[0].mxu0
      %3299 = vdwg.mxu0
      %3302 = vrot.lane.b32.xlu0 %v3294, 18
      %v3303 = vpop.permute.xlu0 %3302
      %3304 = vrot.lane.b32.xlu0 %v3297, 18
      %v3305 = vpop.permute.xlu0 %3304
      %v3308 = vsel %vm1083, 0.0, %v3303
      %v3309 = vsel %vm1083, 0.0, %v3305
      %v3310 = vpack.c.bf16 %v3309, %v3308
      %v3311 = vmul.bf16 %v3310, %v2819
      %3312 = vrot.lane.b32.xlu0 %v3294, 17
      %v3313 = vpop.permute.xlu0 %3312
      %3314 = vrot.lane.b32.xlu0 %v3297, 17
      %v3315 = vpop.permute.xlu0 %3314
      %v3318 = vsel %vm1114, 0.0, %v3313
      %v3319 = vsel %vm1114, 0.0, %v3315
      %v3320 = vpack.c.bf16 %v3319, %v3318
      %v3321 = vmul.bf16 %v3320, %v2832
      %3322 = vrot.lane.b32.xlu0 %v3294, 16
      %v3323 = vpop.permute.xlu0 %3322
      %3324 = vrot.lane.b32.xlu0 %v3297, 16
      %v3325 = vpop.permute.xlu0 %3324
      %v3328 = vsel %vm1150, 0.0, %v3323
      %v3329 = vsel %vm1150, 0.0, %v3325
      %v3330 = vpack.c.bf16 %v3329, %v3328
      %v3331 = vmul.bf16 %v3330, %v2846
      %3332 = vrot.lane.b32.xlu0 %v3294, 15
      %v3333 = vpop.permute.xlu0 %3332
      %3334 = vrot.lane.b32.xlu0 %v3297, 15
      %v3335 = vpop.permute.xlu0 %3334
      %v3338 = vsel %vm1181, 0.0, %v3333
      %v3339 = vsel %vm1181, 0.0, %v3335
      %v3340 = vpack.c.bf16 %v3339, %v3338
      %v3341 = vmul.bf16 %v3340, %v2859
      %3342 = vrot.lane.b32.xlu0 %v3294, 14
      %v3343 = vpop.permute.xlu0 %3342
      %3344 = vrot.lane.b32.xlu0 %v3297, 14
      %v3345 = vpop.permute.xlu0 %3344
      %v3348 = vsel %vm1211, 0.0, %v3343
      %v3349 = vsel %vm1211, 0.0, %v3345
      %v3350 = vpack.c.bf16 %v3349, %v3348
      %v3351 = vmul.bf16 %v3350, %v2873
      %3352 = vrot.lane.b32.xlu0 %v3294, 10
      %v3353 = vpop.permute.xlu0 %3352
      %3354 = vrot.lane.b32.xlu0 %v3297, 10
      %v3355 = vpop.permute.xlu0 %3354
      %v3358 = vsel %vm2878, 0.0, %v3353
      %v3359 = vsel %vm2878, 0.0, %v3355
      %v3360 = vpack.c.bf16 %v3359, %v3358
      %v3361 = vmul.bf16 %v3360, %v2887
      %3362 = vrot.lane.b32.xlu0 %v3294, 9
      %v3363 = vpop.permute.xlu0 %3362
      %3364 = vrot.lane.b32.xlu0 %v3297, 9
      %v3365 = vpop.permute.xlu0 %3364
      %v3368 = vsel %vm2892, 0.0, %v3363
      %v3369 = vsel %vm2892, 0.0, %v3365
      %v3370 = vpack.c.bf16 %v3369, %v3368
      %v3371 = vmul.bf16 %v3370, %v2902
      %3372 = vrot.lane.b32.xlu0 %v3294, 8
      %v3373 = vpop.permute.xlu0 %3372
      %3374 = vrot.lane.b32.xlu0 %v3297, 8
      %v3375 = vpop.permute.xlu0 %3374
      %v3378 = vsel %vm2907, 0.0, %v3373
      %v3379 = vsel %vm2907, 0.0, %v3375
      %v3380 = vpack.c.bf16 %v3379, %v3378
      %v3381 = vmul.bf16 %v3380, %v2916
      %3382 = vrot.lane.b32.xlu0 %v3294, 7
      %v3383 = vpop.permute.xlu0 %3382
      %3384 = vrot.lane.b32.xlu0 %v3297, 7
      %v3385 = vpop.permute.xlu0 %3384
      %v3388 = vsel %vm2921, 0.0, %v3383
      %v3389 = vsel %vm2921, 0.0, %v3385
      %v3390 = vpack.c.bf16 %v3389, %v3388
      %v3391 = vmul.bf16 %v3390, %v2931
      %3392 = vrot.lane.b32.xlu0 %v3294, 6
      %v3393 = vpop.permute.xlu0 %3392
      %3394 = vrot.lane.b32.xlu0 %v3297, 6
      %v3395 = vpop.permute.xlu0 %3394
      %v3398 = vsel %vm2936, 0.0, %v3393
      %v3399 = vsel %vm2936, 0.0, %v3395
      %v3400 = vpack.c.bf16 %v3399, %v3398
      %v3401 = vmul.bf16 %v3400, %v2945
      %3402 = vrot.lane.b32.xlu0 %v3294, 2
      %v3403 = vpop.permute.xlu0 %3402
      %3404 = vrot.lane.b32.xlu0 %v3297, 2
      %v3405 = vpop.permute.xlu0 %3404
      %v3408 = vsel %vm1244, 0.0, %v3403
      %v3409 = vsel %vm1244, 0.0, %v3405
      %v3410 = vpack.c.bf16 %v3409, %v3408
      %v3411 = vmul.bf16 %v3410, %v2959
      %3412 = vrot.lane.b32.xlu0 %v3294, 1
      %v3413 = vpop.permute.xlu0 %3412
      %3414 = vrot.lane.b32.xlu0 %v3297, 1
      %v3415 = vpop.permute.xlu0 %3414
      %v3418 = vsel %vm1280, 0.0, %v3413
      %v3419 = vsel %vm1280, 0.0, %v3415
      %v3420 = vpack.c.bf16 %v3419, %v3418
      %v3421 = vmul.bf16 %v3420, %v2972
      %v3422 = vpack.c.bf16 %v3297, %v3294
      %v3423 = vmul.bf16 %v3422, %v2982
      %3424 = vrot.lane.b32.xlu0 %v3294, 127
      %v3425 = vpop.permute.xlu0 %3424
      %3426 = vrot.lane.b32.xlu0 %v3297, 127
      %v3427 = vpop.permute.xlu0 %3426
      %v3430 = vsel %vm2987, %v3425, 0.0
      %v3431 = vsel %vm2987, %v3427, 0.0
      %v3432 = vpack.c.bf16 %v3431, %v3430
      %v3433 = vmul.bf16 %v3432, %v2996
      %3434 = vrot.lane.b32.xlu0 %v3294, 126
      %v3435 = vpop.permute.xlu0 %3434
      %3436 = vrot.lane.b32.xlu0 %v3297, 126
      %v3437 = vpop.permute.xlu0 %3436
      %v3440 = vsel %vm3001, %v3435, 0.0
      %v3441 = vsel %vm3001, %v3437, 0.0
      %v3442 = vpack.c.bf16 %v3441, %v3440
      %v3443 = vmul.bf16 %v3442, %v3011
      %3444 = vrot.lane.b32.xlu0 %v3294, 122
      %v3445 = vpop.permute.xlu0 %3444
      %3446 = vrot.lane.b32.xlu0 %v3297, 122
      %v3447 = vpop.permute.xlu0 %3446
      %v3450 = vsel %vm3016, %v3445, 0.0
      %v3451 = vsel %vm3016, %v3447, 0.0
      %v3452 = vpack.c.bf16 %v3451, %v3450
      %v3453 = vmul.bf16 %v3452, %v3025
      %3454 = vrot.lane.b32.xlu0 %v3294, 121
      %v3455 = vpop.permute.xlu0 %3454
      %3456 = vrot.lane.b32.xlu0 %v3297, 121
      %v3457 = vpop.permute.xlu0 %3456
      %v3460 = vsel %vm3030, %v3455, 0.0
      %v3461 = vsel %vm3030, %v3457, 0.0
      %v3462 = vpack.c.bf16 %v3461, %v3460
      %v3463 = vmul.bf16 %v3462, %v3040
      %3464 = vrot.lane.b32.xlu0 %v3294, 120
      %v3465 = vpop.permute.xlu0 %3464
      %3466 = vrot.lane.b32.xlu0 %v3297, 120
      %v3467 = vpop.permute.xlu0 %3466
      %v3470 = vsel %vm3045, %v3465, 0.0
      %v3471 = vsel %vm3045, %v3467, 0.0
      %v3472 = vpack.c.bf16 %v3471, %v3470
      %v3473 = vmul.bf16 %v3472, %v3054
      %3474 = vrot.lane.b32.xlu0 %v3294, 119
      %v3475 = vpop.permute.xlu0 %3474
      %3476 = vrot.lane.b32.xlu0 %v3297, 119
      %v3477 = vpop.permute.xlu0 %3476
      %v3480 = vsel %vm3059, %v3475, 0.0
      %v3481 = vsel %vm3059, %v3477, 0.0
      %v3482 = vpack.c.bf16 %v3481, %v3480
      %v3483 = vmul.bf16 %v3482, %v3069
      %3484 = vrot.lane.b32.xlu0 %v3294, 118
      %v3485 = vpop.permute.xlu0 %3484
      %3486 = vrot.lane.b32.xlu0 %v3297, 118
      %v3487 = vpop.permute.xlu0 %3486
      %v3490 = vsel %vm3074, %v3485, 0.0
      %v3491 = vsel %vm3074, %v3487, 0.0
      %v3492 = vpack.c.bf16 %v3491, %v3490
      %v3493 = vmul.bf16 %v3492, %v3083
      %3494 = vrot.lane.b32.xlu0 %v3294, 114
      %v3495 = vpop.permute.xlu0 %3494
      %3496 = vrot.lane.b32.xlu0 %v3297, 114
      %v3497 = vpop.permute.xlu0 %3496
      %v3500 = vsel %vm3088, %v3495, 0.0
      %v3501 = vsel %vm3088, %v3497, 0.0
      %v3502 = vpack.c.bf16 %v3501, %v3500
      %v3503 = vmul.bf16 %v3502, %v3098
      %3504 = vrot.lane.b32.xlu0 %v3294, 113
      %v3505 = vpop.permute.xlu0 %3504
      %3506 = vrot.lane.b32.xlu0 %v3297, 113
      %v3507 = vpop.permute.xlu0 %3506
      %v3510 = vsel %vm3103, %v3505, 0.0
      %v3511 = vsel %vm3103, %v3507, 0.0
      %v3512 = vpack.c.bf16 %v3511, %v3510
      %v3513 = vmul.bf16 %v3512, %v3112
      %3514 = vrot.lane.b32.xlu0 %v3294, 112
      %v3515 = vpop.permute.xlu0 %3514
      %3516 = vrot.lane.b32.xlu0 %v3297, 112
      %v3517 = vpop.permute.xlu0 %3516
      %v3520 = vsel %vm3117, %v3515, 0.0
      %v3521 = vsel %vm3117, %v3517, 0.0
      %v3522 = vpack.c.bf16 %v3521, %v3520
      %v3523 = vmul.bf16 %v3522, %v3127
      %3524 = vrot.lane.b32.xlu0 %v3294, 111
      %v3525 = vpop.permute.xlu0 %3524
      %3526 = vrot.lane.b32.xlu0 %v3297, 111
      %v3527 = vpop.permute.xlu0 %3526
      %v3530 = vsel %vm3132, %v3525, 0.0
      %v3531 = vsel %vm3132, %v3527, 0.0
      %v3532 = vpack.c.bf16 %v3531, %v3530
      %v3533 = vmul.bf16 %v3532, %v3141
      %3534 = vrot.lane.b32.xlu0 %v3294, 110
      %v3535 = vpop.permute.xlu0 %3534
      %3536 = vrot.lane.b32.xlu0 %v3297, 110
      %v3537 = vpop.permute.xlu0 %3536
      %v3540 = vsel %vm3146, %v3535, 0.0
      %v3541 = vsel %vm3146, %v3537, 0.0
      %v3542 = vpack.c.bf16 %v3541, %v3540
      %v3543 = vmul.bf16 %v3542, %v3156
      %v3544 = vld [vmem:[%s9] sm:$0xff]
      %v3545 = vld [vmem:[%s9 + $0x8] sm:$0xff]
      %v3546 = vld [vmem:[%s9 + $0x10] sm:$0xff]
      %v3547 = vld [vmem:[%s9 + $0x18] sm:$0xff]
      %v3548 = vld [vmem:[%s25] sm:$0xff]
      %v3549 = vld [vmem:[%s25 + $0x8] sm:$0xff]
      %3551 = vset.pattern.permute.xlu0 0
      %3552 = vperm.xlu0 %3551, %v3548
      %v3553 = vpop.permute.xlu0 %3552
      %3556 = vset.pattern.permute.xlu0 0
      %3557 = vperm.xlu0 %3556, %v3549
      %v3558 = vpop.permute.xlu0 %3557
      %v3564 = vunpack.c.l.b16 %v3544
      %v3565 = vunpack.c.h.b16 %v3544
      %v3566 = vunpack.c.l.b16 %v3545
      %v3567 = vunpack.c.h.b16 %v3545
      %v3568 = vunpack.c.l.b16 %v3546
      %v3569 = vunpack.c.h.b16 %v3546
      %v3570 = vunpack.c.l.b16 %v3547
      %v3571 = vunpack.c.h.b16 %v3547
      %v3572 = vpack.c.b16 %v3568, %v3564
      %v3573 = vpack.c.b16 %v3569, %v3565
      %v3574 = vpack.c.b16 %v3570, %v3566
      %v3575 = vpack.c.b16 %v3571, %v3567
      %v3580 = vsel %vm1150, %v3575, 0
      %3582 = vmatprep.subr.bf16.mxu0 0
      %3583 = vmatpush1.bf16.msra.mxu0 %v3311
      %3584 = vmatprep.subr.bf16.mxu0 0
      %3585 = vmatpush1.bf16.msra.mxu0 %v3321
      %3586 = vmatprep.subr.bf16.mxu0 0
      %3587 = vmatpush1.bf16.msra.mxu0 %v3331
      %3588 = vmatprep.subr.bf16.mxu0 0
      %3589 = vmatpush1.bf16.msra.mxu0 %v3341
      %3590 = vmatprep.subr.bf16.mxu0 0
      %3591 = vmatpush1.bf16.msra.mxu0 %v3351
      %3592 = vmatprep.subr.bf16.mxu0 0
      %3593 = vmatpush1.bf16.msra.mxu0 %v3361
      %3594 = vmatprep.subr.bf16.mxu0 0
      %3595 = vmatpush1.bf16.msra.mxu0 %v3371
      %3596 = vmatprep.subr.bf16.mxu0 0
      %3597 = vmatpush1.bf16.msra.mxu0 %v3381
      %3598 = vmatprep.subr.bf16.mxu0 0
      %3599 = vmatpush1.bf16.msra.mxu0 %v3391
      %3600 = vmatprep.subr.bf16.mxu0 0
      %3601 = vmatpush1.bf16.msra.mxu0 %v3401
      %3602 = vmatprep.subr.bf16.mxu0 0
      %3603 = vmatpush1.bf16.msra.mxu0 %v3411
      %3604 = vmatprep.subr.bf16.mxu0 0
      %3605 = vmatpush1.bf16.msra.mxu0 %v3421
      %3606 = vmatprep.subr.bf16.mxu0 0
      %3607 = vmatpush1.bf16.msra.mxu0 %v3423
      %3608 = vmatprep.subr.bf16.mxu0 0
      %3609 = vmatpush1.bf16.msra.mxu0 %v3433
      %3610 = vmatprep.subr.bf16.mxu0 0
      %3611 = vmatpush1.bf16.msra.mxu0 %v3443
      %3612 = vmatprep.subr.bf16.mxu0 0
      %3613 = vmatpush1.bf16.msra.mxu0 %v3453
      %3614 = vmatprep.mubr.bf16.mxu0 %v3573
      %3615 = vmatmul.mubr.bf16.gmra.mrb[0].mxu0 %v3572
      %v3616 = vpop.f32.mrb[0].mxu0
      %v3617 = vadd.f32 %v3553, %v3616
      %v3618 = vpop.f32.mrb[0].mxu0
      %v3619 = vpop.f32.mrb[0].mxu0
      %v3620 = vadd.f32 %v3558, %v3619
      %v3621 = vpop.f32.mrb[0].mxu0
      %3622 = vdwg.mxu0
      %3623 = vmatprep.subr.bf16.mxu0 0
      %3624 = vmatpush1.bf16.msra.mxu0 %v3463
      %3625 = vmatprep.subr.bf16.mxu0 0
      %3626 = vmatpush1.bf16.msra.mxu0 %v3473
      %3627 = vmatprep.subr.bf16.mxu0 0
      %3628 = vmatpush1.bf16.msra.mxu0 %v3483
      %3629 = vmatprep.subr.bf16.mxu0 0
      %3630 = vmatpush1.bf16.msra.mxu0 %v3493
      %3631 = vmatprep.subr.bf16.mxu0 0
      %3632 = vmatpush1.bf16.msra.mxu0 %v3503
      %3633 = vmatprep.subr.bf16.mxu0 0
      %3634 = vmatpush1.bf16.msra.mxu0 %v3513
      %3635 = vmatprep.subr.bf16.mxu0 0
      %3636 = vmatpush1.bf16.msra.mxu0 %v3523
      %3637 = vmatprep.subr.bf16.mxu0 0
      %3638 = vmatpush1.bf16.msra.mxu0 %v3533
      %3639 = vmatprep.subr.bf16.mxu0 0
      %3640 = vmatpush1.bf16.msra.mxu0 %v3543
      %3641 = vmatprep.subr.bf16.mxu0 0
      %3642 = vmatpush1.bf16.msra.mxu0 0
      %3643 = vmatprep.subr.bf16.mxu0 0
      %3644 = vmatpush1.bf16.msra.mxu0 0
      %3645 = vmatprep.subr.bf16.mxu0 0
      %3646 = vmatpush1.bf16.msra.mxu0 0
      %3647 = vmatprep.subr.bf16.mxu0 0
      %3648 = vmatpush1.bf16.msra.mxu0 0
      %3649 = vmatprep.subr.bf16.mxu0 0
      %3650 = vmatpush1.bf16.msra.mxu0 0
      %3651 = vmatprep.subr.bf16.mxu0 0
      %3652 = vmatpush1.bf16.msra.mxu0 0
      %3653 = vmatprep.subr.bf16.mxu0 0
      %3654 = vmatpush1.bf16.msra.mxu0 0
      %3655 = vmatprep.mubr.bf16.mxu0 %v3580
      %3656 = vmatmul.mubr.bf16.gmra.mrb[0].mxu0 %v3574
      %v3657 = vpop.f32.mrb[0].mxu0
      %v3658 = vadd.f32 %v3617, %v3657
      %v3659 = vpop.f32.mrb[0].mxu0
      %v3660 = vpop.f32.mrb[0].mxu0
      %v3661 = vadd.f32 %v3620, %v3660
      %v3662 = vpop.f32.mrb[0].mxu0
      %3663 = vdwg.mxu0
      %v3664 = vmax.f32 %v3658, 0.0
      %v3665 = vmax.f32 %v3661, 0.0
      %3668 = vrot.lane.b32.xlu0 %v3664, 127
      %v3669 = vpop.permute.xlu0 %3668
      %3670 = vrot.lane.b32.xlu0 %v3665, 127
      %v3671 = vpop.permute.xlu0 %3670
      %v3674 = vsel %vm2987, %v3669, 0.0
      %v3675 = vsel %vm2987, %v3671, 0.0
      %v3676 = vmax.f32 %v3664, %v3674
      %v3677 = vmax.f32 %v3665, %v3675
      %3680 = vrot.lane.b32.xlu0 %v3676, 120
      %v3681 = vpop.permute.xlu0 %3680
      %3682 = vrot.lane.b32.xlu0 %v3677, 120
      %v3683 = vpop.permute.xlu0 %3682
      %v3686 = vsel %vm3045, %v3681, 0.0
      %v3687 = vsel %vm3045, %v3683, 0.0
      %v3688 = vmax.f32 %v3676, %v3686
      %v3689 = vmax.f32 %v3677, %v3687
      %v3690 = vld [vmem:[%s45] sm:$0xff]
      %v3691 = vld [vmem:[%s45 + $0x8] sm:$0xff]
      %v3692 = vld [vmem:[%s45 + $0x10] sm:$0xff]
      %v3693 = vld [vmem:[%s45 + $0x18] sm:$0xff]
      %v3694 = vld [vmem:[%s45 + $0x20] sm:$0xff]
      %v3695 = vld [vmem:[%s45 + $0x28] sm:$0xff]
      %v3696 = vld [vmem:[%s45 + $0x30] sm:$0xff]
      %v3697 = vld [vmem:[%s45 + $0x38] sm:$0xff]
      %vm3698 = vcmask 523264
      %v3700 = vsel %vm3698, %v3688, 0
      %v3703 = vsel %vm3698, %v3689, 0
      %3705 = vmatprep.subr.mxu0 0.0
      %3706 = vmatpush1.msra.mxu0 %v3690
      %3707 = vmatprep.subr.mxu0 0.0
      %3708 = vmatpush1.msra.mxu0 %v3691
      %3709 = vmatprep.subr.mxu0 0.0
      %3710 = vmatpush1.msra.mxu0 %v3692
      %3711 = vmatprep.subr.mxu0 0.0
      %3712 = vmatpush1.msra.mxu0 %v3693
      %3713 = vmatprep.subr.mxu0 0.0
      %3714 = vmatpush1.msra.mxu0 %v3694
      %3715 = vmatprep.subr.mxu0 0.0
      %3716 = vmatpush1.msra.mxu0 %v3695
      %3717 = vmatprep.subr.mxu0 0.0
      %3718 = vmatpush1.msra.mxu0 %v3696
      %3719 = vmatprep.subr.mxu0 0.0
      %3720 = vmatpush1.msra.mxu0 %v3697
      %3721 = vmatprep.subr.mxu0 0.0
      %3722 = vmatpush1.msra.mxu0 0.0
      %3723 = vmatprep.subr.mxu0 0.0
      %3724 = vmatpush1.msra.mxu0 0.0
      %3725 = vmatprep.subr.mxu0 0.0
      %3726 = vmatpush1.msra.mxu0 0.0
      %3727 = vmatprep.subr.mxu0 0.0
      %3728 = vmatpush1.msra.mxu0 0.0
      %3729 = vmatprep.subr.mxu0 0.0
      %3730 = vmatpush1.msra.mxu0 0.0
      %3731 = vmatprep.subr.mxu0 0.0
      %3732 = vmatpush1.msra.mxu0 0.0
      %3733 = vmatprep.subr.mxu0 0.0
      %3734 = vmatpush1.msra.mxu0 0.0
      %3735 = vmatprep.subr.mxu0 0.0
      %3736 = vmatpush1.msra.mxu0 0.0
      %3737 = vmatprep.subr.mxu0 0.0
      %3738 = vmatpush1.msra.mxu0 0.0
      %3739 = vmatprep.subr.mxu0 0.0
      %3740 = vmatpush1.msra.mxu0 0.0
      %3741 = vmatprep.subr.mxu0 0.0
      %3742 = vmatpush1.msra.mxu0 0.0
      %3743 = vmatprep.subr.mxu0 0.0
      %3744 = vmatpush1.msra.mxu0 0.0
      %3745 = vmatprep.subr.mxu0 0.0
      %3746 = vmatpush1.msra.mxu0 0.0
      %3747 = vmatprep.subr.mxu0 0.0
      %3748 = vmatpush1.msra.mxu0 0.0
      %3749 = vmatprep.subr.mxu0 0.0
      %3750 = vmatpush1.msra.mxu0 0.0
      %3751 = vmatprep.subr.mxu0 0.0
      %3752 = vmatpush1.msra.mxu0 0.0
      %3753 = vmatprep.subr.mxu0 0.0
      %3754 = vmatpush1.msra.mxu0 0.0
      %3755 = vmatprep.subr.mxu0 0.0
      %3756 = vmatpush1.msra.mxu0 0.0
      %3757 = vmatprep.subr.mxu0 0.0
      %3758 = vmatpush1.msra.mxu0 0.0
      %3759 = vmatprep.subr.mxu0 0.0
      %3760 = vmatpush1.msra.mxu0 0.0
      %3761 = vmatprep.subr.mxu0 0.0
      %3762 = vmatpush1.msra.mxu0 0.0
      %3763 = vmatprep.subr.mxu0 0.0
      %3764 = vmatpush1.msra.mxu0 0.0
      %3765 = vmatprep.subr.mxu0 0.0
      %3766 = vmatpush1.msra.mxu0 0.0
      %3767 = vmatprep.subr.mxu0 0.0
      %3768 = vmatpush1.msra.mxu0 0.0
      %3769 = vmatprep.mubr.f32.mxu0 0.0
      %3770 = vmatmul.mubr.f32.gmra.mrb[0].mxu0 %v3700
      %v3771 = vpop.f32.mrb[0].mxu0
      %v3772 = vadd.f32 0.0, %v3771
      %v3773 = vpop.f32.mrb[0].mxu0
      %3774 = vmatprep.mubr.f32.mxu0 0.0
      %3775 = vmatmul.mubr.f32.gmra.mrb[0].mxu0 %v3703
      %v3776 = vpop.f32.mrb[0].mxu0
      %v3777 = vadd.f32 0.0, %v3776
      %v3778 = vpop.f32.mrb[0].mxu0
      %3779 = vdwg.mxu0
      %3782 = vrot.lane.b32.xlu0 %v3772, 10
      %v3783 = vpop.permute.xlu0 %3782
      %3784 = vrot.lane.b32.xlu0 %v3777, 10
      %v3785 = vpop.permute.xlu0 %3784
      %v3788 = vsel %vm2878, 0.0, %v3783
      %v3789 = vsel %vm2878, 0.0, %v3785
      %v3790 = vpack.c.bf16 %v3789, %v3788
      %v3791 = vld [vmem:[%s39] sm:$0x1]
      %v3793 = vpack.i.b16 %v3791, %v3791
      %v3795 = vlaneseq
      %v3796 = vshrl.u32 %v3795, 7
      %v3797 = vsub.s32 0, %v3796
      %v3798 = vrot.slane %v3793, %v3797
      %v3799 = vmul.bf16 %v3790, %v3798
      %3800 = vrot.lane.b32.xlu0 %v3772, 9
      %v3801 = vpop.permute.xlu0 %3800
      %3802 = vrot.lane.b32.xlu0 %v3777, 9
      %v3803 = vpop.permute.xlu0 %3802
      %v3806 = vsel %vm2892, 0.0, %v3801
      %v3807 = vsel %vm2892, 0.0, %v3803
      %v3808 = vpack.c.bf16 %v3807, %v3806
      %v3809 = vshrl.u32 %v3791, 16
      %v3810 = vpack.i.b16 %v3809, %v3809
      %v3812 = vlaneseq
      %v3813 = vshrl.u32 %v3812, 7
      %v3814 = vsub.s32 0, %v3813
      %v3815 = vrot.slane %v3810, %v3814
      %v3816 = vmul.bf16 %v3808, %v3815
      %3817 = vrot.lane.b32.xlu0 %v3772, 8
      %v3818 = vpop.permute.xlu0 %3817
      %3819 = vrot.lane.b32.xlu0 %v3777, 8
      %v3820 = vpop.permute.xlu0 %3819
      %v3823 = vsel %vm2907, 0.0, %v3818
      %v3824 = vsel %vm2907, 0.0, %v3820
      %v3825 = vpack.c.bf16 %v3824, %v3823
      %v3826 = vld [vmem:[%s39] sm:$0x2]
      %v3828 = vpack.i.b16 %v3826, %v3826
      %v3830 = vlaneseq
      %v3831 = vshrl.u32 %v3830, 7
      %v3832 = vsub.s32 1, %v3831
      %v3833 = vrot.slane %v3828, %v3832
      %v3834 = vmul.bf16 %v3825, %v3833
      %3835 = vrot.lane.b32.xlu0 %v3772, 7
      %v3836 = vpop.permute.xlu0 %3835
      %3837 = vrot.lane.b32.xlu0 %v3777, 7
      %v3838 = vpop.permute.xlu0 %3837
      %v3841 = vsel %vm2921, 0.0, %v3836
      %v3842 = vsel %vm2921, 0.0, %v3838
      %v3843 = vpack.c.bf16 %v3842, %v3841
      %v3844 = vshrl.u32 %v3826, 16
      %v3845 = vpack.i.b16 %v3844, %v3844
      %v3847 = vlaneseq
      %v3848 = vshrl.u32 %v3847, 7
      %v3849 = vsub.s32 1, %v3848
      %v3850 = vrot.slane %v3845, %v3849
      %v3851 = vmul.bf16 %v3843, %v3850
      %3852 = vrot.lane.b32.xlu0 %v3772, 6
      %v3853 = vpop.permute.xlu0 %3852
      %3854 = vrot.lane.b32.xlu0 %v3777, 6
      %v3855 = vpop.permute.xlu0 %3854
      %v3858 = vsel %vm2936, 0.0, %v3853
      %v3859 = vsel %vm2936, 0.0, %v3855
      %v3860 = vpack.c.bf16 %v3859, %v3858
      %v3861 = vld [vmem:[%s39] sm:$0x4]
      %v3863 = vpack.i.b16 %v3861, %v3861
      %v3865 = vlaneseq
      %v3866 = vshrl.u32 %v3865, 7
      %v3867 = vsub.s32 2, %v3866
      %v3868 = vrot.slane %v3863, %v3867
      %v3869 = vmul.bf16 %v3860, %v3868
      %v3870 = vshrl.u32 %v3861, 16
      %v3871 = vpack.i.b16 %v3870, %v3870
      %v3873 = vlaneseq
      %v3874 = vshrl.u32 %v3873, 7
      %v3875 = vsub.s32 2, %v3874
      %v3876 = vrot.slane %v3871, %v3875
      %v3877 = vmul.bf16 %v3860, %v3876
      %3878 = vrot.lane.b32.xlu0 %v3772, 5
      %v3879 = vpop.permute.xlu0 %3878
      %3880 = vrot.lane.b32.xlu0 %v3777, 5
      %v3881 = vpop.permute.xlu0 %3880
      %vm3884 = vcmask 39936
      %v3885 = vsel %vm3884, 0.0, %v3879
      %v3886 = vsel %vm3884, 0.0, %v3881
      %v3887 = vpack.c.bf16 %v3886, %v3885
      %v3888 = vld [vmem:[%s39] sm:$0x8]
      %v3890 = vpack.i.b16 %v3888, %v3888
      %v3892 = vlaneseq
      %v3893 = vshrl.u32 %v3892, 7
      %v3894 = vsub.s32 3, %v3893
      %v3895 = vrot.slane %v3890, %v3894
      %v3896 = vmul.bf16 %v3887, %v3895
      %3897 = vrot.lane.b32.xlu0 %v3772, 4
      %v3898 = vpop.permute.xlu0 %3897
      %3899 = vrot.lane.b32.xlu0 %v3777, 4
      %v3900 = vpop.permute.xlu0 %3899
      %vm3903 = vcmask 31744
      %v3904 = vsel %vm3903, 0.0, %v3898
      %v3905 = vsel %vm3903, 0.0, %v3900
      %v3906 = vpack.c.bf16 %v3905, %v3904
      %v3907 = vshrl.u32 %v3888, 16
      %v3908 = vpack.i.b16 %v3907, %v3907
      %v3910 = vlaneseq
      %v3911 = vshrl.u32 %v3910, 7
      %v3912 = vsub.s32 3, %v3911
      %v3913 = vrot.slane %v3908, %v3912
      %v3914 = vmul.bf16 %v3906, %v3913
      %3915 = vrot.lane.b32.xlu0 %v3772, 3
      %v3916 = vpop.permute.xlu0 %3915
      %3917 = vrot.lane.b32.xlu0 %v3777, 3
      %v3918 = vpop.permute.xlu0 %3917
      %vm3921 = vcmask 23552
      %v3922 = vsel %vm3921, 0.0, %v3916
      %v3923 = vsel %vm3921, 0.0, %v3918
      %v3924 = vpack.c.bf16 %v3923, %v3922
      %v3925 = vld [vmem:[%s39 + $0x4] sm:$0x1]
      %v3927 = vpack.i.b16 %v3925, %v3925
      %v3929 = vlaneseq
      %v3930 = vshrl.u32 %v3929, 7
      %v3931 = vsub.s32 0, %v3930
      %v3932 = vrot.slane %v3927, %v3931
      %v3933 = vmul.bf16 %v3924, %v3932
      %3934 = vrot.lane.b32.xlu0 %v3772, 2
      %v3935 = vpop.permute.xlu0 %3934
      %3936 = vrot.lane.b32.xlu0 %v3777, 2
      %v3937 = vpop.permute.xlu0 %3936
      %v3940 = vsel %vm1244, 0.0, %v3935
      %v3941 = vsel %vm1244, 0.0, %v3937
      %v3942 = vpack.c.bf16 %v3941, %v3940
      %v3943 = vshrl.u32 %v3925, 16
      %v3944 = vpack.i.b16 %v3943, %v3943
      %v3946 = vlaneseq
      %v3947 = vshrl.u32 %v3946, 7
      %v3948 = vsub.s32 0, %v3947
      %v3949 = vrot.slane %v3944, %v3948
      %v3950 = vmul.bf16 %v3942, %v3949
      %v3951 = vld [vmem:[%s39 + $0x4] sm:$0x2]
      %v3953 = vpack.i.b16 %v3951, %v3951
      %v3955 = vlaneseq
      %v3956 = vshrl.u32 %v3955, 7
      %v3957 = vsub.s32 1, %v3956
      %v3958 = vrot.slane %v3953, %v3957
      %v3959 = vmul.bf16 %v3942, %v3958
      %3960 = vrot.lane.b32.xlu0 %v3772, 1
      %v3961 = vpop.permute.xlu0 %3960
      %3962 = vrot.lane.b32.xlu0 %v3777, 1
      %v3963 = vpop.permute.xlu0 %3962
      %v3966 = vsel %vm1280, 0.0, %v3961
      %v3967 = vsel %vm1280, 0.0, %v3963
      %v3968 = vpack.c.bf16 %v3967, %v3966
      %v3969 = vshrl.u32 %v3951, 16
      %v3970 = vpack.i.b16 %v3969, %v3969
      %v3972 = vlaneseq
      %v3973 = vshrl.u32 %v3972, 7
      %v3974 = vsub.s32 1, %v3973
      %v3975 = vrot.slane %v3970, %v3974
      %v3976 = vmul.bf16 %v3968, %v3975
      %v3977 = vpack.c.bf16 %v3777, %v3772
      %v3978 = vld [vmem:[%s39 + $0x4] sm:$0x4]
      %v3980 = vpack.i.b16 %v3978, %v3978
      %v3982 = vlaneseq
      %v3983 = vshrl.u32 %v3982, 7
      %v3984 = vsub.s32 2, %v3983
      %v3985 = vrot.slane %v3980, %v3984
      %v3986 = vmul.bf16 %v3977, %v3985
      %3987 = vrot.lane.b32.xlu0 %v3772, 127
      %v3988 = vpop.permute.xlu0 %3987
      %3989 = vrot.lane.b32.xlu0 %v3777, 127
      %v3990 = vpop.permute.xlu0 %3989
      %v3993 = vsel %vm1181, %v3988, 0.0
      %v3994 = vsel %vm1181, %v3990, 0.0
      %v3995 = vpack.c.bf16 %v3994, %v3993
      %v3996 = vshrl.u32 %v3978, 16
      %v3997 = vpack.i.b16 %v3996, %v3996
      %v3999 = vlaneseq
      %v4000 = vshrl.u32 %v3999, 7
      %v4001 = vsub.s32 2, %v4000
      %v4002 = vrot.slane %v3997, %v4001
      %v4003 = vmul.bf16 %v3995, %v4002
      %4004 = vrot.lane.b32.xlu0 %v3772, 126
      %v4005 = vpop.permute.xlu0 %4004
      %4006 = vrot.lane.b32.xlu0 %v3777, 126
      %v4007 = vpop.permute.xlu0 %4006
      %v4010 = vsel %vm1211, %v4005, 0.0
      %v4011 = vsel %vm1211, %v4007, 0.0
      %v4012 = vpack.c.bf16 %v4011, %v4010
      %v4013 = vld [vmem:[%s39 + $0x4] sm:$0x8]
      %v4015 = vpack.i.b16 %v4013, %v4013
      %v4017 = vlaneseq
      %v4018 = vshrl.u32 %v4017, 7
      %v4019 = vsub.s32 3, %v4018
      %v4020 = vrot.slane %v4015, %v4019
      %v4021 = vmul.bf16 %v4012, %v4020
      %v4022 = vshrl.u32 %v4013, 16
      %v4023 = vpack.i.b16 %v4022, %v4022
      %v4025 = vlaneseq
      %v4026 = vshrl.u32 %v4025, 7
      %v4027 = vsub.s32 3, %v4026
      %v4028 = vrot.slane %v4023, %v4027
      %v4029 = vmul.bf16 %v4012, %v4028
      %4030 = vrot.lane.b32.xlu0 %v3772, 125
      %v4031 = vpop.permute.xlu0 %4030
      %4032 = vrot.lane.b32.xlu0 %v3777, 125
      %v4033 = vpop.permute.xlu0 %4032
      %vm4036 = vcmask 105472
      %v4037 = vsel %vm4036, %v4031, 0.0
      %v4038 = vsel %vm4036, %v4033, 0.0
      %v4039 = vpack.c.bf16 %v4038, %v4037
      %v4040 = vld [vmem:[%s39 + $0x8] sm:$0x1]
      %v4042 = vpack.i.b16 %v4040, %v4040
      %v4044 = vlaneseq
      %v4045 = vshrl.u32 %v4044, 7
      %v4046 = vsub.s32 0, %v4045
      %v4047 = vrot.slane %v4042, %v4046
      %v4048 = vmul.bf16 %v4039, %v4047
      %4049 = vrot.lane.b32.xlu0 %v3772, 124
      %v4050 = vpop.permute.xlu0 %4049
      %4051 = vrot.lane.b32.xlu0 %v3777, 124
      %v4052 = vpop.permute.xlu0 %4051
      %vm4055 = vcmask 97280
      %v4056 = vsel %vm4055, %v4050, 0.0
      %v4057 = vsel %vm4055, %v4052, 0.0
      %v4058 = vpack.c.bf16 %v4057, %v4056
      %v4059 = vshrl.u32 %v4040, 16
      %v4060 = vpack.i.b16 %v4059, %v4059
      %v4062 = vlaneseq
      %v4063 = vshrl.u32 %v4062, 7
      %v4064 = vsub.s32 0, %v4063
      %v4065 = vrot.slane %v4060, %v4064
      %v4066 = vmul.bf16 %v4058, %v4065
      %4067 = vrot.lane.b32.xlu0 %v3772, 123
      %v4068 = vpop.permute.xlu0 %4067
      %4069 = vrot.lane.b32.xlu0 %v3777, 123
      %v4070 = vpop.permute.xlu0 %4069
      %vm4073 = vcmask 89088
      %v4074 = vsel %vm4073, %v4068, 0.0
      %v4075 = vsel %vm4073, %v4070, 0.0
      %v4076 = vpack.c.bf16 %v4075, %v4074
      %v4077 = vld [vmem:[%s39 + $0x8] sm:$0x2]
      %v4079 = vpack.i.b16 %v4077, %v4077
      %v4081 = vlaneseq
      %v4082 = vshrl.u32 %v4081, 7
      %v4083 = vsub.s32 1, %v4082
      %v4084 = vrot.slane %v4079, %v4083
      %v4085 = vmul.bf16 %v4076, %v4084
      %4086 = vrot.lane.b32.xlu0 %v3772, 122
      %v4087 = vpop.permute.xlu0 %4086
      %4088 = vrot.lane.b32.xlu0 %v3777, 122
      %v4089 = vpop.permute.xlu0 %4088
      %v4092 = vsel %vm2878, %v4087, 0.0
      %v4093 = vsel %vm2878, %v4089, 0.0
      %v4094 = vpack.c.bf16 %v4093, %v4092
      %v4095 = vshrl.u32 %v4077, 16
      %v4096 = vpack.i.b16 %v4095, %v4095
      %v4098 = vlaneseq
      %v4099 = vshrl.u32 %v4098, 7
      %v4100 = vsub.s32 1, %v4099
      %v4101 = vrot.slane %v4096, %v4100
      %v4102 = vmul.bf16 %v4094, %v4101
      %v4103 = vld [vmem:[%s39 + $0x8] sm:$0x4]
      %v4105 = vpack.i.b16 %v4103, %v4103
      %v4107 = vlaneseq
      %v4108 = vshrl.u32 %v4107, 7
      %v4109 = vsub.s32 2, %v4108
      %v4110 = vrot.slane %v4105, %v4109
      %v4111 = vmul.bf16 %v4094, %v4110
      %4112 = vrot.lane.b32.xlu0 %v3772, 121
      %v4113 = vpop.permute.xlu0 %4112
      %4114 = vrot.lane.b32.xlu0 %v3777, 121
      %v4115 = vpop.permute.xlu0 %4114
      %v4118 = vsel %vm2892, %v4113, 0.0
      %v4119 = vsel %vm2892, %v4115, 0.0
      %v4120 = vpack.c.bf16 %v4119, %v4118
      %v4121 = vshrl.u32 %v4103, 16
      %v4122 = vpack.i.b16 %v4121, %v4121
      %v4124 = vlaneseq
      %v4125 = vshrl.u32 %v4124, 7
      %v4126 = vsub.s32 2, %v4125
      %v4127 = vrot.slane %v4122, %v4126
      %v4128 = vmul.bf16 %v4120, %v4127
      %4129 = vrot.lane.b32.xlu0 %v3772, 120
      %v4130 = vpop.permute.xlu0 %4129
      %4131 = vrot.lane.b32.xlu0 %v3777, 120
      %v4132 = vpop.permute.xlu0 %4131
      %v4135 = vsel %vm2907, %v4130, 0.0
      %v4136 = vsel %vm2907, %v4132, 0.0
      %v4137 = vpack.c.bf16 %v4136, %v4135
      %v4138 = vld [vmem:[%s39 + $0x8] sm:$0x8]
      %v4140 = vpack.i.b16 %v4138, %v4138
      %v4142 = vlaneseq
      %v4143 = vshrl.u32 %v4142, 7
      %v4144 = vsub.s32 3, %v4143
      %v4145 = vrot.slane %v4140, %v4144
      %v4146 = vmul.bf16 %v4137, %v4145
      %4147 = vrot.lane.b32.xlu0 %v3772, 119
      %v4148 = vpop.permute.xlu0 %4147
      %4149 = vrot.lane.b32.xlu0 %v3777, 119
      %v4150 = vpop.permute.xlu0 %4149
      %v4153 = vsel %vm2921, %v4148, 0.0
      %v4154 = vsel %vm2921, %v4150, 0.0
      %v4155 = vpack.c.bf16 %v4154, %v4153
      %v4156 = vshrl.u32 %v4138, 16
      %v4157 = vpack.i.b16 %v4156, %v4156
      %v4159 = vlaneseq
      %v4160 = vshrl.u32 %v4159, 7
      %v4161 = vsub.s32 3, %v4160
      %v4162 = vrot.slane %v4157, %v4161
      %v4163 = vmul.bf16 %v4155, %v4162
      %4164 = vrot.lane.b32.xlu0 %v3772, 118
      %v4165 = vpop.permute.xlu0 %4164
      %4166 = vrot.lane.b32.xlu0 %v3777, 118
      %v4167 = vpop.permute.xlu0 %4166
      %v4170 = vsel %vm2936, %v4165, 0.0
      %v4171 = vsel %vm2936, %v4167, 0.0
      %v4172 = vpack.c.bf16 %v4171, %v4170
      %v4173 = vld [vmem:[%s39 + $0xc] sm:$0x1]
      %v4175 = vpack.i.b16 %v4173, %v4173
      %v4177 = vlaneseq
      %v4178 = vshrl.u32 %v4177, 7
      %v4179 = vsub.s32 0, %v4178
      %v4180 = vrot.slane %v4175, %v4179
      %v4181 = vmul.bf16 %v4172, %v4180
      %v4182 = vld [vmem:[%s11] sm:$0xff]
      %v4183 = vld [vmem:[%s11 + $0x8] sm:$0xff]
      %v4184 = vld [vmem:[%s11 + $0x10] sm:$0xff]
      %v4185 = vld [vmem:[%s11 + $0x18] sm:$0xff]
      %v4186 = vld [vmem:[%s27] sm:$0xff]
      %v4187 = vld [vmem:[%s27 + $0x8] sm:$0xff]
      %4189 = vset.pattern.permute.xlu0 0
      %4190 = vperm.xlu0 %4189, %v4186
      %v4191 = vpop.permute.xlu0 %4190
      %4194 = vset.pattern.permute.xlu0 0
      %4195 = vperm.xlu0 %4194, %v4187
      %v4196 = vpop.permute.xlu0 %4195
      %v4202 = vunpack.c.l.b16 %v4182
      %v4203 = vunpack.c.h.b16 %v4182
      %v4204 = vunpack.c.l.b16 %v4183
      %v4205 = vunpack.c.h.b16 %v4183
      %v4206 = vunpack.c.l.b16 %v4184
      %v4207 = vunpack.c.h.b16 %v4184
      %v4208 = vunpack.c.l.b16 %v4185
      %v4209 = vunpack.c.h.b16 %v4185
      %v4210 = vpack.c.b16 %v4206, %v4202
      %v4211 = vpack.c.b16 %v4207, %v4203
      %v4212 = vpack.c.b16 %v4208, %v4204
      %v4213 = vpack.c.b16 %v4209, %v4205
      %v4218 = vsel %vm1150, %v4213, 0
      %4220 = vmatprep.subr.bf16.mxu0 0
      %4221 = vmatpush1.bf16.msra.mxu0 %v3799
      %4222 = vmatprep.subr.bf16.mxu0 0
      %4223 = vmatpush1.bf16.msra.mxu0 %v3816
      %4224 = vmatprep.subr.bf16.mxu0 0
      %4225 = vmatpush1.bf16.msra.mxu0 %v3834
      %4226 = vmatprep.subr.bf16.mxu0 0
      %4227 = vmatpush1.bf16.msra.mxu0 %v3851
      %4228 = vmatprep.subr.bf16.mxu0 0
      %4229 = vmatpush1.bf16.msra.mxu0 %v3869
      %4230 = vmatprep.subr.bf16.mxu0 0
      %4231 = vmatpush1.bf16.msra.mxu0 %v3877
      %4232 = vmatprep.subr.bf16.mxu0 0
      %4233 = vmatpush1.bf16.msra.mxu0 %v3896
      %4234 = vmatprep.subr.bf16.mxu0 0
      %4235 = vmatpush1.bf16.msra.mxu0 %v3914
      %4236 = vmatprep.subr.bf16.mxu0 0
      %4237 = vmatpush1.bf16.msra.mxu0 %v3933
      %4238 = vmatprep.subr.bf16.mxu0 0
      %4239 = vmatpush1.bf16.msra.mxu0 %v3950
      %4240 = vmatprep.subr.bf16.mxu0 0
      %4241 = vmatpush1.bf16.msra.mxu0 %v3959
      %4242 = vmatprep.subr.bf16.mxu0 0
      %4243 = vmatpush1.bf16.msra.mxu0 %v3976
      %4244 = vmatprep.subr.bf16.mxu0 0
      %4245 = vmatpush1.bf16.msra.mxu0 %v3986
      %4246 = vmatprep.subr.bf16.mxu0 0
      %4247 = vmatpush1.bf16.msra.mxu0 %v4003
      %4248 = vmatprep.subr.bf16.mxu0 0
      %4249 = vmatpush1.bf16.msra.mxu0 %v4021
      %4250 = vmatprep.subr.bf16.mxu0 0
      %4251 = vmatpush1.bf16.msra.mxu0 %v4029
      %4252 = vmatprep.mubr.bf16.mxu0 %v4211
      %4253 = vmatmul.mubr.bf16.gmra.mrb[0].mxu0 %v4210
      %v4254 = vpop.f32.mrb[0].mxu0
      %v4255 = vadd.f32 %v4191, %v4254
      %v4256 = vpop.f32.mrb[0].mxu0
      %v4257 = vpop.f32.mrb[0].mxu0
      %v4258 = vadd.f32 %v4196, %v4257
      %v4259 = vpop.f32.mrb[0].mxu0
      %4260 = vdwg.mxu0
      %4261 = vmatprep.subr.bf16.mxu0 0
      %4262 = vmatpush1.bf16.msra.mxu0 %v4048
      %4263 = vmatprep.subr.bf16.mxu0 0
      %4264 = vmatpush1.bf16.msra.mxu0 %v4066
      %4265 = vmatprep.subr.bf16.mxu0 0
      %4266 = vmatpush1.bf16.msra.mxu0 %v4085
      %4267 = vmatprep.subr.bf16.mxu0 0
      %4268 = vmatpush1.bf16.msra.mxu0 %v4102
      %4269 = vmatprep.subr.bf16.mxu0 0
      %4270 = vmatpush1.bf16.msra.mxu0 %v4111
      %4271 = vmatprep.subr.bf16.mxu0 0
      %4272 = vmatpush1.bf16.msra.mxu0 %v4128
      %4273 = vmatprep.subr.bf16.mxu0 0
      %4274 = vmatpush1.bf16.msra.mxu0 %v4146
      %4275 = vmatprep.subr.bf16.mxu0 0
      %4276 = vmatpush1.bf16.msra.mxu0 %v4163
      %4277 = vmatprep.subr.bf16.mxu0 0
      %4278 = vmatpush1.bf16.msra.mxu0 %v4181
      %4279 = vmatprep.subr.bf16.mxu0 0
      %4280 = vmatpush1.bf16.msra.mxu0 0
      %4281 = vmatprep.subr.bf16.mxu0 0
      %4282 = vmatpush1.bf16.msra.mxu0 0
      %4283 = vmatprep.subr.bf16.mxu0 0
      %4284 = vmatpush1.bf16.msra.mxu0 0
      %4285 = vmatprep.subr.bf16.mxu0 0
      %4286 = vmatpush1.bf16.msra.mxu0 0
      %4287 = vmatprep.subr.bf16.mxu0 0
      %4288 = vmatpush1.bf16.msra.mxu0 0
      %4289 = vmatprep.subr.bf16.mxu0 0
      %4290 = vmatpush1.bf16.msra.mxu0 0
      %4291 = vmatprep.subr.bf16.mxu0 0
      %4292 = vmatpush1.bf16.msra.mxu0 0
      %4293 = vmatprep.mubr.bf16.mxu0 %v4218
      %4294 = vmatmul.mubr.bf16.gmra.mrb[0].mxu0 %v4212
      %v4295 = vpop.f32.mrb[0].mxu0
      %v4296 = vadd.f32 %v4255, %v4295
      %v4297 = vpop.f32.mrb[0].mxu0
      %v4298 = vpop.f32.mrb[0].mxu0
      %v4299 = vadd.f32 %v4258, %v4298
      %v4300 = vpop.f32.mrb[0].mxu0
      %4301 = vdwg.mxu0
      %4304 = vrot.lane.b32.xlu0 %v4296, 10
      %v4305 = vpop.permute.xlu0 %4304
      %4306 = vrot.lane.b32.xlu0 %v4299, 10
      %v4307 = vpop.permute.xlu0 %4306
      %v4310 = vsel %vm2878, 0.0, %v4305
      %v4311 = vsel %vm2878, 0.0, %v4307
      %v4312 = vpack.c.bf16 %v4311, %v4310
      %v4313 = vmul.bf16 %v4312, %v3798
      %4314 = vrot.lane.b32.xlu0 %v4296, 9
      %v4315 = vpop.permute.xlu0 %4314
      %4316 = vrot.lane.b32.xlu0 %v4299, 9
      %v4317 = vpop.permute.xlu0 %4316
      %v4320 = vsel %vm2892, 0.0, %v4315
      %v4321 = vsel %vm2892, 0.0, %v4317
      %v4322 = vpack.c.bf16 %v4321, %v4320
      %v4323 = vmul.bf16 %v4322, %v3815
      %4324 = vrot.lane.b32.xlu0 %v4296, 8
      %v4325 = vpop.permute.xlu0 %4324
      %4326 = vrot.lane.b32.xlu0 %v4299, 8
      %v4327 = vpop.permute.xlu0 %4326
      %v4330 = vsel %vm2907, 0.0, %v4325
      %v4331 = vsel %vm2907, 0.0, %v4327
      %v4332 = vpack.c.bf16 %v4331, %v4330
      %v4333 = vmul.bf16 %v4332, %v3833
      %4334 = vrot.lane.b32.xlu0 %v4296, 7
      %v4335 = vpop.permute.xlu0 %4334
      %4336 = vrot.lane.b32.xlu0 %v4299, 7
      %v4337 = vpop.permute.xlu0 %4336
      %v4340 = vsel %vm2921, 0.0, %v4335
      %v4341 = vsel %vm2921, 0.0, %v4337
      %v4342 = vpack.c.bf16 %v4341, %v4340
      %v4343 = vmul.bf16 %v4342, %v3850
      %4344 = vrot.lane.b32.xlu0 %v4296, 6
      %v4345 = vpop.permute.xlu0 %4344
      %4346 = vrot.lane.b32.xlu0 %v4299, 6
      %v4347 = vpop.permute.xlu0 %4346
      %v4350 = vsel %vm2936, 0.0, %v4345
      %v4351 = vsel %vm2936, 0.0, %v4347
      %v4352 = vpack.c.bf16 %v4351, %v4350
      %v4353 = vmul.bf16 %v4352, %v3868
      %v4354 = vmul.bf16 %v4352, %v3876
      %4355 = vrot.lane.b32.xlu0 %v4296, 5
      %v4356 = vpop.permute.xlu0 %4355
      %4357 = vrot.lane.b32.xlu0 %v4299, 5
      %v4358 = vpop.permute.xlu0 %4357
      %v4361 = vsel %vm3884, 0.0, %v4356
      %v4362 = vsel %vm3884, 0.0, %v4358
      %v4363 = vpack.c.bf16 %v4362, %v4361
      %v4364 = vmul.bf16 %v4363, %v3895
      %4365 = vrot.lane.b32.xlu0 %v4296, 4
      %v4366 = vpop.permute.xlu0 %4365
      %4367 = vrot.lane.b32.xlu0 %v4299, 4
      %v4368 = vpop.permute.xlu0 %4367
      %v4371 = vsel %vm3903, 0.0, %v4366
      %v4372 = vsel %vm3903, 0.0, %v4368
      %v4373 = vpack.c.bf16 %v4372, %v4371
      %v4374 = vmul.bf16 %v4373, %v3913
      %4375 = vrot.lane.b32.xlu0 %v4296, 3
      %v4376 = vpop.permute.xlu0 %4375
      %4377 = vrot.lane.b32.xlu0 %v4299, 3
      %v4378 = vpop.permute.xlu0 %4377
      %v4381 = vsel %vm3921, 0.0, %v4376
      %v4382 = vsel %vm3921, 0.0, %v4378
      %v4383 = vpack.c.bf16 %v4382, %v4381
      %v4384 = vmul.bf16 %v4383, %v3932
      %4385 = vrot.lane.b32.xlu0 %v4296, 2
      %v4386 = vpop.permute.xlu0 %4385
      %4387 = vrot.lane.b32.xlu0 %v4299, 2
      %v4388 = vpop.permute.xlu0 %4387
      %v4391 = vsel %vm1244, 0.0, %v4386
      %v4392 = vsel %vm1244, 0.0, %v4388
      %v4393 = vpack.c.bf16 %v4392, %v4391
      %v4394 = vmul.bf16 %v4393, %v3949
      %v4395 = vmul.bf16 %v4393, %v3958
      %4396 = vrot.lane.b32.xlu0 %v4296, 1
      %v4397 = vpop.permute.xlu0 %4396
      %4398 = vrot.lane.b32.xlu0 %v4299, 1
      %v4399 = vpop.permute.xlu0 %4398
      %v4402 = vsel %vm1280, 0.0, %v4397
      %v4403 = vsel %vm1280, 0.0, %v4399
      %v4404 = vpack.c.bf16 %v4403, %v4402
      %v4405 = vmul.bf16 %v4404, %v3975
      %v4406 = vpack.c.bf16 %v4299, %v4296
      %v4407 = vmul.bf16 %v4406, %v3985
      %4408 = vrot.lane.b32.xlu0 %v4296, 127
      %v4409 = vpop.permute.xlu0 %4408
      %4410 = vrot.lane.b32.xlu0 %v4299, 127
      %v4411 = vpop.permute.xlu0 %4410
      %v4414 = vsel %vm1181, %v4409, 0.0
      %v4415 = vsel %vm1181, %v4411, 0.0
      %v4416 = vpack.c.bf16 %v4415, %v4414
      %v4417 = vmul.bf16 %v4416, %v4002
      %4418 = vrot.lane.b32.xlu0 %v4296, 126
      %v4419 = vpop.permute.xlu0 %4418
      %4420 = vrot.lane.b32.xlu0 %v4299, 126
      %v4421 = vpop.permute.xlu0 %4420
      %v4424 = vsel %vm1211, %v4419, 0.0
      %v4425 = vsel %vm1211, %v4421, 0.0
      %v4426 = vpack.c.bf16 %v4425, %v4424
      %v4427 = vmul.bf16 %v4426, %v4020
      %v4428 = vmul.bf16 %v4426, %v4028
      %4429 = vrot.lane.b32.xlu0 %v4296, 125
      %v4430 = vpop.permute.xlu0 %4429
      %4431 = vrot.lane.b32.xlu0 %v4299, 125
      %v4432 = vpop.permute.xlu0 %4431
      %v4435 = vsel %vm4036, %v4430, 0.0
      %v4436 = vsel %vm4036, %v4432, 0.0
      %v4437 = vpack.c.bf16 %v4436, %v4435
      %v4438 = vmul.bf16 %v4437, %v4047
      %4439 = vrot.lane.b32.xlu0 %v4296, 124
      %v4440 = vpop.permute.xlu0 %4439
      %4441 = vrot.lane.b32.xlu0 %v4299, 124
      %v4442 = vpop.permute.xlu0 %4441
      %v4445 = vsel %vm4055, %v4440, 0.0
      %v4446 = vsel %vm4055, %v4442, 0.0
      %v4447 = vpack.c.bf16 %v4446, %v4445
      %v4448 = vmul.bf16 %v4447, %v4065
      %4449 = vrot.lane.b32.xlu0 %v4296, 123
      %v4450 = vpop.permute.xlu0 %4449
      %4451 = vrot.lane.b32.xlu0 %v4299, 123
      %v4452 = vpop.permute.xlu0 %4451
      %v4455 = vsel %vm4073, %v4450, 0.0
      %v4456 = vsel %vm4073, %v4452, 0.0
      %v4457 = vpack.c.bf16 %v4456, %v4455
      %v4458 = vmul.bf16 %v4457, %v4084
      %4459 = vrot.lane.b32.xlu0 %v4296, 122
      %v4460 = vpop.permute.xlu0 %4459
      %4461 = vrot.lane.b32.xlu0 %v4299, 122
      %v4462 = vpop.permute.xlu0 %4461
      %v4465 = vsel %vm2878, %v4460, 0.0
      %v4466 = vsel %vm2878, %v4462, 0.0
      %v4467 = vpack.c.bf16 %v4466, %v4465
      %v4468 = vmul.bf16 %v4467, %v4101
      %v4469 = vmul.bf16 %v4467, %v4110
      %4470 = vrot.lane.b32.xlu0 %v4296, 121
      %v4471 = vpop.permute.xlu0 %4470
      %4472 = vrot.lane.b32.xlu0 %v4299, 121
      %v4473 = vpop.permute.xlu0 %4472
      %v4476 = vsel %vm2892, %v4471, 0.0
      %v4477 = vsel %vm2892, %v4473, 0.0
      %v4478 = vpack.c.bf16 %v4477, %v4476
      %v4479 = vmul.bf16 %v4478, %v4127
      %4480 = vrot.lane.b32.xlu0 %v4296, 120
      %v4481 = vpop.permute.xlu0 %4480
      %4482 = vrot.lane.b32.xlu0 %v4299, 120
      %v4483 = vpop.permute.xlu0 %4482
      %v4486 = vsel %vm2907, %v4481, 0.0
      %v4487 = vsel %vm2907, %v4483, 0.0
      %v4488 = vpack.c.bf16 %v4487, %v4486
      %v4489 = vmul.bf16 %v4488, %v4145
      %4490 = vrot.lane.b32.xlu0 %v4296, 119
      %v4491 = vpop.permute.xlu0 %4490
      %4492 = vrot.lane.b32.xlu0 %v4299, 119
      %v4493 = vpop.permute.xlu0 %4492
      %v4496 = vsel %vm2921, %v4491, 0.0
      %v4497 = vsel %vm2921, %v4493, 0.0
      %v4498 = vpack.c.bf16 %v4497, %v4496
      %v4499 = vmul.bf16 %v4498, %v4162
      %4500 = vrot.lane.b32.xlu0 %v4296, 118
      %v4501 = vpop.permute.xlu0 %4500
      %4502 = vrot.lane.b32.xlu0 %v4299, 118
      %v4503 = vpop.permute.xlu0 %4502
      %v4506 = vsel %vm2936, %v4501, 0.0
      %v4507 = vsel %vm2936, %v4503, 0.0
      %v4508 = vpack.c.bf16 %v4507, %v4506
      %v4509 = vmul.bf16 %v4508, %v4180
      %v4510 = vld [vmem:[%s13] sm:$0xff]
      %v4511 = vld [vmem:[%s13 + $0x8] sm:$0xff]
      %v4512 = vld [vmem:[%s13 + $0x10] sm:$0xff]
      %v4513 = vld [vmem:[%s13 + $0x18] sm:$0xff]
      %v4514 = vld [vmem:[%s29] sm:$0xff]
      %v4515 = vld [vmem:[%s29 + $0x8] sm:$0xff]
      %4517 = vset.pattern.permute.xlu0 0
      %4518 = vperm.xlu0 %4517, %v4514
      %v4519 = vpop.permute.xlu0 %4518
      %4522 = vset.pattern.permute.xlu0 0
      %4523 = vperm.xlu0 %4522, %v4515
      %v4524 = vpop.permute.xlu0 %4523
      %v4530 = vunpack.c.l.b16 %v4510
      %v4531 = vunpack.c.h.b16 %v4510
      %v4532 = vunpack.c.l.b16 %v4511
      %v4533 = vunpack.c.h.b16 %v4511
      %v4534 = vunpack.c.l.b16 %v4512
      %v4535 = vunpack.c.h.b16 %v4512
      %v4536 = vunpack.c.l.b16 %v4513
      %v4537 = vunpack.c.h.b16 %v4513
      %v4538 = vpack.c.b16 %v4534, %v4530
      %v4539 = vpack.c.b16 %v4535, %v4531
      %v4540 = vpack.c.b16 %v4536, %v4532
      %v4541 = vpack.c.b16 %v4537, %v4533
      %v4546 = vsel %vm1150, %v4541, 0
      %4548 = vmatprep.subr.bf16.mxu0 0
      %4549 = vmatpush1.bf16.msra.mxu0 %v4313
      %4550 = vmatprep.subr.bf16.mxu0 0
      %4551 = vmatpush1.bf16.msra.mxu0 %v4323
      %4552 = vmatprep.subr.bf16.mxu0 0
      %4553 = vmatpush1.bf16.msra.mxu0 %v4333
      %4554 = vmatprep.subr.bf16.mxu0 0
      %4555 = vmatpush1.bf16.msra.mxu0 %v4343
      %4556 = vmatprep.subr.bf16.mxu0 0
      %4557 = vmatpush1.bf16.msra.mxu0 %v4353
      %4558 = vmatprep.subr.bf16.mxu0 0
      %4559 = vmatpush1.bf16.msra.mxu0 %v4354
      %4560 = vmatprep.subr.bf16.mxu0 0
      %4561 = vmatpush1.bf16.msra.mxu0 %v4364
      %4562 = vmatprep.subr.bf16.mxu0 0
      %4563 = vmatpush1.bf16.msra.mxu0 %v4374
      %4564 = vmatprep.subr.bf16.mxu0 0
      %4565 = vmatpush1.bf16.msra.mxu0 %v4384
      %4566 = vmatprep.subr.bf16.mxu0 0
      %4567 = vmatpush1.bf16.msra.mxu0 %v4394
      %4568 = vmatprep.subr.bf16.mxu0 0
      %4569 = vmatpush1.bf16.msra.mxu0 %v4395
      %4570 = vmatprep.subr.bf16.mxu0 0
      %4571 = vmatpush1.bf16.msra.mxu0 %v4405
      %4572 = vmatprep.subr.bf16.mxu0 0
      %4573 = vmatpush1.bf16.msra.mxu0 %v4407
      %4574 = vmatprep.subr.bf16.mxu0 0
      %4575 = vmatpush1.bf16.msra.mxu0 %v4417
      %4576 = vmatprep.subr.bf16.mxu0 0
      %4577 = vmatpush1.bf16.msra.mxu0 %v4427
      %4578 = vmatprep.subr.bf16.mxu0 0
      %4579 = vmatpush1.bf16.msra.mxu0 %v4428
      %4580 = vmatprep.mubr.bf16.mxu0 %v4539
      %4581 = vmatmul.mubr.bf16.gmra.mrb[0].mxu0 %v4538
      %v4582 = vpop.f32.mrb[0].mxu0
      %v4583 = vadd.f32 %v4519, %v4582
      %v4584 = vpop.f32.mrb[0].mxu0
      %v4585 = vpop.f32.mrb[0].mxu0
      %v4586 = vadd.f32 %v4524, %v4585
      %v4587 = vpop.f32.mrb[0].mxu0
      %4588 = vdwg.mxu0
      %4589 = vmatprep.subr.bf16.mxu0 0
      %4590 = vmatpush1.bf16.msra.mxu0 %v4438
      %4591 = vmatprep.subr.bf16.mxu0 0
      %4592 = vmatpush1.bf16.msra.mxu0 %v4448
      %4593 = vmatprep.subr.bf16.mxu0 0
      %4594 = vmatpush1.bf16.msra.mxu0 %v4458
      %4595 = vmatprep.subr.bf16.mxu0 0
      %4596 = vmatpush1.bf16.msra.mxu0 %v4468
      %4597 = vmatprep.subr.bf16.mxu0 0
      %4598 = vmatpush1.bf16.msra.mxu0 %v4469
      %4599 = vmatprep.subr.bf16.mxu0 0
      %4600 = vmatpush1.bf16.msra.mxu0 %v4479
      %4601 = vmatprep.subr.bf16.mxu0 0
      %4602 = vmatpush1.bf16.msra.mxu0 %v4489
      %4603 = vmatprep.subr.bf16.mxu0 0
      %4604 = vmatpush1.bf16.msra.mxu0 %v4499
      %4605 = vmatprep.subr.bf16.mxu0 0
      %4606 = vmatpush1.bf16.msra.mxu0 %v4509
      %4607 = vmatprep.subr.bf16.mxu0 0
      %4608 = vmatpush1.bf16.msra.mxu0 0
      %4609 = vmatprep.subr.bf16.mxu0 0
      %4610 = vmatpush1.bf16.msra.mxu0 0
      %4611 = vmatprep.subr.bf16.mxu0 0
      %4612 = vmatpush1.bf16.msra.mxu0 0
      %4613 = vmatprep.subr.bf16.mxu0 0
      %4614 = vmatpush1.bf16.msra.mxu0 0
      %4615 = vmatprep.subr.bf16.mxu0 0
      %4616 = vmatpush1.bf16.msra.mxu0 0
      %4617 = vmatprep.subr.bf16.mxu0 0
      %4618 = vmatpush1.bf16.msra.mxu0 0
      %4619 = vmatprep.subr.bf16.mxu0 0
      %4620 = vmatpush1.bf16.msra.mxu0 0
      %4621 = vmatprep.mubr.bf16.mxu0 %v4546
      %4622 = vmatmul.mubr.bf16.gmra.mrb[0].mxu0 %v4540
      %v4623 = vpop.f32.mrb[0].mxu0
      %v4624 = vadd.f32 %v4583, %v4623
      %v4625 = vpop.f32.mrb[0].mxu0
      %v4626 = vpop.f32.mrb[0].mxu0
      %v4627 = vadd.f32 %v4586, %v4626
      %v4628 = vpop.f32.mrb[0].mxu0
      %4629 = vdwg.mxu0
      %v4630 = vmax.f32 %v4624, 0.0
      %v4631 = vmax.f32 %v4627, 0.0
      %4634 = vrot.lane.b32.xlu0 %v4630, 127
      %v4635 = vpop.permute.xlu0 %4634
      %4636 = vrot.lane.b32.xlu0 %v4631, 127
      %v4637 = vpop.permute.xlu0 %4636
      %v4640 = vsel %vm1181, %v4635, 0.0
      %v4641 = vsel %vm1181, %v4637, 0.0
      %v4642 = vmax.f32 %v4630, %v4640
      %v4643 = vmax.f32 %v4631, %v4641
      %4646 = vrot.lane.b32.xlu0 %v4642, 124
      %v4647 = vpop.permute.xlu0 %4646
      %4648 = vrot.lane.b32.xlu0 %v4643, 124
      %v4649 = vpop.permute.xlu0 %4648
      %v4652 = vsel %vm4055, %v4647, 0.0
      %v4653 = vsel %vm4055, %v4649, 0.0
      %v4654 = vmax.f32 %v4642, %v4652
      %v4655 = vmax.f32 %v4643, %v4653
      %v4656 = vld [vmem:[%s47] sm:$0xff]
      %v4657 = vld [vmem:[%s47 + $0x8] sm:$0xff]
      %v4659 = vsel %vm1150, %v4654, 0
      %v4662 = vsel %vm1150, %v4655, 0
      %4664 = vmatprep.subr.mxu0 0.0
      %4665 = vmatpush1.msra.mxu0 %v4656
      %4666 = vmatprep.subr.mxu0 0.0
      %4667 = vmatpush1.msra.mxu0 %v4657
      %4668 = vmatprep.subr.mxu0 0.0
      %4669 = vmatpush1.msra.mxu0 0.0
      %4670 = vmatprep.subr.mxu0 0.0
      %4671 = vmatpush1.msra.mxu0 0.0
      %4672 = vmatprep.subr.mxu0 0.0
      %4673 = vmatpush1.msra.mxu0 0.0
      %4674 = vmatprep.subr.mxu0 0.0
      %4675 = vmatpush1.msra.mxu0 0.0
      %4676 = vmatprep.subr.mxu0 0.0
      %4677 = vmatpush1.msra.mxu0 0.0
      %4678 = vmatprep.subr.mxu0 0.0
      %4679 = vmatpush1.msra.mxu0 0.0
      %4680 = vmatprep.subr.mxu0 0.0
      %4681 = vmatpush1.msra.mxu0 0.0
      %4682 = vmatprep.subr.mxu0 0.0
      %4683 = vmatpush1.msra.mxu0 0.0
      %4684 = vmatprep.subr.mxu0 0.0
      %4685 = vmatpush1.msra.mxu0 0.0
      %4686 = vmatprep.subr.mxu0 0.0
      %4687 = vmatpush1.msra.mxu0 0.0
      %4688 = vmatprep.subr.mxu0 0.0
      %4689 = vmatpush1.msra.mxu0 0.0
      %4690 = vmatprep.subr.mxu0 0.0
      %4691 = vmatpush1.msra.mxu0 0.0
      %4692 = vmatprep.subr.mxu0 0.0
      %4693 = vmatpush1.msra.mxu0 0.0
      %4694 = vmatprep.subr.mxu0 0.0
      %4695 = vmatpush1.msra.mxu0 0.0
      %4696 = vmatprep.subr.mxu0 0.0
      %4697 = vmatpush1.msra.mxu0 0.0
      %4698 = vmatprep.subr.mxu0 0.0
      %4699 = vmatpush1.msra.mxu0 0.0
      %4700 = vmatprep.subr.mxu0 0.0
      %4701 = vmatpush1.msra.mxu0 0.0
      %4702 = vmatprep.subr.mxu0 0.0
      %4703 = vmatpush1.msra.mxu0 0.0
      %4704 = vmatprep.subr.mxu0 0.0
      %4705 = vmatpush1.msra.mxu0 0.0
      %4706 = vmatprep.subr.mxu0 0.0
      %4707 = vmatpush1.msra.mxu0 0.0
      %4708 = vmatprep.subr.mxu0 0.0
      %4709 = vmatpush1.msra.mxu0 0.0
      %4710 = vmatprep.subr.mxu0 0.0
      %4711 = vmatpush1.msra.mxu0 0.0
      %4712 = vmatprep.subr.mxu0 0.0
      %4713 = vmatpush1.msra.mxu0 0.0
      %4714 = vmatprep.subr.mxu0 0.0
      %4715 = vmatpush1.msra.mxu0 0.0
      %4716 = vmatprep.subr.mxu0 0.0
      %4717 = vmatpush1.msra.mxu0 0.0
      %4718 = vmatprep.subr.mxu0 0.0
      %4719 = vmatpush1.msra.mxu0 0.0
      %4720 = vmatprep.subr.mxu0 0.0
      %4721 = vmatpush1.msra.mxu0 0.0
      %4722 = vmatprep.subr.mxu0 0.0
      %4723 = vmatpush1.msra.mxu0 0.0
      %4724 = vmatprep.subr.mxu0 0.0
      %4725 = vmatpush1.msra.mxu0 0.0
      %4726 = vmatprep.subr.mxu0 0.0
      %4727 = vmatpush1.msra.mxu0 0.0
      %4728 = vmatprep.mubr.f32.mxu0 0.0
      %4729 = vmatmul.mubr.f32.gmra.mrb[0].mxu0 %v4659
      %v4730 = vpop.f32.mrb[0].mxu0
      %v4731 = vadd.f32 0.0, %v4730
      %v4732 = vpop.f32.mrb[0].mxu0
      %4733 = vmatprep.mubr.f32.mxu0 0.0
      %4734 = vmatmul.mubr.f32.gmra.mrb[0].mxu0 %v4662
      %v4735 = vpop.f32.mrb[0].mxu0
      %v4736 = vadd.f32 0.0, %v4735
      %v4737 = vpop.f32.mrb[0].mxu0
      %4738 = vdwg.mxu0
      %4741 = vrot.lane.b32.xlu0 %v4731, 3
      %v4742 = vpop.permute.xlu0 %4741
      %4743 = vrot.lane.b32.xlu0 %v4736, 3
      %v4744 = vpop.permute.xlu0 %4743
      %v4747 = vsel %vm3921, 0.0, %v4742
      %v4748 = vsel %vm3921, 0.0, %v4744
      %v4749 = vpack.c.bf16 %v4748, %v4747
      %v4750 = vld [vmem:[%s41] sm:$0x1]
      %v4752 = vpack.i.b16 %v4750, %v4750
      %v4754 = vlaneseq
      %v4755 = vshrl.u32 %v4754, 7
      %v4756 = vsub.s32 0, %v4755
      %v4757 = vrot.slane %v4752, %v4756
      %v4758 = vmul.bf16 %v4749, %v4757
      %4759 = vrot.lane.b32.xlu0 %v4731, 2
      %v4760 = vpop.permute.xlu0 %4759
      %4761 = vrot.lane.b32.xlu0 %v4736, 2
      %v4762 = vpop.permute.xlu0 %4761
      %v4765 = vsel %vm1244, 0.0, %v4760
      %v4766 = vsel %vm1244, 0.0, %v4762
      %v4767 = vpack.c.bf16 %v4766, %v4765
      %v4768 = vshrl.u32 %v4750, 16
      %v4769 = vpack.i.b16 %v4768, %v4768
      %v4771 = vlaneseq
      %v4772 = vshrl.u32 %v4771, 7
      %v4773 = vsub.s32 0, %v4772
      %v4774 = vrot.slane %v4769, %v4773
      %v4775 = vmul.bf16 %v4767, %v4774
      %4776 = vrot.lane.b32.xlu0 %v4731, 1
      %v4777 = vpop.permute.xlu0 %4776
      %4778 = vrot.lane.b32.xlu0 %v4736, 1
      %v4779 = vpop.permute.xlu0 %4778
      %v4782 = vsel %vm1280, 0.0, %v4777
      %v4783 = vsel %vm1280, 0.0, %v4779
      %v4784 = vpack.c.bf16 %v4783, %v4782
      %v4785 = vld [vmem:[%s41] sm:$0x2]
      %v4787 = vpack.i.b16 %v4785, %v4785
      %v4789 = vlaneseq
      %v4790 = vshrl.u32 %v4789, 7
      %v4791 = vsub.s32 1, %v4790
      %v4792 = vrot.slane %v4787, %v4791
      %v4793 = vmul.bf16 %v4784, %v4792
      %v4794 = vshrl.u32 %v4785, 16
      %v4795 = vpack.i.b16 %v4794, %v4794
      %v4797 = vlaneseq
      %v4798 = vshrl.u32 %v4797, 7
      %v4799 = vsub.s32 1, %v4798
      %v4800 = vrot.slane %v4795, %v4799
      %v4801 = vmul.bf16 %v4784, %v4800
      %v4802 = vpack.c.bf16 %v4736, %v4731
      %v4803 = vld [vmem:[%s41] sm:$0x4]
      %v4805 = vpack.i.b16 %v4803, %v4803
      %v4807 = vlaneseq
      %v4808 = vshrl.u32 %v4807, 7
      %v4809 = vsub.s32 2, %v4808
      %v4810 = vrot.slane %v4805, %v4809
      %v4811 = vmul.bf16 %v4802, %v4810
      %4812 = vrot.lane.b32.xlu0 %v4731, 127
      %v4813 = vpop.permute.xlu0 %4812
      %4814 = vrot.lane.b32.xlu0 %v4736, 127
      %v4815 = vpop.permute.xlu0 %4814
      %v4818 = vsel %vm3921, %v4813, 0.0
      %v4819 = vsel %vm3921, %v4815, 0.0
      %v4820 = vpack.c.bf16 %v4819, %v4818
      %v4821 = vshrl.u32 %v4803, 16
      %v4822 = vpack.i.b16 %v4821, %v4821
      %v4824 = vlaneseq
      %v4825 = vshrl.u32 %v4824, 7
      %v4826 = vsub.s32 2, %v4825
      %v4827 = vrot.slane %v4822, %v4826
      %v4828 = vmul.bf16 %v4820, %v4827
      %v4829 = vld [vmem:[%s41] sm:$0x8]
      %v4831 = vpack.i.b16 %v4829, %v4829
      %v4833 = vlaneseq
      %v4834 = vshrl.u32 %v4833, 7
      %v4835 = vsub.s32 3, %v4834
      %v4836 = vrot.slane %v4831, %v4835
      %v4837 = vmul.bf16 %v4820, %v4836
      %4838 = vrot.lane.b32.xlu0 %v4731, 126
      %v4839 = vpop.permute.xlu0 %4838
      %4840 = vrot.lane.b32.xlu0 %v4736, 126
      %v4841 = vpop.permute.xlu0 %4840
      %v4844 = vsel %vm1244, %v4839, 0.0
      %v4845 = vsel %vm1244, %v4841, 0.0
      %v4846 = vpack.c.bf16 %v4845, %v4844
      %v4847 = vshrl.u32 %v4829, 16
      %v4848 = vpack.i.b16 %v4847, %v4847
      %v4850 = vlaneseq
      %v4851 = vshrl.u32 %v4850, 7
      %v4852 = vsub.s32 3, %v4851
      %v4853 = vrot.slane %v4848, %v4852
      %v4854 = vmul.bf16 %v4846, %v4853
      %4855 = vrot.lane.b32.xlu0 %v4731, 125
      %v4856 = vpop.permute.xlu0 %4855
      %4857 = vrot.lane.b32.xlu0 %v4736, 125
      %v4858 = vpop.permute.xlu0 %4857
      %v4861 = vsel %vm1280, %v4856, 0.0
      %v4862 = vsel %vm1280, %v4858, 0.0
      %v4863 = vpack.c.bf16 %v4862, %v4861
      %v4864 = vld [vmem:[%s41 + $0x4] sm:$0x1]
      %v4866 = vpack.i.b16 %v4864, %v4864
      %v4868 = vlaneseq
      %v4869 = vshrl.u32 %v4868, 7
      %v4870 = vsub.s32 0, %v4869
      %v4871 = vrot.slane %v4866, %v4870
      %v4872 = vmul.bf16 %v4863, %v4871
      %v4873 = vld [vmem:[%s15] sm:$0xff]
      %v4874 = vld [vmem:[%s31] sm:$0xff]
      %4876 = vset.pattern.permute.xlu0 0
      %4877 = vperm.xlu0 %4876, %v4874
      %v4878 = vpop.permute.xlu0 %4877
      %v4881 = vunpack.c.l.b16 %v4873
      %v4882 = vunpack.c.h.b16 %v4873
      %v4883 = vpack.c.b16 %v4881, %v4881
      %v4884 = vpack.c.b16 %v4882, %v4882
      %v4887 = vsel %vm1150, %v4884, 0
      %4889 = vmatprep.subr.bf16.mxu0 0
      %4890 = vmatpush1.bf16.msra.mxu0 %v4758
      %4891 = vmatprep.subr.bf16.mxu0 0
      %4892 = vmatpush1.bf16.msra.mxu0 %v4775
      %4893 = vmatprep.subr.bf16.mxu0 0
      %4894 = vmatpush1.bf16.msra.mxu0 %v4793
      %4895 = vmatprep.subr.bf16.mxu0 0
      %4896 = vmatpush1.bf16.msra.mxu0 %v4801
      %4897 = vmatprep.subr.bf16.mxu0 0
      %4898 = vmatpush1.bf16.msra.mxu0 %v4811
      %4899 = vmatprep.subr.bf16.mxu0 0
      %4900 = vmatpush1.bf16.msra.mxu0 %v4828
      %4901 = vmatprep.subr.bf16.mxu0 0
      %4902 = vmatpush1.bf16.msra.mxu0 %v4837
      %4903 = vmatprep.subr.bf16.mxu0 0
      %4904 = vmatpush1.bf16.msra.mxu0 %v4854
      %4905 = vmatprep.subr.bf16.mxu0 0
      %4906 = vmatpush1.bf16.msra.mxu0 %v4872
      %4907 = vmatprep.subr.bf16.mxu0 0
      %4908 = vmatpush1.bf16.msra.mxu0 0
      %4909 = vmatprep.subr.bf16.mxu0 0
      %4910 = vmatpush1.bf16.msra.mxu0 0
      %4911 = vmatprep.subr.bf16.mxu0 0
      %4912 = vmatpush1.bf16.msra.mxu0 0
      %4913 = vmatprep.subr.bf16.mxu0 0
      %4914 = vmatpush1.bf16.msra.mxu0 0
      %4915 = vmatprep.subr.bf16.mxu0 0
      %4916 = vmatpush1.bf16.msra.mxu0 0
      %4917 = vmatprep.subr.bf16.mxu0 0
      %4918 = vmatpush1.bf16.msra.mxu0 0
      %4919 = vmatprep.subr.bf16.mxu0 0
      %4920 = vmatpush1.bf16.msra.mxu0 0
      %4921 = vmatprep.mubr.bf16.mxu0 %v4887
      %4922 = vmatmul.mubr.bf16.gmra.mrb[0].mxu0 %v4883
      %v4923 = vpop.f32.mrb[0].mxu0
      %v4924 = vadd.f32 %v4878, %v4923
      %v4925 = vpop.f32.mrb[0].mxu0
      %v4926 = vpop.f32.mrb[0].mxu0
      %v4927 = vpop.f32.mrb[0].mxu0
      %4928 = vdwg.mxu0
      %4930 = vrot.lane.b32.xlu0 %v4924, 3
      %v4931 = vpop.permute.xlu0 %4930
      %v4933 = vsel %vm3921, 0.0, %v4931
      %v4934 = vpack.c.bf16 %v4933, %v4933
      %v4935 = vmul.bf16 %v4934, %v4757
      %4936 = vrot.lane.b32.xlu0 %v4924, 2
      %v4937 = vpop.permute.xlu0 %4936
      %v4939 = vsel %vm1244, 0.0, %v4937
      %v4940 = vpack.c.bf16 %v4939, %v4939
      %v4941 = vmul.bf16 %v4940, %v4774
      %4942 = vrot.lane.b32.xlu0 %v4924, 1
      %v4943 = vpop.permute.xlu0 %4942
      %v4945 = vsel %vm1280, 0.0, %v4943
      %v4946 = vpack.c.bf16 %v4945, %v4945
      %v4947 = vmul.bf16 %v4946, %v4792
      %v4948 = vmul.bf16 %v4946, %v4800
      %v4949 = vpack.c.bf16 %v4924, %v4924
      %v4950 = vmul.bf16 %v4949, %v4810
      %4951 = vrot.lane.b32.xlu0 %v4924, 127
      %v4952 = vpop.permute.xlu0 %4951
      %v4954 = vsel %vm3921, %v4952, 0.0
      %v4955 = vpack.c.bf16 %v4954, %v4954
      %v4956 = vmul.bf16 %v4955, %v4827
      %v4957 = vmul.bf16 %v4955, %v4836
      %4958 = vrot.lane.b32.xlu0 %v4924, 126
      %v4959 = vpop.permute.xlu0 %4958
      %v4961 = vsel %vm1244, %v4959, 0.0
      %v4962 = vpack.c.bf16 %v4961, %v4961
      %v4963 = vmul.bf16 %v4962, %v4853
      %4964 = vrot.lane.b32.xlu0 %v4924, 125
      %v4965 = vpop.permute.xlu0 %4964
      %v4967 = vsel %vm1280, %v4965, 0.0
      %v4968 = vpack.c.bf16 %v4967, %v4967
      %v4969 = vmul.bf16 %v4968, %v4871
      %v4971 = vrot.slane %v4941, 4
      %v4973 = vrot.slane %v4948, 4
      %v4975 = vrot.slane %v4956, 4
      %v4977 = vrot.slane %v4963, 4
      %v4980 = vsel %vm2501, %v4935, %v4971
      %v4984 = vsel %vm2501, %v4947, %v4973
      %v4988 = vsel %vm2501, %v4950, %v4975
      %v4992 = vsel %vm2501, %v4957, %v4977
      %v4994 = vld [vmem:[%s17] sm:$0x1]
      %v4995 = vld [vmem:[#allocation2] sm:$0x1]
      %4997 = vset.pattern.permute.xlu0 0
      %4998 = vperm.xlu0 %4997, %v4995
      %v4999 = vpop.permute.xlu0 %4998
      %v5001 = vlaneseq
      %v5002 = vshrl.u32 %v5001, 7
      %v5003 = vsub.s32 0, %v5002
      %v5004 = vrot.slane %v4999, %v5003
      %v5006 = vsel %vm2627, %v4994, 0
      %v5009 = vsel %vm2501, %v4969, 0
      %5011 = vmatprep.subr.bf16.mxu0 0
      %5012 = vmatpush1.bf16.msra.mxu0 %v4980
      %5013 = vmatprep.subr.bf16.mxu0 0
      %5014 = vmatpush1.bf16.msra.mxu0 %v4984
      %5015 = vmatprep.subr.bf16.mxu0 0
      %5016 = vmatpush1.bf16.msra.mxu0 %v4988
      %5017 = vmatprep.subr.bf16.mxu0 0
      %5018 = vmatpush1.bf16.msra.mxu0 %v4992
      %5019 = vmatprep.subr.bf16.mxu0 0
      %5020 = vmatpush1.bf16.msra.mxu0 %v5009
      %5021 = vmatprep.subr.bf16.mxu0 0
      %5022 = vmatpush1.bf16.msra.mxu0 0
      %5023 = vmatprep.subr.bf16.mxu0 0
      %5024 = vmatpush1.bf16.msra.mxu0 0
      %5025 = vmatprep.subr.bf16.mxu0 0
      %5026 = vmatpush1.bf16.msra.mxu0 0
      %5027 = vmatprep.subr.bf16.mxu0 0
      %5028 = vmatpush1.bf16.msra.mxu0 0
      %5029 = vmatprep.subr.bf16.mxu0 0
      %5030 = vmatpush1.bf16.msra.mxu0 0
      %5031 = vmatprep.subr.bf16.mxu0 0
      %5032 = vmatpush1.bf16.msra.mxu0 0
      %5033 = vmatprep.subr.bf16.mxu0 0
      %5034 = vmatpush1.bf16.msra.mxu0 0
      %5035 = vmatprep.subr.bf16.mxu0 0
      %5036 = vmatpush1.bf16.msra.mxu0 0
      %5037 = vmatprep.subr.bf16.mxu0 0
      %5038 = vmatpush1.bf16.msra.mxu0 0
      %5039 = vmatprep.subr.bf16.mxu0 0
      %5040 = vmatpush1.bf16.msra.mxu0 0
      %5041 = vmatprep.subr.bf16.mxu0 0
      %5042 = vmatpush1.bf16.msra.mxu0 0
      %5043 = vmatprep.mubr.bf16.mxu0 0
      %5044 = vmatmul.mubr.bf16.gmra.mrb[0].mxu0 %v5006
      %v5045 = vpop.f32.mrb[0].mxu0
      %v5046 = vadd.f32 %v5004, %v5045
      %v5047 = vpop.f32.mrb[0].mxu0
      %v5048 = vpop.f32.mrb[0].mxu0
      %v5049 = vpop.f32.mrb[0].mxu0
      %5050 = vdwg.mxu0
      %v5051 = vmax.f32 %v5046, 0.0
      %v5052 = vld [vmem:[%s49] sm:$0x1]
      %v5053 = vmul.f32 %v5051, %v5052
      %v5054 = vld [vmem:[%s51] sm:$0xf]
      %v5055 = vld [vmem:[%s53] sm:$0x1]
      %v5057 = vsel %vm3903, %v5053, 0
      %v5060 = vsel %vm2501, %v5054, 0
      %5062 = vmatprep.subr.mxu0 0.0
      %5063 = vmatpush1.msra.mxu0 %v5060
      %5064 = vmatprep.subr.mxu0 0.0
      %5065 = vmatpush1.msra.mxu0 0.0
      %5066 = vmatprep.subr.mxu0 0.0
      %5067 = vmatpush1.msra.mxu0 0.0
      %5068 = vmatprep.subr.mxu0 0.0
      %5069 = vmatpush1.msra.mxu0 0.0
      %5070 = vmatprep.subr.mxu0 0.0
      %5071 = vmatpush1.msra.mxu0 0.0
      %5072 = vmatprep.subr.mxu0 0.0
      %5073 = vmatpush1.msra.mxu0 0.0
      %5074 = vmatprep.subr.mxu0 0.0
      %5075 = vmatpush1.msra.mxu0 0.0
      %5076 = vmatprep.subr.mxu0 0.0
      %5077 = vmatpush1.msra.mxu0 0.0
      %5078 = vmatprep.subr.mxu0 0.0
      %5079 = vmatpush1.msra.mxu0 0.0
      %5080 = vmatprep.subr.mxu0 0.0
      %5081 = vmatpush1.msra.mxu0 0.0
      %5082 = vmatprep.subr.mxu0 0.0
      %5083 = vmatpush1.msra.mxu0 0.0
      %5084 = vmatprep.subr.mxu0 0.0
      %5085 = vmatpush1.msra.mxu0 0.0
      %5086 = vmatprep.subr.mxu0 0.0
      %5087 = vmatpush1.msra.mxu0 0.0
      %5088 = vmatprep.subr.mxu0 0.0
      %5089 = vmatpush1.msra.mxu0 0.0
      %5090 = vmatprep.subr.mxu0 0.0
      %5091 = vmatpush1.msra.mxu0 0.0
      %5092 = vmatprep.subr.mxu0 0.0
      %5093 = vmatpush1.msra.mxu0 0.0
      %5094 = vmatprep.subr.mxu0 0.0
      %5095 = vmatpush1.msra.mxu0 0.0
      %5096 = vmatprep.subr.mxu0 0.0
      %5097 = vmatpush1.msra.mxu0 0.0
      %5098 = vmatprep.subr.mxu0 0.0
      %5099 = vmatpush1.msra.mxu0 0.0
      %5100 = vmatprep.subr.mxu0 0.0
      %5101 = vmatpush1.msra.mxu0 0.0
      %5102 = vmatprep.subr.mxu0 0.0
      %5103 = vmatpush1.msra.mxu0 0.0
      %5104 = vmatprep.subr.mxu0 0.0
      %5105 = vmatpush1.msra.mxu0 0.0
      %5106 = vmatprep.subr.mxu0 0.0
      %5107 = vmatpush1.msra.mxu0 0.0
      %5108 = vmatprep.subr.mxu0 0.0
      %5109 = vmatpush1.msra.mxu0 0.0
      %5110 = vmatprep.subr.mxu0 0.0
      %5111 = vmatpush1.msra.mxu0 0.0
      %5112 = vmatprep.subr.mxu0 0.0
      %5113 = vmatpush1.msra.mxu0 0.0
      %5114 = vmatprep.subr.mxu0 0.0
      %5115 = vmatpush1.msra.mxu0 0.0
      %5116 = vmatprep.subr.mxu0 0.0
      %5117 = vmatpush1.msra.mxu0 0.0
      %5118 = vmatprep.subr.mxu0 0.0
      %5119 = vmatpush1.msra.mxu0 0.0
      %5120 = vmatprep.subr.mxu0 0.0
      %5121 = vmatpush1.msra.mxu0 0.0
      %5122 = vmatprep.subr.mxu0 0.0
      %5123 = vmatpush1.msra.mxu0 0.0
      %5124 = vmatprep.subr.mxu0 0.0
      %5125 = vmatpush1.msra.mxu0 0.0
      %5126 = vmatprep.mubr.f32.mxu0 0.0
      %5127 = vmatmul.mubr.f32.gmra.mrb[0].mxu0 %v5057
      %v5128 = vpop.f32.mrb[0].mxu0
      %v5129 = vadd.f32 %v5055, %v5128
      %v5130 = vpop.f32.mrb[0].mxu0
      %5131 = vdwg.mxu0
      %v5132 = vmax.f32 %v5129, 0.0
      %v5133 = vld [vmem:[%s55] sm:$0xff]
      %v5134 = vld [vmem:[%s55 + $0x8] sm:$0xff]
      %v5135 = vld [vmem:[%s55 + $0x10] sm:$0xff]
      %v5136 = vld [vmem:[%s55 + $0x18] sm:$0xff]
      %v5137 = vld [vmem:[#allocation3] sm:$0x1]
      %v5139 = vsel %vm980, %v5132, 0
      %5141 = vmatprep.subr.mxu0 0.0
      %5142 = vmatpush1.msra.mxu0 %v5133
      %5143 = vmatprep.subr.mxu0 0.0
      %5144 = vmatpush1.msra.mxu0 %v5134
      %5145 = vmatprep.subr.mxu0 0.0
      %5146 = vmatpush1.msra.mxu0 %v5135
      %5147 = vmatprep.subr.mxu0 0.0
      %5148 = vmatpush1.msra.mxu0 %v5136
      %5149 = vmatprep.subr.mxu0 0.0
      %5150 = vmatpush1.msra.mxu0 0.0
      %5151 = vmatprep.subr.mxu0 0.0
      %5152 = vmatpush1.msra.mxu0 0.0
      %5153 = vmatprep.subr.mxu0 0.0
      %5154 = vmatpush1.msra.mxu0 0.0
      %5155 = vmatprep.subr.mxu0 0.0
      %5156 = vmatpush1.msra.mxu0 0.0
      %5157 = vmatprep.subr.mxu0 0.0
      %5158 = vmatpush1.msra.mxu0 0.0
      %5159 = vmatprep.subr.mxu0 0.0
      %5160 = vmatpush1.msra.mxu0 0.0
      %5161 = vmatprep.subr.mxu0 0.0
      %5162 = vmatpush1.msra.mxu0 0.0
      %5163 = vmatprep.subr.mxu0 0.0
      %5164 = vmatpush1.msra.mxu0 0.0
      %5165 = vmatprep.subr.mxu0 0.0
      %5166 = vmatpush1.msra.mxu0 0.0
      %5167 = vmatprep.subr.mxu0 0.0
      %5168 = vmatpush1.msra.mxu0 0.0
      %5169 = vmatprep.subr.mxu0 0.0
      %5170 = vmatpush1.msra.mxu0 0.0
      %5171 = vmatprep.subr.mxu0 0.0
      %5172 = vmatpush1.msra.mxu0 0.0
      %5173 = vmatprep.subr.mxu0 0.0
      %5174 = vmatpush1.msra.mxu0 0.0
      %5175 = vmatprep.subr.mxu0 0.0
      %5176 = vmatpush1.msra.mxu0 0.0
      %5177 = vmatprep.subr.mxu0 0.0
      %5178 = vmatpush1.msra.mxu0 0.0
      %5179 = vmatprep.subr.mxu0 0.0
      %5180 = vmatpush1.msra.mxu0 0.0
      %5181 = vmatprep.subr.mxu0 0.0
      %5182 = vmatpush1.msra.mxu0 0.0
      %5183 = vmatprep.subr.mxu0 0.0
      %5184 = vmatpush1.msra.mxu0 0.0
      %5185 = vmatprep.subr.mxu0 0.0
      %5186 = vmatpush1.msra.mxu0 0.0
      %5187 = vmatprep.subr.mxu0 0.0
      %5188 = vmatpush1.msra.mxu0 0.0
      %5189 = vmatprep.subr.mxu0 0.0
      %5190 = vmatpush1.msra.mxu0 0.0
      %5191 = vmatprep.subr.mxu0 0.0
      %5192 = vmatpush1.msra.mxu0 0.0
      %5193 = vmatprep.subr.mxu0 0.0
      %5194 = vmatpush1.msra.mxu0 0.0
      %5195 = vmatprep.subr.mxu0 0.0
      %5196 = vmatpush1.msra.mxu0 0.0
      %5197 = vmatprep.subr.mxu0 0.0
      %5198 = vmatpush1.msra.mxu0 0.0
      %5199 = vmatprep.subr.mxu0 0.0
      %5200 = vmatpush1.msra.mxu0 0.0
      %5201 = vmatprep.subr.mxu0 0.0
      %5202 = vmatpush1.msra.mxu0 0.0
      %5203 = vmatprep.subr.mxu0 0.0
      %5204 = vmatpush1.msra.mxu0 0.0
      %5205 = vmatprep.mubr.f32.mxu0 0.0
      %5206 = vmatmul.mubr.f32.gmra.mrb[0].mxu0 %v5139
      %v5207 = vpop.f32.mrb[0].mxu0
      %v5208 = vadd.f32 %v5137, %v5207
      %v5209 = vpop.f32.mrb[0].mxu0
      %5210 = vdwg.mxu0
      %v5211 = vxor.u32 %v5208, 2147483648
      %v5212 = vmul.f32 %v5211, 1.442695
      %v5213 = vpow.pop %v5212
      %v5214 = vadd.f32 %v5213, 1.0
      %v5215 = vrcp.pop %v5214
      %v5216 = vmul.f32 1.0, %v5215
      %vm5217 = vcmask 0
      %5218 = vst.msk [vmem:[%s899] sm:$0x1] %vm5217, %v5216
      %p5219 = scmp.lt.s32.totalorder %s74, 1
      %s5220 = scalar_select %p5219, %s74, 1
      %s5221 = scalar_lea.vmem %s59, %s5220
      // Predicated region
      $region137: #{cnn_forward.1} parent=135 // pred_check
        %p5222 = pneg %p706
      $region138: #{cnn_forward.1} parent=135 // pred_check_branch
        %5224 = sbr.rel (%p5222) target = $region140
      $region139: #{cnn_forward.1} parent=135 // pred_region
        _
      $region140: #{cnn_forward.1} parent=135 // pred_fallthru
        _
    $region136: #{cnn_forward.1} parent=5 // pred_fallthru
      _
    %p5225 = scmp.le.s32.totalorder 2, %s69
    // Predicated region
    $region141: #{cnn_forward.1} parent=5 // pred_check
      %p5226 = pneg %p5225
    $region142: #{cnn_forward.1} parent=5 // pred_check_branch
      %5228 = sbr.rel (%p5226) target = $region144
    $region143: #{cnn_forward.1} parent=5 // pred_region
      %s5229 = ssub.s32 %s69, 2
      // Predicated region
      $region145: #{cnn_forward.1} parent=143 // pred_check
        %p5230 = pneg %p712
      $region146: #{cnn_forward.1} parent=143 // pred_check_branch
        %5232 = sbr.rel (%p5230) target = $region148
      $region147: #{cnn_forward.1} parent=143 // pred_region
        %p5233 = scmp.lt.s32.totalorder %s75, 1
        %s5234 = scalar_select %p5233, %s75, 1
        %s5235 = scalar_lea.vmem %s59, %s5234
      $region148: #{cnn_forward.1} parent=143 // pred_fallthru
        _
    $region144: #{cnn_forward.1} parent=5 // pred_fallthru
      _
  $region6: #{cnn_forward.1} parent=0 // loop_footer
    %s73 = sadd.s32 1, %s69
  $region7: #{cnn_forward.1} parent=0 // loop_footer_branch
    %68 = sbr.rel target = $region3
  $region8: #{cnn_forward.1} parent=0 // loop_exit
    _

</llo_original>
